<compile_context>
chip_gen: v5e
topology: v5e:2x2
jax: 0.10.0
libtpu: 0.0.40
codegen_flags: <defaults>
</compile_context>

<pallas_src>
import functools

import jax
import jax.numpy as jnp
from jax.experimental import pallas as pl
from jax.experimental.pallas import tpu as pltpu


def _round_up(n, m):
    return ((n + m - 1) // m) * m


# ----------------------------------------------------------------------------
# Kernel
# ----------------------------------------------------------------------------
def _sae_kernel(x_ref, mask_ref,
                w1_ref, b1_ref, w2_ref, b2_ref,
                w3_ref, b3_ref, w4_ref, b4_ref,
                out_ref, *, act_dtype):
    cd = w1_ref.dtype                    # MXU compute dtype (bf16 or f32)

    x = x_ref[...].astype(cd)            # cast in-kernel (no wrapper convert pass)

    # ---- encoder: Linear -> Sigmoid -> (Dropout p=0 = identity) -> Linear ----
    t1 = jnp.dot(x, w1_ref[...], preferred_element_type=jnp.float32) + b1_ref[...]
    h1 = jax.nn.sigmoid(t1.astype(act_dtype))       # bf16 on v6e/v7x, f32 on v5e
    z = jnp.dot(h1.astype(cd), w2_ref[...],
                preferred_element_type=jnp.float32) + b2_ref[...]

    # ---- latent mask (f32 elementwise) ----
    z = z * mask_ref[...].astype(jnp.float32)

    # ---- decoder: Linear -> Sigmoid -> (Dropout p=0 = identity) -> Linear ----
    t2 = jnp.dot(z.astype(cd), w3_ref[...],
                 preferred_element_type=jnp.float32) + b3_ref[...]
    h2 = jax.nn.sigmoid(t2.astype(act_dtype))
    y = jnp.dot(h2.astype(cd), w4_ref[...],
                preferred_element_type=jnp.float32) + b4_ref[...]

    out_ref[...] = y.astype(out_ref.dtype)


# ----------------------------------------------------------------------------
# One-time parameter preparation
# ----------------------------------------------------------------------------
def prepare_params(params, compute_dtype=jnp.bfloat16):
    """One-time weight prep (do this OUTSIDE the per-call path).

    Only the HIDDEN dim D1 is zero-padded up to a multiple of 128 lanes so the
    two large activations (h1, h2) and the big MXU operands stay lane-dense.
    D0 / D2 / Dout are left unpadded (their blocks cover the full array dim).
    Zero padding of D1 is exact: padded h columns are sigmoid(0)=0.5 and are
    annihilated by the zero-padded ROWS of the next layer's weight.
    Weights are cast to the MXU compute dtype; biases stay f32 (added to the
    f32 MXU accumulator).
    """
    D0, D1 = params["w1"].shape
    D2 = params["w2"].shape[1]
    Dout = params["w4"].shape[1]
    D1p = _round_up(D1, 128)
    pad = D1p - D1

    return {
        "w1": jnp.pad(params["w1"], ((0, 0), (0, pad))).astype(compute_dtype),
        "b1": jnp.pad(params["b1"], ((0, 0), (0, pad))).astype(jnp.float32),
        "w2": jnp.pad(params["w2"], ((0, pad), (0, 0))).astype(compute_dtype),
        "b2": params["b2"].astype(jnp.float32),
        "w3": jnp.pad(params["w3"], ((0, 0), (0, pad))).astype(compute_dtype),
        "b3": jnp.pad(params["b3"], ((0, 0), (0, pad))).astype(jnp.float32),
        "w4": jnp.pad(params["w4"], ((0, pad), (0, 0))).astype(compute_dtype),
        "b4": params["b4"].astype(jnp.float32),
        "dims": (D0, D1, D2, Dout),
    }


# ----------------------------------------------------------------------------
# Chip policy helpers
# ----------------------------------------------------------------------------
def _tpu_policy():
    """Return (tensorcores_per_chip, default_scoped_vmem, physical_vmem, is_v5e)."""
    kind = ""
    try:
        kind = jax.devices()[0].device_kind.lower()
    except Exception:
        pass
    is_v5e = ("v5 lite" in kind) or ("v5lite" in kind) or ("v5e" in kind)
    is_v7 = ("v7" in kind) or ("7x" in kind)

    vmem_cap = 64 * 1024 * 1024          # conservative default (v7x per-TC size)
    try:
        info = pltpu.get_tpu_info()
        vmem_cap = int(getattr(info, "vmem_capacity_bytes", vmem_cap))
    except Exception:
        pass

    scoped_default = (16 if is_v5e else 32) * 1024 * 1024
    n_tc = 2 if is_v7 else 1
    return n_tc, scoped_default, vmem_cap, is_v5e


def pick_act_dtype(compute_dtype):
    """bf16 sigmoids only where the VPU/EUP has a bf16 path (v6e/v7x)."""
    if jnp.dtype(compute_dtype) != jnp.dtype(jnp.bfloat16):
        return jnp.float32
    _, _, _, is_v5e = _tpu_policy()
    return jnp.float32 if is_v5e else jnp.bfloat16


def _vmem_estimate(tm, D0, D2, Dout, D1p, csz, out_sz):
    # double-buffered per-step x / mask / out tiles (x, mask assumed 4B in HBM)
    tiles = 2 * tm * (D0 * 4 + D2 * 4 + Dout * out_sz)
    # weights counted twice (covers the no-Buffered fallback) + f32 biases
    weights = 2 * ((D0 * D1p + D1p * D2 + D2 * D1p + D1p * Dout) * csz
                   + (2 * D1p + D2 + Dout) * 4)
    # activation / intermediate headroom
    act = 6 * tm * D1p * 4
    return tiles + weights + act


# ----------------------------------------------------------------------------
# Forward wrapper
# ----------------------------------------------------------------------------
def structured_autoencoder_forward(x, mask, prepared, *, batch_tile=None,
                                   act_dtype=None, out_dtype=jnp.float32):
    """x: (B, D0), mask: (B, D2). `prepared` comes from prepare_params()."""
    D0, D1, D2, Dout = prepared["dims"]
    compute_dtype = prepared["w1"].dtype
    D1p = prepared["w1"].shape[1]
    B = x.shape[0]
    assert x.shape[1] == D0 and mask.shape == (B, D2)

    n_tc, scoped_default, vmem_cap, _ = _tpu_policy()
    if act_dtype is None:
        act_dtype = pick_act_dtype(compute_dtype)

    csz = jnp.dtype(compute_dtype).itemsize
    out_sz = jnp.dtype(out_dtype).itemsize
    sub = 16 if csz == 2 else (32 if csz == 1 else 8)   # sublane packing of cd

    # ---- batch-tile policy ----
    # single-TC chips (v5e/v6e): collapse the grid to 1 step when possible;
    # dual-TC v7x: even grid length >= 2 so both TensorCores get work.
    if batch_tile is None:
        batch_tile = 1024 if n_tc == 1 else 512
    if n_tc == 1:
        tm = min(_round_up(B, sub), _round_up(batch_tile, sub))
    else:
        tm = min(_round_up((B + 1) // 2, sub), _round_up(batch_tile, sub))
    tm = max(tm, sub)

    # shrink the tile if its footprint would exceed ~90% of physical VMEM
    vmem_ceiling = max(int(0.9 * vmem_cap), 8 * 1024 * 1024)
    while (_vmem_estimate(tm, D0, D2, Dout, D1p, csz, out_sz) > vmem_ceiling
           and tm > sub):
        tm = max(sub, _round_up(tm // 2, sub))

    grid_len = -(-B // tm)
    if n_tc == 2 and grid_len % 2:
        grid_len += 1                      # keep the parallel batch axis even
    Bp = grid_len * tm

    # Only pad batch ROWS (and only when needed) — no lane pad, no dtype cast.
    xp = x if Bp == B else jnp.pad(x, ((0, Bp - B), (0, 0)))
    maskp = mask if Bp == B else jnp.pad(mask, ((0, Bp - B), (0, 0)))

    est = _vmem_estimate(tm, D0, D2, Dout, D1p, csz, out_sz)
    cp_kwargs = dict(dimension_semantics=("parallel",))
    if est > (scoped_default * 3) // 4:    # threshold derived from chip default
        cp_kwargs["vmem_limit_bytes"] = min(int(est * 1.25), vmem_ceiling)

    w_elems = D0 * D1p + D1p * D2 + D2 * D1p + D1p * Dout
    cost = pl.CostEstimate(
        flops=int(2 * Bp * w_elems),
        transcendentals=int(2 * Bp * D1p),
        bytes_accessed=int(xp.size * xp.dtype.itemsize
                           + maskp.size * maskp.dtype.itemsize
                           + Bp * Dout * out_sz
                           + w_elems * csz
                           + (2 * D1p + D2 + Dout) * 4),
    )

    kernel = functools.partial(_sae_kernel, act_dtype=act_dtype)

    def _build_and_call(resident_buffered):
        def res_spec(shape):
            # Grid-invariant block: same (0,0) block every step.
            if resident_buffered:
                return pl.BlockSpec(shape, lambda i: (0, 0),
                                    pipeline_mode=pl.Buffered(1))
            return pl.BlockSpec(shape, lambda i: (0, 0))

        return pl.pallas_call(
            kernel,
            out_shape=jax.ShapeDtypeStruct((Bp, Dout), out_dtype),
            grid_spec=pltpu.PrefetchScalarGridSpec(
                num_scalar_prefetch=0,
                grid=(grid_len,),
                in_specs=[
                    pl.BlockSpec((tm, D0), lambda i: (i, 0)),      # x (unpadded lanes)
                    pl.BlockSpec((tm, D2), lambda i: (i, 0)),      # mask (unpadded)
                    res_spec((D0, D1p)), res_spec((1, D1p)),       # enc linear0
                    res_spec((D1p, D2)), res_spec((1, D2)),        # enc linear1
                    res_spec((D2, D1p)), res_spec((1, D1p)),       # dec linear0
                    res_spec((D1p, Dout)), res_spec((1, Dout)),    # dec linear1
                ],
                out_specs=pl.BlockSpec((tm, Dout), lambda i: (i, 0)),
            ),
            compiler_params=pltpu.CompilerParams(**cp_kwargs),
            cost_estimate=cost,
        )(xp, maskp,
          prepared["w1"], prepared["b1"], prepared["w2"], prepared["b2"],
          prepared["w3"], prepared["b3"], prepared["w4"], prepared["b4"])

    try:
        out = _build_and_call(resident_buffered=True)
    except Exception:
        # pipeline_mode / Buffered(1) not supported by this jax build:
        # fall back to plain (double-buffered) resident weight specs.
        out = _build_and_call(resident_buffered=False)

    return out if Bp == B else out[:B]


# ----------------------------------------------------------------------------
# Reference + demo
# ----------------------------------------------------------------------------
def _init_linear(key, d_in, d_out):
    """Deterministic init mimicking nn.Linear's uniform(-1/sqrt(in), 1/sqrt(in)).
    Weight already transposed to (in, out); bias as (1, out)."""
    kw, kb = jax.random.split(key)
    bound = 1.0 / jnp.sqrt(jnp.float32(d_in))
    w = jax.random.uniform(kw, (d_in, d_out), jnp.float32, -bound, bound)
    b = jax.random.uniform(kb, (1, d_out), jnp.float32, -bound, bound)
    return w, b


def _reference_forward(x, mask, p, compute_dtype=jnp.float32,
                       act_dtype=jnp.float32):
    """Pure-JAX reference mirroring the kernel's dtype strategy."""
    cd = compute_dtype

    def lin(a, w, b):
        return jnp.dot(a.astype(cd), w.astype(cd),
                       preferred_element_type=jnp.float32) + b

    h1 = jax.nn.sigmoid(lin(x, p["w1"], p["b1"]).astype(act_dtype))
    z = lin(h1, p["w2"], p["b2"]) * mask
    h2 = jax.nn.sigmoid(lin(z, p["w3"], p["b3"]).astype(act_dtype))
    return lin(h2, p["w4"], p["b4"])


if __name__ == "__main__":
    # encoder dims [32, 64, 16], decoder dims [16, 64, 32]; batch 512 gives a
    # 1-step grid on single-TC chips and a 2-step parallel grid on v7x.
    B, D0, D1, D2 = 512, 32, 64, 16

    key = jax.random.PRNGKey(0)
    kx, km, k1, k2, k3, k4 = jax.random.split(key, 6)

    x = jax.random.normal(kx, (B, D0), jnp.float32)
    mask = (jax.random.uniform(km, (B, D2)) > 0.5).astype(jnp.float32)

    w1, b1 = _init_linear(k1, D0, D1)   # encoder linear0
    w2, b2 = _init_linear(k2, D1, D2)   # encoder linear1
    w3, b3 = _init_linear(k3, D2, D1)   # decoder linear0
    w4, b4 = _init_linear(k4, D1, D0)   # decoder linear1
    params = dict(w1=w1, b1=b1, w2=w2, b2=b2, w3=w3, b3=b3, w4=w4, b4=b4)

    # ---- strict check: f32 MXU path vs f32 reference ----
    prep_f32 = prepare_params(params, compute_dtype=jnp.float32)
    out_f32 = jax.block_until_ready(
        structured_autoencoder_forward(x, mask, prep_f32))
    ref_f32 = _reference_forward(x, mask, params, jnp.float32, jnp.float32)
    assert out_f32.shape == (B, D0)
    assert jnp.allclose(out_f32, ref_f32, atol=1e-5, rtol=1e-5)

    # ---- optimized path: bf16 MXU operands, f32 accumulation, chip-dependent
    #      activation dtype (bf16 on v6e/v7x, f32 on v5e) ----
    prep_bf16 = prepare_params(params, compute_dtype=jnp.bfloat16)
    act = pick_act_dtype(jnp.bfloat16)
    out_bf16 = jax.block_until_ready(
        structured_autoencoder_forward(x, mask, prep_bf16))
    ref_bf16 = _reference_forward(x, mask, params, jnp.bfloat16, act)
    assert out_bf16.shape == (B, D0)
    assert jnp.allclose(out_bf16, ref_bf16, atol=2e-3, rtol=2e-3)
    # sanity vs exact f32 math (bf16 operand/activation rounding only)
    assert jnp.allclose(out_bf16, ref_f32, atol=5e-2, rtol=5e-2)

    print("KERNEL_OK")
</pallas_src>

<mosaic_0001>
module attributes {stable_mosaic.version = 11 : i64} {
  func.func @_sae_kernel(%arg0: i32, %arg1: memref<512x32xf32, #tpu.memory_space<vmem>>, %arg2: memref<512x16xf32, #tpu.memory_space<vmem>>, %arg3: memref<32x128xf32, #tpu.memory_space<vmem>>, %arg4: memref<1x128xf32, #tpu.memory_space<vmem>>, %arg5: memref<128x16xf32, #tpu.memory_space<vmem>>, %arg6: memref<1x16xf32, #tpu.memory_space<vmem>>, %arg7: memref<16x128xf32, #tpu.memory_space<vmem>>, %arg8: memref<1x128xf32, #tpu.memory_space<vmem>>, %arg9: memref<128x32xf32, #tpu.memory_space<vmem>>, %arg10: memref<1x32xf32, #tpu.memory_space<vmem>>, %arg11: memref<512x32xf32, #tpu.memory_space<vmem>>) attributes {dimension_semantics = [#tpu.dimension_semantics<parallel>], iteration_bounds = array<i64: 1>, scalar_prefetch = 0 : i64, scratch_operands = 0 : i64, tpu.core_type = #tpu.core_type<tc>, window_params = [{transform_indices = @transform_0, window_bounds = array<i64: 512, 32>}, {transform_indices = @transform_1, window_bounds = array<i64: 512, 16>}, {pipeline_mode = #tpu.pipeline_mode<synchronous>, transform_indices = @transform_2, window_bounds = array<i64: 32, 128>}, {pipeline_mode = #tpu.pipeline_mode<synchronous>, transform_indices = @transform_3, window_bounds = array<i64: 1, 128>}, {pipeline_mode = #tpu.pipeline_mode<synchronous>, transform_indices = @transform_4, window_bounds = array<i64: 128, 16>}, {pipeline_mode = #tpu.pipeline_mode<synchronous>, transform_indices = @transform_5, window_bounds = array<i64: 1, 16>}, {pipeline_mode = #tpu.pipeline_mode<synchronous>, transform_indices = @transform_6, window_bounds = array<i64: 16, 128>}, {pipeline_mode = #tpu.pipeline_mode<synchronous>, transform_indices = @transform_7, window_bounds = array<i64: 1, 128>}, {pipeline_mode = #tpu.pipeline_mode<synchronous>, transform_indices = @transform_8, window_bounds = array<i64: 128, 32>}, {pipeline_mode = #tpu.pipeline_mode<synchronous>, transform_indices = @transform_9, window_bounds = array<i64: 1, 32>}, {transform_indices = @transform_10, window_bounds = array<i64: 512, 32>}]} {
    %c0 = arith.constant 0 : index
    %c0_0 = arith.constant 0 : index
    %0 = vector.load %arg1[%c0, %c0_0] : memref<512x32xf32, #tpu.memory_space<vmem>>, vector<512x32xf32>
    %c0_1 = arith.constant 0 : index
    %c0_2 = arith.constant 0 : index
    %1 = vector.load %arg3[%c0_1, %c0_2] : memref<32x128xf32, #tpu.memory_space<vmem>>, vector<32x128xf32>
    %cst = arith.constant dense<0.000000e+00> : vector<512x128xf32>
    %2 = tpu.matmul %0, %1, %cst {dimension_numbers = #tpu.dot_dimension_numbers<[1], [0], [0], [1], [0, 0, 1, 1], [], []>} : vector<512x32xf32>, vector<32x128xf32>, vector<512x128xf32> -> vector<512x128xf32>
    %c0_3 = arith.constant 0 : index
    %c0_4 = arith.constant 0 : index
    %3 = vector.load %arg4[%c0_3, %c0_4] : memref<1x128xf32, #tpu.memory_space<vmem>>, vector<1x128xf32>
    %4 = vector.broadcast %3 : vector<1x128xf32> to vector<512x128xf32>
    %5 = arith.addf %2, %4 : vector<512x128xf32>
    %6 = arith.negf %5 : vector<512x128xf32>
    %7 = math.exp %6 : vector<512x128xf32>
    %cst_5 = arith.constant 1.000000e+00 : f32
    %8 = vector.broadcast %cst_5 : f32 to vector<512x128xf32>
    %9 = arith.addf %8, %7 : vector<512x128xf32>
    %10 = arith.divf %8, %9 : vector<512x128xf32>
    %c0_6 = arith.constant 0 : index
    %c0_7 = arith.constant 0 : index
    %11 = vector.load %arg5[%c0_6, %c0_7] : memref<128x16xf32, #tpu.memory_space<vmem>>, vector<128x16xf32>
    %cst_8 = arith.constant dense<0.000000e+00> : vector<512x16xf32>
    %12 = tpu.matmul %10, %11, %cst_8 {dimension_numbers = #tpu.dot_dimension_numbers<[1], [0], [0], [1], [0, 0, 1, 1], [], []>} : vector<512x128xf32>, vector<128x16xf32>, vector<512x16xf32> -> vector<512x16xf32>
    %c0_9 = arith.constant 0 : index
    %c0_10 = arith.constant 0 : index
    %13 = vector.load %arg6[%c0_9, %c0_10] : memref<1x16xf32, #tpu.memory_space<vmem>>, vector<1x16xf32>
    %14 = vector.broadcast %13 : vector<1x16xf32> to vector<512x16xf32>
    %15 = arith.addf %12, %14 : vector<512x16xf32>
    %c0_11 = arith.constant 0 : index
    %c0_12 = arith.constant 0 : index
    %16 = vector.load %arg2[%c0_11, %c0_12] : memref<512x16xf32, #tpu.memory_space<vmem>>, vector<512x16xf32>
    %17 = arith.mulf %15, %16 : vector<512x16xf32>
    %c0_13 = arith.constant 0 : index
    %c0_14 = arith.constant 0 : index
    %18 = vector.load %arg7[%c0_13, %c0_14] : memref<16x128xf32, #tpu.memory_space<vmem>>, vector<16x128xf32>
    %cst_15 = arith.constant dense<0.000000e+00> : vector<512x128xf32>
    %19 = tpu.matmul %17, %18, %cst_15 {dimension_numbers = #tpu.dot_dimension_numbers<[1], [0], [0], [1], [0, 0, 1, 1], [], []>} : vector<512x16xf32>, vector<16x128xf32>, vector<512x128xf32> -> vector<512x128xf32>
    %c0_16 = arith.constant 0 : index
    %c0_17 = arith.constant 0 : index
    %20 = vector.load %arg8[%c0_16, %c0_17] : memref<1x128xf32, #tpu.memory_space<vmem>>, vector<1x128xf32>
    %21 = vector.broadcast %20 : vector<1x128xf32> to vector<512x128xf32>
    %22 = arith.addf %19, %21 : vector<512x128xf32>
    %23 = arith.negf %22 : vector<512x128xf32>
    %24 = math.exp %23 : vector<512x128xf32>
    %cst_18 = arith.constant 1.000000e+00 : f32
    %25 = vector.broadcast %cst_18 : f32 to vector<512x128xf32>
    %26 = arith.addf %25, %24 : vector<512x128xf32>
    %27 = arith.divf %25, %26 : vector<512x128xf32>
    %c0_19 = arith.constant 0 : index
    %c0_20 = arith.constant 0 : index
    %28 = vector.load %arg9[%c0_19, %c0_20] : memref<128x32xf32, #tpu.memory_space<vmem>>, vector<128x32xf32>
    %cst_21 = arith.constant dense<0.000000e+00> : vector<512x32xf32>
    %29 = tpu.matmul %27, %28, %cst_21 {dimension_numbers = #tpu.dot_dimension_numbers<[1], [0], [0], [1], [0, 0, 1, 1], [], []>} : vector<512x128xf32>, vector<128x32xf32>, vector<512x32xf32> -> vector<512x32xf32>
    %c0_22 = arith.constant 0 : index
    %c0_23 = arith.constant 0 : index
    %30 = vector.load %arg10[%c0_22, %c0_23] : memref<1x32xf32, #tpu.memory_space<vmem>>, vector<1x32xf32>
    %31 = vector.broadcast %30 : vector<1x32xf32> to vector<512x32xf32>
    %32 = arith.addf %29, %31 : vector<512x32xf32>
    %c0_24 = arith.constant 0 : index
    %c0_25 = arith.constant 0 : index
    %33 = vector.load %arg11[%c0_24, %c0_25] : memref<512x32xf32, #tpu.memory_space<vmem>>, vector<512x32xf32>
    tpu.vector_store %arg11[%c0_24, %c0_25], %32 {strides = array<i32>} : memref<512x32xf32, #tpu.memory_space<vmem>>, vector<512x32xf32>,
    return
  }
  func.func @transform_0(%arg0: i32) -> (i32, i32) {
    %c0_i32 = arith.constant 0 : i32
    %c0_i32_0 = arith.constant 0 : i32
    return %arg0, %c0_i32 : i32, i32
  }
  func.func @transform_1(%arg0: i32) -> (i32, i32) {
    %c0_i32 = arith.constant 0 : i32
    %c0_i32_0 = arith.constant 0 : i32
    return %arg0, %c0_i32 : i32, i32
  }
  func.func @transform_2(%arg0: i32) -> (i32, i32) {
    %c0_i32 = arith.constant 0 : i32
    %c0_i32_0 = arith.constant 0 : i32
    %c0_i32_1 = arith.constant 0 : i32
    return %c0_i32, %c0_i32_0 : i32, i32
  }
  func.func @transform_3(%arg0: i32) -> (i32, i32) {
    %c0_i32 = arith.constant 0 : i32
    %c0_i32_0 = arith.constant 0 : i32
    %c0_i32_1 = arith.constant 0 : i32
    return %c0_i32, %c0_i32_0 : i32, i32
  }
  func.func @transform_4(%arg0: i32) -> (i32, i32) {
    %c0_i32 = arith.constant 0 : i32
    %c0_i32_0 = arith.constant 0 : i32
    %c0_i32_1 = arith.constant 0 : i32
    return %c0_i32, %c0_i32_0 : i32, i32
  }
  func.func @transform_5(%arg0: i32) -> (i32, i32) {
    %c0_i32 = arith.constant 0 : i32
    %c0_i32_0 = arith.constant 0 : i32
    %c0_i32_1 = arith.constant 0 : i32
    return %c0_i32, %c0_i32_0 : i32, i32
  }
  func.func @transform_6(%arg0: i32) -> (i32, i32) {
    %c0_i32 = arith.constant 0 : i32
    %c0_i32_0 = arith.constant 0 : i32
    %c0_i32_1 = arith.constant 0 : i32
    return %c0_i32, %c0_i32_0 : i32, i32
  }
  func.func @transform_7(%arg0: i32) -> (i32, i32) {
    %c0_i32 = arith.constant 0 : i32
    %c0_i32_0 = arith.constant 0 : i32
    %c0_i32_1 = arith.constant 0 : i32
    return %c0_i32, %c0_i32_0 : i32, i32
  }
  func.func @transform_8(%arg0: i32) -> (i32, i32) {
    %c0_i32 = arith.constant 0 : i32
    %c0_i32_0 = arith.constant 0 : i32
    %c0_i32_1 = arith.constant 0 : i32
    return %c0_i32, %c0_i32_0 : i32, i32
  }
  func.func @transform_9(%arg0: i32) -> (i32, i32) {
    %c0_i32 = arith.constant 0 : i32
    %c0_i32_0 = arith.constant 0 : i32
    %c0_i32_1 = arith.constant 0 : i32
    return %c0_i32, %c0_i32_0 : i32, i32
  }
  func.func @transform_10(%arg0: i32) -> (i32, i32) {
    %c0_i32 = arith.constant 0 : i32
    %c0_i32_0 = arith.constant 0 : i32
    return %arg0, %c0_i32 : i32, i32
  }
}

module attributes {stable_mosaic.version = 11 : i64} {
  func.func @_sae_kernel(%arg0: i32, %arg1: memref<512x32xf32, #tpu.memory_space<vmem>>, %arg2: memref<512x16xf32, #tpu.memory_space<vmem>>, %arg3: memref<32x128xf32, #tpu.memory_space<vmem>>, %arg4: memref<1x128xf32, #tpu.memory_space<vmem>>, %arg5: memref<128x16xf32, #tpu.memory_space<vmem>>, %arg6: memref<1x16xf32, #tpu.memory_space<vmem>>, %arg7: memref<16x128xf32, #tpu.memory_space<vmem>>, %arg8: memref<1x128xf32, #tpu.memory_space<vmem>>, %arg9: memref<128x32xf32, #tpu.memory_space<vmem>>, %arg10: memref<1x32xf32, #tpu.memory_space<vmem>>, %arg11: memref<512x32xf32, #tpu.memory_space<vmem>>) attributes {dimension_semantics = [#tpu.dimension_semantics<parallel>], iteration_bounds = array<i64: 1>, scalar_prefetch = 0 : i64, scratch_operands = 0 : i64, tpu.core_type = #tpu.core_type<tc>, window_params = [{transform_indices = @transform_0, window_bounds = array<i64: 512, 32>}, {transform_indices = @transform_1, window_bounds = array<i64: 512, 16>}, {pipeline_mode = #tpu.pipeline_mode<synchronous>, transform_indices = @transform_2, window_bounds = array<i64: 32, 128>}, {pipeline_mode = #tpu.pipeline_mode<synchronous>, transform_indices = @transform_3, window_bounds = array<i64: 1, 128>}, {pipeline_mode = #tpu.pipeline_mode<synchronous>, transform_indices = @transform_4, window_bounds = array<i64: 128, 16>}, {pipeline_mode = #tpu.pipeline_mode<synchronous>, transform_indices = @transform_5, window_bounds = array<i64: 1, 16>}, {pipeline_mode = #tpu.pipeline_mode<synchronous>, transform_indices = @transform_6, window_bounds = array<i64: 16, 128>}, {pipeline_mode = #tpu.pipeline_mode<synchronous>, transform_indices = @transform_7, window_bounds = array<i64: 1, 128>}, {pipeline_mode = #tpu.pipeline_mode<synchronous>, transform_indices = @transform_8, window_bounds = array<i64: 128, 32>}, {pipeline_mode = #tpu.pipeline_mode<synchronous>, transform_indices = @transform_9, window_bounds = array<i64: 1, 32>}, {transform_indices = @transform_10, window_bounds = array<i64: 512, 32>}]} {
    %c0 = arith.constant 0 : index
    %c0_0 = arith.constant 0 : index
    %0 = vector.load %arg1[%c0, %c0_0] : memref<512x32xf32, #tpu.memory_space<vmem>>, vector<512x32xf32>
    %c0_1 = arith.constant 0 : index
    %c0_2 = arith.constant 0 : index
    %1 = vector.load %arg3[%c0_1, %c0_2] : memref<32x128xf32, #tpu.memory_space<vmem>>, vector<32x128xf32>
    %cst = arith.constant dense<0.000000e+00> : vector<512x128xf32>
    %2 = tpu.matmul %0, %1, %cst {dimension_numbers = #tpu.dot_dimension_numbers<[1], [0], [0], [1], [0, 0, 1, 1], [], []>} : vector<512x32xf32>, vector<32x128xf32>, vector<512x128xf32> -> vector<512x128xf32>
    %c0_3 = arith.constant 0 : index
    %c0_4 = arith.constant 0 : index
    %3 = vector.load %arg4[%c0_3, %c0_4] : memref<1x128xf32, #tpu.memory_space<vmem>>, vector<1x128xf32>
    %4 = vector.broadcast %3 : vector<1x128xf32> to vector<512x128xf32>
    %5 = arith.addf %2, %4 : vector<512x128xf32>
    %6 = arith.negf %5 : vector<512x128xf32>
    %7 = math.exp %6 : vector<512x128xf32>
    %cst_5 = arith.constant 1.000000e+00 : f32
    %8 = vector.broadcast %cst_5 : f32 to vector<512x128xf32>
    %9 = arith.addf %8, %7 : vector<512x128xf32>
    %10 = arith.divf %8, %9 : vector<512x128xf32>
    %c0_6 = arith.constant 0 : index
    %c0_7 = arith.constant 0 : index
    %11 = vector.load %arg5[%c0_6, %c0_7] : memref<128x16xf32, #tpu.memory_space<vmem>>, vector<128x16xf32>
    %cst_8 = arith.constant dense<0.000000e+00> : vector<512x16xf32>
    %12 = tpu.matmul %10, %11, %cst_8 {dimension_numbers = #tpu.dot_dimension_numbers<[1], [0], [0], [1], [0, 0, 1, 1], [], []>} : vector<512x128xf32>, vector<128x16xf32>, vector<512x16xf32> -> vector<512x16xf32>
    %c0_9 = arith.constant 0 : index
    %c0_10 = arith.constant 0 : index
    %13 = vector.load %arg6[%c0_9, %c0_10] : memref<1x16xf32, #tpu.memory_space<vmem>>, vector<1x16xf32>
    %14 = vector.broadcast %13 : vector<1x16xf32> to vector<512x16xf32>
    %15 = arith.addf %12, %14 : vector<512x16xf32>
    %c0_11 = arith.constant 0 : index
    %c0_12 = arith.constant 0 : index
    %16 = vector.load %arg2[%c0_11, %c0_12] : memref<512x16xf32, #tpu.memory_space<vmem>>, vector<512x16xf32>
    %17 = arith.mulf %15, %16 : vector<512x16xf32>
    %c0_13 = arith.constant 0 : index
    %c0_14 = arith.constant 0 : index
    %18 = vector.load %arg7[%c0_13, %c0_14] : memref<16x128xf32, #tpu.memory_space<vmem>>, vector<16x128xf32>
    %cst_15 = arith.constant dense<0.000000e+00> : vector<512x128xf32>
    %19 = tpu.matmul %17, %18, %cst_15 {dimension_numbers = #tpu.dot_dimension_numbers<[1], [0], [0], [1], [0, 0, 1, 1], [], []>} : vector<512x16xf32>, vector<16x128xf32>, vector<512x128xf32> -> vector<512x128xf32>
    %c0_16 = arith.constant 0 : index
    %c0_17 = arith.constant 0 : index
    %20 = vector.load %arg8[%c0_16, %c0_17] : memref<1x128xf32, #tpu.memory_space<vmem>>, vector<1x128xf32>
    %21 = vector.broadcast %20 : vector<1x128xf32> to vector<512x128xf32>
    %22 = arith.addf %19, %21 : vector<512x128xf32>
    %23 = arith.negf %22 : vector<512x128xf32>
    %24 = math.exp %23 : vector<512x128xf32>
    %cst_18 = arith.constant 1.000000e+00 : f32
    %25 = vector.broadcast %cst_18 : f32 to vector<512x128xf32>
    %26 = arith.addf %25, %24 : vector<512x128xf32>
    %27 = arith.divf %25, %26 : vector<512x128xf32>
    %c0_19 = arith.constant 0 : index
    %c0_20 = arith.constant 0 : index
    %28 = vector.load %arg9[%c0_19, %c0_20] : memref<128x32xf32, #tpu.memory_space<vmem>>, vector<128x32xf32>
    %cst_21 = arith.constant dense<0.000000e+00> : vector<512x32xf32>
    %29 = tpu.matmul %27, %28, %cst_21 {dimension_numbers = #tpu.dot_dimension_numbers<[1], [0], [0], [1], [0, 0, 1, 1], [], []>} : vector<512x128xf32>, vector<128x32xf32>, vector<512x32xf32> -> vector<512x32xf32>
    %c0_22 = arith.constant 0 : index
    %c0_23 = arith.constant 0 : index
    %30 = vector.load %arg10[%c0_22, %c0_23] : memref<1x32xf32, #tpu.memory_space<vmem>>, vector<1x32xf32>
    %31 = vector.broadcast %30 : vector<1x32xf32> to vector<512x32xf32>
    %32 = arith.addf %29, %31 : vector<512x32xf32>
    %c0_24 = arith.constant 0 : index
    %c0_25 = arith.constant 0 : index
    %33 = vector.load %arg11[%c0_24, %c0_25] : memref<512x32xf32, #tpu.memory_space<vmem>>, vector<512x32xf32>
    tpu.vector_store %arg11[%c0_24, %c0_25], %32 {strides = array<i32>} : memref<512x32xf32, #tpu.memory_space<vmem>>, vector<512x32xf32>,
    return
  }
  func.func @transform_0(%arg0: i32) -> (i32, i32) {
    %c0_i32 = arith.constant 0 : i32
    %c0_i32_0 = arith.constant 0 : i32
    return %arg0, %c0_i32 : i32, i32
  }
  func.func @transform_1(%arg0: i32) -> (i32, i32) {
    %c0_i32 = arith.constant 0 : i32
    %c0_i32_0 = arith.constant 0 : i32
    return %arg0, %c0_i32 : i32, i32
  }
  func.func @transform_2(%arg0: i32) -> (i32, i32) {
    %c0_i32 = arith.constant 0 : i32
    %c0_i32_0 = arith.constant 0 : i32
    %c0_i32_1 = arith.constant 0 : i32
    return %c0_i32, %c0_i32_0 : i32, i32
  }
  func.func @transform_3(%arg0: i32) -> (i32, i32) {
    %c0_i32 = arith.constant 0 : i32
    %c0_i32_0 = arith.constant 0 : i32
    %c0_i32_1 = arith.constant 0 : i32
    return %c0_i32, %c0_i32_0 : i32, i32
  }
  func.func @transform_4(%arg0: i32) -> (i32, i32) {
    %c0_i32 = arith.constant 0 : i32
    %c0_i32_0 = arith.constant 0 : i32
    %c0_i32_1 = arith.constant 0 : i32
    return %c0_i32, %c0_i32_0 : i32, i32
  }
  func.func @transform_5(%arg0: i32) -> (i32, i32) {
    %c0_i32 = arith.constant 0 : i32
    %c0_i32_0 = arith.constant 0 : i32
    %c0_i32_1 = arith.constant 0 : i32
    return %c0_i32, %c0_i32_0 : i32, i32
  }
  func.func @transform_6(%arg0: i32) -> (i32, i32) {
    %c0_i32 = arith.constant 0 : i32
    %c0_i32_0 = arith.constant 0 : i32
    %c0_i32_1 = arith.constant 0 : i32
    return %c0_i32, %c0_i32_0 : i32, i32
  }
  func.func @transform_7(%arg0: i32) -> (i32, i32) {
    %c0_i32 = arith.constant 0 : i32
    %c0_i32_0 = arith.constant 0 : i32
    %c0_i32_1 = arith.constant 0 : i32
    return %c0_i32, %c0_i32_0 : i32, i32
  }
  func.func @transform_8(%arg0: i32) -> (i32, i32) {
    %c0_i32 = arith.constant 0 : i32
    %c0_i32_0 = arith.constant 0 : i32
    %c0_i32_1 = arith.constant 0 : i32
    return %c0_i32, %c0_i32_0 : i32, i32
  }
  func.func @transform_9(%arg0: i32) -> (i32, i32) {
    %c0_i32 = arith.constant 0 : i32
    %c0_i32_0 = arith.constant 0 : i32
    %c0_i32_1 = arith.constant 0 : i32
    return %c0_i32, %c0_i32_0 : i32, i32
  }
  func.func @transform_10(%arg0: i32) -> (i32, i32) {
    %c0_i32 = arith.constant 0 : i32
    %c0_i32_0 = arith.constant 0 : i32
    return %arg0, %c0_i32 : i32, i32
  }
}

</mosaic_0001>

<llo_original>
// kernel: tpu_custom_call.1
$region0: #{tpu_custom_call.1}
  #allocation0 [shape = 'u32[]', space=smem, size = 0x4, offset = 0x4, fixed_abs, tag = 'smem constant byte address 0x4 - core index']
  #allocation1 [shape = 'u32[72,128]{1,0:T(1,128)}', space=vmem, size = 0x9000, scoped, tag = 'internal scratch']
  %s0 = inlined_call_operand.vmem [shape: f32[512,32], index: 0, kind: input, shape index: {}]
  %s1 = inlined_call_operand.vmem [shape: f32[512,16], index: 1, kind: input, shape index: {}]
  %s2 = inlined_call_operand.vmem [shape: f32[32,128], index: 2, kind: input, shape index: {}]
  %s3 = inlined_call_operand.vmem [shape: f32[1,128], index: 3, kind: input, shape index: {}]
  %s4 = inlined_call_operand.vmem [shape: f32[128,16], index: 4, kind: input, shape index: {}]
  %s5 = inlined_call_operand.vmem [shape: f32[1,16], index: 5, kind: input, shape index: {}]
  %s6 = inlined_call_operand.vmem [shape: f32[16,128], index: 6, kind: input, shape index: {}]
  %s7 = inlined_call_operand.vmem [shape: f32[1,128], index: 7, kind: input, shape index: {}]
  %s8 = inlined_call_operand.vmem [shape: f32[128,32], index: 8, kind: input, shape index: {}]
  %s9 = inlined_call_operand.vmem [shape: f32[1,32], index: 9, kind: input, shape index: {}]
  %s10 = inlined_call_operand.vmem [shape: f32[512,32], index: 10, kind: output, shape index: {}]
  %s11 = sld [smem:[#allocation0]]
  $region50: #{tpu_custom_call.1} parent=0
    _
  %s13 = ssub.s32 1, %s11
  %s14 = scalar_select 0, %s13, %s11
  // Predicated region
  $region2: #{tpu_custom_call.1} parent=0 // pred_check
    _
  $region3: #{tpu_custom_call.1} parent=0 // pred_check_branch
    %16 = sbr.rel (0) target = $region5
  $region4: #{tpu_custom_call.1} parent=0 // pred_region
    _
  $region5: #{tpu_custom_call.1} parent=0 // pred_fallthru
    _
  // Predicated region
  $region6: #{tpu_custom_call.1} parent=0 // pred_check
    _
  $region7: #{tpu_custom_call.1} parent=0 // pred_check_branch
    %18 = sbr.rel (0) target = $region9
  $region8: #{tpu_custom_call.1} parent=0 // pred_region
    _
  $region9: #{tpu_custom_call.1} parent=0 // pred_fallthru
    _
  // Predicated region
  $region10: #{tpu_custom_call.1} parent=0 // pred_check
    _
  $region11: #{tpu_custom_call.1} parent=0 // pred_check_branch
    %20 = sbr.rel (0) target = $region13
  $region12: #{tpu_custom_call.1} parent=0 // pred_region
    _
  $region13: #{tpu_custom_call.1} parent=0 // pred_fallthru
    _
  // Predicated region
  $region14: #{tpu_custom_call.1} parent=0 // pred_check
    _
  $region15: #{tpu_custom_call.1} parent=0 // pred_check_branch
    %22 = sbr.rel (0) target = $region17
  $region16: #{tpu_custom_call.1} parent=0 // pred_region
    _
  $region17: #{tpu_custom_call.1} parent=0 // pred_fallthru
    _
  // Predicated region
  $region18: #{tpu_custom_call.1} parent=0 // pred_check
    _
  $region19: #{tpu_custom_call.1} parent=0 // pred_check_branch
    %24 = sbr.rel (0) target = $region21
  $region20: #{tpu_custom_call.1} parent=0 // pred_region
    _
  $region21: #{tpu_custom_call.1} parent=0 // pred_fallthru
    _
  // Predicated region
  $region22: #{tpu_custom_call.1} parent=0 // pred_check
    _
  $region23: #{tpu_custom_call.1} parent=0 // pred_check_branch
    %26 = sbr.rel (0) target = $region25
  $region24: #{tpu_custom_call.1} parent=0 // pred_region
    _
  $region25: #{tpu_custom_call.1} parent=0 // pred_fallthru
    _
  // Predicated region
  $region26: #{tpu_custom_call.1} parent=0 // pred_check
    _
  $region27: #{tpu_custom_call.1} parent=0 // pred_check_branch
    %28 = sbr.rel (0) target = $region29
  $region28: #{tpu_custom_call.1} parent=0 // pred_region
    _
  $region29: #{tpu_custom_call.1} parent=0 // pred_fallthru
    _
  // Predicated region
  $region30: #{tpu_custom_call.1} parent=0 // pred_check
    _
  $region31: #{tpu_custom_call.1} parent=0 // pred_check_branch
    %30 = sbr.rel (0) target = $region33
  $region32: #{tpu_custom_call.1} parent=0 // pred_region
    _
  $region33: #{tpu_custom_call.1} parent=0 // pred_fallthru
    _
  // Predicated region
  $region34: #{tpu_custom_call.1} parent=0 // pred_check
    _
  $region35: #{tpu_custom_call.1} parent=0 // pred_check_branch
    %32 = sbr.rel (0) target = $region37
  $region36: #{tpu_custom_call.1} parent=0 // pred_region
    _
  $region37: #{tpu_custom_call.1} parent=0 // pred_fallthru
    _
  // Predicated region
  $region38: #{tpu_custom_call.1} parent=0 // pred_check
    _
  $region39: #{tpu_custom_call.1} parent=0 // pred_check_branch
    %34 = sbr.rel (0) target = $region41
  $region40: #{tpu_custom_call.1} parent=0 // pred_region
    _
  $region41: #{tpu_custom_call.1} parent=0 // pred_fallthru
    _
  %v35 = vld [vmem:[%s0] sm:$0xff]
  %v36 = vld [vmem:[%s0 + $0x8] sm:$0xff]
  %v37 = vld [vmem:[%s0 + $0x10] sm:$0xff]
  %v38 = vld [vmem:[%s0 + $0x18] sm:$0xff]
  %v39 = vld [vmem:[%s0 + $0x20] sm:$0xff]
  %v40 = vld [vmem:[%s0 + $0x28] sm:$0xff]
  %v41 = vld [vmem:[%s0 + $0x30] sm:$0xff]
  %v42 = vld [vmem:[%s0 + $0x38] sm:$0xff]
  %v43 = vld [vmem:[%s0 + $0x40] sm:$0xff]
  %v44 = vld [vmem:[%s0 + $0x48] sm:$0xff]
  %v45 = vld [vmem:[%s0 + $0x50] sm:$0xff]
  %v46 = vld [vmem:[%s0 + $0x58] sm:$0xff]
  %v47 = vld [vmem:[%s0 + $0x60] sm:$0xff]
  %v48 = vld [vmem:[%s0 + $0x68] sm:$0xff]
  %v49 = vld [vmem:[%s0 + $0x70] sm:$0xff]
  %v50 = vld [vmem:[%s0 + $0x78] sm:$0xff]
  %v51 = vld [vmem:[%s0 + $0x80] sm:$0xff]
  %v52 = vld [vmem:[%s0 + $0x88] sm:$0xff]
  %v53 = vld [vmem:[%s0 + $0x90] sm:$0xff]
  %v54 = vld [vmem:[%s0 + $0x98] sm:$0xff]
  %v55 = vld [vmem:[%s0 + $0xa0] sm:$0xff]
  %v56 = vld [vmem:[%s0 + $0xa8] sm:$0xff]
  %v57 = vld [vmem:[%s0 + $0xb0] sm:$0xff]
  %v58 = vld [vmem:[%s0 + $0xb8] sm:$0xff]
  %v59 = vld [vmem:[%s0 + $0xc0] sm:$0xff]
  %v60 = vld [vmem:[%s0 + $0xc8] sm:$0xff]
  %v61 = vld [vmem:[%s0 + $0xd0] sm:$0xff]
  %v62 = vld [vmem:[%s0 + $0xd8] sm:$0xff]
  %v63 = vld [vmem:[%s0 + $0xe0] sm:$0xff]
  %v64 = vld [vmem:[%s0 + $0xe8] sm:$0xff]
  %v65 = vld [vmem:[%s0 + $0xf0] sm:$0xff]
  %v66 = vld [vmem:[%s0 + $0xf8] sm:$0xff]
  %v67 = vld [vmem:[%s0 + $0x100] sm:$0xff]
  %v68 = vld [vmem:[%s0 + $0x108] sm:$0xff]
  %v69 = vld [vmem:[%s0 + $0x110] sm:$0xff]
  %v70 = vld [vmem:[%s0 + $0x118] sm:$0xff]
  %v71 = vld [vmem:[%s0 + $0x120] sm:$0xff]
  %v72 = vld [vmem:[%s0 + $0x128] sm:$0xff]
  %v73 = vld [vmem:[%s0 + $0x130] sm:$0xff]
  %v74 = vld [vmem:[%s0 + $0x138] sm:$0xff]
  %v75 = vld [vmem:[%s0 + $0x140] sm:$0xff]
  %v76 = vld [vmem:[%s0 + $0x148] sm:$0xff]
  %v77 = vld [vmem:[%s0 + $0x150] sm:$0xff]
  %v78 = vld [vmem:[%s0 + $0x158] sm:$0xff]
  %v79 = vld [vmem:[%s0 + $0x160] sm:$0xff]
  %v80 = vld [vmem:[%s0 + $0x168] sm:$0xff]
  %v81 = vld [vmem:[%s0 + $0x170] sm:$0xff]
  %v82 = vld [vmem:[%s0 + $0x178] sm:$0xff]
  %v83 = vld [vmem:[%s0 + $0x180] sm:$0xff]
  %v84 = vld [vmem:[%s0 + $0x188] sm:$0xff]
  %v85 = vld [vmem:[%s0 + $0x190] sm:$0xff]
  %v86 = vld [vmem:[%s0 + $0x198] sm:$0xff]
  %v87 = vld [vmem:[%s0 + $0x1a0] sm:$0xff]
  %v88 = vld [vmem:[%s0 + $0x1a8] sm:$0xff]
  %v89 = vld [vmem:[%s0 + $0x1b0] sm:$0xff]
  %v90 = vld [vmem:[%s0 + $0x1b8] sm:$0xff]
  %v91 = vld [vmem:[%s0 + $0x1c0] sm:$0xff]
  %v92 = vld [vmem:[%s0 + $0x1c8] sm:$0xff]
  %v93 = vld [vmem:[%s0 + $0x1d0] sm:$0xff]
  %v94 = vld [vmem:[%s0 + $0x1d8] sm:$0xff]
  %v95 = vld [vmem:[%s0 + $0x1e0] sm:$0xff]
  %v96 = vld [vmem:[%s0 + $0x1e8] sm:$0xff]
  %v97 = vld [vmem:[%s0 + $0x1f0] sm:$0xff]
  %v98 = vld [vmem:[%s0 + $0x1f8] sm:$0xff]
  %v99 = vld [vmem:[%s2] sm:$0xff]
  %v100 = vld [vmem:[%s2 + $0x8] sm:$0xff]
  %v101 = vld [vmem:[%s2 + $0x10] sm:$0xff]
  %v102 = vld [vmem:[%s2 + $0x18] sm:$0xff]
  %v103 = vld [vmem:[%s3] sm:$0x1]
  %v105 = vperm.slane %v103, 0
  %vm107 = vcmask 261120
  %v109 = vsel %vm107, %v35, 0
  %v112 = vsel %vm107, %v36, 0
  %v115 = vsel %vm107, %v37, 0
  %v118 = vsel %vm107, %v38, 0
  %v121 = vsel %vm107, %v39, 0
  %v124 = vsel %vm107, %v40, 0
  %v127 = vsel %vm107, %v41, 0
  %v130 = vsel %vm107, %v42, 0
  %v133 = vsel %vm107, %v43, 0
  %v136 = vsel %vm107, %v44, 0
  %v139 = vsel %vm107, %v45, 0
  %v142 = vsel %vm107, %v46, 0
  %v145 = vsel %vm107, %v47, 0
  %v148 = vsel %vm107, %v48, 0
  %v151 = vsel %vm107, %v49, 0
  %v154 = vsel %vm107, %v50, 0
  %v157 = vsel %vm107, %v51, 0
  %v160 = vsel %vm107, %v52, 0
  %v163 = vsel %vm107, %v53, 0
  %v166 = vsel %vm107, %v54, 0
  %v169 = vsel %vm107, %v55, 0
  %v172 = vsel %vm107, %v56, 0
  %v175 = vsel %vm107, %v57, 0
  %v178 = vsel %vm107, %v58, 0
  %v181 = vsel %vm107, %v59, 0
  %v184 = vsel %vm107, %v60, 0
  %v187 = vsel %vm107, %v61, 0
  %v190 = vsel %vm107, %v62, 0
  %v193 = vsel %vm107, %v63, 0
  %v196 = vsel %vm107, %v64, 0
  %v199 = vsel %vm107, %v65, 0
  %v202 = vsel %vm107, %v66, 0
  %v205 = vsel %vm107, %v67, 0
  %v208 = vsel %vm107, %v68, 0
  %v211 = vsel %vm107, %v69, 0
  %v214 = vsel %vm107, %v70, 0
  %v217 = vsel %vm107, %v71, 0
  %v220 = vsel %vm107, %v72, 0
  %v223 = vsel %vm107, %v73, 0
  %v226 = vsel %vm107, %v74, 0
  %v229 = vsel %vm107, %v75, 0
  %v232 = vsel %vm107, %v76, 0
  %v235 = vsel %vm107, %v77, 0
  %v238 = vsel %vm107, %v78, 0
  %v241 = vsel %vm107, %v79, 0
  %v244 = vsel %vm107, %v80, 0
  %v247 = vsel %vm107, %v81, 0
  %v250 = vsel %vm107, %v82, 0
  %v253 = vsel %vm107, %v83, 0
  %v256 = vsel %vm107, %v84, 0
  %v259 = vsel %vm107, %v85, 0
  %v262 = vsel %vm107, %v86, 0
  %v265 = vsel %vm107, %v87, 0
  %v268 = vsel %vm107, %v88, 0
  %v271 = vsel %vm107, %v89, 0
  %v274 = vsel %vm107, %v90, 0
  %v277 = vsel %vm107, %v91, 0
  %v280 = vsel %vm107, %v92, 0
  %v283 = vsel %vm107, %v93, 0
  %v286 = vsel %vm107, %v94, 0
  %v289 = vsel %vm107, %v95, 0
  %v292 = vsel %vm107, %v96, 0
  %v295 = vsel %vm107, %v97, 0
  %v298 = vsel %vm107, %v98, 0
  %300 = vmatpush.msra.mxu0 0.0
  %301 = vmatpush.msra.mxu0 0.0
  %302 = vmatpush.msra.mxu0 0.0
  %303 = vmatpush.msra.mxu0 0.0
  %304 = vmatpush.msra.mxu0 0.0
  %305 = vmatpush.msra.mxu0 0.0
  %306 = vmatpush.msra.mxu0 0.0
  %307 = vmatpush.msra.mxu0 0.0
  %308 = vmatpush.msra.mxu0 0.0
  %309 = vmatpush.msra.mxu0 0.0
  %310 = vmatpush.msra.mxu0 0.0
  %311 = vmatpush.msra.mxu0 0.0
  %312 = vmatpush.msra.mxu0 %v102
  %313 = vmatpush.msra.mxu0 %v101
  %314 = vmatpush.msra.mxu0 %v100
  %315 = vmatpush.msra.mxu0 %v99
  %316 = vmatmul.f32.gmra.mxu0 %v109
  %v317 = vpop.f32.mrf.mxu0
  %v318 = vadd.f32 %v105, %v317
  %319 = vmatmul.f32.gmra.mxu0 %v112
  %v320 = vpop.f32.mrf.mxu0
  %v321 = vadd.f32 %v105, %v320
  %322 = vmatmul.f32.gmra.mxu0 %v115
  %v323 = vpop.f32.mrf.mxu0
  %v324 = vadd.f32 %v105, %v323
  %325 = vmatmul.f32.gmra.mxu0 %v118
  %v326 = vpop.f32.mrf.mxu0
  %v327 = vadd.f32 %v105, %v326
  %328 = vmatmul.f32.gmra.mxu0 %v121
  %v329 = vpop.f32.mrf.mxu0
  %v330 = vadd.f32 %v105, %v329
  %331 = vmatmul.f32.gmra.mxu0 %v124
  %v332 = vpop.f32.mrf.mxu0
  %v333 = vadd.f32 %v105, %v332
  %334 = vmatmul.f32.gmra.mxu0 %v127
  %v335 = vpop.f32.mrf.mxu0
  %v336 = vadd.f32 %v105, %v335
  %337 = vmatmul.f32.gmra.mxu0 %v130
  %v338 = vpop.f32.mrf.mxu0
  %v339 = vadd.f32 %v105, %v338
  %340 = vmatmul.f32.gmra.mxu0 %v133
  %v341 = vpop.f32.mrf.mxu0
  %v342 = vadd.f32 %v105, %v341
  %343 = vmatmul.f32.gmra.mxu0 %v136
  %v344 = vpop.f32.mrf.mxu0
  %v345 = vadd.f32 %v105, %v344
  %346 = vmatmul.f32.gmra.mxu0 %v139
  %v347 = vpop.f32.mrf.mxu0
  %v348 = vadd.f32 %v105, %v347
  %349 = vmatmul.f32.gmra.mxu0 %v142
  %v350 = vpop.f32.mrf.mxu0
  %v351 = vadd.f32 %v105, %v350
  %352 = vmatmul.f32.gmra.mxu0 %v145
  %v353 = vpop.f32.mrf.mxu0
  %v354 = vadd.f32 %v105, %v353
  %355 = vmatmul.f32.gmra.mxu0 %v148
  %v356 = vpop.f32.mrf.mxu0
  %v357 = vadd.f32 %v105, %v356
  %358 = vmatmul.f32.gmra.mxu0 %v151
  %v359 = vpop.f32.mrf.mxu0
  %v360 = vadd.f32 %v105, %v359
  %361 = vmatmul.f32.gmra.mxu0 %v154
  %v362 = vpop.f32.mrf.mxu0
  %v363 = vadd.f32 %v105, %v362
  %364 = vmatmul.f32.gmra.mxu0 %v157
  %v365 = vpop.f32.mrf.mxu0
  %v366 = vadd.f32 %v105, %v365
  %367 = vmatmul.f32.gmra.mxu0 %v160
  %v368 = vpop.f32.mrf.mxu0
  %v369 = vadd.f32 %v105, %v368
  %370 = vmatmul.f32.gmra.mxu0 %v163
  %v371 = vpop.f32.mrf.mxu0
  %v372 = vadd.f32 %v105, %v371
  %373 = vmatmul.f32.gmra.mxu0 %v166
  %v374 = vpop.f32.mrf.mxu0
  %v375 = vadd.f32 %v105, %v374
  %376 = vmatmul.f32.gmra.mxu0 %v169
  %v377 = vpop.f32.mrf.mxu0
  %v378 = vadd.f32 %v105, %v377
  %379 = vmatmul.f32.gmra.mxu0 %v172
  %v380 = vpop.f32.mrf.mxu0
  %v381 = vadd.f32 %v105, %v380
  %382 = vmatmul.f32.gmra.mxu0 %v175
  %v383 = vpop.f32.mrf.mxu0
  %v384 = vadd.f32 %v105, %v383
  %385 = vmatmul.f32.gmra.mxu0 %v178
  %v386 = vpop.f32.mrf.mxu0
  %v387 = vadd.f32 %v105, %v386
  %388 = vmatmul.f32.gmra.mxu0 %v181
  %v389 = vpop.f32.mrf.mxu0
  %v390 = vadd.f32 %v105, %v389
  %391 = vmatmul.f32.gmra.mxu0 %v184
  %v392 = vpop.f32.mrf.mxu0
  %v393 = vadd.f32 %v105, %v392
  %394 = vmatmul.f32.gmra.mxu0 %v187
  %v395 = vpop.f32.mrf.mxu0
  %v396 = vadd.f32 %v105, %v395
  %397 = vmatmul.f32.gmra.mxu0 %v190
  %v398 = vpop.f32.mrf.mxu0
  %v399 = vadd.f32 %v105, %v398
  %400 = vmatmul.f32.gmra.mxu0 %v193
  %v401 = vpop.f32.mrf.mxu0
  %v402 = vadd.f32 %v105, %v401
  %403 = vmatmul.f32.gmra.mxu0 %v196
  %v404 = vpop.f32.mrf.mxu0
  %v405 = vadd.f32 %v105, %v404
  %406 = vmatmul.f32.gmra.mxu0 %v199
  %v407 = vpop.f32.mrf.mxu0
  %v408 = vadd.f32 %v105, %v407
  %409 = vmatmul.f32.gmra.mxu0 %v202
  %v410 = vpop.f32.mrf.mxu0
  %v411 = vadd.f32 %v105, %v410
  %412 = vmatmul.f32.gmra.mxu0 %v205
  %v413 = vpop.f32.mrf.mxu0
  %v414 = vadd.f32 %v105, %v413
  %415 = vmatmul.f32.gmra.mxu0 %v208
  %v416 = vpop.f32.mrf.mxu0
  %v417 = vadd.f32 %v105, %v416
  %418 = vmatmul.f32.gmra.mxu0 %v211
  %v419 = vpop.f32.mrf.mxu0
  %v420 = vadd.f32 %v105, %v419
  %421 = vmatmul.f32.gmra.mxu0 %v214
  %v422 = vpop.f32.mrf.mxu0
  %v423 = vadd.f32 %v105, %v422
  %424 = vmatmul.f32.gmra.mxu0 %v217
  %v425 = vpop.f32.mrf.mxu0
  %v426 = vadd.f32 %v105, %v425
  %427 = vmatmul.f32.gmra.mxu0 %v220
  %v428 = vpop.f32.mrf.mxu0
  %v429 = vadd.f32 %v105, %v428
  %430 = vmatmul.f32.gmra.mxu0 %v223
  %v431 = vpop.f32.mrf.mxu0
  %v432 = vadd.f32 %v105, %v431
  %433 = vmatmul.f32.gmra.mxu0 %v226
  %v434 = vpop.f32.mrf.mxu0
  %v435 = vadd.f32 %v105, %v434
  %436 = vmatmul.f32.gmra.mxu0 %v229
  %v437 = vpop.f32.mrf.mxu0
  %v438 = vadd.f32 %v105, %v437
  %439 = vmatmul.f32.gmra.mxu0 %v232
  %v440 = vpop.f32.mrf.mxu0
  %v441 = vadd.f32 %v105, %v440
  %442 = vmatmul.f32.gmra.mxu0 %v235
  %v443 = vpop.f32.mrf.mxu0
  %v444 = vadd.f32 %v105, %v443
  %445 = vmatmul.f32.gmra.mxu0 %v238
  %v446 = vpop.f32.mrf.mxu0
  %v447 = vadd.f32 %v105, %v446
  %448 = vmatmul.f32.gmra.mxu0 %v241
  %v449 = vpop.f32.mrf.mxu0
  %v450 = vadd.f32 %v105, %v449
  %451 = vmatmul.f32.gmra.mxu0 %v244
  %v452 = vpop.f32.mrf.mxu0
  %v453 = vadd.f32 %v105, %v452
  %454 = vmatmul.f32.gmra.mxu0 %v247
  %v455 = vpop.f32.mrf.mxu0
  %v456 = vadd.f32 %v105, %v455
  %457 = vmatmul.f32.gmra.mxu0 %v250
  %v458 = vpop.f32.mrf.mxu0
  %v459 = vadd.f32 %v105, %v458
  %460 = vmatmul.f32.gmra.mxu0 %v253
  %v461 = vpop.f32.mrf.mxu0
  %v462 = vadd.f32 %v105, %v461
  %463 = vmatmul.f32.gmra.mxu0 %v256
  %v464 = vpop.f32.mrf.mxu0
  %v465 = vadd.f32 %v105, %v464
  %466 = vmatmul.f32.gmra.mxu0 %v259
  %v467 = vpop.f32.mrf.mxu0
  %v468 = vadd.f32 %v105, %v467
  %469 = vmatmul.f32.gmra.mxu0 %v262
  %v470 = vpop.f32.mrf.mxu0
  %v471 = vadd.f32 %v105, %v470
  %472 = vmatmul.f32.gmra.mxu0 %v265
  %v473 = vpop.f32.mrf.mxu0
  %v474 = vadd.f32 %v105, %v473
  %475 = vmatmul.f32.gmra.mxu0 %v268
  %v476 = vpop.f32.mrf.mxu0
  %v477 = vadd.f32 %v105, %v476
  %478 = vmatmul.f32.gmra.mxu0 %v271
  %v479 = vpop.f32.mrf.mxu0
  %v480 = vadd.f32 %v105, %v479
  %481 = vmatmul.f32.gmra.mxu0 %v274
  %v482 = vpop.f32.mrf.mxu0
  %v483 = vadd.f32 %v105, %v482
  %484 = vmatmul.f32.gmra.mxu0 %v277
  %v485 = vpop.f32.mrf.mxu0
  %v486 = vadd.f32 %v105, %v485
  %487 = vmatmul.f32.gmra.mxu0 %v280
  %v488 = vpop.f32.mrf.mxu0
  %v489 = vadd.f32 %v105, %v488
  %490 = vmatmul.f32.gmra.mxu0 %v283
  %v491 = vpop.f32.mrf.mxu0
  %v492 = vadd.f32 %v105, %v491
  %493 = vmatmul.f32.gmra.mxu0 %v286
  %v494 = vpop.f32.mrf.mxu0
  %v495 = vadd.f32 %v105, %v494
  %496 = vmatmul.f32.gmra.mxu0 %v289
  %v497 = vpop.f32.mrf.mxu0
  %v498 = vadd.f32 %v105, %v497
  %499 = vmatmul.f32.gmra.mxu0 %v292
  %v500 = vpop.f32.mrf.mxu0
  %v501 = vadd.f32 %v105, %v500
  %502 = vmatmul.f32.gmra.mxu0 %v295
  %v503 = vpop.f32.mrf.mxu0
  %v504 = vadd.f32 %v105, %v503
  %505 = vmatmul.f32.gmra.mxu0 %v298
  %v506 = vpop.f32.mrf.mxu0
  %v507 = vadd.f32 %v105, %v506
  %508 = vdwg.mxu0
  %v509 = vxor.u32 %v318, 2147483648
  %v510 = vxor.u32 %v321, 2147483648
  %v511 = vxor.u32 %v324, 2147483648
  %v512 = vxor.u32 %v327, 2147483648
  %v513 = vxor.u32 %v330, 2147483648
  %v514 = vxor.u32 %v333, 2147483648
  %v515 = vxor.u32 %v336, 2147483648
  %v516 = vxor.u32 %v339, 2147483648
  %v517 = vxor.u32 %v342, 2147483648
  %v518 = vxor.u32 %v345, 2147483648
  %v519 = vxor.u32 %v348, 2147483648
  %v520 = vxor.u32 %v351, 2147483648
  %v521 = vxor.u32 %v354, 2147483648
  %v522 = vxor.u32 %v357, 2147483648
  %v523 = vxor.u32 %v360, 2147483648
  %v524 = vxor.u32 %v363, 2147483648
  %v525 = vxor.u32 %v366, 2147483648
  %v526 = vxor.u32 %v369, 2147483648
  %v527 = vxor.u32 %v372, 2147483648
  %v528 = vxor.u32 %v375, 2147483648
  %v529 = vxor.u32 %v378, 2147483648
  %v530 = vxor.u32 %v381, 2147483648
  %v531 = vxor.u32 %v384, 2147483648
  %v532 = vxor.u32 %v387, 2147483648
  %v533 = vxor.u32 %v390, 2147483648
  %v534 = vxor.u32 %v393, 2147483648
  %v535 = vxor.u32 %v396, 2147483648
  %v536 = vxor.u32 %v399, 2147483648
  %v537 = vxor.u32 %v402, 2147483648
  %v538 = vxor.u32 %v405, 2147483648
  %v539 = vxor.u32 %v408, 2147483648
  %v540 = vxor.u32 %v411, 2147483648
  %v541 = vxor.u32 %v414, 2147483648
  %v542 = vxor.u32 %v417, 2147483648
  %v543 = vxor.u32 %v420, 2147483648
  %v544 = vxor.u32 %v423, 2147483648
  %v545 = vxor.u32 %v426, 2147483648
  %v546 = vxor.u32 %v429, 2147483648
  %v547 = vxor.u32 %v432, 2147483648
  %v548 = vxor.u32 %v435, 2147483648
  %v549 = vxor.u32 %v438, 2147483648
  %v550 = vxor.u32 %v441, 2147483648
  %v551 = vxor.u32 %v444, 2147483648
  %v552 = vxor.u32 %v447, 2147483648
  %v553 = vxor.u32 %v450, 2147483648
  %v554 = vxor.u32 %v453, 2147483648
  %v555 = vxor.u32 %v456, 2147483648
  %v556 = vxor.u32 %v459, 2147483648
  %v557 = vxor.u32 %v462, 2147483648
  %v558 = vxor.u32 %v465, 2147483648
  %v559 = vxor.u32 %v468, 2147483648
  %v560 = vxor.u32 %v471, 2147483648
  %v561 = vxor.u32 %v474, 2147483648
  %v562 = vxor.u32 %v477, 2147483648
  %v563 = vxor.u32 %v480, 2147483648
  %v564 = vxor.u32 %v483, 2147483648
  %v565 = vxor.u32 %v486, 2147483648
  %v566 = vxor.u32 %v489, 2147483648
  %v567 = vxor.u32 %v492, 2147483648
  %v568 = vxor.u32 %v495, 2147483648
  %v569 = vxor.u32 %v498, 2147483648
  %v570 = vxor.u32 %v501, 2147483648
  %v571 = vxor.u32 %v504, 2147483648
  %v572 = vxor.u32 %v507, 2147483648
  %v573 = vmul.f32 %v509, 1.442695
  %v574 = vpow.pop %v573
  %v575 = vmul.f32 %v510, 1.442695
  %v576 = vpow.pop %v575
  %v577 = vmul.f32 %v511, 1.442695
  %v578 = vpow.pop %v577
  %v579 = vmul.f32 %v512, 1.442695
  %v580 = vpow.pop %v579
  %v581 = vmul.f32 %v513, 1.442695
  %v582 = vpow.pop %v581
  %v583 = vmul.f32 %v514, 1.442695
  %v584 = vpow.pop %v583
  %v585 = vmul.f32 %v515, 1.442695
  %v586 = vpow.pop %v585
  %v587 = vmul.f32 %v516, 1.442695
  %v588 = vpow.pop %v587
  %v589 = vmul.f32 %v517, 1.442695
  %v590 = vpow.pop %v589
  %v591 = vmul.f32 %v518, 1.442695
  %v592 = vpow.pop %v591
  %v593 = vmul.f32 %v519, 1.442695
  %v594 = vpow.pop %v593
  %v595 = vmul.f32 %v520, 1.442695
  %v596 = vpow.pop %v595
  %v597 = vmul.f32 %v521, 1.442695
  %v598 = vpow.pop %v597
  %v599 = vmul.f32 %v522, 1.442695
  %v600 = vpow.pop %v599
  %v601 = vmul.f32 %v523, 1.442695
  %v602 = vpow.pop %v601
  %v603 = vmul.f32 %v524, 1.442695
  %v604 = vpow.pop %v603
  %v605 = vmul.f32 %v525, 1.442695
  %v606 = vpow.pop %v605
  %v607 = vmul.f32 %v526, 1.442695
  %v608 = vpow.pop %v607
  %v609 = vmul.f32 %v527, 1.442695
  %v610 = vpow.pop %v609
  %v611 = vmul.f32 %v528, 1.442695
  %v612 = vpow.pop %v611
  %v613 = vmul.f32 %v529, 1.442695
  %v614 = vpow.pop %v613
  %v615 = vmul.f32 %v530, 1.442695
  %v616 = vpow.pop %v615
  %v617 = vmul.f32 %v531, 1.442695
  %v618 = vpow.pop %v617
  %v619 = vmul.f32 %v532, 1.442695
  %v620 = vpow.pop %v619
  %v621 = vmul.f32 %v533, 1.442695
  %v622 = vpow.pop %v621
  %v623 = vmul.f32 %v534, 1.442695
  %v624 = vpow.pop %v623
  %v625 = vmul.f32 %v535, 1.442695
  %v626 = vpow.pop %v625
  %v627 = vmul.f32 %v536, 1.442695
  %v628 = vpow.pop %v627
  %v629 = vmul.f32 %v537, 1.442695
  %v630 = vpow.pop %v629
  %v631 = vmul.f32 %v538, 1.442695
  %v632 = vpow.pop %v631
  %v633 = vmul.f32 %v539, 1.442695
  %v634 = vpow.pop %v633
  %v635 = vmul.f32 %v540, 1.442695
  %v636 = vpow.pop %v635
  %v637 = vmul.f32 %v541, 1.442695
  %v638 = vpow.pop %v637
  %v639 = vmul.f32 %v542, 1.442695
  %v640 = vpow.pop %v639
  %v641 = vmul.f32 %v543, 1.442695
  %v642 = vpow.pop %v641
  %v643 = vmul.f32 %v544, 1.442695
  %v644 = vpow.pop %v643
  %v645 = vmul.f32 %v545, 1.442695
  %v646 = vpow.pop %v645
  %v647 = vmul.f32 %v546, 1.442695
  %v648 = vpow.pop %v647
  %v649 = vmul.f32 %v547, 1.442695
  %v650 = vpow.pop %v649
  %v651 = vmul.f32 %v548, 1.442695
  %v652 = vpow.pop %v651
  %v653 = vmul.f32 %v549, 1.442695
  %v654 = vpow.pop %v653
  %v655 = vmul.f32 %v550, 1.442695
  %v656 = vpow.pop %v655
  %v657 = vmul.f32 %v551, 1.442695
  %v658 = vpow.pop %v657
  %v659 = vmul.f32 %v552, 1.442695
  %v660 = vpow.pop %v659
  %v661 = vmul.f32 %v553, 1.442695
  %v662 = vpow.pop %v661
  %v663 = vmul.f32 %v554, 1.442695
  %v664 = vpow.pop %v663
  %v665 = vmul.f32 %v555, 1.442695
  %v666 = vpow.pop %v665
  %v667 = vmul.f32 %v556, 1.442695
  %v668 = vpow.pop %v667
  %v669 = vmul.f32 %v557, 1.442695
  %v670 = vpow.pop %v669
  %v671 = vmul.f32 %v558, 1.442695
  %v672 = vpow.pop %v671
  %v673 = vmul.f32 %v559, 1.442695
  %v674 = vpow.pop %v673
  %v675 = vmul.f32 %v560, 1.442695
  %v676 = vpow.pop %v675
  %v677 = vmul.f32 %v561, 1.442695
  %v678 = vpow.pop %v677
  %v679 = vmul.f32 %v562, 1.442695
  %v680 = vpow.pop %v679
  %v681 = vmul.f32 %v563, 1.442695
  %v682 = vpow.pop %v681
  %v683 = vmul.f32 %v564, 1.442695
  %v684 = vpow.pop %v683
  %v685 = vmul.f32 %v565, 1.442695
  %v686 = vpow.pop %v685
  %v687 = vmul.f32 %v566, 1.442695
  %v688 = vpow.pop %v687
  %v689 = vmul.f32 %v567, 1.442695
  %v690 = vpow.pop %v689
  %v691 = vmul.f32 %v568, 1.442695
  %v692 = vpow.pop %v691
  %v693 = vmul.f32 %v569, 1.442695
  %v694 = vpow.pop %v693
  %v695 = vmul.f32 %v570, 1.442695
  %v696 = vpow.pop %v695
  %v697 = vmul.f32 %v571, 1.442695
  %v698 = vpow.pop %v697
  %v699 = vmul.f32 %v572, 1.442695
  %v700 = vpow.pop %v699
  %v701 = vadd.f32 %v574, 1.0
  %v702 = vadd.f32 %v576, 1.0
  %v703 = vadd.f32 %v578, 1.0
  %v704 = vadd.f32 %v580, 1.0
  %v705 = vadd.f32 %v582, 1.0
  %v706 = vadd.f32 %v584, 1.0
  %v707 = vadd.f32 %v586, 1.0
  %v708 = vadd.f32 %v588, 1.0
  %v709 = vadd.f32 %v590, 1.0
  %v710 = vadd.f32 %v592, 1.0
  %v711 = vadd.f32 %v594, 1.0
  %v712 = vadd.f32 %v596, 1.0
  %v713 = vadd.f32 %v598, 1.0
  %v714 = vadd.f32 %v600, 1.0
  %v715 = vadd.f32 %v602, 1.0
  %v716 = vadd.f32 %v604, 1.0
  %v717 = vadd.f32 %v606, 1.0
  %v718 = vadd.f32 %v608, 1.0
  %v719 = vadd.f32 %v610, 1.0
  %v720 = vadd.f32 %v612, 1.0
  %v721 = vadd.f32 %v614, 1.0
  %v722 = vadd.f32 %v616, 1.0
  %v723 = vadd.f32 %v618, 1.0
  %v724 = vadd.f32 %v620, 1.0
  %v725 = vadd.f32 %v622, 1.0
  %v726 = vadd.f32 %v624, 1.0
  %v727 = vadd.f32 %v626, 1.0
  %v728 = vadd.f32 %v628, 1.0
  %v729 = vadd.f32 %v630, 1.0
  %v730 = vadd.f32 %v632, 1.0
  %v731 = vadd.f32 %v634, 1.0
  %v732 = vadd.f32 %v636, 1.0
  %v733 = vadd.f32 %v638, 1.0
  %v734 = vadd.f32 %v640, 1.0
  %v735 = vadd.f32 %v642, 1.0
  %v736 = vadd.f32 %v644, 1.0
  %v737 = vadd.f32 %v646, 1.0
  %v738 = vadd.f32 %v648, 1.0
  %v739 = vadd.f32 %v650, 1.0
  %v740 = vadd.f32 %v652, 1.0
  %v741 = vadd.f32 %v654, 1.0
  %v742 = vadd.f32 %v656, 1.0
  %v743 = vadd.f32 %v658, 1.0
  %v744 = vadd.f32 %v660, 1.0
  %v745 = vadd.f32 %v662, 1.0
  %v746 = vadd.f32 %v664, 1.0
  %v747 = vadd.f32 %v666, 1.0
  %v748 = vadd.f32 %v668, 1.0
  %v749 = vadd.f32 %v670, 1.0
  %v750 = vadd.f32 %v672, 1.0
  %v751 = vadd.f32 %v674, 1.0
  %v752 = vadd.f32 %v676, 1.0
  %v753 = vadd.f32 %v678, 1.0
  %v754 = vadd.f32 %v680, 1.0
  %v755 = vadd.f32 %v682, 1.0
  %v756 = vadd.f32 %v684, 1.0
  %v757 = vadd.f32 %v686, 1.0
  %v758 = vadd.f32 %v688, 1.0
  %v759 = vadd.f32 %v690, 1.0
  %v760 = vadd.f32 %v692, 1.0
  %v761 = vadd.f32 %v694, 1.0
  %v762 = vadd.f32 %v696, 1.0
  %v763 = vadd.f32 %v698, 1.0
  %v764 = vadd.f32 %v700, 1.0
  %v765 = vrcp.pop %v701
  %v766 = vmul.f32 %v701, %v765
  %v767 = vsub.f32 1.0, %v766
  %v768 = vmul.f32 %v765, %v767
  %v769 = vadd.f32 %v765, %v768
  %vm770 = vweird.f32 %v701
  %vm771 = vweird.f32 %v765
  %vm772 = vmor %vm770, %vm771
  %v773 = vsel %vm772, %v765, %v769
  %v774 = vand.u32 2147483647, %v701
  %vm775 = vcmp.eq.f32.partialorder %v774, 8.507059e+37
  %v776 = vand.u32 %v701, 2147483648
  %v777 = vor.u32 1.1754944e-38, %v776
  %v778 = vsel %vm775, %v777, %v773
  %v779 = vmul.f32 1.0, %v778
  %v780 = vrcp.pop %v702
  %v781 = vmul.f32 %v702, %v780
  %v782 = vsub.f32 1.0, %v781
  %v783 = vmul.f32 %v780, %v782
  %v784 = vadd.f32 %v780, %v783
  %vm785 = vweird.f32 %v702
  %vm786 = vweird.f32 %v780
  %vm787 = vmor %vm785, %vm786
  %v788 = vsel %vm787, %v780, %v784
  %v789 = vand.u32 2147483647, %v702
  %vm790 = vcmp.eq.f32.partialorder %v789, 8.507059e+37
  %v791 = vand.u32 %v702, 2147483648
  %v792 = vor.u32 1.1754944e-38, %v791
  %v793 = vsel %vm790, %v792, %v788
  %v794 = vmul.f32 1.0, %v793
  %v795 = vrcp.pop %v703
  %v796 = vmul.f32 %v703, %v795
  %v797 = vsub.f32 1.0, %v796
  %v798 = vmul.f32 %v795, %v797
  %v799 = vadd.f32 %v795, %v798
  %vm800 = vweird.f32 %v703
  %vm801 = vweird.f32 %v795
  %vm802 = vmor %vm800, %vm801
  %v803 = vsel %vm802, %v795, %v799
  %v804 = vand.u32 2147483647, %v703
  %vm805 = vcmp.eq.f32.partialorder %v804, 8.507059e+37
  %v806 = vand.u32 %v703, 2147483648
  %v807 = vor.u32 1.1754944e-38, %v806
  %v808 = vsel %vm805, %v807, %v803
  %v809 = vmul.f32 1.0, %v808
  %v810 = vrcp.pop %v704
  %v811 = vmul.f32 %v704, %v810
  %v812 = vsub.f32 1.0, %v811
  %v813 = vmul.f32 %v810, %v812
  %v814 = vadd.f32 %v810, %v813
  %vm815 = vweird.f32 %v704
  %vm816 = vweird.f32 %v810
  %vm817 = vmor %vm815, %vm816
  %v818 = vsel %vm817, %v810, %v814
  %v819 = vand.u32 2147483647, %v704
  %vm820 = vcmp.eq.f32.partialorder %v819, 8.507059e+37
  %v821 = vand.u32 %v704, 2147483648
  %v822 = vor.u32 1.1754944e-38, %v821
  %v823 = vsel %vm820, %v822, %v818
  %v824 = vmul.f32 1.0, %v823
  %v825 = vrcp.pop %v705
  %v826 = vmul.f32 %v705, %v825
  %v827 = vsub.f32 1.0, %v826
  %v828 = vmul.f32 %v825, %v827
  %v829 = vadd.f32 %v825, %v828
  %vm830 = vweird.f32 %v705
  %vm831 = vweird.f32 %v825
  %vm832 = vmor %vm830, %vm831
  %v833 = vsel %vm832, %v825, %v829
  %v834 = vand.u32 2147483647, %v705
  %vm835 = vcmp.eq.f32.partialorder %v834, 8.507059e+37
  %v836 = vand.u32 %v705, 2147483648
  %v837 = vor.u32 1.1754944e-38, %v836
  %v838 = vsel %vm835, %v837, %v833
  %v839 = vmul.f32 1.0, %v838
  %v840 = vrcp.pop %v706
  %v841 = vmul.f32 %v706, %v840
  %v842 = vsub.f32 1.0, %v841
  %v843 = vmul.f32 %v840, %v842
  %v844 = vadd.f32 %v840, %v843
  %vm845 = vweird.f32 %v706
  %vm846 = vweird.f32 %v840
  %vm847 = vmor %vm845, %vm846
  %v848 = vsel %vm847, %v840, %v844
  %v849 = vand.u32 2147483647, %v706
  %vm850 = vcmp.eq.f32.partialorder %v849, 8.507059e+37
  %v851 = vand.u32 %v706, 2147483648
  %v852 = vor.u32 1.1754944e-38, %v851
  %v853 = vsel %vm850, %v852, %v848
  %v854 = vmul.f32 1.0, %v853
  %v855 = vrcp.pop %v707
  %v856 = vmul.f32 %v707, %v855
  %v857 = vsub.f32 1.0, %v856
  %v858 = vmul.f32 %v855, %v857
  %v859 = vadd.f32 %v855, %v858
  %vm860 = vweird.f32 %v707
  %vm861 = vweird.f32 %v855
  %vm862 = vmor %vm860, %vm861
  %v863 = vsel %vm862, %v855, %v859
  %v864 = vand.u32 2147483647, %v707
  %vm865 = vcmp.eq.f32.partialorder %v864, 8.507059e+37
  %v866 = vand.u32 %v707, 2147483648
  %v867 = vor.u32 1.1754944e-38, %v866
  %v868 = vsel %vm865, %v867, %v863
  %v869 = vmul.f32 1.0, %v868
  %v870 = vrcp.pop %v708
  %v871 = vmul.f32 %v708, %v870
  %v872 = vsub.f32 1.0, %v871
  %v873 = vmul.f32 %v870, %v872
  %v874 = vadd.f32 %v870, %v873
  %vm875 = vweird.f32 %v708
  %vm876 = vweird.f32 %v870
  %vm877 = vmor %vm875, %vm876
  %v878 = vsel %vm877, %v870, %v874
  %v879 = vand.u32 2147483647, %v708
  %vm880 = vcmp.eq.f32.partialorder %v879, 8.507059e+37
  %v881 = vand.u32 %v708, 2147483648
  %v882 = vor.u32 1.1754944e-38, %v881
  %v883 = vsel %vm880, %v882, %v878
  %v884 = vmul.f32 1.0, %v883
  %v885 = vrcp.pop %v709
  %v886 = vmul.f32 %v709, %v885
  %v887 = vsub.f32 1.0, %v886
  %v888 = vmul.f32 %v885, %v887
  %v889 = vadd.f32 %v885, %v888
  %vm890 = vweird.f32 %v709
  %vm891 = vweird.f32 %v885
  %vm892 = vmor %vm890, %vm891
  %v893 = vsel %vm892, %v885, %v889
  %v894 = vand.u32 2147483647, %v709
  %vm895 = vcmp.eq.f32.partialorder %v894, 8.507059e+37
  %v896 = vand.u32 %v709, 2147483648
  %v897 = vor.u32 1.1754944e-38, %v896
  %v898 = vsel %vm895, %v897, %v893
  %v899 = vmul.f32 1.0, %v898
  %v900 = vrcp.pop %v710
  %v901 = vmul.f32 %v710, %v900
  %v902 = vsub.f32 1.0, %v901
  %v903 = vmul.f32 %v900, %v902
  %v904 = vadd.f32 %v900, %v903
  %vm905 = vweird.f32 %v710
  %vm906 = vweird.f32 %v900
  %vm907 = vmor %vm905, %vm906
  %v908 = vsel %vm907, %v900, %v904
  %v909 = vand.u32 2147483647, %v710
  %vm910 = vcmp.eq.f32.partialorder %v909, 8.507059e+37
  %v911 = vand.u32 %v710, 2147483648
  %v912 = vor.u32 1.1754944e-38, %v911
  %v913 = vsel %vm910, %v912, %v908
  %v914 = vmul.f32 1.0, %v913
  %v915 = vrcp.pop %v711
  %v916 = vmul.f32 %v711, %v915
  %v917 = vsub.f32 1.0, %v916
  %v918 = vmul.f32 %v915, %v917
  %v919 = vadd.f32 %v915, %v918
  %vm920 = vweird.f32 %v711
  %vm921 = vweird.f32 %v915
  %vm922 = vmor %vm920, %vm921
  %v923 = vsel %vm922, %v915, %v919
  %v924 = vand.u32 2147483647, %v711
  %vm925 = vcmp.eq.f32.partialorder %v924, 8.507059e+37
  %v926 = vand.u32 %v711, 2147483648
  %v927 = vor.u32 1.1754944e-38, %v926
  %v928 = vsel %vm925, %v927, %v923
  %v929 = vmul.f32 1.0, %v928
  %v930 = vrcp.pop %v712
  %v931 = vmul.f32 %v712, %v930
  %v932 = vsub.f32 1.0, %v931
  %v933 = vmul.f32 %v930, %v932
  %v934 = vadd.f32 %v930, %v933
  %vm935 = vweird.f32 %v712
  %vm936 = vweird.f32 %v930
  %vm937 = vmor %vm935, %vm936
  %v938 = vsel %vm937, %v930, %v934
  %v939 = vand.u32 2147483647, %v712
  %vm940 = vcmp.eq.f32.partialorder %v939, 8.507059e+37
  %v941 = vand.u32 %v712, 2147483648
  %v942 = vor.u32 1.1754944e-38, %v941
  %v943 = vsel %vm940, %v942, %v938
  %v944 = vmul.f32 1.0, %v943
  %v945 = vrcp.pop %v713
  %v946 = vmul.f32 %v713, %v945
  %v947 = vsub.f32 1.0, %v946
  %v948 = vmul.f32 %v945, %v947
  %v949 = vadd.f32 %v945, %v948
  %vm950 = vweird.f32 %v713
  %vm951 = vweird.f32 %v945
  %vm952 = vmor %vm950, %vm951
  %v953 = vsel %vm952, %v945, %v949
  %v954 = vand.u32 2147483647, %v713
  %vm955 = vcmp.eq.f32.partialorder %v954, 8.507059e+37
  %v956 = vand.u32 %v713, 2147483648
  %v957 = vor.u32 1.1754944e-38, %v956
  %v958 = vsel %vm955, %v957, %v953
  %v959 = vmul.f32 1.0, %v958
  %v960 = vrcp.pop %v714
  %v961 = vmul.f32 %v714, %v960
  %v962 = vsub.f32 1.0, %v961
  %v963 = vmul.f32 %v960, %v962
  %v964 = vadd.f32 %v960, %v963
  %vm965 = vweird.f32 %v714
  %vm966 = vweird.f32 %v960
  %vm967 = vmor %vm965, %vm966
  %v968 = vsel %vm967, %v960, %v964
  %v969 = vand.u32 2147483647, %v714
  %vm970 = vcmp.eq.f32.partialorder %v969, 8.507059e+37
  %v971 = vand.u32 %v714, 2147483648
  %v972 = vor.u32 1.1754944e-38, %v971
  %v973 = vsel %vm970, %v972, %v968
  %v974 = vmul.f32 1.0, %v973
  %v975 = vrcp.pop %v715
  %v976 = vmul.f32 %v715, %v975
  %v977 = vsub.f32 1.0, %v976
  %v978 = vmul.f32 %v975, %v977
  %v979 = vadd.f32 %v975, %v978
  %vm980 = vweird.f32 %v715
  %vm981 = vweird.f32 %v975
  %vm982 = vmor %vm980, %vm981
  %v983 = vsel %vm982, %v975, %v979
  %v984 = vand.u32 2147483647, %v715
  %vm985 = vcmp.eq.f32.partialorder %v984, 8.507059e+37
  %v986 = vand.u32 %v715, 2147483648
  %v987 = vor.u32 1.1754944e-38, %v986
  %v988 = vsel %vm985, %v987, %v983
  %v989 = vmul.f32 1.0, %v988
  %v990 = vrcp.pop %v716
  %v991 = vmul.f32 %v716, %v990
  %v992 = vsub.f32 1.0, %v991
  %v993 = vmul.f32 %v990, %v992
  %v994 = vadd.f32 %v990, %v993
  %vm995 = vweird.f32 %v716
  %vm996 = vweird.f32 %v990
  %vm997 = vmor %vm995, %vm996
  %v998 = vsel %vm997, %v990, %v994
  %v999 = vand.u32 2147483647, %v716
  %vm1000 = vcmp.eq.f32.partialorder %v999, 8.507059e+37
  %v1001 = vand.u32 %v716, 2147483648
  %v1002 = vor.u32 1.1754944e-38, %v1001
  %v1003 = vsel %vm1000, %v1002, %v998
  %v1004 = vmul.f32 1.0, %v1003
  %v1005 = vrcp.pop %v717
  %v1006 = vmul.f32 %v717, %v1005
  %v1007 = vsub.f32 1.0, %v1006
  %v1008 = vmul.f32 %v1005, %v1007
  %v1009 = vadd.f32 %v1005, %v1008
  %vm1010 = vweird.f32 %v717
  %vm1011 = vweird.f32 %v1005
  %vm1012 = vmor %vm1010, %vm1011
  %v1013 = vsel %vm1012, %v1005, %v1009
  %v1014 = vand.u32 2147483647, %v717
  %vm1015 = vcmp.eq.f32.partialorder %v1014, 8.507059e+37
  %v1016 = vand.u32 %v717, 2147483648
  %v1017 = vor.u32 1.1754944e-38, %v1016
  %v1018 = vsel %vm1015, %v1017, %v1013
  %v1019 = vmul.f32 1.0, %v1018
  %v1020 = vrcp.pop %v718
  %v1021 = vmul.f32 %v718, %v1020
  %v1022 = vsub.f32 1.0, %v1021
  %v1023 = vmul.f32 %v1020, %v1022
  %v1024 = vadd.f32 %v1020, %v1023
  %vm1025 = vweird.f32 %v718
  %vm1026 = vweird.f32 %v1020
  %vm1027 = vmor %vm1025, %vm1026
  %v1028 = vsel %vm1027, %v1020, %v1024
  %v1029 = vand.u32 2147483647, %v718
  %vm1030 = vcmp.eq.f32.partialorder %v1029, 8.507059e+37
  %v1031 = vand.u32 %v718, 2147483648
  %v1032 = vor.u32 1.1754944e-38, %v1031
  %v1033 = vsel %vm1030, %v1032, %v1028
  %v1034 = vmul.f32 1.0, %v1033
  %v1035 = vrcp.pop %v719
  %v1036 = vmul.f32 %v719, %v1035
  %v1037 = vsub.f32 1.0, %v1036
  %v1038 = vmul.f32 %v1035, %v1037
  %v1039 = vadd.f32 %v1035, %v1038
  %vm1040 = vweird.f32 %v719
  %vm1041 = vweird.f32 %v1035
  %vm1042 = vmor %vm1040, %vm1041
  %v1043 = vsel %vm1042, %v1035, %v1039
  %v1044 = vand.u32 2147483647, %v719
  %vm1045 = vcmp.eq.f32.partialorder %v1044, 8.507059e+37
  %v1046 = vand.u32 %v719, 2147483648
  %v1047 = vor.u32 1.1754944e-38, %v1046
  %v1048 = vsel %vm1045, %v1047, %v1043
  %v1049 = vmul.f32 1.0, %v1048
  %v1050 = vrcp.pop %v720
  %v1051 = vmul.f32 %v720, %v1050
  %v1052 = vsub.f32 1.0, %v1051
  %v1053 = vmul.f32 %v1050, %v1052
  %v1054 = vadd.f32 %v1050, %v1053
  %vm1055 = vweird.f32 %v720
  %vm1056 = vweird.f32 %v1050
  %vm1057 = vmor %vm1055, %vm1056
  %v1058 = vsel %vm1057, %v1050, %v1054
  %v1059 = vand.u32 2147483647, %v720
  %vm1060 = vcmp.eq.f32.partialorder %v1059, 8.507059e+37
  %v1061 = vand.u32 %v720, 2147483648
  %v1062 = vor.u32 1.1754944e-38, %v1061
  %v1063 = vsel %vm1060, %v1062, %v1058
  %v1064 = vmul.f32 1.0, %v1063
  %v1065 = vrcp.pop %v721
  %v1066 = vmul.f32 %v721, %v1065
  %v1067 = vsub.f32 1.0, %v1066
  %v1068 = vmul.f32 %v1065, %v1067
  %v1069 = vadd.f32 %v1065, %v1068
  %vm1070 = vweird.f32 %v721
  %vm1071 = vweird.f32 %v1065
  %vm1072 = vmor %vm1070, %vm1071
  %v1073 = vsel %vm1072, %v1065, %v1069
  %v1074 = vand.u32 2147483647, %v721
  %vm1075 = vcmp.eq.f32.partialorder %v1074, 8.507059e+37
  %v1076 = vand.u32 %v721, 2147483648
  %v1077 = vor.u32 1.1754944e-38, %v1076
  %v1078 = vsel %vm1075, %v1077, %v1073
  %v1079 = vmul.f32 1.0, %v1078
  %v1080 = vrcp.pop %v722
  %v1081 = vmul.f32 %v722, %v1080
  %v1082 = vsub.f32 1.0, %v1081
  %v1083 = vmul.f32 %v1080, %v1082
  %v1084 = vadd.f32 %v1080, %v1083
  %vm1085 = vweird.f32 %v722
  %vm1086 = vweird.f32 %v1080
  %vm1087 = vmor %vm1085, %vm1086
  %v1088 = vsel %vm1087, %v1080, %v1084
  %v1089 = vand.u32 2147483647, %v722
  %vm1090 = vcmp.eq.f32.partialorder %v1089, 8.507059e+37
  %v1091 = vand.u32 %v722, 2147483648
  %v1092 = vor.u32 1.1754944e-38, %v1091
  %v1093 = vsel %vm1090, %v1092, %v1088
  %v1094 = vmul.f32 1.0, %v1093
  %v1095 = vrcp.pop %v723
  %v1096 = vmul.f32 %v723, %v1095
  %v1097 = vsub.f32 1.0, %v1096
  %v1098 = vmul.f32 %v1095, %v1097
  %v1099 = vadd.f32 %v1095, %v1098
  %vm1100 = vweird.f32 %v723
  %vm1101 = vweird.f32 %v1095
  %vm1102 = vmor %vm1100, %vm1101
  %v1103 = vsel %vm1102, %v1095, %v1099
  %v1104 = vand.u32 2147483647, %v723
  %vm1105 = vcmp.eq.f32.partialorder %v1104, 8.507059e+37
  %v1106 = vand.u32 %v723, 2147483648
  %v1107 = vor.u32 1.1754944e-38, %v1106
  %v1108 = vsel %vm1105, %v1107, %v1103
  %v1109 = vmul.f32 1.0, %v1108
  %v1110 = vrcp.pop %v724
  %v1111 = vmul.f32 %v724, %v1110
  %v1112 = vsub.f32 1.0, %v1111
  %v1113 = vmul.f32 %v1110, %v1112
  %v1114 = vadd.f32 %v1110, %v1113
  %vm1115 = vweird.f32 %v724
  %vm1116 = vweird.f32 %v1110
  %vm1117 = vmor %vm1115, %vm1116
  %v1118 = vsel %vm1117, %v1110, %v1114
  %v1119 = vand.u32 2147483647, %v724
  %vm1120 = vcmp.eq.f32.partialorder %v1119, 8.507059e+37
  %v1121 = vand.u32 %v724, 2147483648
  %v1122 = vor.u32 1.1754944e-38, %v1121
  %v1123 = vsel %vm1120, %v1122, %v1118
  %v1124 = vmul.f32 1.0, %v1123
  %v1125 = vrcp.pop %v725
  %v1126 = vmul.f32 %v725, %v1125
  %v1127 = vsub.f32 1.0, %v1126
  %v1128 = vmul.f32 %v1125, %v1127
  %v1129 = vadd.f32 %v1125, %v1128
  %vm1130 = vweird.f32 %v725
  %vm1131 = vweird.f32 %v1125
  %vm1132 = vmor %vm1130, %vm1131
  %v1133 = vsel %vm1132, %v1125, %v1129
  %v1134 = vand.u32 2147483647, %v725
  %vm1135 = vcmp.eq.f32.partialorder %v1134, 8.507059e+37
  %v1136 = vand.u32 %v725, 2147483648
  %v1137 = vor.u32 1.1754944e-38, %v1136
  %v1138 = vsel %vm1135, %v1137, %v1133
  %v1139 = vmul.f32 1.0, %v1138
  %v1140 = vrcp.pop %v726
  %v1141 = vmul.f32 %v726, %v1140
  %v1142 = vsub.f32 1.0, %v1141
  %v1143 = vmul.f32 %v1140, %v1142
  %v1144 = vadd.f32 %v1140, %v1143
  %vm1145 = vweird.f32 %v726
  %vm1146 = vweird.f32 %v1140
  %vm1147 = vmor %vm1145, %vm1146
  %v1148 = vsel %vm1147, %v1140, %v1144
  %v1149 = vand.u32 2147483647, %v726
  %vm1150 = vcmp.eq.f32.partialorder %v1149, 8.507059e+37
  %v1151 = vand.u32 %v726, 2147483648
  %v1152 = vor.u32 1.1754944e-38, %v1151
  %v1153 = vsel %vm1150, %v1152, %v1148
  %v1154 = vmul.f32 1.0, %v1153
  %v1155 = vrcp.pop %v727
  %v1156 = vmul.f32 %v727, %v1155
  %v1157 = vsub.f32 1.0, %v1156
  %v1158 = vmul.f32 %v1155, %v1157
  %v1159 = vadd.f32 %v1155, %v1158
  %vm1160 = vweird.f32 %v727
  %vm1161 = vweird.f32 %v1155
  %vm1162 = vmor %vm1160, %vm1161
  %v1163 = vsel %vm1162, %v1155, %v1159
  %v1164 = vand.u32 2147483647, %v727
  %vm1165 = vcmp.eq.f32.partialorder %v1164, 8.507059e+37
  %v1166 = vand.u32 %v727, 2147483648
  %v1167 = vor.u32 1.1754944e-38, %v1166
  %v1168 = vsel %vm1165, %v1167, %v1163
  %v1169 = vmul.f32 1.0, %v1168
  %v1170 = vrcp.pop %v728
  %v1171 = vmul.f32 %v728, %v1170
  %v1172 = vsub.f32 1.0, %v1171
  %v1173 = vmul.f32 %v1170, %v1172
  %v1174 = vadd.f32 %v1170, %v1173
  %vm1175 = vweird.f32 %v728
  %vm1176 = vweird.f32 %v1170
  %vm1177 = vmor %vm1175, %vm1176
  %v1178 = vsel %vm1177, %v1170, %v1174
  %v1179 = vand.u32 2147483647, %v728
  %vm1180 = vcmp.eq.f32.partialorder %v1179, 8.507059e+37
  %v1181 = vand.u32 %v728, 2147483648
  %v1182 = vor.u32 1.1754944e-38, %v1181
  %v1183 = vsel %vm1180, %v1182, %v1178
  %v1184 = vmul.f32 1.0, %v1183
  %v1185 = vrcp.pop %v729
  %v1186 = vmul.f32 %v729, %v1185
  %v1187 = vsub.f32 1.0, %v1186
  %v1188 = vmul.f32 %v1185, %v1187
  %v1189 = vadd.f32 %v1185, %v1188
  %vm1190 = vweird.f32 %v729
  %vm1191 = vweird.f32 %v1185
  %vm1192 = vmor %vm1190, %vm1191
  %v1193 = vsel %vm1192, %v1185, %v1189
  %v1194 = vand.u32 2147483647, %v729
  %vm1195 = vcmp.eq.f32.partialorder %v1194, 8.507059e+37
  %v1196 = vand.u32 %v729, 2147483648
  %v1197 = vor.u32 1.1754944e-38, %v1196
  %v1198 = vsel %vm1195, %v1197, %v1193
  %v1199 = vmul.f32 1.0, %v1198
  %v1200 = vrcp.pop %v730
  %v1201 = vmul.f32 %v730, %v1200
  %v1202 = vsub.f32 1.0, %v1201
  %v1203 = vmul.f32 %v1200, %v1202
  %v1204 = vadd.f32 %v1200, %v1203
  %vm1205 = vweird.f32 %v730
  %vm1206 = vweird.f32 %v1200
  %vm1207 = vmor %vm1205, %vm1206
  %v1208 = vsel %vm1207, %v1200, %v1204
  %v1209 = vand.u32 2147483647, %v730
  %vm1210 = vcmp.eq.f32.partialorder %v1209, 8.507059e+37
  %v1211 = vand.u32 %v730, 2147483648
  %v1212 = vor.u32 1.1754944e-38, %v1211
  %v1213 = vsel %vm1210, %v1212, %v1208
  %v1214 = vmul.f32 1.0, %v1213
  %v1215 = vrcp.pop %v731
  %v1216 = vmul.f32 %v731, %v1215
  %v1217 = vsub.f32 1.0, %v1216
  %v1218 = vmul.f32 %v1215, %v1217
  %v1219 = vadd.f32 %v1215, %v1218
  %vm1220 = vweird.f32 %v731
  %vm1221 = vweird.f32 %v1215
  %vm1222 = vmor %vm1220, %vm1221
  %v1223 = vsel %vm1222, %v1215, %v1219
  %v1224 = vand.u32 2147483647, %v731
  %vm1225 = vcmp.eq.f32.partialorder %v1224, 8.507059e+37
  %v1226 = vand.u32 %v731, 2147483648
  %v1227 = vor.u32 1.1754944e-38, %v1226
  %v1228 = vsel %vm1225, %v1227, %v1223
  %v1229 = vmul.f32 1.0, %v1228
  %v1230 = vrcp.pop %v732
  %v1231 = vmul.f32 %v732, %v1230
  %v1232 = vsub.f32 1.0, %v1231
  %v1233 = vmul.f32 %v1230, %v1232
  %v1234 = vadd.f32 %v1230, %v1233
  %vm1235 = vweird.f32 %v732
  %vm1236 = vweird.f32 %v1230
  %vm1237 = vmor %vm1235, %vm1236
  %v1238 = vsel %vm1237, %v1230, %v1234
  %v1239 = vand.u32 2147483647, %v732
  %vm1240 = vcmp.eq.f32.partialorder %v1239, 8.507059e+37
  %v1241 = vand.u32 %v732, 2147483648
  %v1242 = vor.u32 1.1754944e-38, %v1241
  %v1243 = vsel %vm1240, %v1242, %v1238
  %v1244 = vmul.f32 1.0, %v1243
  %v1245 = vrcp.pop %v733
  %v1246 = vmul.f32 %v733, %v1245
  %v1247 = vsub.f32 1.0, %v1246
  %v1248 = vmul.f32 %v1245, %v1247
  %v1249 = vadd.f32 %v1245, %v1248
  %vm1250 = vweird.f32 %v733
  %vm1251 = vweird.f32 %v1245
  %vm1252 = vmor %vm1250, %vm1251
  %v1253 = vsel %vm1252, %v1245, %v1249
  %v1254 = vand.u32 2147483647, %v733
  %vm1255 = vcmp.eq.f32.partialorder %v1254, 8.507059e+37
  %v1256 = vand.u32 %v733, 2147483648
  %v1257 = vor.u32 1.1754944e-38, %v1256
  %v1258 = vsel %vm1255, %v1257, %v1253
  %v1259 = vmul.f32 1.0, %v1258
  %v1260 = vrcp.pop %v734
  %v1261 = vmul.f32 %v734, %v1260
  %v1262 = vsub.f32 1.0, %v1261
  %v1263 = vmul.f32 %v1260, %v1262
  %v1264 = vadd.f32 %v1260, %v1263
  %vm1265 = vweird.f32 %v734
  %vm1266 = vweird.f32 %v1260
  %vm1267 = vmor %vm1265, %vm1266
  %v1268 = vsel %vm1267, %v1260, %v1264
  %v1269 = vand.u32 2147483647, %v734
  %vm1270 = vcmp.eq.f32.partialorder %v1269, 8.507059e+37
  %v1271 = vand.u32 %v734, 2147483648
  %v1272 = vor.u32 1.1754944e-38, %v1271
  %v1273 = vsel %vm1270, %v1272, %v1268
  %v1274 = vmul.f32 1.0, %v1273
  %v1275 = vrcp.pop %v735
  %v1276 = vmul.f32 %v735, %v1275
  %v1277 = vsub.f32 1.0, %v1276
  %v1278 = vmul.f32 %v1275, %v1277
  %v1279 = vadd.f32 %v1275, %v1278
  %vm1280 = vweird.f32 %v735
  %vm1281 = vweird.f32 %v1275
  %vm1282 = vmor %vm1280, %vm1281
  %v1283 = vsel %vm1282, %v1275, %v1279
  %v1284 = vand.u32 2147483647, %v735
  %vm1285 = vcmp.eq.f32.partialorder %v1284, 8.507059e+37
  %v1286 = vand.u32 %v735, 2147483648
  %v1287 = vor.u32 1.1754944e-38, %v1286
  %v1288 = vsel %vm1285, %v1287, %v1283
  %v1289 = vmul.f32 1.0, %v1288
  %v1290 = vrcp.pop %v736
  %v1291 = vmul.f32 %v736, %v1290
  %v1292 = vsub.f32 1.0, %v1291
  %v1293 = vmul.f32 %v1290, %v1292
  %v1294 = vadd.f32 %v1290, %v1293
  %vm1295 = vweird.f32 %v736
  %vm1296 = vweird.f32 %v1290
  %vm1297 = vmor %vm1295, %vm1296
  %v1298 = vsel %vm1297, %v1290, %v1294
  %v1299 = vand.u32 2147483647, %v736
  %vm1300 = vcmp.eq.f32.partialorder %v1299, 8.507059e+37
  %v1301 = vand.u32 %v736, 2147483648
  %v1302 = vor.u32 1.1754944e-38, %v1301
  %v1303 = vsel %vm1300, %v1302, %v1298
  %v1304 = vmul.f32 1.0, %v1303
  %v1305 = vrcp.pop %v737
  %v1306 = vmul.f32 %v737, %v1305
  %v1307 = vsub.f32 1.0, %v1306
  %v1308 = vmul.f32 %v1305, %v1307
  %v1309 = vadd.f32 %v1305, %v1308
  %vm1310 = vweird.f32 %v737
  %vm1311 = vweird.f32 %v1305
  %vm1312 = vmor %vm1310, %vm1311
  %v1313 = vsel %vm1312, %v1305, %v1309
  %v1314 = vand.u32 2147483647, %v737
  %vm1315 = vcmp.eq.f32.partialorder %v1314, 8.507059e+37
  %v1316 = vand.u32 %v737, 2147483648
  %v1317 = vor.u32 1.1754944e-38, %v1316
  %v1318 = vsel %vm1315, %v1317, %v1313
  %v1319 = vmul.f32 1.0, %v1318
  %v1320 = vrcp.pop %v738
  %v1321 = vmul.f32 %v738, %v1320
  %v1322 = vsub.f32 1.0, %v1321
  %v1323 = vmul.f32 %v1320, %v1322
  %v1324 = vadd.f32 %v1320, %v1323
  %vm1325 = vweird.f32 %v738
  %vm1326 = vweird.f32 %v1320
  %vm1327 = vmor %vm1325, %vm1326
  %v1328 = vsel %vm1327, %v1320, %v1324
  %v1329 = vand.u32 2147483647, %v738
  %vm1330 = vcmp.eq.f32.partialorder %v1329, 8.507059e+37
  %v1331 = vand.u32 %v738, 2147483648
  %v1332 = vor.u32 1.1754944e-38, %v1331
  %v1333 = vsel %vm1330, %v1332, %v1328
  %v1334 = vmul.f32 1.0, %v1333
  %v1335 = vrcp.pop %v739
  %v1336 = vmul.f32 %v739, %v1335
  %v1337 = vsub.f32 1.0, %v1336
  %v1338 = vmul.f32 %v1335, %v1337
  %v1339 = vadd.f32 %v1335, %v1338
  %vm1340 = vweird.f32 %v739
  %vm1341 = vweird.f32 %v1335
  %vm1342 = vmor %vm1340, %vm1341
  %v1343 = vsel %vm1342, %v1335, %v1339
  %v1344 = vand.u32 2147483647, %v739
  %vm1345 = vcmp.eq.f32.partialorder %v1344, 8.507059e+37
  %v1346 = vand.u32 %v739, 2147483648
  %v1347 = vor.u32 1.1754944e-38, %v1346
  %v1348 = vsel %vm1345, %v1347, %v1343
  %v1349 = vmul.f32 1.0, %v1348
  %v1350 = vrcp.pop %v740
  %v1351 = vmul.f32 %v740, %v1350
  %v1352 = vsub.f32 1.0, %v1351
  %v1353 = vmul.f32 %v1350, %v1352
  %v1354 = vadd.f32 %v1350, %v1353
  %vm1355 = vweird.f32 %v740
  %vm1356 = vweird.f32 %v1350
  %vm1357 = vmor %vm1355, %vm1356
  %v1358 = vsel %vm1357, %v1350, %v1354
  %v1359 = vand.u32 2147483647, %v740
  %vm1360 = vcmp.eq.f32.partialorder %v1359, 8.507059e+37
  %v1361 = vand.u32 %v740, 2147483648
  %v1362 = vor.u32 1.1754944e-38, %v1361
  %v1363 = vsel %vm1360, %v1362, %v1358
  %v1364 = vmul.f32 1.0, %v1363
  %v1365 = vrcp.pop %v741
  %v1366 = vmul.f32 %v741, %v1365
  %v1367 = vsub.f32 1.0, %v1366
  %v1368 = vmul.f32 %v1365, %v1367
  %v1369 = vadd.f32 %v1365, %v1368
  %vm1370 = vweird.f32 %v741
  %vm1371 = vweird.f32 %v1365
  %vm1372 = vmor %vm1370, %vm1371
  %v1373 = vsel %vm1372, %v1365, %v1369
  %v1374 = vand.u32 2147483647, %v741
  %vm1375 = vcmp.eq.f32.partialorder %v1374, 8.507059e+37
  %v1376 = vand.u32 %v741, 2147483648
  %v1377 = vor.u32 1.1754944e-38, %v1376
  %v1378 = vsel %vm1375, %v1377, %v1373
  %v1379 = vmul.f32 1.0, %v1378
  %v1380 = vrcp.pop %v742
  %v1381 = vmul.f32 %v742, %v1380
  %v1382 = vsub.f32 1.0, %v1381
  %v1383 = vmul.f32 %v1380, %v1382
  %v1384 = vadd.f32 %v1380, %v1383
  %vm1385 = vweird.f32 %v742
  %vm1386 = vweird.f32 %v1380
  %vm1387 = vmor %vm1385, %vm1386
  %v1388 = vsel %vm1387, %v1380, %v1384
  %v1389 = vand.u32 2147483647, %v742
  %vm1390 = vcmp.eq.f32.partialorder %v1389, 8.507059e+37
  %v1391 = vand.u32 %v742, 2147483648
  %v1392 = vor.u32 1.1754944e-38, %v1391
  %v1393 = vsel %vm1390, %v1392, %v1388
  %v1394 = vmul.f32 1.0, %v1393
  %v1395 = vrcp.pop %v743
  %v1396 = vmul.f32 %v743, %v1395
  %v1397 = vsub.f32 1.0, %v1396
  %v1398 = vmul.f32 %v1395, %v1397
  %v1399 = vadd.f32 %v1395, %v1398
  %vm1400 = vweird.f32 %v743
  %vm1401 = vweird.f32 %v1395
  %vm1402 = vmor %vm1400, %vm1401
  %v1403 = vsel %vm1402, %v1395, %v1399
  %v1404 = vand.u32 2147483647, %v743
  %vm1405 = vcmp.eq.f32.partialorder %v1404, 8.507059e+37
  %v1406 = vand.u32 %v743, 2147483648
  %v1407 = vor.u32 1.1754944e-38, %v1406
  %v1408 = vsel %vm1405, %v1407, %v1403
  %v1409 = vmul.f32 1.0, %v1408
  %v1410 = vrcp.pop %v744
  %v1411 = vmul.f32 %v744, %v1410
  %v1412 = vsub.f32 1.0, %v1411
  %v1413 = vmul.f32 %v1410, %v1412
  %v1414 = vadd.f32 %v1410, %v1413
  %vm1415 = vweird.f32 %v744
  %vm1416 = vweird.f32 %v1410
  %vm1417 = vmor %vm1415, %vm1416
  %v1418 = vsel %vm1417, %v1410, %v1414
  %v1419 = vand.u32 2147483647, %v744
  %vm1420 = vcmp.eq.f32.partialorder %v1419, 8.507059e+37
  %v1421 = vand.u32 %v744, 2147483648
  %v1422 = vor.u32 1.1754944e-38, %v1421
  %v1423 = vsel %vm1420, %v1422, %v1418
  %v1424 = vmul.f32 1.0, %v1423
  %v1425 = vrcp.pop %v745
  %v1426 = vmul.f32 %v745, %v1425
  %v1427 = vsub.f32 1.0, %v1426
  %v1428 = vmul.f32 %v1425, %v1427
  %v1429 = vadd.f32 %v1425, %v1428
  %vm1430 = vweird.f32 %v745
  %vm1431 = vweird.f32 %v1425
  %vm1432 = vmor %vm1430, %vm1431
  %v1433 = vsel %vm1432, %v1425, %v1429
  %v1434 = vand.u32 2147483647, %v745
  %vm1435 = vcmp.eq.f32.partialorder %v1434, 8.507059e+37
  %v1436 = vand.u32 %v745, 2147483648
  %v1437 = vor.u32 1.1754944e-38, %v1436
  %v1438 = vsel %vm1435, %v1437, %v1433
  %v1439 = vmul.f32 1.0, %v1438
  %v1440 = vrcp.pop %v746
  %v1441 = vmul.f32 %v746, %v1440
  %v1442 = vsub.f32 1.0, %v1441
  %v1443 = vmul.f32 %v1440, %v1442
  %v1444 = vadd.f32 %v1440, %v1443
  %vm1445 = vweird.f32 %v746
  %vm1446 = vweird.f32 %v1440
  %vm1447 = vmor %vm1445, %vm1446
  %v1448 = vsel %vm1447, %v1440, %v1444
  %v1449 = vand.u32 2147483647, %v746
  %vm1450 = vcmp.eq.f32.partialorder %v1449, 8.507059e+37
  %v1451 = vand.u32 %v746, 2147483648
  %v1452 = vor.u32 1.1754944e-38, %v1451
  %v1453 = vsel %vm1450, %v1452, %v1448
  %v1454 = vmul.f32 1.0, %v1453
  %v1455 = vrcp.pop %v747
  %v1456 = vmul.f32 %v747, %v1455
  %v1457 = vsub.f32 1.0, %v1456
  %v1458 = vmul.f32 %v1455, %v1457
  %v1459 = vadd.f32 %v1455, %v1458
  %vm1460 = vweird.f32 %v747
  %vm1461 = vweird.f32 %v1455
  %vm1462 = vmor %vm1460, %vm1461
  %v1463 = vsel %vm1462, %v1455, %v1459
  %v1464 = vand.u32 2147483647, %v747
  %vm1465 = vcmp.eq.f32.partialorder %v1464, 8.507059e+37
  %v1466 = vand.u32 %v747, 2147483648
  %v1467 = vor.u32 1.1754944e-38, %v1466
  %v1468 = vsel %vm1465, %v1467, %v1463
  %v1469 = vmul.f32 1.0, %v1468
  %v1470 = vrcp.pop %v748
  %v1471 = vmul.f32 %v748, %v1470
  %v1472 = vsub.f32 1.0, %v1471
  %v1473 = vmul.f32 %v1470, %v1472
  %v1474 = vadd.f32 %v1470, %v1473
  %vm1475 = vweird.f32 %v748
  %vm1476 = vweird.f32 %v1470
  %vm1477 = vmor %vm1475, %vm1476
  %v1478 = vsel %vm1477, %v1470, %v1474
  %v1479 = vand.u32 2147483647, %v748
  %vm1480 = vcmp.eq.f32.partialorder %v1479, 8.507059e+37
  %v1481 = vand.u32 %v748, 2147483648
  %v1482 = vor.u32 1.1754944e-38, %v1481
  %v1483 = vsel %vm1480, %v1482, %v1478
  %v1484 = vmul.f32 1.0, %v1483
  %v1485 = vrcp.pop %v749
  %v1486 = vmul.f32 %v749, %v1485
  %v1487 = vsub.f32 1.0, %v1486
  %v1488 = vmul.f32 %v1485, %v1487
  %v1489 = vadd.f32 %v1485, %v1488
  %vm1490 = vweird.f32 %v749
  %vm1491 = vweird.f32 %v1485
  %vm1492 = vmor %vm1490, %vm1491
  %v1493 = vsel %vm1492, %v1485, %v1489
  %v1494 = vand.u32 2147483647, %v749
  %vm1495 = vcmp.eq.f32.partialorder %v1494, 8.507059e+37
  %v1496 = vand.u32 %v749, 2147483648
  %v1497 = vor.u32 1.1754944e-38, %v1496
  %v1498 = vsel %vm1495, %v1497, %v1493
  %v1499 = vmul.f32 1.0, %v1498
  %v1500 = vrcp.pop %v750
  %v1501 = vmul.f32 %v750, %v1500
  %v1502 = vsub.f32 1.0, %v1501
  %v1503 = vmul.f32 %v1500, %v1502
  %v1504 = vadd.f32 %v1500, %v1503
  %vm1505 = vweird.f32 %v750
  %vm1506 = vweird.f32 %v1500
  %vm1507 = vmor %vm1505, %vm1506
  %v1508 = vsel %vm1507, %v1500, %v1504
  %v1509 = vand.u32 2147483647, %v750
  %vm1510 = vcmp.eq.f32.partialorder %v1509, 8.507059e+37
  %v1511 = vand.u32 %v750, 2147483648
  %v1512 = vor.u32 1.1754944e-38, %v1511
  %v1513 = vsel %vm1510, %v1512, %v1508
  %v1514 = vmul.f32 1.0, %v1513
  %v1515 = vrcp.pop %v751
  %v1516 = vmul.f32 %v751, %v1515
  %v1517 = vsub.f32 1.0, %v1516
  %v1518 = vmul.f32 %v1515, %v1517
  %v1519 = vadd.f32 %v1515, %v1518
  %vm1520 = vweird.f32 %v751
  %vm1521 = vweird.f32 %v1515
  %vm1522 = vmor %vm1520, %vm1521
  %v1523 = vsel %vm1522, %v1515, %v1519
  %v1524 = vand.u32 2147483647, %v751
  %vm1525 = vcmp.eq.f32.partialorder %v1524, 8.507059e+37
  %v1526 = vand.u32 %v751, 2147483648
  %v1527 = vor.u32 1.1754944e-38, %v1526
  %v1528 = vsel %vm1525, %v1527, %v1523
  %v1529 = vmul.f32 1.0, %v1528
  %v1530 = vrcp.pop %v752
  %v1531 = vmul.f32 %v752, %v1530
  %v1532 = vsub.f32 1.0, %v1531
  %v1533 = vmul.f32 %v1530, %v1532
  %v1534 = vadd.f32 %v1530, %v1533
  %vm1535 = vweird.f32 %v752
  %vm1536 = vweird.f32 %v1530
  %vm1537 = vmor %vm1535, %vm1536
  %v1538 = vsel %vm1537, %v1530, %v1534
  %v1539 = vand.u32 2147483647, %v752
  %vm1540 = vcmp.eq.f32.partialorder %v1539, 8.507059e+37
  %v1541 = vand.u32 %v752, 2147483648
  %v1542 = vor.u32 1.1754944e-38, %v1541
  %v1543 = vsel %vm1540, %v1542, %v1538
  %v1544 = vmul.f32 1.0, %v1543
  %v1545 = vrcp.pop %v753
  %v1546 = vmul.f32 %v753, %v1545
  %v1547 = vsub.f32 1.0, %v1546
  %v1548 = vmul.f32 %v1545, %v1547
  %v1549 = vadd.f32 %v1545, %v1548
  %vm1550 = vweird.f32 %v753
  %vm1551 = vweird.f32 %v1545
  %vm1552 = vmor %vm1550, %vm1551
  %v1553 = vsel %vm1552, %v1545, %v1549
  %v1554 = vand.u32 2147483647, %v753
  %vm1555 = vcmp.eq.f32.partialorder %v1554, 8.507059e+37
  %v1556 = vand.u32 %v753, 2147483648
  %v1557 = vor.u32 1.1754944e-38, %v1556
  %v1558 = vsel %vm1555, %v1557, %v1553
  %v1559 = vmul.f32 1.0, %v1558
  %v1560 = vrcp.pop %v754
  %v1561 = vmul.f32 %v754, %v1560
  %v1562 = vsub.f32 1.0, %v1561
  %v1563 = vmul.f32 %v1560, %v1562
  %v1564 = vadd.f32 %v1560, %v1563
  %vm1565 = vweird.f32 %v754
  %vm1566 = vweird.f32 %v1560
  %vm1567 = vmor %vm1565, %vm1566
  %v1568 = vsel %vm1567, %v1560, %v1564
  %v1569 = vand.u32 2147483647, %v754
  %vm1570 = vcmp.eq.f32.partialorder %v1569, 8.507059e+37
  %v1571 = vand.u32 %v754, 2147483648
  %v1572 = vor.u32 1.1754944e-38, %v1571
  %v1573 = vsel %vm1570, %v1572, %v1568
  %v1574 = vmul.f32 1.0, %v1573
  %v1575 = vrcp.pop %v755
  %v1576 = vmul.f32 %v755, %v1575
  %v1577 = vsub.f32 1.0, %v1576
  %v1578 = vmul.f32 %v1575, %v1577
  %v1579 = vadd.f32 %v1575, %v1578
  %vm1580 = vweird.f32 %v755
  %vm1581 = vweird.f32 %v1575
  %vm1582 = vmor %vm1580, %vm1581
  %v1583 = vsel %vm1582, %v1575, %v1579
  %v1584 = vand.u32 2147483647, %v755
  %vm1585 = vcmp.eq.f32.partialorder %v1584, 8.507059e+37
  %v1586 = vand.u32 %v755, 2147483648
  %v1587 = vor.u32 1.1754944e-38, %v1586
  %v1588 = vsel %vm1585, %v1587, %v1583
  %v1589 = vmul.f32 1.0, %v1588
  %v1590 = vrcp.pop %v756
  %v1591 = vmul.f32 %v756, %v1590
  %v1592 = vsub.f32 1.0, %v1591
  %v1593 = vmul.f32 %v1590, %v1592
  %v1594 = vadd.f32 %v1590, %v1593
  %vm1595 = vweird.f32 %v756
  %vm1596 = vweird.f32 %v1590
  %vm1597 = vmor %vm1595, %vm1596
  %v1598 = vsel %vm1597, %v1590, %v1594
  %v1599 = vand.u32 2147483647, %v756
  %vm1600 = vcmp.eq.f32.partialorder %v1599, 8.507059e+37
  %v1601 = vand.u32 %v756, 2147483648
  %v1602 = vor.u32 1.1754944e-38, %v1601
  %v1603 = vsel %vm1600, %v1602, %v1598
  %v1604 = vmul.f32 1.0, %v1603
  %v1605 = vrcp.pop %v757
  %v1606 = vmul.f32 %v757, %v1605
  %v1607 = vsub.f32 1.0, %v1606
  %v1608 = vmul.f32 %v1605, %v1607
  %v1609 = vadd.f32 %v1605, %v1608
  %vm1610 = vweird.f32 %v757
  %vm1611 = vweird.f32 %v1605
  %vm1612 = vmor %vm1610, %vm1611
  %v1613 = vsel %vm1612, %v1605, %v1609
  %v1614 = vand.u32 2147483647, %v757
  %vm1615 = vcmp.eq.f32.partialorder %v1614, 8.507059e+37
  %v1616 = vand.u32 %v757, 2147483648
  %v1617 = vor.u32 1.1754944e-38, %v1616
  %v1618 = vsel %vm1615, %v1617, %v1613
  %v1619 = vmul.f32 1.0, %v1618
  %v1620 = vrcp.pop %v758
  %v1621 = vmul.f32 %v758, %v1620
  %v1622 = vsub.f32 1.0, %v1621
  %v1623 = vmul.f32 %v1620, %v1622
  %v1624 = vadd.f32 %v1620, %v1623
  %vm1625 = vweird.f32 %v758
  %vm1626 = vweird.f32 %v1620
  %vm1627 = vmor %vm1625, %vm1626
  %v1628 = vsel %vm1627, %v1620, %v1624
  %v1629 = vand.u32 2147483647, %v758
  %vm1630 = vcmp.eq.f32.partialorder %v1629, 8.507059e+37
  %v1631 = vand.u32 %v758, 2147483648
  %v1632 = vor.u32 1.1754944e-38, %v1631
  %v1633 = vsel %vm1630, %v1632, %v1628
  %v1634 = vmul.f32 1.0, %v1633
  %v1635 = vrcp.pop %v759
  %v1636 = vmul.f32 %v759, %v1635
  %v1637 = vsub.f32 1.0, %v1636
  %v1638 = vmul.f32 %v1635, %v1637
  %v1639 = vadd.f32 %v1635, %v1638
  %vm1640 = vweird.f32 %v759
  %vm1641 = vweird.f32 %v1635
  %vm1642 = vmor %vm1640, %vm1641
  %v1643 = vsel %vm1642, %v1635, %v1639
  %v1644 = vand.u32 2147483647, %v759
  %vm1645 = vcmp.eq.f32.partialorder %v1644, 8.507059e+37
  %v1646 = vand.u32 %v759, 2147483648
  %v1647 = vor.u32 1.1754944e-38, %v1646
  %v1648 = vsel %vm1645, %v1647, %v1643
  %v1649 = vmul.f32 1.0, %v1648
  %v1650 = vrcp.pop %v760
  %v1651 = vmul.f32 %v760, %v1650
  %v1652 = vsub.f32 1.0, %v1651
  %v1653 = vmul.f32 %v1650, %v1652
  %v1654 = vadd.f32 %v1650, %v1653
  %vm1655 = vweird.f32 %v760
  %vm1656 = vweird.f32 %v1650
  %vm1657 = vmor %vm1655, %vm1656
  %v1658 = vsel %vm1657, %v1650, %v1654
  %v1659 = vand.u32 2147483647, %v760
  %vm1660 = vcmp.eq.f32.partialorder %v1659, 8.507059e+37
  %v1661 = vand.u32 %v760, 2147483648
  %v1662 = vor.u32 1.1754944e-38, %v1661
  %v1663 = vsel %vm1660, %v1662, %v1658
  %v1664 = vmul.f32 1.0, %v1663
  %v1665 = vrcp.pop %v761
  %v1666 = vmul.f32 %v761, %v1665
  %v1667 = vsub.f32 1.0, %v1666
  %v1668 = vmul.f32 %v1665, %v1667
  %v1669 = vadd.f32 %v1665, %v1668
  %vm1670 = vweird.f32 %v761
  %vm1671 = vweird.f32 %v1665
  %vm1672 = vmor %vm1670, %vm1671
  %v1673 = vsel %vm1672, %v1665, %v1669
  %v1674 = vand.u32 2147483647, %v761
  %vm1675 = vcmp.eq.f32.partialorder %v1674, 8.507059e+37
  %v1676 = vand.u32 %v761, 2147483648
  %v1677 = vor.u32 1.1754944e-38, %v1676
  %v1678 = vsel %vm1675, %v1677, %v1673
  %v1679 = vmul.f32 1.0, %v1678
  %v1680 = vrcp.pop %v762
  %v1681 = vmul.f32 %v762, %v1680
  %v1682 = vsub.f32 1.0, %v1681
  %v1683 = vmul.f32 %v1680, %v1682
  %v1684 = vadd.f32 %v1680, %v1683
  %vm1685 = vweird.f32 %v762
  %vm1686 = vweird.f32 %v1680
  %vm1687 = vmor %vm1685, %vm1686
  %v1688 = vsel %vm1687, %v1680, %v1684
  %v1689 = vand.u32 2147483647, %v762
  %vm1690 = vcmp.eq.f32.partialorder %v1689, 8.507059e+37
  %v1691 = vand.u32 %v762, 2147483648
  %v1692 = vor.u32 1.1754944e-38, %v1691
  %v1693 = vsel %vm1690, %v1692, %v1688
  %v1694 = vmul.f32 1.0, %v1693
  %v1695 = vrcp.pop %v763
  %v1696 = vmul.f32 %v763, %v1695
  %v1697 = vsub.f32 1.0, %v1696
  %v1698 = vmul.f32 %v1695, %v1697
  %v1699 = vadd.f32 %v1695, %v1698
  %vm1700 = vweird.f32 %v763
  %vm1701 = vweird.f32 %v1695
  %vm1702 = vmor %vm1700, %vm1701
  %v1703 = vsel %vm1702, %v1695, %v1699
  %v1704 = vand.u32 2147483647, %v763
  %vm1705 = vcmp.eq.f32.partialorder %v1704, 8.507059e+37
  %v1706 = vand.u32 %v763, 2147483648
  %v1707 = vor.u32 1.1754944e-38, %v1706
  %v1708 = vsel %vm1705, %v1707, %v1703
  %v1709 = vmul.f32 1.0, %v1708
  %v1710 = vrcp.pop %v764
  %v1711 = vmul.f32 %v764, %v1710
  %v1712 = vsub.f32 1.0, %v1711
  %v1713 = vmul.f32 %v1710, %v1712
  %v1714 = vadd.f32 %v1710, %v1713
  %vm1715 = vweird.f32 %v764
  %vm1716 = vweird.f32 %v1710
  %vm1717 = vmor %vm1715, %vm1716
  %v1718 = vsel %vm1717, %v1710, %v1714
  %v1719 = vand.u32 2147483647, %v764
  %vm1720 = vcmp.eq.f32.partialorder %v1719, 8.507059e+37
  %v1721 = vand.u32 %v764, 2147483648
  %v1722 = vor.u32 1.1754944e-38, %v1721
  %v1723 = vsel %vm1720, %v1722, %v1718
  %v1724 = vmul.f32 1.0, %v1723
  %v1725 = vld [vmem:[%s4] sm:$0xff]
  %v1726 = vld [vmem:[%s4 + $0x8] sm:$0xff]
  %v1727 = vld [vmem:[%s4 + $0x10] sm:$0xff]
  %v1728 = vld [vmem:[%s4 + $0x18] sm:$0xff]
  %v1729 = vld [vmem:[%s4 + $0x20] sm:$0xff]
  %v1730 = vld [vmem:[%s4 + $0x28] sm:$0xff]
  %v1731 = vld [vmem:[%s4 + $0x30] sm:$0xff]
  %v1732 = vld [vmem:[%s4 + $0x38] sm:$0xff]
  %v1733 = vld [vmem:[%s4 + $0x40] sm:$0xff]
  %v1734 = vld [vmem:[%s4 + $0x48] sm:$0xff]
  %v1735 = vld [vmem:[%s4 + $0x50] sm:$0xff]
  %v1736 = vld [vmem:[%s4 + $0x58] sm:$0xff]
  %v1737 = vld [vmem:[%s4 + $0x60] sm:$0xff]
  %v1738 = vld [vmem:[%s4 + $0x68] sm:$0xff]
  %v1739 = vld [vmem:[%s4 + $0x70] sm:$0xff]
  %v1740 = vld [vmem:[%s4 + $0x78] sm:$0xff]
  %v1741 = vld [vmem:[%s5] sm:$0x1]
  %v1743 = vperm.slane %v1741, 0
  %1745 = vmatpush.msra.mxu0 %v1740
  %1746 = vmatpush.msra.mxu0 %v1739
  %1747 = vmatpush.msra.mxu0 %v1738
  %1748 = vmatpush.msra.mxu0 %v1737
  %1749 = vmatpush.msra.mxu0 %v1736
  %1750 = vmatpush.msra.mxu0 %v1735
  %1751 = vmatpush.msra.mxu0 %v1734
  %1752 = vmatpush.msra.mxu0 %v1733
  %1753 = vmatpush.msra.mxu0 %v1732
  %1754 = vmatpush.msra.mxu0 %v1731
  %1755 = vmatpush.msra.mxu0 %v1730
  %1756 = vmatpush.msra.mxu0 %v1729
  %1757 = vmatpush.msra.mxu0 %v1728
  %1758 = vmatpush.msra.mxu0 %v1727
  %1759 = vmatpush.msra.mxu0 %v1726
  %1760 = vmatpush.msra.mxu0 %v1725
  %1761 = vmatmul.f32.gmra.mxu0 %v779
  %v1762 = vpop.f32.mrf.mxu0
  %v1763 = vadd.f32 %v1743, %v1762
  %1764 = vmatmul.f32.gmra.mxu0 %v794
  %v1765 = vpop.f32.mrf.mxu0
  %v1766 = vadd.f32 %v1743, %v1765
  %1767 = vmatmul.f32.gmra.mxu0 %v809
  %v1768 = vpop.f32.mrf.mxu0
  %v1769 = vadd.f32 %v1743, %v1768
  %1770 = vmatmul.f32.gmra.mxu0 %v824
  %v1771 = vpop.f32.mrf.mxu0
  %v1772 = vadd.f32 %v1743, %v1771
  %1773 = vmatmul.f32.gmra.mxu0 %v839
  %v1774 = vpop.f32.mrf.mxu0
  %v1775 = vadd.f32 %v1743, %v1774
  %1776 = vmatmul.f32.gmra.mxu0 %v854
  %v1777 = vpop.f32.mrf.mxu0
  %v1778 = vadd.f32 %v1743, %v1777
  %1779 = vmatmul.f32.gmra.mxu0 %v869
  %v1780 = vpop.f32.mrf.mxu0
  %v1781 = vadd.f32 %v1743, %v1780
  %1782 = vmatmul.f32.gmra.mxu0 %v884
  %v1783 = vpop.f32.mrf.mxu0
  %v1784 = vadd.f32 %v1743, %v1783
  %1785 = vmatmul.f32.gmra.mxu0 %v899
  %v1786 = vpop.f32.mrf.mxu0
  %v1787 = vadd.f32 %v1743, %v1786
  %1788 = vmatmul.f32.gmra.mxu0 %v914
  %v1789 = vpop.f32.mrf.mxu0
  %v1790 = vadd.f32 %v1743, %v1789
  %1791 = vmatmul.f32.gmra.mxu0 %v929
  %v1792 = vpop.f32.mrf.mxu0
  %v1793 = vadd.f32 %v1743, %v1792
  %1794 = vmatmul.f32.gmra.mxu0 %v944
  %v1795 = vpop.f32.mrf.mxu0
  %v1796 = vadd.f32 %v1743, %v1795
  %1797 = vmatmul.f32.gmra.mxu0 %v959
  %v1798 = vpop.f32.mrf.mxu0
  %v1799 = vadd.f32 %v1743, %v1798
  %1800 = vmatmul.f32.gmra.mxu0 %v974
  %v1801 = vpop.f32.mrf.mxu0
  %v1802 = vadd.f32 %v1743, %v1801
  %1803 = vmatmul.f32.gmra.mxu0 %v989
  %v1804 = vpop.f32.mrf.mxu0
  %v1805 = vadd.f32 %v1743, %v1804
  %1806 = vmatmul.f32.gmra.mxu0 %v1004
  %v1807 = vpop.f32.mrf.mxu0
  %v1808 = vadd.f32 %v1743, %v1807
  %1809 = vmatmul.f32.gmra.mxu0 %v1019
  %v1810 = vpop.f32.mrf.mxu0
  %v1811 = vadd.f32 %v1743, %v1810
  %1812 = vmatmul.f32.gmra.mxu0 %v1034
  %v1813 = vpop.f32.mrf.mxu0
  %v1814 = vadd.f32 %v1743, %v1813
  %1815 = vmatmul.f32.gmra.mxu0 %v1049
  %v1816 = vpop.f32.mrf.mxu0
  %v1817 = vadd.f32 %v1743, %v1816
  %1818 = vmatmul.f32.gmra.mxu0 %v1064
  %v1819 = vpop.f32.mrf.mxu0
  %v1820 = vadd.f32 %v1743, %v1819
  %1821 = vmatmul.f32.gmra.mxu0 %v1079
  %v1822 = vpop.f32.mrf.mxu0
  %v1823 = vadd.f32 %v1743, %v1822
  %1824 = vmatmul.f32.gmra.mxu0 %v1094
  %v1825 = vpop.f32.mrf.mxu0
  %v1826 = vadd.f32 %v1743, %v1825
  %1827 = vmatmul.f32.gmra.mxu0 %v1109
  %v1828 = vpop.f32.mrf.mxu0
  %v1829 = vadd.f32 %v1743, %v1828
  %1830 = vmatmul.f32.gmra.mxu0 %v1124
  %v1831 = vpop.f32.mrf.mxu0
  %v1832 = vadd.f32 %v1743, %v1831
  %1833 = vmatmul.f32.gmra.mxu0 %v1139
  %v1834 = vpop.f32.mrf.mxu0
  %v1835 = vadd.f32 %v1743, %v1834
  %1836 = vmatmul.f32.gmra.mxu0 %v1154
  %v1837 = vpop.f32.mrf.mxu0
  %v1838 = vadd.f32 %v1743, %v1837
  %1839 = vmatmul.f32.gmra.mxu0 %v1169
  %v1840 = vpop.f32.mrf.mxu0
  %v1841 = vadd.f32 %v1743, %v1840
  %1842 = vmatmul.f32.gmra.mxu0 %v1184
  %v1843 = vpop.f32.mrf.mxu0
  %v1844 = vadd.f32 %v1743, %v1843
  %1845 = vmatmul.f32.gmra.mxu0 %v1199
  %v1846 = vpop.f32.mrf.mxu0
  %v1847 = vadd.f32 %v1743, %v1846
  %1848 = vmatmul.f32.gmra.mxu0 %v1214
  %v1849 = vpop.f32.mrf.mxu0
  %v1850 = vadd.f32 %v1743, %v1849
  %1851 = vmatmul.f32.gmra.mxu0 %v1229
  %v1852 = vpop.f32.mrf.mxu0
  %v1853 = vadd.f32 %v1743, %v1852
  %1854 = vmatmul.f32.gmra.mxu0 %v1244
  %v1855 = vpop.f32.mrf.mxu0
  %v1856 = vadd.f32 %v1743, %v1855
  %1857 = vmatmul.f32.gmra.mxu0 %v1259
  %v1858 = vpop.f32.mrf.mxu0
  %v1859 = vadd.f32 %v1743, %v1858
  %1860 = vmatmul.f32.gmra.mxu0 %v1274
  %v1861 = vpop.f32.mrf.mxu0
  %v1862 = vadd.f32 %v1743, %v1861
  %1863 = vmatmul.f32.gmra.mxu0 %v1289
  %v1864 = vpop.f32.mrf.mxu0
  %v1865 = vadd.f32 %v1743, %v1864
  %1866 = vmatmul.f32.gmra.mxu0 %v1304
  %v1867 = vpop.f32.mrf.mxu0
  %v1868 = vadd.f32 %v1743, %v1867
  %1869 = vmatmul.f32.gmra.mxu0 %v1319
  %v1870 = vpop.f32.mrf.mxu0
  %v1871 = vadd.f32 %v1743, %v1870
  %1872 = vmatmul.f32.gmra.mxu0 %v1334
  %v1873 = vpop.f32.mrf.mxu0
  %v1874 = vadd.f32 %v1743, %v1873
  %1875 = vmatmul.f32.gmra.mxu0 %v1349
  %v1876 = vpop.f32.mrf.mxu0
  %v1877 = vadd.f32 %v1743, %v1876
  %1878 = vmatmul.f32.gmra.mxu0 %v1364
  %v1879 = vpop.f32.mrf.mxu0
  %v1880 = vadd.f32 %v1743, %v1879
  %1881 = vmatmul.f32.gmra.mxu0 %v1379
  %v1882 = vpop.f32.mrf.mxu0
  %v1883 = vadd.f32 %v1743, %v1882
  %1884 = vmatmul.f32.gmra.mxu0 %v1394
  %v1885 = vpop.f32.mrf.mxu0
  %v1886 = vadd.f32 %v1743, %v1885
  %1887 = vmatmul.f32.gmra.mxu0 %v1409
  %v1888 = vpop.f32.mrf.mxu0
  %v1889 = vadd.f32 %v1743, %v1888
  %1890 = vmatmul.f32.gmra.mxu0 %v1424
  %v1891 = vpop.f32.mrf.mxu0
  %v1892 = vadd.f32 %v1743, %v1891
  %1893 = vmatmul.f32.gmra.mxu0 %v1439
  %v1894 = vpop.f32.mrf.mxu0
  %v1895 = vadd.f32 %v1743, %v1894
  %1896 = vmatmul.f32.gmra.mxu0 %v1454
  %v1897 = vpop.f32.mrf.mxu0
  %v1898 = vadd.f32 %v1743, %v1897
  %1899 = vmatmul.f32.gmra.mxu0 %v1469
  %v1900 = vpop.f32.mrf.mxu0
  %v1901 = vadd.f32 %v1743, %v1900
  %1902 = vmatmul.f32.gmra.mxu0 %v1484
  %v1903 = vpop.f32.mrf.mxu0
  %v1904 = vadd.f32 %v1743, %v1903
  %1905 = vmatmul.f32.gmra.mxu0 %v1499
  %v1906 = vpop.f32.mrf.mxu0
  %v1907 = vadd.f32 %v1743, %v1906
  %1908 = vmatmul.f32.gmra.mxu0 %v1514
  %v1909 = vpop.f32.mrf.mxu0
  %v1910 = vadd.f32 %v1743, %v1909
  %1911 = vmatmul.f32.gmra.mxu0 %v1529
  %v1912 = vpop.f32.mrf.mxu0
  %v1913 = vadd.f32 %v1743, %v1912
  %1914 = vmatmul.f32.gmra.mxu0 %v1544
  %v1915 = vpop.f32.mrf.mxu0
  %v1916 = vadd.f32 %v1743, %v1915
  %1917 = vmatmul.f32.gmra.mxu0 %v1559
  %v1918 = vpop.f32.mrf.mxu0
  %v1919 = vadd.f32 %v1743, %v1918
  %1920 = vmatmul.f32.gmra.mxu0 %v1574
  %v1921 = vpop.f32.mrf.mxu0
  %v1922 = vadd.f32 %v1743, %v1921
  %1923 = vmatmul.f32.gmra.mxu0 %v1589
  %v1924 = vpop.f32.mrf.mxu0
  %v1925 = vadd.f32 %v1743, %v1924
  %1926 = vmatmul.f32.gmra.mxu0 %v1604
  %v1927 = vpop.f32.mrf.mxu0
  %v1928 = vadd.f32 %v1743, %v1927
  %1929 = vmatmul.f32.gmra.mxu0 %v1619
  %v1930 = vpop.f32.mrf.mxu0
  %v1931 = vadd.f32 %v1743, %v1930
  %1932 = vmatmul.f32.gmra.mxu0 %v1634
  %v1933 = vpop.f32.mrf.mxu0
  %v1934 = vadd.f32 %v1743, %v1933
  %1935 = vmatmul.f32.gmra.mxu0 %v1649
  %v1936 = vpop.f32.mrf.mxu0
  %v1937 = vadd.f32 %v1743, %v1936
  %1938 = vmatmul.f32.gmra.mxu0 %v1664
  %v1939 = vpop.f32.mrf.mxu0
  %v1940 = vadd.f32 %v1743, %v1939
  %1941 = vmatmul.f32.gmra.mxu0 %v1679
  %v1942 = vpop.f32.mrf.mxu0
  %v1943 = vadd.f32 %v1743, %v1942
  %1944 = vmatmul.f32.gmra.mxu0 %v1694
  %v1945 = vpop.f32.mrf.mxu0
  %v1946 = vadd.f32 %v1743, %v1945
  %1947 = vmatmul.f32.gmra.mxu0 %v1709
  %v1948 = vpop.f32.mrf.mxu0
  %v1949 = vadd.f32 %v1743, %v1948
  %1950 = vmatmul.f32.gmra.mxu0 %v1724
  %v1951 = vpop.f32.mrf.mxu0
  %v1952 = vadd.f32 %v1743, %v1951
  %1953 = vdwg.mxu0
  %v1954 = vld [vmem:[%s1] sm:$0xff]
  %v1955 = vld [vmem:[%s1 + $0x8] sm:$0xff]
  %v1956 = vld [vmem:[%s1 + $0x10] sm:$0xff]
  %v1957 = vld [vmem:[%s1 + $0x18] sm:$0xff]
  %v1958 = vld [vmem:[%s1 + $0x20] sm:$0xff]
  %v1959 = vld [vmem:[%s1 + $0x28] sm:$0xff]
  %v1960 = vld [vmem:[%s1 + $0x30] sm:$0xff]
  %v1961 = vld [vmem:[%s1 + $0x38] sm:$0xff]
  %v1962 = vld [vmem:[%s1 + $0x40] sm:$0xff]
  %v1963 = vld [vmem:[%s1 + $0x48] sm:$0xff]
  %v1964 = vld [vmem:[%s1 + $0x50] sm:$0xff]
  %v1965 = vld [vmem:[%s1 + $0x58] sm:$0xff]
  %v1966 = vld [vmem:[%s1 + $0x60] sm:$0xff]
  %v1967 = vld [vmem:[%s1 + $0x68] sm:$0xff]
  %v1968 = vld [vmem:[%s1 + $0x70] sm:$0xff]
  %v1969 = vld [vmem:[%s1 + $0x78] sm:$0xff]
  %v1970 = vld [vmem:[%s1 + $0x80] sm:$0xff]
  %v1971 = vld [vmem:[%s1 + $0x88] sm:$0xff]
  %v1972 = vld [vmem:[%s1 + $0x90] sm:$0xff]
  %v1973 = vld [vmem:[%s1 + $0x98] sm:$0xff]
  %v1974 = vld [vmem:[%s1 + $0xa0] sm:$0xff]
  %v1975 = vld [vmem:[%s1 + $0xa8] sm:$0xff]
  %v1976 = vld [vmem:[%s1 + $0xb0] sm:$0xff]
  %v1977 = vld [vmem:[%s1 + $0xb8] sm:$0xff]
  %v1978 = vld [vmem:[%s1 + $0xc0] sm:$0xff]
  %v1979 = vld [vmem:[%s1 + $0xc8] sm:$0xff]
  %v1980 = vld [vmem:[%s1 + $0xd0] sm:$0xff]
  %v1981 = vld [vmem:[%s1 + $0xd8] sm:$0xff]
  %v1982 = vld [vmem:[%s1 + $0xe0] sm:$0xff]
  %v1983 = vld [vmem:[%s1 + $0xe8] sm:$0xff]
  %v1984 = vld [vmem:[%s1 + $0xf0] sm:$0xff]
  %v1985 = vld [vmem:[%s1 + $0xf8] sm:$0xff]
  %v1986 = vld [vmem:[%s1 + $0x100] sm:$0xff]
  %v1987 = vld [vmem:[%s1 + $0x108] sm:$0xff]
  %v1988 = vld [vmem:[%s1 + $0x110] sm:$0xff]
  %v1989 = vld [vmem:[%s1 + $0x118] sm:$0xff]
  %v1990 = vld [vmem:[%s1 + $0x120] sm:$0xff]
  %v1991 = vld [vmem:[%s1 + $0x128] sm:$0xff]
  %v1992 = vld [vmem:[%s1 + $0x130] sm:$0xff]
  %v1993 = vld [vmem:[%s1 + $0x138] sm:$0xff]
  %v1994 = vld [vmem:[%s1 + $0x140] sm:$0xff]
  %v1995 = vld [vmem:[%s1 + $0x148] sm:$0xff]
  %v1996 = vld [vmem:[%s1 + $0x150] sm:$0xff]
  %v1997 = vld [vmem:[%s1 + $0x158] sm:$0xff]
  %v1998 = vld [vmem:[%s1 + $0x160] sm:$0xff]
  %v1999 = vld [vmem:[%s1 + $0x168] sm:$0xff]
  %v2000 = vld [vmem:[%s1 + $0x170] sm:$0xff]
  %v2001 = vld [vmem:[%s1 + $0x178] sm:$0xff]
  %v2002 = vld [vmem:[%s1 + $0x180] sm:$0xff]
  %v2003 = vld [vmem:[%s1 + $0x188] sm:$0xff]
  %v2004 = vld [vmem:[%s1 + $0x190] sm:$0xff]
  %v2005 = vld [vmem:[%s1 + $0x198] sm:$0xff]
  %v2006 = vld [vmem:[%s1 + $0x1a0] sm:$0xff]
  %v2007 = vld [vmem:[%s1 + $0x1a8] sm:$0xff]
  %v2008 = vld [vmem:[%s1 + $0x1b0] sm:$0xff]
  %v2009 = vld [vmem:[%s1 + $0x1b8] sm:$0xff]
  %v2010 = vld [vmem:[%s1 + $0x1c0] sm:$0xff]
  %v2011 = vld [vmem:[%s1 + $0x1c8] sm:$0xff]
  %v2012 = vld [vmem:[%s1 + $0x1d0] sm:$0xff]
  %v2013 = vld [vmem:[%s1 + $0x1d8] sm:$0xff]
  %v2014 = vld [vmem:[%s1 + $0x1e0] sm:$0xff]
  %v2015 = vld [vmem:[%s1 + $0x1e8] sm:$0xff]
  %v2016 = vld [vmem:[%s1 + $0x1f0] sm:$0xff]
  %v2017 = vld [vmem:[%s1 + $0x1f8] sm:$0xff]
  %v2018 = vmul.f32 %v1763, %v1954
  %v2019 = vmul.f32 %v1766, %v1955
  %v2020 = vmul.f32 %v1769, %v1956
  %v2021 = vmul.f32 %v1772, %v1957
  %v2022 = vmul.f32 %v1775, %v1958
  %v2023 = vmul.f32 %v1778, %v1959
  %v2024 = vmul.f32 %v1781, %v1960
  %v2025 = vmul.f32 %v1784, %v1961
  %v2026 = vmul.f32 %v1787, %v1962
  %v2027 = vmul.f32 %v1790, %v1963
  %v2028 = vmul.f32 %v1793, %v1964
  %v2029 = vmul.f32 %v1796, %v1965
  %v2030 = vmul.f32 %v1799, %v1966
  %v2031 = vmul.f32 %v1802, %v1967
  %v2032 = vmul.f32 %v1805, %v1968
  %v2033 = vmul.f32 %v1808, %v1969
  %v2034 = vmul.f32 %v1811, %v1970
  %v2035 = vmul.f32 %v1814, %v1971
  %v2036 = vmul.f32 %v1817, %v1972
  %v2037 = vmul.f32 %v1820, %v1973
  %v2038 = vmul.f32 %v1823, %v1974
  %v2039 = vmul.f32 %v1826, %v1975
  %v2040 = vmul.f32 %v1829, %v1976
  %v2041 = vmul.f32 %v1832, %v1977
  %v2042 = vmul.f32 %v1835, %v1978
  %v2043 = vmul.f32 %v1838, %v1979
  %v2044 = vmul.f32 %v1841, %v1980
  %v2045 = vmul.f32 %v1844, %v1981
  %v2046 = vmul.f32 %v1847, %v1982
  %v2047 = vmul.f32 %v1850, %v1983
  %v2048 = vmul.f32 %v1853, %v1984
  %v2049 = vmul.f32 %v1856, %v1985
  %v2050 = vmul.f32 %v1859, %v1986
  %v2051 = vmul.f32 %v1862, %v1987
  %v2052 = vmul.f32 %v1865, %v1988
  %v2053 = vmul.f32 %v1868, %v1989
  %v2054 = vmul.f32 %v1871, %v1990
  %v2055 = vmul.f32 %v1874, %v1991
  %v2056 = vmul.f32 %v1877, %v1992
  %v2057 = vmul.f32 %v1880, %v1993
  %v2058 = vmul.f32 %v1883, %v1994
  %v2059 = vmul.f32 %v1886, %v1995
  %v2060 = vmul.f32 %v1889, %v1996
  %v2061 = vmul.f32 %v1892, %v1997
  %v2062 = vmul.f32 %v1895, %v1998
  %v2063 = vmul.f32 %v1898, %v1999
  %v2064 = vmul.f32 %v1901, %v2000
  %v2065 = vmul.f32 %v1904, %v2001
  %v2066 = vmul.f32 %v1907, %v2002
  %v2067 = vmul.f32 %v1910, %v2003
  %v2068 = vmul.f32 %v1913, %v2004
  %v2069 = vmul.f32 %v1916, %v2005
  %v2070 = vmul.f32 %v1919, %v2006
  %v2071 = vmul.f32 %v1922, %v2007
  %v2072 = vmul.f32 %v1925, %v2008
  %v2073 = vmul.f32 %v1928, %v2009
  %v2074 = vmul.f32 %v1931, %v2010
  %v2075 = vmul.f32 %v1934, %v2011
  %v2076 = vmul.f32 %v1937, %v2012
  %v2077 = vmul.f32 %v1940, %v2013
  %v2078 = vmul.f32 %v1943, %v2014
  %v2079 = vmul.f32 %v1946, %v2015
  %v2080 = vmul.f32 %v1949, %v2016
  %v2081 = vmul.f32 %v1952, %v2017
  %v2082 = vld [vmem:[%s6] sm:$0xff]
  %v2083 = vld [vmem:[%s6 + $0x8] sm:$0xff]
  %v2084 = vld [vmem:[%s7] sm:$0x1]
  %v2086 = vperm.slane %v2084, 0
  %vm2088 = vcmask 130048
  %v2090 = vsel %vm2088, %v2018, 0
  %v2093 = vsel %vm2088, %v2019, 0
  %v2096 = vsel %vm2088, %v2020, 0
  %v2099 = vsel %vm2088, %v2021, 0
  %v2102 = vsel %vm2088, %v2022, 0
  %v2105 = vsel %vm2088, %v2023, 0
  %v2108 = vsel %vm2088, %v2024, 0
  %v2111 = vsel %vm2088, %v2025, 0
  %v2114 = vsel %vm2088, %v2026, 0
  %v2117 = vsel %vm2088, %v2027, 0
  %v2120 = vsel %vm2088, %v2028, 0
  %v2123 = vsel %vm2088, %v2029, 0
  %v2126 = vsel %vm2088, %v2030, 0
  %v2129 = vsel %vm2088, %v2031, 0
  %v2132 = vsel %vm2088, %v2032, 0
  %v2135 = vsel %vm2088, %v2033, 0
  %v2138 = vsel %vm2088, %v2034, 0
  %v2141 = vsel %vm2088, %v2035, 0
  %v2144 = vsel %vm2088, %v2036, 0
  %v2147 = vsel %vm2088, %v2037, 0
  %v2150 = vsel %vm2088, %v2038, 0
  %v2153 = vsel %vm2088, %v2039, 0
  %v2156 = vsel %vm2088, %v2040, 0
  %v2159 = vsel %vm2088, %v2041, 0
  %v2162 = vsel %vm2088, %v2042, 0
  %v2165 = vsel %vm2088, %v2043, 0
  %v2168 = vsel %vm2088, %v2044, 0
  %v2171 = vsel %vm2088, %v2045, 0
  %v2174 = vsel %vm2088, %v2046, 0
  %v2177 = vsel %vm2088, %v2047, 0
  %v2180 = vsel %vm2088, %v2048, 0
  %v2183 = vsel %vm2088, %v2049, 0
  %v2186 = vsel %vm2088, %v2050, 0
  %v2189 = vsel %vm2088, %v2051, 0
  %v2192 = vsel %vm2088, %v2052, 0
  %v2195 = vsel %vm2088, %v2053, 0
  %v2198 = vsel %vm2088, %v2054, 0
  %v2201 = vsel %vm2088, %v2055, 0
  %v2204 = vsel %vm2088, %v2056, 0
  %v2207 = vsel %vm2088, %v2057, 0
  %v2210 = vsel %vm2088, %v2058, 0
  %v2213 = vsel %vm2088, %v2059, 0
  %v2216 = vsel %vm2088, %v2060, 0
  %v2219 = vsel %vm2088, %v2061, 0
  %v2222 = vsel %vm2088, %v2062, 0
  %v2225 = vsel %vm2088, %v2063, 0
  %v2228 = vsel %vm2088, %v2064, 0
  %v2231 = vsel %vm2088, %v2065, 0
  %v2234 = vsel %vm2088, %v2066, 0
  %v2237 = vsel %vm2088, %v2067, 0
  %v2240 = vsel %vm2088, %v2068, 0
  %v2243 = vsel %vm2088, %v2069, 0
  %v2246 = vsel %vm2088, %v2070, 0
  %v2249 = vsel %vm2088, %v2071, 0
  %v2252 = vsel %vm2088, %v2072, 0
  %v2255 = vsel %vm2088, %v2073, 0
  %v2258 = vsel %vm2088, %v2074, 0
  %v2261 = vsel %vm2088, %v2075, 0
  %v2264 = vsel %vm2088, %v2076, 0
  %v2267 = vsel %vm2088, %v2077, 0
  %v2270 = vsel %vm2088, %v2078, 0
  %v2273 = vsel %vm2088, %v2079, 0
  %v2276 = vsel %vm2088, %v2080, 0
  %v2279 = vsel %vm2088, %v2081, 0
  %2281 = vmatpush.msra.mxu0 0.0
  %2282 = vmatpush.msra.mxu0 0.0
  %2283 = vmatpush.msra.mxu0 0.0
  %2284 = vmatpush.msra.mxu0 0.0
  %2285 = vmatpush.msra.mxu0 0.0
  %2286 = vmatpush.msra.mxu0 0.0
  %2287 = vmatpush.msra.mxu0 0.0
  %2288 = vmatpush.msra.mxu0 0.0
  %2289 = vmatpush.msra.mxu0 0.0
  %2290 = vmatpush.msra.mxu0 0.0
  %2291 = vmatpush.msra.mxu0 0.0
  %2292 = vmatpush.msra.mxu0 0.0
  %2293 = vmatpush.msra.mxu0 0.0
  %2294 = vmatpush.msra.mxu0 0.0
  %2295 = vmatpush.msra.mxu0 %v2083
  %2296 = vmatpush.msra.mxu0 %v2082
  %2297 = vmatmul.f32.gmra.mxu0 %v2090
  %v2298 = vpop.f32.mrf.mxu0
  %v2299 = vadd.f32 %v2086, %v2298
  %2300 = vmatmul.f32.gmra.mxu0 %v2093
  %v2301 = vpop.f32.mrf.mxu0
  %v2302 = vadd.f32 %v2086, %v2301
  %2303 = vmatmul.f32.gmra.mxu0 %v2096
  %v2304 = vpop.f32.mrf.mxu0
  %v2305 = vadd.f32 %v2086, %v2304
  %2306 = vmatmul.f32.gmra.mxu0 %v2099
  %v2307 = vpop.f32.mrf.mxu0
  %v2308 = vadd.f32 %v2086, %v2307
  %2309 = vmatmul.f32.gmra.mxu0 %v2102
  %v2310 = vpop.f32.mrf.mxu0
  %v2311 = vadd.f32 %v2086, %v2310
  %2312 = vmatmul.f32.gmra.mxu0 %v2105
  %v2313 = vpop.f32.mrf.mxu0
  %v2314 = vadd.f32 %v2086, %v2313
  %2315 = vmatmul.f32.gmra.mxu0 %v2108
  %v2316 = vpop.f32.mrf.mxu0
  %v2317 = vadd.f32 %v2086, %v2316
  %2318 = vmatmul.f32.gmra.mxu0 %v2111
  %v2319 = vpop.f32.mrf.mxu0
  %v2320 = vadd.f32 %v2086, %v2319
  %2321 = vmatmul.f32.gmra.mxu0 %v2114
  %v2322 = vpop.f32.mrf.mxu0
  %v2323 = vadd.f32 %v2086, %v2322
  %2324 = vmatmul.f32.gmra.mxu0 %v2117
  %v2325 = vpop.f32.mrf.mxu0
  %v2326 = vadd.f32 %v2086, %v2325
  %2327 = vmatmul.f32.gmra.mxu0 %v2120
  %v2328 = vpop.f32.mrf.mxu0
  %v2329 = vadd.f32 %v2086, %v2328
  %2330 = vmatmul.f32.gmra.mxu0 %v2123
  %v2331 = vpop.f32.mrf.mxu0
  %v2332 = vadd.f32 %v2086, %v2331
  %2333 = vmatmul.f32.gmra.mxu0 %v2126
  %v2334 = vpop.f32.mrf.mxu0
  %v2335 = vadd.f32 %v2086, %v2334
  %2336 = vmatmul.f32.gmra.mxu0 %v2129
  %v2337 = vpop.f32.mrf.mxu0
  %v2338 = vadd.f32 %v2086, %v2337
  %2339 = vmatmul.f32.gmra.mxu0 %v2132
  %v2340 = vpop.f32.mrf.mxu0
  %v2341 = vadd.f32 %v2086, %v2340
  %2342 = vmatmul.f32.gmra.mxu0 %v2135
  %v2343 = vpop.f32.mrf.mxu0
  %v2344 = vadd.f32 %v2086, %v2343
  %2345 = vmatmul.f32.gmra.mxu0 %v2138
  %v2346 = vpop.f32.mrf.mxu0
  %v2347 = vadd.f32 %v2086, %v2346
  %2348 = vmatmul.f32.gmra.mxu0 %v2141
  %v2349 = vpop.f32.mrf.mxu0
  %v2350 = vadd.f32 %v2086, %v2349
  %2351 = vmatmul.f32.gmra.mxu0 %v2144
  %v2352 = vpop.f32.mrf.mxu0
  %v2353 = vadd.f32 %v2086, %v2352
  %2354 = vmatmul.f32.gmra.mxu0 %v2147
  %v2355 = vpop.f32.mrf.mxu0
  %v2356 = vadd.f32 %v2086, %v2355
  %2357 = vmatmul.f32.gmra.mxu0 %v2150
  %v2358 = vpop.f32.mrf.mxu0
  %v2359 = vadd.f32 %v2086, %v2358
  %2360 = vmatmul.f32.gmra.mxu0 %v2153
  %v2361 = vpop.f32.mrf.mxu0
  %v2362 = vadd.f32 %v2086, %v2361
  %2363 = vmatmul.f32.gmra.mxu0 %v2156
  %v2364 = vpop.f32.mrf.mxu0
  %v2365 = vadd.f32 %v2086, %v2364
  %2366 = vmatmul.f32.gmra.mxu0 %v2159
  %v2367 = vpop.f32.mrf.mxu0
  %v2368 = vadd.f32 %v2086, %v2367
  %2369 = vmatmul.f32.gmra.mxu0 %v2162
  %v2370 = vpop.f32.mrf.mxu0
  %v2371 = vadd.f32 %v2086, %v2370
  %2372 = vmatmul.f32.gmra.mxu0 %v2165
  %v2373 = vpop.f32.mrf.mxu0
  %v2374 = vadd.f32 %v2086, %v2373
  %2375 = vmatmul.f32.gmra.mxu0 %v2168
  %v2376 = vpop.f32.mrf.mxu0
  %v2377 = vadd.f32 %v2086, %v2376
  %2378 = vmatmul.f32.gmra.mxu0 %v2171
  %v2379 = vpop.f32.mrf.mxu0
  %v2380 = vadd.f32 %v2086, %v2379
  %2381 = vmatmul.f32.gmra.mxu0 %v2174
  %v2382 = vpop.f32.mrf.mxu0
  %v2383 = vadd.f32 %v2086, %v2382
  %2384 = vmatmul.f32.gmra.mxu0 %v2177
  %v2385 = vpop.f32.mrf.mxu0
  %v2386 = vadd.f32 %v2086, %v2385
  %2387 = vmatmul.f32.gmra.mxu0 %v2180
  %v2388 = vpop.f32.mrf.mxu0
  %v2389 = vadd.f32 %v2086, %v2388
  %2390 = vmatmul.f32.gmra.mxu0 %v2183
  %v2391 = vpop.f32.mrf.mxu0
  %v2392 = vadd.f32 %v2086, %v2391
  %2393 = vmatmul.f32.gmra.mxu0 %v2186
  %v2394 = vpop.f32.mrf.mxu0
  %v2395 = vadd.f32 %v2086, %v2394
  %2396 = vmatmul.f32.gmra.mxu0 %v2189
  %v2397 = vpop.f32.mrf.mxu0
  %v2398 = vadd.f32 %v2086, %v2397
  %2399 = vmatmul.f32.gmra.mxu0 %v2192
  %v2400 = vpop.f32.mrf.mxu0
  %v2401 = vadd.f32 %v2086, %v2400
  %2402 = vmatmul.f32.gmra.mxu0 %v2195
  %v2403 = vpop.f32.mrf.mxu0
  %v2404 = vadd.f32 %v2086, %v2403
  %2405 = vmatmul.f32.gmra.mxu0 %v2198
  %v2406 = vpop.f32.mrf.mxu0
  %v2407 = vadd.f32 %v2086, %v2406
  %2408 = vmatmul.f32.gmra.mxu0 %v2201
  %v2409 = vpop.f32.mrf.mxu0
  %v2410 = vadd.f32 %v2086, %v2409
  %2411 = vmatmul.f32.gmra.mxu0 %v2204
  %v2412 = vpop.f32.mrf.mxu0
  %v2413 = vadd.f32 %v2086, %v2412
  %2414 = vmatmul.f32.gmra.mxu0 %v2207
  %v2415 = vpop.f32.mrf.mxu0
  %v2416 = vadd.f32 %v2086, %v2415
  %2417 = vmatmul.f32.gmra.mxu0 %v2210
  %v2418 = vpop.f32.mrf.mxu0
  %v2419 = vadd.f32 %v2086, %v2418
  %2420 = vmatmul.f32.gmra.mxu0 %v2213
  %v2421 = vpop.f32.mrf.mxu0
  %v2422 = vadd.f32 %v2086, %v2421
  %2423 = vmatmul.f32.gmra.mxu0 %v2216
  %v2424 = vpop.f32.mrf.mxu0
  %v2425 = vadd.f32 %v2086, %v2424
  %2426 = vmatmul.f32.gmra.mxu0 %v2219
  %v2427 = vpop.f32.mrf.mxu0
  %v2428 = vadd.f32 %v2086, %v2427
  %2429 = vmatmul.f32.gmra.mxu0 %v2222
  %v2430 = vpop.f32.mrf.mxu0
  %v2431 = vadd.f32 %v2086, %v2430
  %2432 = vmatmul.f32.gmra.mxu0 %v2225
  %v2433 = vpop.f32.mrf.mxu0
  %v2434 = vadd.f32 %v2086, %v2433
  %2435 = vmatmul.f32.gmra.mxu0 %v2228
  %v2436 = vpop.f32.mrf.mxu0
  %v2437 = vadd.f32 %v2086, %v2436
  %2438 = vmatmul.f32.gmra.mxu0 %v2231
  %v2439 = vpop.f32.mrf.mxu0
  %v2440 = vadd.f32 %v2086, %v2439
  %2441 = vmatmul.f32.gmra.mxu0 %v2234
  %v2442 = vpop.f32.mrf.mxu0
  %v2443 = vadd.f32 %v2086, %v2442
  %2444 = vmatmul.f32.gmra.mxu0 %v2237
  %v2445 = vpop.f32.mrf.mxu0
  %v2446 = vadd.f32 %v2086, %v2445
  %2447 = vmatmul.f32.gmra.mxu0 %v2240
  %v2448 = vpop.f32.mrf.mxu0
  %v2449 = vadd.f32 %v2086, %v2448
  %2450 = vmatmul.f32.gmra.mxu0 %v2243
  %v2451 = vpop.f32.mrf.mxu0
  %v2452 = vadd.f32 %v2086, %v2451
  %2453 = vmatmul.f32.gmra.mxu0 %v2246
  %v2454 = vpop.f32.mrf.mxu0
  %v2455 = vadd.f32 %v2086, %v2454
  %2456 = vmatmul.f32.gmra.mxu0 %v2249
  %v2457 = vpop.f32.mrf.mxu0
  %v2458 = vadd.f32 %v2086, %v2457
  %2459 = vmatmul.f32.gmra.mxu0 %v2252
  %v2460 = vpop.f32.mrf.mxu0
  %v2461 = vadd.f32 %v2086, %v2460
  %2462 = vmatmul.f32.gmra.mxu0 %v2255
  %v2463 = vpop.f32.mrf.mxu0
  %v2464 = vadd.f32 %v2086, %v2463
  %2465 = vmatmul.f32.gmra.mxu0 %v2258
  %v2466 = vpop.f32.mrf.mxu0
  %v2467 = vadd.f32 %v2086, %v2466
  %2468 = vmatmul.f32.gmra.mxu0 %v2261
  %v2469 = vpop.f32.mrf.mxu0
  %v2470 = vadd.f32 %v2086, %v2469
  %2471 = vmatmul.f32.gmra.mxu0 %v2264
  %v2472 = vpop.f32.mrf.mxu0
  %v2473 = vadd.f32 %v2086, %v2472
  %2474 = vmatmul.f32.gmra.mxu0 %v2267
  %v2475 = vpop.f32.mrf.mxu0
  %v2476 = vadd.f32 %v2086, %v2475
  %2477 = vmatmul.f32.gmra.mxu0 %v2270
  %v2478 = vpop.f32.mrf.mxu0
  %v2479 = vadd.f32 %v2086, %v2478
  %2480 = vmatmul.f32.gmra.mxu0 %v2273
  %v2481 = vpop.f32.mrf.mxu0
  %v2482 = vadd.f32 %v2086, %v2481
  %2483 = vmatmul.f32.gmra.mxu0 %v2276
  %v2484 = vpop.f32.mrf.mxu0
  %v2485 = vadd.f32 %v2086, %v2484
  %2486 = vmatmul.f32.gmra.mxu0 %v2279
  %v2487 = vpop.f32.mrf.mxu0
  %v2488 = vadd.f32 %v2086, %v2487
  %2489 = vdwg.mxu0
  %v2490 = vxor.u32 %v2299, 2147483648
  %v2491 = vxor.u32 %v2302, 2147483648
  %v2492 = vxor.u32 %v2305, 2147483648
  %v2493 = vxor.u32 %v2308, 2147483648
  %v2494 = vxor.u32 %v2311, 2147483648
  %v2495 = vxor.u32 %v2314, 2147483648
  %v2496 = vxor.u32 %v2317, 2147483648
  %v2497 = vxor.u32 %v2320, 2147483648
  %v2498 = vxor.u32 %v2323, 2147483648
  %v2499 = vxor.u32 %v2326, 2147483648
  %v2500 = vxor.u32 %v2329, 2147483648
  %v2501 = vxor.u32 %v2332, 2147483648
  %v2502 = vxor.u32 %v2335, 2147483648
  %v2503 = vxor.u32 %v2338, 2147483648
  %v2504 = vxor.u32 %v2341, 2147483648
  %v2505 = vxor.u32 %v2344, 2147483648
  %v2506 = vxor.u32 %v2347, 2147483648
  %v2507 = vxor.u32 %v2350, 2147483648
  %v2508 = vxor.u32 %v2353, 2147483648
  %v2509 = vxor.u32 %v2356, 2147483648
  %v2510 = vxor.u32 %v2359, 2147483648
  %v2511 = vxor.u32 %v2362, 2147483648
  %v2512 = vxor.u32 %v2365, 2147483648
  %v2513 = vxor.u32 %v2368, 2147483648
  %v2514 = vxor.u32 %v2371, 2147483648
  %v2515 = vxor.u32 %v2374, 2147483648
  %v2516 = vxor.u32 %v2377, 2147483648
  %v2517 = vxor.u32 %v2380, 2147483648
  %v2518 = vxor.u32 %v2383, 2147483648
  %v2519 = vxor.u32 %v2386, 2147483648
  %v2520 = vxor.u32 %v2389, 2147483648
  %v2521 = vxor.u32 %v2392, 2147483648
  %v2522 = vxor.u32 %v2395, 2147483648
  %v2523 = vxor.u32 %v2398, 2147483648
  %v2524 = vxor.u32 %v2401, 2147483648
  %v2525 = vxor.u32 %v2404, 2147483648
  %v2526 = vxor.u32 %v2407, 2147483648
  %v2527 = vxor.u32 %v2410, 2147483648
  %v2528 = vxor.u32 %v2413, 2147483648
  %v2529 = vxor.u32 %v2416, 2147483648
  %v2530 = vxor.u32 %v2419, 2147483648
  %v2531 = vxor.u32 %v2422, 2147483648
  %v2532 = vxor.u32 %v2425, 2147483648
  %v2533 = vxor.u32 %v2428, 2147483648
  %v2534 = vxor.u32 %v2431, 2147483648
  %v2535 = vxor.u32 %v2434, 2147483648
  %v2536 = vxor.u32 %v2437, 2147483648
  %v2537 = vxor.u32 %v2440, 2147483648
  %v2538 = vxor.u32 %v2443, 2147483648
  %v2539 = vxor.u32 %v2446, 2147483648
  %v2540 = vxor.u32 %v2449, 2147483648
  %v2541 = vxor.u32 %v2452, 2147483648
  %v2542 = vxor.u32 %v2455, 2147483648
  %v2543 = vxor.u32 %v2458, 2147483648
  %v2544 = vxor.u32 %v2461, 2147483648
  %v2545 = vxor.u32 %v2464, 2147483648
  %v2546 = vxor.u32 %v2467, 2147483648
  %v2547 = vxor.u32 %v2470, 2147483648
  %v2548 = vxor.u32 %v2473, 2147483648
  %v2549 = vxor.u32 %v2476, 2147483648
  %v2550 = vxor.u32 %v2479, 2147483648
  %v2551 = vxor.u32 %v2482, 2147483648
  %v2552 = vxor.u32 %v2485, 2147483648
  %v2553 = vxor.u32 %v2488, 2147483648
  %v2554 = vmul.f32 %v2490, 1.442695
  %v2555 = vpow.pop %v2554
  %v2556 = vmul.f32 %v2491, 1.442695
  %v2557 = vpow.pop %v2556
  %v2558 = vmul.f32 %v2492, 1.442695
  %v2559 = vpow.pop %v2558
  %v2560 = vmul.f32 %v2493, 1.442695
  %v2561 = vpow.pop %v2560
  %v2562 = vmul.f32 %v2494, 1.442695
  %v2563 = vpow.pop %v2562
  %v2564 = vmul.f32 %v2495, 1.442695
  %v2565 = vpow.pop %v2564
  %v2566 = vmul.f32 %v2496, 1.442695
  %v2567 = vpow.pop %v2566
  %v2568 = vmul.f32 %v2497, 1.442695
  %v2569 = vpow.pop %v2568
  %v2570 = vmul.f32 %v2498, 1.442695
  %v2571 = vpow.pop %v2570
  %v2572 = vmul.f32 %v2499, 1.442695
  %v2573 = vpow.pop %v2572
  %v2574 = vmul.f32 %v2500, 1.442695
  %v2575 = vpow.pop %v2574
  %v2576 = vmul.f32 %v2501, 1.442695
  %v2577 = vpow.pop %v2576
  %v2578 = vmul.f32 %v2502, 1.442695
  %v2579 = vpow.pop %v2578
  %v2580 = vmul.f32 %v2503, 1.442695
  %v2581 = vpow.pop %v2580
  %v2582 = vmul.f32 %v2504, 1.442695
  %v2583 = vpow.pop %v2582
  %v2584 = vmul.f32 %v2505, 1.442695
  %v2585 = vpow.pop %v2584
  %v2586 = vmul.f32 %v2506, 1.442695
  %v2587 = vpow.pop %v2586
  %v2588 = vmul.f32 %v2507, 1.442695
  %v2589 = vpow.pop %v2588
  %v2590 = vmul.f32 %v2508, 1.442695
  %v2591 = vpow.pop %v2590
  %v2592 = vmul.f32 %v2509, 1.442695
  %v2593 = vpow.pop %v2592
  %v2594 = vmul.f32 %v2510, 1.442695
  %v2595 = vpow.pop %v2594
  %v2596 = vmul.f32 %v2511, 1.442695
  %v2597 = vpow.pop %v2596
  %v2598 = vmul.f32 %v2512, 1.442695
  %v2599 = vpow.pop %v2598
  %v2600 = vmul.f32 %v2513, 1.442695
  %v2601 = vpow.pop %v2600
  %v2602 = vmul.f32 %v2514, 1.442695
  %v2603 = vpow.pop %v2602
  %v2604 = vmul.f32 %v2515, 1.442695
  %v2605 = vpow.pop %v2604
  %v2606 = vmul.f32 %v2516, 1.442695
  %v2607 = vpow.pop %v2606
  %v2608 = vmul.f32 %v2517, 1.442695
  %v2609 = vpow.pop %v2608
  %v2610 = vmul.f32 %v2518, 1.442695
  %v2611 = vpow.pop %v2610
  %v2612 = vmul.f32 %v2519, 1.442695
  %v2613 = vpow.pop %v2612
  %v2614 = vmul.f32 %v2520, 1.442695
  %v2615 = vpow.pop %v2614
  %v2616 = vmul.f32 %v2521, 1.442695
  %v2617 = vpow.pop %v2616
  %v2618 = vmul.f32 %v2522, 1.442695
  %v2619 = vpow.pop %v2618
  %v2620 = vmul.f32 %v2523, 1.442695
  %v2621 = vpow.pop %v2620
  %v2622 = vmul.f32 %v2524, 1.442695
  %v2623 = vpow.pop %v2622
  %v2624 = vmul.f32 %v2525, 1.442695
  %v2625 = vpow.pop %v2624
  %v2626 = vmul.f32 %v2526, 1.442695
  %v2627 = vpow.pop %v2626
  %v2628 = vmul.f32 %v2527, 1.442695
  %v2629 = vpow.pop %v2628
  %v2630 = vmul.f32 %v2528, 1.442695
  %v2631 = vpow.pop %v2630
  %v2632 = vmul.f32 %v2529, 1.442695
  %v2633 = vpow.pop %v2632
  %v2634 = vmul.f32 %v2530, 1.442695
  %v2635 = vpow.pop %v2634
  %v2636 = vmul.f32 %v2531, 1.442695
  %v2637 = vpow.pop %v2636
  %v2638 = vmul.f32 %v2532, 1.442695
  %v2639 = vpow.pop %v2638
  %v2640 = vmul.f32 %v2533, 1.442695
  %v2641 = vpow.pop %v2640
  %v2642 = vmul.f32 %v2534, 1.442695
  %v2643 = vpow.pop %v2642
  %v2644 = vmul.f32 %v2535, 1.442695
  %v2645 = vpow.pop %v2644
  %v2646 = vmul.f32 %v2536, 1.442695
  %v2647 = vpow.pop %v2646
  %v2648 = vmul.f32 %v2537, 1.442695
  %v2649 = vpow.pop %v2648
  %v2650 = vmul.f32 %v2538, 1.442695
  %v2651 = vpow.pop %v2650
  %v2652 = vmul.f32 %v2539, 1.442695
  %v2653 = vpow.pop %v2652
  %v2654 = vmul.f32 %v2540, 1.442695
  %v2655 = vpow.pop %v2654
  %v2656 = vmul.f32 %v2541, 1.442695
  %v2657 = vpow.pop %v2656
  %v2658 = vmul.f32 %v2542, 1.442695
  %v2659 = vpow.pop %v2658
  %v2660 = vmul.f32 %v2543, 1.442695
  %v2661 = vpow.pop %v2660
  %v2662 = vmul.f32 %v2544, 1.442695
  %v2663 = vpow.pop %v2662
  %v2664 = vmul.f32 %v2545, 1.442695
  %v2665 = vpow.pop %v2664
  %v2666 = vmul.f32 %v2546, 1.442695
  %v2667 = vpow.pop %v2666
  %v2668 = vmul.f32 %v2547, 1.442695
  %v2669 = vpow.pop %v2668
  %v2670 = vmul.f32 %v2548, 1.442695
  %v2671 = vpow.pop %v2670
  %v2672 = vmul.f32 %v2549, 1.442695
  %v2673 = vpow.pop %v2672
  %v2674 = vmul.f32 %v2550, 1.442695
  %v2675 = vpow.pop %v2674
  %v2676 = vmul.f32 %v2551, 1.442695
  %v2677 = vpow.pop %v2676
  %v2678 = vmul.f32 %v2552, 1.442695
  %v2679 = vpow.pop %v2678
  %v2680 = vmul.f32 %v2553, 1.442695
  %v2681 = vpow.pop %v2680
  %v2682 = vadd.f32 %v2555, 1.0
  %v2683 = vadd.f32 %v2557, 1.0
  %v2684 = vadd.f32 %v2559, 1.0
  %v2685 = vadd.f32 %v2561, 1.0
  %v2686 = vadd.f32 %v2563, 1.0
  %v2687 = vadd.f32 %v2565, 1.0
  %v2688 = vadd.f32 %v2567, 1.0
  %v2689 = vadd.f32 %v2569, 1.0
  %v2690 = vadd.f32 %v2571, 1.0
  %v2691 = vadd.f32 %v2573, 1.0
  %v2692 = vadd.f32 %v2575, 1.0
  %v2693 = vadd.f32 %v2577, 1.0
  %v2694 = vadd.f32 %v2579, 1.0
  %v2695 = vadd.f32 %v2581, 1.0
  %v2696 = vadd.f32 %v2583, 1.0
  %v2697 = vadd.f32 %v2585, 1.0
  %v2698 = vadd.f32 %v2587, 1.0
  %v2699 = vadd.f32 %v2589, 1.0
  %v2700 = vadd.f32 %v2591, 1.0
  %v2701 = vadd.f32 %v2593, 1.0
  %v2702 = vadd.f32 %v2595, 1.0
  %v2703 = vadd.f32 %v2597, 1.0
  %v2704 = vadd.f32 %v2599, 1.0
  %v2705 = vadd.f32 %v2601, 1.0
  %v2706 = vadd.f32 %v2603, 1.0
  %v2707 = vadd.f32 %v2605, 1.0
  %v2708 = vadd.f32 %v2607, 1.0
  %v2709 = vadd.f32 %v2609, 1.0
  %v2710 = vadd.f32 %v2611, 1.0
  %v2711 = vadd.f32 %v2613, 1.0
  %v2712 = vadd.f32 %v2615, 1.0
  %v2713 = vadd.f32 %v2617, 1.0
  %v2714 = vadd.f32 %v2619, 1.0
  %v2715 = vadd.f32 %v2621, 1.0
  %v2716 = vadd.f32 %v2623, 1.0
  %v2717 = vadd.f32 %v2625, 1.0
  %v2718 = vadd.f32 %v2627, 1.0
  %v2719 = vadd.f32 %v2629, 1.0
  %v2720 = vadd.f32 %v2631, 1.0
  %v2721 = vadd.f32 %v2633, 1.0
  %v2722 = vadd.f32 %v2635, 1.0
  %v2723 = vadd.f32 %v2637, 1.0
  %v2724 = vadd.f32 %v2639, 1.0
  %v2725 = vadd.f32 %v2641, 1.0
  %v2726 = vadd.f32 %v2643, 1.0
  %v2727 = vadd.f32 %v2645, 1.0
  %v2728 = vadd.f32 %v2647, 1.0
  %v2729 = vadd.f32 %v2649, 1.0
  %v2730 = vadd.f32 %v2651, 1.0
  %v2731 = vadd.f32 %v2653, 1.0
  %v2732 = vadd.f32 %v2655, 1.0
  %v2733 = vadd.f32 %v2657, 1.0
  %v2734 = vadd.f32 %v2659, 1.0
  %v2735 = vadd.f32 %v2661, 1.0
  %v2736 = vadd.f32 %v2663, 1.0
  %v2737 = vadd.f32 %v2665, 1.0
  %v2738 = vadd.f32 %v2667, 1.0
  %v2739 = vadd.f32 %v2669, 1.0
  %v2740 = vadd.f32 %v2671, 1.0
  %v2741 = vadd.f32 %v2673, 1.0
  %v2742 = vadd.f32 %v2675, 1.0
  %v2743 = vadd.f32 %v2677, 1.0
  %v2744 = vadd.f32 %v2679, 1.0
  %v2745 = vadd.f32 %v2681, 1.0
  %v2746 = vrcp.pop %v2682
  %v2747 = vmul.f32 %v2682, %v2746
  %v2748 = vsub.f32 1.0, %v2747
  %v2749 = vmul.f32 %v2746, %v2748
  %v2750 = vadd.f32 %v2746, %v2749
  %vm2751 = vweird.f32 %v2682
  %vm2752 = vweird.f32 %v2746
  %vm2753 = vmor %vm2751, %vm2752
  %v2754 = vsel %vm2753, %v2746, %v2750
  %v2755 = vand.u32 2147483647, %v2682
  %vm2756 = vcmp.eq.f32.partialorder %v2755, 8.507059e+37
  %v2757 = vand.u32 %v2682, 2147483648
  %v2758 = vor.u32 1.1754944e-38, %v2757
  %v2759 = vsel %vm2756, %v2758, %v2754
  %v2760 = vmul.f32 1.0, %v2759
  %v2761 = vrcp.pop %v2683
  %v2762 = vmul.f32 %v2683, %v2761
  %v2763 = vsub.f32 1.0, %v2762
  %v2764 = vmul.f32 %v2761, %v2763
  %v2765 = vadd.f32 %v2761, %v2764
  %vm2766 = vweird.f32 %v2683
  %vm2767 = vweird.f32 %v2761
  %vm2768 = vmor %vm2766, %vm2767
  %v2769 = vsel %vm2768, %v2761, %v2765
  %v2770 = vand.u32 2147483647, %v2683
  %vm2771 = vcmp.eq.f32.partialorder %v2770, 8.507059e+37
  %v2772 = vand.u32 %v2683, 2147483648
  %v2773 = vor.u32 1.1754944e-38, %v2772
  %v2774 = vsel %vm2771, %v2773, %v2769
  %v2775 = vmul.f32 1.0, %v2774
  %v2776 = vrcp.pop %v2684
  %v2777 = vmul.f32 %v2684, %v2776
  %v2778 = vsub.f32 1.0, %v2777
  %v2779 = vmul.f32 %v2776, %v2778
  %v2780 = vadd.f32 %v2776, %v2779
  %vm2781 = vweird.f32 %v2684
  %vm2782 = vweird.f32 %v2776
  %vm2783 = vmor %vm2781, %vm2782
  %v2784 = vsel %vm2783, %v2776, %v2780
  %v2785 = vand.u32 2147483647, %v2684
  %vm2786 = vcmp.eq.f32.partialorder %v2785, 8.507059e+37
  %v2787 = vand.u32 %v2684, 2147483648
  %v2788 = vor.u32 1.1754944e-38, %v2787
  %v2789 = vsel %vm2786, %v2788, %v2784
  %v2790 = vmul.f32 1.0, %v2789
  %v2791 = vrcp.pop %v2685
  %v2792 = vmul.f32 %v2685, %v2791
  %v2793 = vsub.f32 1.0, %v2792
  %v2794 = vmul.f32 %v2791, %v2793
  %v2795 = vadd.f32 %v2791, %v2794
  %vm2796 = vweird.f32 %v2685
  %vm2797 = vweird.f32 %v2791
  %vm2798 = vmor %vm2796, %vm2797
  %v2799 = vsel %vm2798, %v2791, %v2795
  %v2800 = vand.u32 2147483647, %v2685
  %vm2801 = vcmp.eq.f32.partialorder %v2800, 8.507059e+37
  %v2802 = vand.u32 %v2685, 2147483648
  %v2803 = vor.u32 1.1754944e-38, %v2802
  %v2804 = vsel %vm2801, %v2803, %v2799
  %v2805 = vmul.f32 1.0, %v2804
  %v2806 = vrcp.pop %v2686
  %v2807 = vmul.f32 %v2686, %v2806
  %v2808 = vsub.f32 1.0, %v2807
  %v2809 = vmul.f32 %v2806, %v2808
  %v2810 = vadd.f32 %v2806, %v2809
  %vm2811 = vweird.f32 %v2686
  %vm2812 = vweird.f32 %v2806
  %vm2813 = vmor %vm2811, %vm2812
  %v2814 = vsel %vm2813, %v2806, %v2810
  %v2815 = vand.u32 2147483647, %v2686
  %vm2816 = vcmp.eq.f32.partialorder %v2815, 8.507059e+37
  %v2817 = vand.u32 %v2686, 2147483648
  %v2818 = vor.u32 1.1754944e-38, %v2817
  %v2819 = vsel %vm2816, %v2818, %v2814
  %v2820 = vmul.f32 1.0, %v2819
  %v2821 = vrcp.pop %v2687
  %v2822 = vmul.f32 %v2687, %v2821
  %v2823 = vsub.f32 1.0, %v2822
  %v2824 = vmul.f32 %v2821, %v2823
  %v2825 = vadd.f32 %v2821, %v2824
  %vm2826 = vweird.f32 %v2687
  %vm2827 = vweird.f32 %v2821
  %vm2828 = vmor %vm2826, %vm2827
  %v2829 = vsel %vm2828, %v2821, %v2825
  %v2830 = vand.u32 2147483647, %v2687
  %vm2831 = vcmp.eq.f32.partialorder %v2830, 8.507059e+37
  %v2832 = vand.u32 %v2687, 2147483648
  %v2833 = vor.u32 1.1754944e-38, %v2832
  %v2834 = vsel %vm2831, %v2833, %v2829
  %v2835 = vmul.f32 1.0, %v2834
  %v2836 = vrcp.pop %v2688
  %v2837 = vmul.f32 %v2688, %v2836
  %v2838 = vsub.f32 1.0, %v2837
  %v2839 = vmul.f32 %v2836, %v2838
  %v2840 = vadd.f32 %v2836, %v2839
  %vm2841 = vweird.f32 %v2688
  %vm2842 = vweird.f32 %v2836
  %vm2843 = vmor %vm2841, %vm2842
  %v2844 = vsel %vm2843, %v2836, %v2840
  %v2845 = vand.u32 2147483647, %v2688
  %vm2846 = vcmp.eq.f32.partialorder %v2845, 8.507059e+37
  %v2847 = vand.u32 %v2688, 2147483648
  %v2848 = vor.u32 1.1754944e-38, %v2847
  %v2849 = vsel %vm2846, %v2848, %v2844
  %v2850 = vmul.f32 1.0, %v2849
  %v2851 = vrcp.pop %v2689
  %v2852 = vmul.f32 %v2689, %v2851
  %v2853 = vsub.f32 1.0, %v2852
  %v2854 = vmul.f32 %v2851, %v2853
  %v2855 = vadd.f32 %v2851, %v2854
  %vm2856 = vweird.f32 %v2689
  %vm2857 = vweird.f32 %v2851
  %vm2858 = vmor %vm2856, %vm2857
  %v2859 = vsel %vm2858, %v2851, %v2855
  %v2860 = vand.u32 2147483647, %v2689
  %vm2861 = vcmp.eq.f32.partialorder %v2860, 8.507059e+37
  %v2862 = vand.u32 %v2689, 2147483648
  %v2863 = vor.u32 1.1754944e-38, %v2862
  %v2864 = vsel %vm2861, %v2863, %v2859
  %v2865 = vmul.f32 1.0, %v2864
  %v2866 = vrcp.pop %v2690
  %v2867 = vmul.f32 %v2690, %v2866
  %v2868 = vsub.f32 1.0, %v2867
  %v2869 = vmul.f32 %v2866, %v2868
  %v2870 = vadd.f32 %v2866, %v2869
  %vm2871 = vweird.f32 %v2690
  %vm2872 = vweird.f32 %v2866
  %vm2873 = vmor %vm2871, %vm2872
  %v2874 = vsel %vm2873, %v2866, %v2870
  %v2875 = vand.u32 2147483647, %v2690
  %vm2876 = vcmp.eq.f32.partialorder %v2875, 8.507059e+37
  %v2877 = vand.u32 %v2690, 2147483648
  %v2878 = vor.u32 1.1754944e-38, %v2877
  %v2879 = vsel %vm2876, %v2878, %v2874
  %v2880 = vmul.f32 1.0, %v2879
  %v2881 = vrcp.pop %v2691
  %v2882 = vmul.f32 %v2691, %v2881
  %v2883 = vsub.f32 1.0, %v2882
  %v2884 = vmul.f32 %v2881, %v2883
  %v2885 = vadd.f32 %v2881, %v2884
  %vm2886 = vweird.f32 %v2691
  %vm2887 = vweird.f32 %v2881
  %vm2888 = vmor %vm2886, %vm2887
  %v2889 = vsel %vm2888, %v2881, %v2885
  %v2890 = vand.u32 2147483647, %v2691
  %vm2891 = vcmp.eq.f32.partialorder %v2890, 8.507059e+37
  %v2892 = vand.u32 %v2691, 2147483648
  %v2893 = vor.u32 1.1754944e-38, %v2892
  %v2894 = vsel %vm2891, %v2893, %v2889
  %v2895 = vmul.f32 1.0, %v2894
  %v2896 = vrcp.pop %v2692
  %v2897 = vmul.f32 %v2692, %v2896
  %v2898 = vsub.f32 1.0, %v2897
  %v2899 = vmul.f32 %v2896, %v2898
  %v2900 = vadd.f32 %v2896, %v2899
  %vm2901 = vweird.f32 %v2692
  %vm2902 = vweird.f32 %v2896
  %vm2903 = vmor %vm2901, %vm2902
  %v2904 = vsel %vm2903, %v2896, %v2900
  %v2905 = vand.u32 2147483647, %v2692
  %vm2906 = vcmp.eq.f32.partialorder %v2905, 8.507059e+37
  %v2907 = vand.u32 %v2692, 2147483648
  %v2908 = vor.u32 1.1754944e-38, %v2907
  %v2909 = vsel %vm2906, %v2908, %v2904
  %v2910 = vmul.f32 1.0, %v2909
  %v2911 = vrcp.pop %v2693
  %v2912 = vmul.f32 %v2693, %v2911
  %v2913 = vsub.f32 1.0, %v2912
  %v2914 = vmul.f32 %v2911, %v2913
  %v2915 = vadd.f32 %v2911, %v2914
  %vm2916 = vweird.f32 %v2693
  %vm2917 = vweird.f32 %v2911
  %vm2918 = vmor %vm2916, %vm2917
  %v2919 = vsel %vm2918, %v2911, %v2915
  %v2920 = vand.u32 2147483647, %v2693
  %vm2921 = vcmp.eq.f32.partialorder %v2920, 8.507059e+37
  %v2922 = vand.u32 %v2693, 2147483648
  %v2923 = vor.u32 1.1754944e-38, %v2922
  %v2924 = vsel %vm2921, %v2923, %v2919
  %v2925 = vmul.f32 1.0, %v2924
  %v2926 = vrcp.pop %v2694
  %v2927 = vmul.f32 %v2694, %v2926
  %v2928 = vsub.f32 1.0, %v2927
  %v2929 = vmul.f32 %v2926, %v2928
  %v2930 = vadd.f32 %v2926, %v2929
  %vm2931 = vweird.f32 %v2694
  %vm2932 = vweird.f32 %v2926
  %vm2933 = vmor %vm2931, %vm2932
  %v2934 = vsel %vm2933, %v2926, %v2930
  %v2935 = vand.u32 2147483647, %v2694
  %vm2936 = vcmp.eq.f32.partialorder %v2935, 8.507059e+37
  %v2937 = vand.u32 %v2694, 2147483648
  %v2938 = vor.u32 1.1754944e-38, %v2937
  %v2939 = vsel %vm2936, %v2938, %v2934
  %v2940 = vmul.f32 1.0, %v2939
  %v2941 = vrcp.pop %v2695
  %v2942 = vmul.f32 %v2695, %v2941
  %v2943 = vsub.f32 1.0, %v2942
  %v2944 = vmul.f32 %v2941, %v2943
  %v2945 = vadd.f32 %v2941, %v2944
  %vm2946 = vweird.f32 %v2695
  %vm2947 = vweird.f32 %v2941
  %vm2948 = vmor %vm2946, %vm2947
  %v2949 = vsel %vm2948, %v2941, %v2945
  %v2950 = vand.u32 2147483647, %v2695
  %vm2951 = vcmp.eq.f32.partialorder %v2950, 8.507059e+37
  %v2952 = vand.u32 %v2695, 2147483648
  %v2953 = vor.u32 1.1754944e-38, %v2952
  %v2954 = vsel %vm2951, %v2953, %v2949
  %v2955 = vmul.f32 1.0, %v2954
  %v2956 = vrcp.pop %v2696
  %v2957 = vmul.f32 %v2696, %v2956
  %v2958 = vsub.f32 1.0, %v2957
  %v2959 = vmul.f32 %v2956, %v2958
  %v2960 = vadd.f32 %v2956, %v2959
  %vm2961 = vweird.f32 %v2696
  %vm2962 = vweird.f32 %v2956
  %vm2963 = vmor %vm2961, %vm2962
  %v2964 = vsel %vm2963, %v2956, %v2960
  %v2965 = vand.u32 2147483647, %v2696
  %vm2966 = vcmp.eq.f32.partialorder %v2965, 8.507059e+37
  %v2967 = vand.u32 %v2696, 2147483648
  %v2968 = vor.u32 1.1754944e-38, %v2967
  %v2969 = vsel %vm2966, %v2968, %v2964
  %v2970 = vmul.f32 1.0, %v2969
  %v2971 = vrcp.pop %v2697
  %v2972 = vmul.f32 %v2697, %v2971
  %v2973 = vsub.f32 1.0, %v2972
  %v2974 = vmul.f32 %v2971, %v2973
  %v2975 = vadd.f32 %v2971, %v2974
  %vm2976 = vweird.f32 %v2697
  %vm2977 = vweird.f32 %v2971
  %vm2978 = vmor %vm2976, %vm2977
  %v2979 = vsel %vm2978, %v2971, %v2975
  %v2980 = vand.u32 2147483647, %v2697
  %vm2981 = vcmp.eq.f32.partialorder %v2980, 8.507059e+37
  %v2982 = vand.u32 %v2697, 2147483648
  %v2983 = vor.u32 1.1754944e-38, %v2982
  %v2984 = vsel %vm2981, %v2983, %v2979
  %v2985 = vmul.f32 1.0, %v2984
  %v2986 = vrcp.pop %v2698
  %v2987 = vmul.f32 %v2698, %v2986
  %v2988 = vsub.f32 1.0, %v2987
  %v2989 = vmul.f32 %v2986, %v2988
  %v2990 = vadd.f32 %v2986, %v2989
  %vm2991 = vweird.f32 %v2698
  %vm2992 = vweird.f32 %v2986
  %vm2993 = vmor %vm2991, %vm2992
  %v2994 = vsel %vm2993, %v2986, %v2990
  %v2995 = vand.u32 2147483647, %v2698
  %vm2996 = vcmp.eq.f32.partialorder %v2995, 8.507059e+37
  %v2997 = vand.u32 %v2698, 2147483648
  %v2998 = vor.u32 1.1754944e-38, %v2997
  %v2999 = vsel %vm2996, %v2998, %v2994
  %v3000 = vmul.f32 1.0, %v2999
  %v3001 = vrcp.pop %v2699
  %v3002 = vmul.f32 %v2699, %v3001
  %v3003 = vsub.f32 1.0, %v3002
  %v3004 = vmul.f32 %v3001, %v3003
  %v3005 = vadd.f32 %v3001, %v3004
  %vm3006 = vweird.f32 %v2699
  %vm3007 = vweird.f32 %v3001
  %vm3008 = vmor %vm3006, %vm3007
  %v3009 = vsel %vm3008, %v3001, %v3005
  %v3010 = vand.u32 2147483647, %v2699
  %vm3011 = vcmp.eq.f32.partialorder %v3010, 8.507059e+37
  %v3012 = vand.u32 %v2699, 2147483648
  %v3013 = vor.u32 1.1754944e-38, %v3012
  %v3014 = vsel %vm3011, %v3013, %v3009
  %v3015 = vmul.f32 1.0, %v3014
  %v3016 = vrcp.pop %v2700
  %v3017 = vmul.f32 %v2700, %v3016
  %v3018 = vsub.f32 1.0, %v3017
  %v3019 = vmul.f32 %v3016, %v3018
  %v3020 = vadd.f32 %v3016, %v3019
  %vm3021 = vweird.f32 %v2700
  %vm3022 = vweird.f32 %v3016
  %vm3023 = vmor %vm3021, %vm3022
  %v3024 = vsel %vm3023, %v3016, %v3020
  %v3025 = vand.u32 2147483647, %v2700
  %vm3026 = vcmp.eq.f32.partialorder %v3025, 8.507059e+37
  %v3027 = vand.u32 %v2700, 2147483648
  %v3028 = vor.u32 1.1754944e-38, %v3027
  %v3029 = vsel %vm3026, %v3028, %v3024
  %v3030 = vmul.f32 1.0, %v3029
  %v3031 = vrcp.pop %v2701
  %v3032 = vmul.f32 %v2701, %v3031
  %v3033 = vsub.f32 1.0, %v3032
  %v3034 = vmul.f32 %v3031, %v3033
  %v3035 = vadd.f32 %v3031, %v3034
  %vm3036 = vweird.f32 %v2701
  %vm3037 = vweird.f32 %v3031
  %vm3038 = vmor %vm3036, %vm3037
  %v3039 = vsel %vm3038, %v3031, %v3035
  %v3040 = vand.u32 2147483647, %v2701
  %vm3041 = vcmp.eq.f32.partialorder %v3040, 8.507059e+37
  %v3042 = vand.u32 %v2701, 2147483648
  %v3043 = vor.u32 1.1754944e-38, %v3042
  %v3044 = vsel %vm3041, %v3043, %v3039
  %v3045 = vmul.f32 1.0, %v3044
  %v3046 = vrcp.pop %v2702
  %v3047 = vmul.f32 %v2702, %v3046
  %v3048 = vsub.f32 1.0, %v3047
  %v3049 = vmul.f32 %v3046, %v3048
  %v3050 = vadd.f32 %v3046, %v3049
  %vm3051 = vweird.f32 %v2702
  %vm3052 = vweird.f32 %v3046
  %vm3053 = vmor %vm3051, %vm3052
  %v3054 = vsel %vm3053, %v3046, %v3050
  %v3055 = vand.u32 2147483647, %v2702
  %vm3056 = vcmp.eq.f32.partialorder %v3055, 8.507059e+37
  %v3057 = vand.u32 %v2702, 2147483648
  %v3058 = vor.u32 1.1754944e-38, %v3057
  %v3059 = vsel %vm3056, %v3058, %v3054
  %v3060 = vmul.f32 1.0, %v3059
  %v3061 = vrcp.pop %v2703
  %v3062 = vmul.f32 %v2703, %v3061
  %v3063 = vsub.f32 1.0, %v3062
  %v3064 = vmul.f32 %v3061, %v3063
  %v3065 = vadd.f32 %v3061, %v3064
  %vm3066 = vweird.f32 %v2703
  %vm3067 = vweird.f32 %v3061
  %vm3068 = vmor %vm3066, %vm3067
  %v3069 = vsel %vm3068, %v3061, %v3065
  %v3070 = vand.u32 2147483647, %v2703
  %vm3071 = vcmp.eq.f32.partialorder %v3070, 8.507059e+37
  %v3072 = vand.u32 %v2703, 2147483648
  %v3073 = vor.u32 1.1754944e-38, %v3072
  %v3074 = vsel %vm3071, %v3073, %v3069
  %v3075 = vmul.f32 1.0, %v3074
  %v3076 = vrcp.pop %v2704
  %v3077 = vmul.f32 %v2704, %v3076
  %v3078 = vsub.f32 1.0, %v3077
  %v3079 = vmul.f32 %v3076, %v3078
  %v3080 = vadd.f32 %v3076, %v3079
  %vm3081 = vweird.f32 %v2704
  %vm3082 = vweird.f32 %v3076
  %vm3083 = vmor %vm3081, %vm3082
  %v3084 = vsel %vm3083, %v3076, %v3080
  %v3085 = vand.u32 2147483647, %v2704
  %vm3086 = vcmp.eq.f32.partialorder %v3085, 8.507059e+37
  %v3087 = vand.u32 %v2704, 2147483648
  %v3088 = vor.u32 1.1754944e-38, %v3087
  %v3089 = vsel %vm3086, %v3088, %v3084
  %v3090 = vmul.f32 1.0, %v3089
  %v3091 = vrcp.pop %v2705
  %v3092 = vmul.f32 %v2705, %v3091
  %v3093 = vsub.f32 1.0, %v3092
  %v3094 = vmul.f32 %v3091, %v3093
  %v3095 = vadd.f32 %v3091, %v3094
  %vm3096 = vweird.f32 %v2705
  %vm3097 = vweird.f32 %v3091
  %vm3098 = vmor %vm3096, %vm3097
  %v3099 = vsel %vm3098, %v3091, %v3095
  %v3100 = vand.u32 2147483647, %v2705
  %vm3101 = vcmp.eq.f32.partialorder %v3100, 8.507059e+37
  %v3102 = vand.u32 %v2705, 2147483648
  %v3103 = vor.u32 1.1754944e-38, %v3102
  %v3104 = vsel %vm3101, %v3103, %v3099
  %v3105 = vmul.f32 1.0, %v3104
  %v3106 = vrcp.pop %v2706
  %v3107 = vmul.f32 %v2706, %v3106
  %v3108 = vsub.f32 1.0, %v3107
  %v3109 = vmul.f32 %v3106, %v3108
  %v3110 = vadd.f32 %v3106, %v3109
  %vm3111 = vweird.f32 %v2706
  %vm3112 = vweird.f32 %v3106
  %vm3113 = vmor %vm3111, %vm3112
  %v3114 = vsel %vm3113, %v3106, %v3110
  %v3115 = vand.u32 2147483647, %v2706
  %vm3116 = vcmp.eq.f32.partialorder %v3115, 8.507059e+37
  %v3117 = vand.u32 %v2706, 2147483648
  %v3118 = vor.u32 1.1754944e-38, %v3117
  %v3119 = vsel %vm3116, %v3118, %v3114
  %v3120 = vmul.f32 1.0, %v3119
  %v3121 = vrcp.pop %v2707
  %v3122 = vmul.f32 %v2707, %v3121
  %v3123 = vsub.f32 1.0, %v3122
  %v3124 = vmul.f32 %v3121, %v3123
  %v3125 = vadd.f32 %v3121, %v3124
  %vm3126 = vweird.f32 %v2707
  %vm3127 = vweird.f32 %v3121
  %vm3128 = vmor %vm3126, %vm3127
  %v3129 = vsel %vm3128, %v3121, %v3125
  %v3130 = vand.u32 2147483647, %v2707
  %vm3131 = vcmp.eq.f32.partialorder %v3130, 8.507059e+37
  %v3132 = vand.u32 %v2707, 2147483648
  %v3133 = vor.u32 1.1754944e-38, %v3132
  %v3134 = vsel %vm3131, %v3133, %v3129
  %v3135 = vmul.f32 1.0, %v3134
  %v3136 = vrcp.pop %v2708
  %v3137 = vmul.f32 %v2708, %v3136
  %v3138 = vsub.f32 1.0, %v3137
  %v3139 = vmul.f32 %v3136, %v3138
  %v3140 = vadd.f32 %v3136, %v3139
  %vm3141 = vweird.f32 %v2708
  %vm3142 = vweird.f32 %v3136
  %vm3143 = vmor %vm3141, %vm3142
  %v3144 = vsel %vm3143, %v3136, %v3140
  %v3145 = vand.u32 2147483647, %v2708
  %vm3146 = vcmp.eq.f32.partialorder %v3145, 8.507059e+37
  %v3147 = vand.u32 %v2708, 2147483648
  %v3148 = vor.u32 1.1754944e-38, %v3147
  %v3149 = vsel %vm3146, %v3148, %v3144
  %v3150 = vmul.f32 1.0, %v3149
  %v3151 = vrcp.pop %v2709
  %v3152 = vmul.f32 %v2709, %v3151
  %v3153 = vsub.f32 1.0, %v3152
  %v3154 = vmul.f32 %v3151, %v3153
  %v3155 = vadd.f32 %v3151, %v3154
  %vm3156 = vweird.f32 %v2709
  %vm3157 = vweird.f32 %v3151
  %vm3158 = vmor %vm3156, %vm3157
  %v3159 = vsel %vm3158, %v3151, %v3155
  %v3160 = vand.u32 2147483647, %v2709
  %vm3161 = vcmp.eq.f32.partialorder %v3160, 8.507059e+37
  %v3162 = vand.u32 %v2709, 2147483648
  %v3163 = vor.u32 1.1754944e-38, %v3162
  %v3164 = vsel %vm3161, %v3163, %v3159
  %v3165 = vmul.f32 1.0, %v3164
  %v3166 = vrcp.pop %v2710
  %v3167 = vmul.f32 %v2710, %v3166
  %v3168 = vsub.f32 1.0, %v3167
  %v3169 = vmul.f32 %v3166, %v3168
  %v3170 = vadd.f32 %v3166, %v3169
  %vm3171 = vweird.f32 %v2710
  %vm3172 = vweird.f32 %v3166
  %vm3173 = vmor %vm3171, %vm3172
  %v3174 = vsel %vm3173, %v3166, %v3170
  %v3175 = vand.u32 2147483647, %v2710
  %vm3176 = vcmp.eq.f32.partialorder %v3175, 8.507059e+37
  %v3177 = vand.u32 %v2710, 2147483648
  %v3178 = vor.u32 1.1754944e-38, %v3177
  %v3179 = vsel %vm3176, %v3178, %v3174
  %v3180 = vmul.f32 1.0, %v3179
  %v3181 = vrcp.pop %v2711
  %v3182 = vmul.f32 %v2711, %v3181
  %v3183 = vsub.f32 1.0, %v3182
  %v3184 = vmul.f32 %v3181, %v3183
  %v3185 = vadd.f32 %v3181, %v3184
  %vm3186 = vweird.f32 %v2711
  %vm3187 = vweird.f32 %v3181
  %vm3188 = vmor %vm3186, %vm3187
  %v3189 = vsel %vm3188, %v3181, %v3185
  %v3190 = vand.u32 2147483647, %v2711
  %vm3191 = vcmp.eq.f32.partialorder %v3190, 8.507059e+37
  %v3192 = vand.u32 %v2711, 2147483648
  %v3193 = vor.u32 1.1754944e-38, %v3192
  %v3194 = vsel %vm3191, %v3193, %v3189
  %v3195 = vmul.f32 1.0, %v3194
  %v3196 = vrcp.pop %v2712
  %v3197 = vmul.f32 %v2712, %v3196
  %v3198 = vsub.f32 1.0, %v3197
  %v3199 = vmul.f32 %v3196, %v3198
  %v3200 = vadd.f32 %v3196, %v3199
  %vm3201 = vweird.f32 %v2712
  %vm3202 = vweird.f32 %v3196
  %vm3203 = vmor %vm3201, %vm3202
  %v3204 = vsel %vm3203, %v3196, %v3200
  %v3205 = vand.u32 2147483647, %v2712
  %vm3206 = vcmp.eq.f32.partialorder %v3205, 8.507059e+37
  %v3207 = vand.u32 %v2712, 2147483648
  %v3208 = vor.u32 1.1754944e-38, %v3207
  %v3209 = vsel %vm3206, %v3208, %v3204
  %v3210 = vmul.f32 1.0, %v3209
  %v3211 = vrcp.pop %v2713
  %v3212 = vmul.f32 %v2713, %v3211
  %v3213 = vsub.f32 1.0, %v3212
  %v3214 = vmul.f32 %v3211, %v3213
  %v3215 = vadd.f32 %v3211, %v3214
  %vm3216 = vweird.f32 %v2713
  %vm3217 = vweird.f32 %v3211
  %vm3218 = vmor %vm3216, %vm3217
  %v3219 = vsel %vm3218, %v3211, %v3215
  %v3220 = vand.u32 2147483647, %v2713
  %vm3221 = vcmp.eq.f32.partialorder %v3220, 8.507059e+37
  %v3222 = vand.u32 %v2713, 2147483648
  %v3223 = vor.u32 1.1754944e-38, %v3222
  %v3224 = vsel %vm3221, %v3223, %v3219
  %v3225 = vmul.f32 1.0, %v3224
  %v3226 = vrcp.pop %v2714
  %v3227 = vmul.f32 %v2714, %v3226
  %v3228 = vsub.f32 1.0, %v3227
  %v3229 = vmul.f32 %v3226, %v3228
  %v3230 = vadd.f32 %v3226, %v3229
  %vm3231 = vweird.f32 %v2714
  %vm3232 = vweird.f32 %v3226
  %vm3233 = vmor %vm3231, %vm3232
  %v3234 = vsel %vm3233, %v3226, %v3230
  %v3235 = vand.u32 2147483647, %v2714
  %vm3236 = vcmp.eq.f32.partialorder %v3235, 8.507059e+37
  %v3237 = vand.u32 %v2714, 2147483648
  %v3238 = vor.u32 1.1754944e-38, %v3237
  %v3239 = vsel %vm3236, %v3238, %v3234
  %v3240 = vmul.f32 1.0, %v3239
  %v3241 = vrcp.pop %v2715
  %v3242 = vmul.f32 %v2715, %v3241
  %v3243 = vsub.f32 1.0, %v3242
  %v3244 = vmul.f32 %v3241, %v3243
  %v3245 = vadd.f32 %v3241, %v3244
  %vm3246 = vweird.f32 %v2715
  %vm3247 = vweird.f32 %v3241
  %vm3248 = vmor %vm3246, %vm3247
  %v3249 = vsel %vm3248, %v3241, %v3245
  %v3250 = vand.u32 2147483647, %v2715
  %vm3251 = vcmp.eq.f32.partialorder %v3250, 8.507059e+37
  %v3252 = vand.u32 %v2715, 2147483648
  %v3253 = vor.u32 1.1754944e-38, %v3252
  %v3254 = vsel %vm3251, %v3253, %v3249
  %v3255 = vmul.f32 1.0, %v3254
  %v3256 = vrcp.pop %v2716
  %v3257 = vmul.f32 %v2716, %v3256
  %v3258 = vsub.f32 1.0, %v3257
  %v3259 = vmul.f32 %v3256, %v3258
  %v3260 = vadd.f32 %v3256, %v3259
  %vm3261 = vweird.f32 %v2716
  %vm3262 = vweird.f32 %v3256
  %vm3263 = vmor %vm3261, %vm3262
  %v3264 = vsel %vm3263, %v3256, %v3260
  %v3265 = vand.u32 2147483647, %v2716
  %vm3266 = vcmp.eq.f32.partialorder %v3265, 8.507059e+37
  %v3267 = vand.u32 %v2716, 2147483648
  %v3268 = vor.u32 1.1754944e-38, %v3267
  %v3269 = vsel %vm3266, %v3268, %v3264
  %v3270 = vmul.f32 1.0, %v3269
  %v3271 = vrcp.pop %v2717
  %v3272 = vmul.f32 %v2717, %v3271
  %v3273 = vsub.f32 1.0, %v3272
  %v3274 = vmul.f32 %v3271, %v3273
  %v3275 = vadd.f32 %v3271, %v3274
  %vm3276 = vweird.f32 %v2717
  %vm3277 = vweird.f32 %v3271
  %vm3278 = vmor %vm3276, %vm3277
  %v3279 = vsel %vm3278, %v3271, %v3275
  %v3280 = vand.u32 2147483647, %v2717
  %vm3281 = vcmp.eq.f32.partialorder %v3280, 8.507059e+37
  %v3282 = vand.u32 %v2717, 2147483648
  %v3283 = vor.u32 1.1754944e-38, %v3282
  %v3284 = vsel %vm3281, %v3283, %v3279
  %v3285 = vmul.f32 1.0, %v3284
  %v3286 = vrcp.pop %v2718
  %v3287 = vmul.f32 %v2718, %v3286
  %v3288 = vsub.f32 1.0, %v3287
  %v3289 = vmul.f32 %v3286, %v3288
  %v3290 = vadd.f32 %v3286, %v3289
  %vm3291 = vweird.f32 %v2718
  %vm3292 = vweird.f32 %v3286
  %vm3293 = vmor %vm3291, %vm3292
  %v3294 = vsel %vm3293, %v3286, %v3290
  %v3295 = vand.u32 2147483647, %v2718
  %vm3296 = vcmp.eq.f32.partialorder %v3295, 8.507059e+37
  %v3297 = vand.u32 %v2718, 2147483648
  %v3298 = vor.u32 1.1754944e-38, %v3297
  %v3299 = vsel %vm3296, %v3298, %v3294
  %v3300 = vmul.f32 1.0, %v3299
  %v3301 = vrcp.pop %v2719
  %v3302 = vmul.f32 %v2719, %v3301
  %v3303 = vsub.f32 1.0, %v3302
  %v3304 = vmul.f32 %v3301, %v3303
  %v3305 = vadd.f32 %v3301, %v3304
  %vm3306 = vweird.f32 %v2719
  %vm3307 = vweird.f32 %v3301
  %vm3308 = vmor %vm3306, %vm3307
  %v3309 = vsel %vm3308, %v3301, %v3305
  %v3310 = vand.u32 2147483647, %v2719
  %vm3311 = vcmp.eq.f32.partialorder %v3310, 8.507059e+37
  %v3312 = vand.u32 %v2719, 2147483648
  %v3313 = vor.u32 1.1754944e-38, %v3312
  %v3314 = vsel %vm3311, %v3313, %v3309
  %v3315 = vmul.f32 1.0, %v3314
  %v3316 = vrcp.pop %v2720
  %v3317 = vmul.f32 %v2720, %v3316
  %v3318 = vsub.f32 1.0, %v3317
  %v3319 = vmul.f32 %v3316, %v3318
  %v3320 = vadd.f32 %v3316, %v3319
  %vm3321 = vweird.f32 %v2720
  %vm3322 = vweird.f32 %v3316
  %vm3323 = vmor %vm3321, %vm3322
  %v3324 = vsel %vm3323, %v3316, %v3320
  %v3325 = vand.u32 2147483647, %v2720
  %vm3326 = vcmp.eq.f32.partialorder %v3325, 8.507059e+37
  %v3327 = vand.u32 %v2720, 2147483648
  %v3328 = vor.u32 1.1754944e-38, %v3327
  %v3329 = vsel %vm3326, %v3328, %v3324
  %v3330 = vmul.f32 1.0, %v3329
  %v3331 = vrcp.pop %v2721
  %v3332 = vmul.f32 %v2721, %v3331
  %v3333 = vsub.f32 1.0, %v3332
  %v3334 = vmul.f32 %v3331, %v3333
  %v3335 = vadd.f32 %v3331, %v3334
  %vm3336 = vweird.f32 %v2721
  %vm3337 = vweird.f32 %v3331
  %vm3338 = vmor %vm3336, %vm3337
  %v3339 = vsel %vm3338, %v3331, %v3335
  %v3340 = vand.u32 2147483647, %v2721
  %vm3341 = vcmp.eq.f32.partialorder %v3340, 8.507059e+37
  %v3342 = vand.u32 %v2721, 2147483648
  %v3343 = vor.u32 1.1754944e-38, %v3342
  %v3344 = vsel %vm3341, %v3343, %v3339
  %v3345 = vmul.f32 1.0, %v3344
  %v3346 = vrcp.pop %v2722
  %v3347 = vmul.f32 %v2722, %v3346
  %v3348 = vsub.f32 1.0, %v3347
  %v3349 = vmul.f32 %v3346, %v3348
  %v3350 = vadd.f32 %v3346, %v3349
  %vm3351 = vweird.f32 %v2722
  %vm3352 = vweird.f32 %v3346
  %vm3353 = vmor %vm3351, %vm3352
  %v3354 = vsel %vm3353, %v3346, %v3350
  %v3355 = vand.u32 2147483647, %v2722
  %vm3356 = vcmp.eq.f32.partialorder %v3355, 8.507059e+37
  %v3357 = vand.u32 %v2722, 2147483648
  %v3358 = vor.u32 1.1754944e-38, %v3357
  %v3359 = vsel %vm3356, %v3358, %v3354
  %v3360 = vmul.f32 1.0, %v3359
  %v3361 = vrcp.pop %v2723
  %v3362 = vmul.f32 %v2723, %v3361
  %v3363 = vsub.f32 1.0, %v3362
  %v3364 = vmul.f32 %v3361, %v3363
  %v3365 = vadd.f32 %v3361, %v3364
  %vm3366 = vweird.f32 %v2723
  %vm3367 = vweird.f32 %v3361
  %vm3368 = vmor %vm3366, %vm3367
  %v3369 = vsel %vm3368, %v3361, %v3365
  %v3370 = vand.u32 2147483647, %v2723
  %vm3371 = vcmp.eq.f32.partialorder %v3370, 8.507059e+37
  %v3372 = vand.u32 %v2723, 2147483648
  %v3373 = vor.u32 1.1754944e-38, %v3372
  %v3374 = vsel %vm3371, %v3373, %v3369
  %v3375 = vmul.f32 1.0, %v3374
  %v3376 = vrcp.pop %v2724
  %v3377 = vmul.f32 %v2724, %v3376
  %v3378 = vsub.f32 1.0, %v3377
  %v3379 = vmul.f32 %v3376, %v3378
  %v3380 = vadd.f32 %v3376, %v3379
  %vm3381 = vweird.f32 %v2724
  %vm3382 = vweird.f32 %v3376
  %vm3383 = vmor %vm3381, %vm3382
  %v3384 = vsel %vm3383, %v3376, %v3380
  %v3385 = vand.u32 2147483647, %v2724
  %vm3386 = vcmp.eq.f32.partialorder %v3385, 8.507059e+37
  %v3387 = vand.u32 %v2724, 2147483648
  %v3388 = vor.u32 1.1754944e-38, %v3387
  %v3389 = vsel %vm3386, %v3388, %v3384
  %v3390 = vmul.f32 1.0, %v3389
  %v3391 = vrcp.pop %v2725
  %v3392 = vmul.f32 %v2725, %v3391
  %v3393 = vsub.f32 1.0, %v3392
  %v3394 = vmul.f32 %v3391, %v3393
  %v3395 = vadd.f32 %v3391, %v3394
  %vm3396 = vweird.f32 %v2725
  %vm3397 = vweird.f32 %v3391
  %vm3398 = vmor %vm3396, %vm3397
  %v3399 = vsel %vm3398, %v3391, %v3395
  %v3400 = vand.u32 2147483647, %v2725
  %vm3401 = vcmp.eq.f32.partialorder %v3400, 8.507059e+37
  %v3402 = vand.u32 %v2725, 2147483648
  %v3403 = vor.u32 1.1754944e-38, %v3402
  %v3404 = vsel %vm3401, %v3403, %v3399
  %v3405 = vmul.f32 1.0, %v3404
  %v3406 = vrcp.pop %v2726
  %v3407 = vmul.f32 %v2726, %v3406
  %v3408 = vsub.f32 1.0, %v3407
  %v3409 = vmul.f32 %v3406, %v3408
  %v3410 = vadd.f32 %v3406, %v3409
  %vm3411 = vweird.f32 %v2726
  %vm3412 = vweird.f32 %v3406
  %vm3413 = vmor %vm3411, %vm3412
  %v3414 = vsel %vm3413, %v3406, %v3410
  %v3415 = vand.u32 2147483647, %v2726
  %vm3416 = vcmp.eq.f32.partialorder %v3415, 8.507059e+37
  %v3417 = vand.u32 %v2726, 2147483648
  %v3418 = vor.u32 1.1754944e-38, %v3417
  %v3419 = vsel %vm3416, %v3418, %v3414
  %v3420 = vmul.f32 1.0, %v3419
  %v3421 = vrcp.pop %v2727
  %v3422 = vmul.f32 %v2727, %v3421
  %v3423 = vsub.f32 1.0, %v3422
  %v3424 = vmul.f32 %v3421, %v3423
  %v3425 = vadd.f32 %v3421, %v3424
  %vm3426 = vweird.f32 %v2727
  %vm3427 = vweird.f32 %v3421
  %vm3428 = vmor %vm3426, %vm3427
  %v3429 = vsel %vm3428, %v3421, %v3425
  %v3430 = vand.u32 2147483647, %v2727
  %vm3431 = vcmp.eq.f32.partialorder %v3430, 8.507059e+37
  %v3432 = vand.u32 %v2727, 2147483648
  %v3433 = vor.u32 1.1754944e-38, %v3432
  %v3434 = vsel %vm3431, %v3433, %v3429
  %v3435 = vmul.f32 1.0, %v3434
  %v3436 = vrcp.pop %v2728
  %v3437 = vmul.f32 %v2728, %v3436
  %v3438 = vsub.f32 1.0, %v3437
  %v3439 = vmul.f32 %v3436, %v3438
  %v3440 = vadd.f32 %v3436, %v3439
  %vm3441 = vweird.f32 %v2728
  %vm3442 = vweird.f32 %v3436
  %vm3443 = vmor %vm3441, %vm3442
  %v3444 = vsel %vm3443, %v3436, %v3440
  %v3445 = vand.u32 2147483647, %v2728
  %vm3446 = vcmp.eq.f32.partialorder %v3445, 8.507059e+37
  %v3447 = vand.u32 %v2728, 2147483648
  %v3448 = vor.u32 1.1754944e-38, %v3447
  %v3449 = vsel %vm3446, %v3448, %v3444
  %v3450 = vmul.f32 1.0, %v3449
  %v3451 = vrcp.pop %v2729
  %v3452 = vmul.f32 %v2729, %v3451
  %v3453 = vsub.f32 1.0, %v3452
  %v3454 = vmul.f32 %v3451, %v3453
  %v3455 = vadd.f32 %v3451, %v3454
  %vm3456 = vweird.f32 %v2729
  %vm3457 = vweird.f32 %v3451
  %vm3458 = vmor %vm3456, %vm3457
  %v3459 = vsel %vm3458, %v3451, %v3455
  %v3460 = vand.u32 2147483647, %v2729
  %vm3461 = vcmp.eq.f32.partialorder %v3460, 8.507059e+37
  %v3462 = vand.u32 %v2729, 2147483648
  %v3463 = vor.u32 1.1754944e-38, %v3462
  %v3464 = vsel %vm3461, %v3463, %v3459
  %v3465 = vmul.f32 1.0, %v3464
  %v3466 = vrcp.pop %v2730
  %v3467 = vmul.f32 %v2730, %v3466
  %v3468 = vsub.f32 1.0, %v3467
  %v3469 = vmul.f32 %v3466, %v3468
  %v3470 = vadd.f32 %v3466, %v3469
  %vm3471 = vweird.f32 %v2730
  %vm3472 = vweird.f32 %v3466
  %vm3473 = vmor %vm3471, %vm3472
  %v3474 = vsel %vm3473, %v3466, %v3470
  %v3475 = vand.u32 2147483647, %v2730
  %vm3476 = vcmp.eq.f32.partialorder %v3475, 8.507059e+37
  %v3477 = vand.u32 %v2730, 2147483648
  %v3478 = vor.u32 1.1754944e-38, %v3477
  %v3479 = vsel %vm3476, %v3478, %v3474
  %v3480 = vmul.f32 1.0, %v3479
  %v3481 = vrcp.pop %v2731
  %v3482 = vmul.f32 %v2731, %v3481
  %v3483 = vsub.f32 1.0, %v3482
  %v3484 = vmul.f32 %v3481, %v3483
  %v3485 = vadd.f32 %v3481, %v3484
  %vm3486 = vweird.f32 %v2731
  %vm3487 = vweird.f32 %v3481
  %vm3488 = vmor %vm3486, %vm3487
  %v3489 = vsel %vm3488, %v3481, %v3485
  %v3490 = vand.u32 2147483647, %v2731
  %vm3491 = vcmp.eq.f32.partialorder %v3490, 8.507059e+37
  %v3492 = vand.u32 %v2731, 2147483648
  %v3493 = vor.u32 1.1754944e-38, %v3492
  %v3494 = vsel %vm3491, %v3493, %v3489
  %v3495 = vmul.f32 1.0, %v3494
  %v3496 = vrcp.pop %v2732
  %v3497 = vmul.f32 %v2732, %v3496
  %v3498 = vsub.f32 1.0, %v3497
  %v3499 = vmul.f32 %v3496, %v3498
  %v3500 = vadd.f32 %v3496, %v3499
  %vm3501 = vweird.f32 %v2732
  %vm3502 = vweird.f32 %v3496
  %vm3503 = vmor %vm3501, %vm3502
  %v3504 = vsel %vm3503, %v3496, %v3500
  %v3505 = vand.u32 2147483647, %v2732
  %vm3506 = vcmp.eq.f32.partialorder %v3505, 8.507059e+37
  %v3507 = vand.u32 %v2732, 2147483648
  %v3508 = vor.u32 1.1754944e-38, %v3507
  %v3509 = vsel %vm3506, %v3508, %v3504
  %v3510 = vmul.f32 1.0, %v3509
  %v3511 = vrcp.pop %v2733
  %v3512 = vmul.f32 %v2733, %v3511
  %v3513 = vsub.f32 1.0, %v3512
  %v3514 = vmul.f32 %v3511, %v3513
  %v3515 = vadd.f32 %v3511, %v3514
  %vm3516 = vweird.f32 %v2733
  %vm3517 = vweird.f32 %v3511
  %vm3518 = vmor %vm3516, %vm3517
  %v3519 = vsel %vm3518, %v3511, %v3515
  %v3520 = vand.u32 2147483647, %v2733
  %vm3521 = vcmp.eq.f32.partialorder %v3520, 8.507059e+37
  %v3522 = vand.u32 %v2733, 2147483648
  %v3523 = vor.u32 1.1754944e-38, %v3522
  %v3524 = vsel %vm3521, %v3523, %v3519
  %v3525 = vmul.f32 1.0, %v3524
  %v3526 = vrcp.pop %v2734
  %v3527 = vmul.f32 %v2734, %v3526
  %v3528 = vsub.f32 1.0, %v3527
  %v3529 = vmul.f32 %v3526, %v3528
  %v3530 = vadd.f32 %v3526, %v3529
  %vm3531 = vweird.f32 %v2734
  %vm3532 = vweird.f32 %v3526
  %vm3533 = vmor %vm3531, %vm3532
  %v3534 = vsel %vm3533, %v3526, %v3530
  %v3535 = vand.u32 2147483647, %v2734
  %vm3536 = vcmp.eq.f32.partialorder %v3535, 8.507059e+37
  %v3537 = vand.u32 %v2734, 2147483648
  %v3538 = vor.u32 1.1754944e-38, %v3537
  %v3539 = vsel %vm3536, %v3538, %v3534
  %v3540 = vmul.f32 1.0, %v3539
  %v3541 = vrcp.pop %v2735
  %v3542 = vmul.f32 %v2735, %v3541
  %v3543 = vsub.f32 1.0, %v3542
  %v3544 = vmul.f32 %v3541, %v3543
  %v3545 = vadd.f32 %v3541, %v3544
  %vm3546 = vweird.f32 %v2735
  %vm3547 = vweird.f32 %v3541
  %vm3548 = vmor %vm3546, %vm3547
  %v3549 = vsel %vm3548, %v3541, %v3545
  %v3550 = vand.u32 2147483647, %v2735
  %vm3551 = vcmp.eq.f32.partialorder %v3550, 8.507059e+37
  %v3552 = vand.u32 %v2735, 2147483648
  %v3553 = vor.u32 1.1754944e-38, %v3552
  %v3554 = vsel %vm3551, %v3553, %v3549
  %v3555 = vmul.f32 1.0, %v3554
  %v3556 = vrcp.pop %v2736
  %v3557 = vmul.f32 %v2736, %v3556
  %v3558 = vsub.f32 1.0, %v3557
  %v3559 = vmul.f32 %v3556, %v3558
  %v3560 = vadd.f32 %v3556, %v3559
  %vm3561 = vweird.f32 %v2736
  %vm3562 = vweird.f32 %v3556
  %vm3563 = vmor %vm3561, %vm3562
  %v3564 = vsel %vm3563, %v3556, %v3560
  %v3565 = vand.u32 2147483647, %v2736
  %vm3566 = vcmp.eq.f32.partialorder %v3565, 8.507059e+37
  %v3567 = vand.u32 %v2736, 2147483648
  %v3568 = vor.u32 1.1754944e-38, %v3567
  %v3569 = vsel %vm3566, %v3568, %v3564
  %v3570 = vmul.f32 1.0, %v3569
  %v3571 = vrcp.pop %v2737
  %v3572 = vmul.f32 %v2737, %v3571
  %v3573 = vsub.f32 1.0, %v3572
  %v3574 = vmul.f32 %v3571, %v3573
  %v3575 = vadd.f32 %v3571, %v3574
  %vm3576 = vweird.f32 %v2737
  %vm3577 = vweird.f32 %v3571
  %vm3578 = vmor %vm3576, %vm3577
  %v3579 = vsel %vm3578, %v3571, %v3575
  %v3580 = vand.u32 2147483647, %v2737
  %vm3581 = vcmp.eq.f32.partialorder %v3580, 8.507059e+37
  %v3582 = vand.u32 %v2737, 2147483648
  %v3583 = vor.u32 1.1754944e-38, %v3582
  %v3584 = vsel %vm3581, %v3583, %v3579
  %v3585 = vmul.f32 1.0, %v3584
  %v3586 = vrcp.pop %v2738
  %v3587 = vmul.f32 %v2738, %v3586
  %v3588 = vsub.f32 1.0, %v3587
  %v3589 = vmul.f32 %v3586, %v3588
  %v3590 = vadd.f32 %v3586, %v3589
  %vm3591 = vweird.f32 %v2738
  %vm3592 = vweird.f32 %v3586
  %vm3593 = vmor %vm3591, %vm3592
  %v3594 = vsel %vm3593, %v3586, %v3590
  %v3595 = vand.u32 2147483647, %v2738
  %vm3596 = vcmp.eq.f32.partialorder %v3595, 8.507059e+37
  %v3597 = vand.u32 %v2738, 2147483648
  %v3598 = vor.u32 1.1754944e-38, %v3597
  %v3599 = vsel %vm3596, %v3598, %v3594
  %v3600 = vmul.f32 1.0, %v3599
  %v3601 = vrcp.pop %v2739
  %v3602 = vmul.f32 %v2739, %v3601
  %v3603 = vsub.f32 1.0, %v3602
  %v3604 = vmul.f32 %v3601, %v3603
  %v3605 = vadd.f32 %v3601, %v3604
  %vm3606 = vweird.f32 %v2739
  %vm3607 = vweird.f32 %v3601
  %vm3608 = vmor %vm3606, %vm3607
  %v3609 = vsel %vm3608, %v3601, %v3605
  %v3610 = vand.u32 2147483647, %v2739
  %vm3611 = vcmp.eq.f32.partialorder %v3610, 8.507059e+37
  %v3612 = vand.u32 %v2739, 2147483648
  %v3613 = vor.u32 1.1754944e-38, %v3612
  %v3614 = vsel %vm3611, %v3613, %v3609
  %v3615 = vmul.f32 1.0, %v3614
  %v3616 = vrcp.pop %v2740
  %v3617 = vmul.f32 %v2740, %v3616
  %v3618 = vsub.f32 1.0, %v3617
  %v3619 = vmul.f32 %v3616, %v3618
  %v3620 = vadd.f32 %v3616, %v3619
  %vm3621 = vweird.f32 %v2740
  %vm3622 = vweird.f32 %v3616
  %vm3623 = vmor %vm3621, %vm3622
  %v3624 = vsel %vm3623, %v3616, %v3620
  %v3625 = vand.u32 2147483647, %v2740
  %vm3626 = vcmp.eq.f32.partialorder %v3625, 8.507059e+37
  %v3627 = vand.u32 %v2740, 2147483648
  %v3628 = vor.u32 1.1754944e-38, %v3627
  %v3629 = vsel %vm3626, %v3628, %v3624
  %v3630 = vmul.f32 1.0, %v3629
  %v3631 = vrcp.pop %v2741
  %v3632 = vmul.f32 %v2741, %v3631
  %v3633 = vsub.f32 1.0, %v3632
  %v3634 = vmul.f32 %v3631, %v3633
  %v3635 = vadd.f32 %v3631, %v3634
  %vm3636 = vweird.f32 %v2741
  %vm3637 = vweird.f32 %v3631
  %vm3638 = vmor %vm3636, %vm3637
  %v3639 = vsel %vm3638, %v3631, %v3635
  %v3640 = vand.u32 2147483647, %v2741
  %vm3641 = vcmp.eq.f32.partialorder %v3640, 8.507059e+37
  %v3642 = vand.u32 %v2741, 2147483648
  %v3643 = vor.u32 1.1754944e-38, %v3642
  %v3644 = vsel %vm3641, %v3643, %v3639
  %v3645 = vmul.f32 1.0, %v3644
  %v3646 = vrcp.pop %v2742
  %v3647 = vmul.f32 %v2742, %v3646
  %v3648 = vsub.f32 1.0, %v3647
  %v3649 = vmul.f32 %v3646, %v3648
  %v3650 = vadd.f32 %v3646, %v3649
  %vm3651 = vweird.f32 %v2742
  %vm3652 = vweird.f32 %v3646
  %vm3653 = vmor %vm3651, %vm3652
  %v3654 = vsel %vm3653, %v3646, %v3650
  %v3655 = vand.u32 2147483647, %v2742
  %vm3656 = vcmp.eq.f32.partialorder %v3655, 8.507059e+37
  %v3657 = vand.u32 %v2742, 2147483648
  %v3658 = vor.u32 1.1754944e-38, %v3657
  %v3659 = vsel %vm3656, %v3658, %v3654
  %v3660 = vmul.f32 1.0, %v3659
  %v3661 = vrcp.pop %v2743
  %v3662 = vmul.f32 %v2743, %v3661
  %v3663 = vsub.f32 1.0, %v3662
  %v3664 = vmul.f32 %v3661, %v3663
  %v3665 = vadd.f32 %v3661, %v3664
  %vm3666 = vweird.f32 %v2743
  %vm3667 = vweird.f32 %v3661
  %vm3668 = vmor %vm3666, %vm3667
  %v3669 = vsel %vm3668, %v3661, %v3665
  %v3670 = vand.u32 2147483647, %v2743
  %vm3671 = vcmp.eq.f32.partialorder %v3670, 8.507059e+37
  %v3672 = vand.u32 %v2743, 2147483648
  %v3673 = vor.u32 1.1754944e-38, %v3672
  %v3674 = vsel %vm3671, %v3673, %v3669
  %v3675 = vmul.f32 1.0, %v3674
  %v3676 = vrcp.pop %v2744
  %v3677 = vmul.f32 %v2744, %v3676
  %v3678 = vsub.f32 1.0, %v3677
  %v3679 = vmul.f32 %v3676, %v3678
  %v3680 = vadd.f32 %v3676, %v3679
  %vm3681 = vweird.f32 %v2744
  %vm3682 = vweird.f32 %v3676
  %vm3683 = vmor %vm3681, %vm3682
  %v3684 = vsel %vm3683, %v3676, %v3680
  %v3685 = vand.u32 2147483647, %v2744
  %vm3686 = vcmp.eq.f32.partialorder %v3685, 8.507059e+37
  %v3687 = vand.u32 %v2744, 2147483648
  %v3688 = vor.u32 1.1754944e-38, %v3687
  %v3689 = vsel %vm3686, %v3688, %v3684
  %v3690 = vmul.f32 1.0, %v3689
  %v3691 = vrcp.pop %v2745
  %v3692 = vmul.f32 %v2745, %v3691
  %v3693 = vsub.f32 1.0, %v3692
  %v3694 = vmul.f32 %v3691, %v3693
  %v3695 = vadd.f32 %v3691, %v3694
  %vm3696 = vweird.f32 %v2745
  %vm3697 = vweird.f32 %v3691
  %vm3698 = vmor %vm3696, %vm3697
  %v3699 = vsel %vm3698, %v3691, %v3695
  %v3700 = vand.u32 2147483647, %v2745
  %vm3701 = vcmp.eq.f32.partialorder %v3700, 8.507059e+37
  %v3702 = vand.u32 %v2745, 2147483648
  %v3703 = vor.u32 1.1754944e-38, %v3702
  %v3704 = vsel %vm3701, %v3703, %v3699
  %v3705 = vmul.f32 1.0, %v3704
  %v3706 = vld [vmem:[%s8] sm:$0xff]
  %v3707 = vld [vmem:[%s8 + $0x8] sm:$0xff]
  %v3708 = vld [vmem:[%s8 + $0x10] sm:$0xff]
  %v3709 = vld [vmem:[%s8 + $0x18] sm:$0xff]
  %v3710 = vld [vmem:[%s8 + $0x20] sm:$0xff]
  %v3711 = vld [vmem:[%s8 + $0x28] sm:$0xff]
  %v3712 = vld [vmem:[%s8 + $0x30] sm:$0xff]
  %v3713 = vld [vmem:[%s8 + $0x38] sm:$0xff]
  %v3714 = vld [vmem:[%s8 + $0x40] sm:$0xff]
  %v3715 = vld [vmem:[%s8 + $0x48] sm:$0xff]
  %v3716 = vld [vmem:[%s8 + $0x50] sm:$0xff]
  %v3717 = vld [vmem:[%s8 + $0x58] sm:$0xff]
  %v3718 = vld [vmem:[%s8 + $0x60] sm:$0xff]
  %v3719 = vld [vmem:[%s8 + $0x68] sm:$0xff]
  %v3720 = vld [vmem:[%s8 + $0x70] sm:$0xff]
  %v3721 = vld [vmem:[%s8 + $0x78] sm:$0xff]
  %v3722 = vld [vmem:[%s9] sm:$0x1]
  %v3724 = vperm.slane %v3722, 0
  %3726 = vmatpush.msra.mxu0 %v3721
  %3727 = vmatpush.msra.mxu0 %v3720
  %3728 = vmatpush.msra.mxu0 %v3719
  %3729 = vmatpush.msra.mxu0 %v3718
  %3730 = vmatpush.msra.mxu0 %v3717
  %3731 = vmatpush.msra.mxu0 %v3716
  %3732 = vmatpush.msra.mxu0 %v3715
  %3733 = vmatpush.msra.mxu0 %v3714
  %3734 = vmatpush.msra.mxu0 %v3713
  %3735 = vmatpush.msra.mxu0 %v3712
  %3736 = vmatpush.msra.mxu0 %v3711
  %3737 = vmatpush.msra.mxu0 %v3710
  %3738 = vmatpush.msra.mxu0 %v3709
  %3739 = vmatpush.msra.mxu0 %v3708
  %3740 = vmatpush.msra.mxu0 %v3707
  %3741 = vmatpush.msra.mxu0 %v3706
  %3742 = vmatmul.f32.gmra.mxu0 %v2760
  %v3743 = vpop.f32.mrf.mxu0
  %v3744 = vadd.f32 %v3724, %v3743
  %3745 = vmatmul.f32.gmra.mxu0 %v2775
  %v3746 = vpop.f32.mrf.mxu0
  %v3747 = vadd.f32 %v3724, %v3746
  %3748 = vmatmul.f32.gmra.mxu0 %v2790
  %v3749 = vpop.f32.mrf.mxu0
  %v3750 = vadd.f32 %v3724, %v3749
  %3751 = vmatmul.f32.gmra.mxu0 %v2805
  %v3752 = vpop.f32.mrf.mxu0
  %v3753 = vadd.f32 %v3724, %v3752
  %3754 = vmatmul.f32.gmra.mxu0 %v2820
  %v3755 = vpop.f32.mrf.mxu0
  %v3756 = vadd.f32 %v3724, %v3755
  %3757 = vmatmul.f32.gmra.mxu0 %v2835
  %v3758 = vpop.f32.mrf.mxu0
  %v3759 = vadd.f32 %v3724, %v3758
  %3760 = vmatmul.f32.gmra.mxu0 %v2850
  %v3761 = vpop.f32.mrf.mxu0
  %v3762 = vadd.f32 %v3724, %v3761
  %3763 = vmatmul.f32.gmra.mxu0 %v2865
  %v3764 = vpop.f32.mrf.mxu0
  %v3765 = vadd.f32 %v3724, %v3764
  %3766 = vmatmul.f32.gmra.mxu0 %v2880
  %v3767 = vpop.f32.mrf.mxu0
  %v3768 = vadd.f32 %v3724, %v3767
  %3769 = vmatmul.f32.gmra.mxu0 %v2895
  %v3770 = vpop.f32.mrf.mxu0
  %v3771 = vadd.f32 %v3724, %v3770
  %3772 = vmatmul.f32.gmra.mxu0 %v2910
  %v3773 = vpop.f32.mrf.mxu0
  %v3774 = vadd.f32 %v3724, %v3773
  %3775 = vmatmul.f32.gmra.mxu0 %v2925
  %v3776 = vpop.f32.mrf.mxu0
  %v3777 = vadd.f32 %v3724, %v3776
  %3778 = vmatmul.f32.gmra.mxu0 %v2940
  %v3779 = vpop.f32.mrf.mxu0
  %v3780 = vadd.f32 %v3724, %v3779
  %3781 = vmatmul.f32.gmra.mxu0 %v2955
  %v3782 = vpop.f32.mrf.mxu0
  %v3783 = vadd.f32 %v3724, %v3782
  %3784 = vmatmul.f32.gmra.mxu0 %v2970
  %v3785 = vpop.f32.mrf.mxu0
  %v3786 = vadd.f32 %v3724, %v3785
  %3787 = vmatmul.f32.gmra.mxu0 %v2985
  %v3788 = vpop.f32.mrf.mxu0
  %v3789 = vadd.f32 %v3724, %v3788
  %3790 = vmatmul.f32.gmra.mxu0 %v3000
  %v3791 = vpop.f32.mrf.mxu0
  %v3792 = vadd.f32 %v3724, %v3791
  %3793 = vmatmul.f32.gmra.mxu0 %v3015
  %v3794 = vpop.f32.mrf.mxu0
  %v3795 = vadd.f32 %v3724, %v3794
  %3796 = vmatmul.f32.gmra.mxu0 %v3030
  %v3797 = vpop.f32.mrf.mxu0
  %v3798 = vadd.f32 %v3724, %v3797
  %3799 = vmatmul.f32.gmra.mxu0 %v3045
  %v3800 = vpop.f32.mrf.mxu0
  %v3801 = vadd.f32 %v3724, %v3800
  %3802 = vmatmul.f32.gmra.mxu0 %v3060
  %v3803 = vpop.f32.mrf.mxu0
  %v3804 = vadd.f32 %v3724, %v3803
  %3805 = vmatmul.f32.gmra.mxu0 %v3075
  %v3806 = vpop.f32.mrf.mxu0
  %v3807 = vadd.f32 %v3724, %v3806
  %3808 = vmatmul.f32.gmra.mxu0 %v3090
  %v3809 = vpop.f32.mrf.mxu0
  %v3810 = vadd.f32 %v3724, %v3809
  %3811 = vmatmul.f32.gmra.mxu0 %v3105
  %v3812 = vpop.f32.mrf.mxu0
  %v3813 = vadd.f32 %v3724, %v3812
  %3814 = vmatmul.f32.gmra.mxu0 %v3120
  %v3815 = vpop.f32.mrf.mxu0
  %v3816 = vadd.f32 %v3724, %v3815
  %3817 = vmatmul.f32.gmra.mxu0 %v3135
  %v3818 = vpop.f32.mrf.mxu0
  %v3819 = vadd.f32 %v3724, %v3818
  %3820 = vmatmul.f32.gmra.mxu0 %v3150
  %v3821 = vpop.f32.mrf.mxu0
  %v3822 = vadd.f32 %v3724, %v3821
  %3823 = vmatmul.f32.gmra.mxu0 %v3165
  %v3824 = vpop.f32.mrf.mxu0
  %v3825 = vadd.f32 %v3724, %v3824
  %3826 = vmatmul.f32.gmra.mxu0 %v3180
  %v3827 = vpop.f32.mrf.mxu0
  %v3828 = vadd.f32 %v3724, %v3827
  %3829 = vmatmul.f32.gmra.mxu0 %v3195
  %v3830 = vpop.f32.mrf.mxu0
  %v3831 = vadd.f32 %v3724, %v3830
  %3832 = vmatmul.f32.gmra.mxu0 %v3210
  %v3833 = vpop.f32.mrf.mxu0
  %v3834 = vadd.f32 %v3724, %v3833
  %3835 = vmatmul.f32.gmra.mxu0 %v3225
  %v3836 = vpop.f32.mrf.mxu0
  %v3837 = vadd.f32 %v3724, %v3836
  %3838 = vmatmul.f32.gmra.mxu0 %v3240
  %v3839 = vpop.f32.mrf.mxu0
  %v3840 = vadd.f32 %v3724, %v3839
  %3841 = vmatmul.f32.gmra.mxu0 %v3255
  %v3842 = vpop.f32.mrf.mxu0
  %v3843 = vadd.f32 %v3724, %v3842
  %3844 = vmatmul.f32.gmra.mxu0 %v3270
  %v3845 = vpop.f32.mrf.mxu0
  %v3846 = vadd.f32 %v3724, %v3845
  %3847 = vmatmul.f32.gmra.mxu0 %v3285
  %v3848 = vpop.f32.mrf.mxu0
  %v3849 = vadd.f32 %v3724, %v3848
  %3850 = vmatmul.f32.gmra.mxu0 %v3300
  %v3851 = vpop.f32.mrf.mxu0
  %v3852 = vadd.f32 %v3724, %v3851
  %3853 = vmatmul.f32.gmra.mxu0 %v3315
  %v3854 = vpop.f32.mrf.mxu0
  %v3855 = vadd.f32 %v3724, %v3854
  %3856 = vmatmul.f32.gmra.mxu0 %v3330
  %v3857 = vpop.f32.mrf.mxu0
  %v3858 = vadd.f32 %v3724, %v3857
  %3859 = vmatmul.f32.gmra.mxu0 %v3345
  %v3860 = vpop.f32.mrf.mxu0
  %v3861 = vadd.f32 %v3724, %v3860
  %3862 = vmatmul.f32.gmra.mxu0 %v3360
  %v3863 = vpop.f32.mrf.mxu0
  %v3864 = vadd.f32 %v3724, %v3863
  %3865 = vmatmul.f32.gmra.mxu0 %v3375
  %v3866 = vpop.f32.mrf.mxu0
  %v3867 = vadd.f32 %v3724, %v3866
  %3868 = vmatmul.f32.gmra.mxu0 %v3390
  %v3869 = vpop.f32.mrf.mxu0
  %v3870 = vadd.f32 %v3724, %v3869
  %3871 = vmatmul.f32.gmra.mxu0 %v3405
  %v3872 = vpop.f32.mrf.mxu0
  %v3873 = vadd.f32 %v3724, %v3872
  %3874 = vmatmul.f32.gmra.mxu0 %v3420
  %v3875 = vpop.f32.mrf.mxu0
  %v3876 = vadd.f32 %v3724, %v3875
  %3877 = vmatmul.f32.gmra.mxu0 %v3435
  %v3878 = vpop.f32.mrf.mxu0
  %v3879 = vadd.f32 %v3724, %v3878
  %3880 = vmatmul.f32.gmra.mxu0 %v3450
  %v3881 = vpop.f32.mrf.mxu0
  %v3882 = vadd.f32 %v3724, %v3881
  %3883 = vmatmul.f32.gmra.mxu0 %v3465
  %v3884 = vpop.f32.mrf.mxu0
  %v3885 = vadd.f32 %v3724, %v3884
  %3886 = vmatmul.f32.gmra.mxu0 %v3480
  %v3887 = vpop.f32.mrf.mxu0
  %v3888 = vadd.f32 %v3724, %v3887
  %3889 = vmatmul.f32.gmra.mxu0 %v3495
  %v3890 = vpop.f32.mrf.mxu0
  %v3891 = vadd.f32 %v3724, %v3890
  %3892 = vmatmul.f32.gmra.mxu0 %v3510
  %v3893 = vpop.f32.mrf.mxu0
  %v3894 = vadd.f32 %v3724, %v3893
  %3895 = vmatmul.f32.gmra.mxu0 %v3525
  %v3896 = vpop.f32.mrf.mxu0
  %v3897 = vadd.f32 %v3724, %v3896
  %3898 = vmatmul.f32.gmra.mxu0 %v3540
  %v3899 = vpop.f32.mrf.mxu0
  %v3900 = vadd.f32 %v3724, %v3899
  %3901 = vmatmul.f32.gmra.mxu0 %v3555
  %v3902 = vpop.f32.mrf.mxu0
  %v3903 = vadd.f32 %v3724, %v3902
  %3904 = vmatmul.f32.gmra.mxu0 %v3570
  %v3905 = vpop.f32.mrf.mxu0
  %v3906 = vadd.f32 %v3724, %v3905
  %3907 = vmatmul.f32.gmra.mxu0 %v3585
  %v3908 = vpop.f32.mrf.mxu0
  %v3909 = vadd.f32 %v3724, %v3908
  %3910 = vmatmul.f32.gmra.mxu0 %v3600
  %v3911 = vpop.f32.mrf.mxu0
  %v3912 = vadd.f32 %v3724, %v3911
  %3913 = vmatmul.f32.gmra.mxu0 %v3615
  %v3914 = vpop.f32.mrf.mxu0
  %v3915 = vadd.f32 %v3724, %v3914
  %3916 = vmatmul.f32.gmra.mxu0 %v3630
  %v3917 = vpop.f32.mrf.mxu0
  %v3918 = vadd.f32 %v3724, %v3917
  %3919 = vmatmul.f32.gmra.mxu0 %v3645
  %v3920 = vpop.f32.mrf.mxu0
  %v3921 = vadd.f32 %v3724, %v3920
  %3922 = vmatmul.f32.gmra.mxu0 %v3660
  %v3923 = vpop.f32.mrf.mxu0
  %v3924 = vadd.f32 %v3724, %v3923
  %3925 = vmatmul.f32.gmra.mxu0 %v3675
  %v3926 = vpop.f32.mrf.mxu0
  %v3927 = vadd.f32 %v3724, %v3926
  %3928 = vmatmul.f32.gmra.mxu0 %v3690
  %v3929 = vpop.f32.mrf.mxu0
  %v3930 = vadd.f32 %v3724, %v3929
  %3931 = vmatmul.f32.gmra.mxu0 %v3705
  %v3932 = vpop.f32.mrf.mxu0
  %v3933 = vadd.f32 %v3724, %v3932
  %3934 = vdwg.mxu0
  %3935 = vst.msk [vmem:[%s10] sm:$0xff] %vm107, %v3744
  %3936 = vst.msk [vmem:[%s10 + $0x8] sm:$0xff] %vm107, %v3747
  %3937 = vst.msk [vmem:[%s10 + $0x10] sm:$0xff] %vm107, %v3750
  %3938 = vst.msk [vmem:[%s10 + $0x18] sm:$0xff] %vm107, %v3753
  %3939 = vst.msk [vmem:[%s10 + $0x20] sm:$0xff] %vm107, %v3756
  %3940 = vst.msk [vmem:[%s10 + $0x28] sm:$0xff] %vm107, %v3759
  %3941 = vst.msk [vmem:[%s10 + $0x30] sm:$0xff] %vm107, %v3762
  %3942 = vst.msk [vmem:[%s10 + $0x38] sm:$0xff] %vm107, %v3765
  %3943 = vst.msk [vmem:[%s10 + $0x40] sm:$0xff] %vm107, %v3768
  %3944 = vst.msk [vmem:[%s10 + $0x48] sm:$0xff] %vm107, %v3771
  %3945 = vst.msk [vmem:[%s10 + $0x50] sm:$0xff] %vm107, %v3774
  %3946 = vst.msk [vmem:[%s10 + $0x58] sm:$0xff] %vm107, %v3777
  %3947 = vst.msk [vmem:[%s10 + $0x60] sm:$0xff] %vm107, %v3780
  %3948 = vst.msk [vmem:[%s10 + $0x68] sm:$0xff] %vm107, %v3783
  %3949 = vst.msk [vmem:[%s10 + $0x70] sm:$0xff] %vm107, %v3786
  %3950 = vst.msk [vmem:[%s10 + $0x78] sm:$0xff] %vm107, %v3789
  %3951 = vst.msk [vmem:[%s10 + $0x80] sm:$0xff] %vm107, %v3792
  %3952 = vst.msk [vmem:[%s10 + $0x88] sm:$0xff] %vm107, %v3795
  %3953 = vst.msk [vmem:[%s10 + $0x90] sm:$0xff] %vm107, %v3798
  %3954 = vst.msk [vmem:[%s10 + $0x98] sm:$0xff] %vm107, %v3801
  %3955 = vst.msk [vmem:[%s10 + $0xa0] sm:$0xff] %vm107, %v3804
  %3956 = vst.msk [vmem:[%s10 + $0xa8] sm:$0xff] %vm107, %v3807
  %3957 = vst.msk [vmem:[%s10 + $0xb0] sm:$0xff] %vm107, %v3810
  %3958 = vst.msk [vmem:[%s10 + $0xb8] sm:$0xff] %vm107, %v3813
  %3959 = vst.msk [vmem:[%s10 + $0xc0] sm:$0xff] %vm107, %v3816
  %3960 = vst.msk [vmem:[%s10 + $0xc8] sm:$0xff] %vm107, %v3819
  %3961 = vst.msk [vmem:[%s10 + $0xd0] sm:$0xff] %vm107, %v3822
  %3962 = vst.msk [vmem:[%s10 + $0xd8] sm:$0xff] %vm107, %v3825
  %3963 = vst.msk [vmem:[%s10 + $0xe0] sm:$0xff] %vm107, %v3828
  %3964 = vst.msk [vmem:[%s10 + $0xe8] sm:$0xff] %vm107, %v3831
  %3965 = vst.msk [vmem:[%s10 + $0xf0] sm:$0xff] %vm107, %v3834
  %3966 = vst.msk [vmem:[%s10 + $0xf8] sm:$0xff] %vm107, %v3837
  %3967 = vst.msk [vmem:[%s10 + $0x100] sm:$0xff] %vm107, %v3840
  %3968 = vst.msk [vmem:[%s10 + $0x108] sm:$0xff] %vm107, %v3843
  %3969 = vst.msk [vmem:[%s10 + $0x110] sm:$0xff] %vm107, %v3846
  %3970 = vst.msk [vmem:[%s10 + $0x118] sm:$0xff] %vm107, %v3849
  %3971 = vst.msk [vmem:[%s10 + $0x120] sm:$0xff] %vm107, %v3852
  %3972 = vst.msk [vmem:[%s10 + $0x128] sm:$0xff] %vm107, %v3855
  %3973 = vst.msk [vmem:[%s10 + $0x130] sm:$0xff] %vm107, %v3858
  %3974 = vst.msk [vmem:[%s10 + $0x138] sm:$0xff] %vm107, %v3861
  %3975 = vst.msk [vmem:[%s10 + $0x140] sm:$0xff] %vm107, %v3864
  %3976 = vst.msk [vmem:[%s10 + $0x148] sm:$0xff] %vm107, %v3867
  %3977 = vst.msk [vmem:[%s10 + $0x150] sm:$0xff] %vm107, %v3870
  %3978 = vst.msk [vmem:[%s10 + $0x158] sm:$0xff] %vm107, %v3873
  %3979 = vst.msk [vmem:[%s10 + $0x160] sm:$0xff] %vm107, %v3876
  %3980 = vst.msk [vmem:[%s10 + $0x168] sm:$0xff] %vm107, %v3879
  %3981 = vst.msk [vmem:[%s10 + $0x170] sm:$0xff] %vm107, %v3882
  %3982 = vst.msk [vmem:[%s10 + $0x178] sm:$0xff] %vm107, %v3885
  %3983 = vst.msk [vmem:[%s10 + $0x180] sm:$0xff] %vm107, %v3888
  %3984 = vst.msk [vmem:[%s10 + $0x188] sm:$0xff] %vm107, %v3891
  %3985 = vst.msk [vmem:[%s10 + $0x190] sm:$0xff] %vm107, %v3894
  %3986 = vst.msk [vmem:[%s10 + $0x198] sm:$0xff] %vm107, %v3897
  %3987 = vst.msk [vmem:[%s10 + $0x1a0] sm:$0xff] %vm107, %v3900
  %3988 = vst.msk [vmem:[%s10 + $0x1a8] sm:$0xff] %vm107, %v3903
  %3989 = vst.msk [vmem:[%s10 + $0x1b0] sm:$0xff] %vm107, %v3906
  %3990 = vst.msk [vmem:[%s10 + $0x1b8] sm:$0xff] %vm107, %v3909
  %3991 = vst.msk [vmem:[%s10 + $0x1c0] sm:$0xff] %vm107, %v3912
  %3992 = vst.msk [vmem:[%s10 + $0x1c8] sm:$0xff] %vm107, %v3915
  %3993 = vst.msk [vmem:[%s10 + $0x1d0] sm:$0xff] %vm107, %v3918
  %3994 = vst.msk [vmem:[%s10 + $0x1d8] sm:$0xff] %vm107, %v3921
  %3995 = vst.msk [vmem:[%s10 + $0x1e0] sm:$0xff] %vm107, %v3924
  %3996 = vst.msk [vmem:[%s10 + $0x1e8] sm:$0xff] %vm107, %v3927
  %3997 = vst.msk [vmem:[%s10 + $0x1f0] sm:$0xff] %vm107, %v3930
  %3998 = vst.msk [vmem:[%s10 + $0x1f8] sm:$0xff] %vm107, %v3933
  // Predicated region
  $region42: #{tpu_custom_call.1} parent=0 // pred_check
    _
  $region43: #{tpu_custom_call.1} parent=0 // pred_check_branch
    %4000 = sbr.rel (0) target = $region45
  $region44: #{tpu_custom_call.1} parent=0 // pred_region
    _
  $region45: #{tpu_custom_call.1} parent=0 // pred_fallthru
    _
  // Predicated region
  $region46: #{tpu_custom_call.1} parent=0 // pred_check
    _
  $region47: #{tpu_custom_call.1} parent=0 // pred_check_branch
    %4002 = sbr.rel (0) target = $region49
  $region48: #{tpu_custom_call.1} parent=0 // pred_region
    _
  $region49: #{tpu_custom_call.1} parent=0 // pred_fallthru
    _

// kernel: tpu_custom_call.1
$region0: #{tpu_custom_call.1}
  #allocation0 [shape = 'u32[]', space=smem, size = 0x4, offset = 0x4, fixed_abs, tag = 'smem constant byte address 0x4 - core index']
  #allocation1 [shape = 'u32[72,128]{1,0:T(1,128)}', space=vmem, size = 0x9000, scoped, tag = 'internal scratch']
  %s0 = inlined_call_operand.vmem [shape: f32[512,32], index: 0, kind: input, shape index: {}]
  %s1 = inlined_call_operand.vmem [shape: f32[512,16], index: 1, kind: input, shape index: {}]
  %s2 = inlined_call_operand.vmem [shape: f32[32,128], index: 2, kind: input, shape index: {}]
  %s3 = inlined_call_operand.vmem [shape: f32[1,128], index: 3, kind: input, shape index: {}]
  %s4 = inlined_call_operand.vmem [shape: f32[128,16], index: 4, kind: input, shape index: {}]
  %s5 = inlined_call_operand.vmem [shape: f32[1,16], index: 5, kind: input, shape index: {}]
  %s6 = inlined_call_operand.vmem [shape: f32[16,128], index: 6, kind: input, shape index: {}]
  %s7 = inlined_call_operand.vmem [shape: f32[1,128], index: 7, kind: input, shape index: {}]
  %s8 = inlined_call_operand.vmem [shape: f32[128,32], index: 8, kind: input, shape index: {}]
  %s9 = inlined_call_operand.vmem [shape: f32[1,32], index: 9, kind: input, shape index: {}]
  %s10 = inlined_call_operand.vmem [shape: f32[512,32], index: 10, kind: output, shape index: {}]
  %s11 = sld [smem:[#allocation0]]
  $region50: #{tpu_custom_call.1} parent=0
    _
  %s13 = ssub.s32 1, %s11
  %s14 = scalar_select 0, %s13, %s11
  // Predicated region
  $region2: #{tpu_custom_call.1} parent=0 // pred_check
    _
  $region3: #{tpu_custom_call.1} parent=0 // pred_check_branch
    %16 = sbr.rel (0) target = $region5
  $region4: #{tpu_custom_call.1} parent=0 // pred_region
    _
  $region5: #{tpu_custom_call.1} parent=0 // pred_fallthru
    _
  // Predicated region
  $region6: #{tpu_custom_call.1} parent=0 // pred_check
    _
  $region7: #{tpu_custom_call.1} parent=0 // pred_check_branch
    %18 = sbr.rel (0) target = $region9
  $region8: #{tpu_custom_call.1} parent=0 // pred_region
    _
  $region9: #{tpu_custom_call.1} parent=0 // pred_fallthru
    _
  // Predicated region
  $region10: #{tpu_custom_call.1} parent=0 // pred_check
    _
  $region11: #{tpu_custom_call.1} parent=0 // pred_check_branch
    %20 = sbr.rel (0) target = $region13
  $region12: #{tpu_custom_call.1} parent=0 // pred_region
    _
  $region13: #{tpu_custom_call.1} parent=0 // pred_fallthru
    _
  // Predicated region
  $region14: #{tpu_custom_call.1} parent=0 // pred_check
    _
  $region15: #{tpu_custom_call.1} parent=0 // pred_check_branch
    %22 = sbr.rel (0) target = $region17
  $region16: #{tpu_custom_call.1} parent=0 // pred_region
    _
  $region17: #{tpu_custom_call.1} parent=0 // pred_fallthru
    _
  // Predicated region
  $region18: #{tpu_custom_call.1} parent=0 // pred_check
    _
  $region19: #{tpu_custom_call.1} parent=0 // pred_check_branch
    %24 = sbr.rel (0) target = $region21
  $region20: #{tpu_custom_call.1} parent=0 // pred_region
    _
  $region21: #{tpu_custom_call.1} parent=0 // pred_fallthru
    _
  // Predicated region
  $region22: #{tpu_custom_call.1} parent=0 // pred_check
    _
  $region23: #{tpu_custom_call.1} parent=0 // pred_check_branch
    %26 = sbr.rel (0) target = $region25
  $region24: #{tpu_custom_call.1} parent=0 // pred_region
    _
  $region25: #{tpu_custom_call.1} parent=0 // pred_fallthru
    _
  // Predicated region
  $region26: #{tpu_custom_call.1} parent=0 // pred_check
    _
  $region27: #{tpu_custom_call.1} parent=0 // pred_check_branch
    %28 = sbr.rel (0) target = $region29
  $region28: #{tpu_custom_call.1} parent=0 // pred_region
    _
  $region29: #{tpu_custom_call.1} parent=0 // pred_fallthru
    _
  // Predicated region
  $region30: #{tpu_custom_call.1} parent=0 // pred_check
    _
  $region31: #{tpu_custom_call.1} parent=0 // pred_check_branch
    %30 = sbr.rel (0) target = $region33
  $region32: #{tpu_custom_call.1} parent=0 // pred_region
    _
  $region33: #{tpu_custom_call.1} parent=0 // pred_fallthru
    _
  // Predicated region
  $region34: #{tpu_custom_call.1} parent=0 // pred_check
    _
  $region35: #{tpu_custom_call.1} parent=0 // pred_check_branch
    %32 = sbr.rel (0) target = $region37
  $region36: #{tpu_custom_call.1} parent=0 // pred_region
    _
  $region37: #{tpu_custom_call.1} parent=0 // pred_fallthru
    _
  // Predicated region
  $region38: #{tpu_custom_call.1} parent=0 // pred_check
    _
  $region39: #{tpu_custom_call.1} parent=0 // pred_check_branch
    %34 = sbr.rel (0) target = $region41
  $region40: #{tpu_custom_call.1} parent=0 // pred_region
    _
  $region41: #{tpu_custom_call.1} parent=0 // pred_fallthru
    _
  %v35 = vld [vmem:[%s0] sm:$0xff]
  %v36 = vld [vmem:[%s0 + $0x8] sm:$0xff]
  %v37 = vld [vmem:[%s0 + $0x10] sm:$0xff]
  %v38 = vld [vmem:[%s0 + $0x18] sm:$0xff]
  %v39 = vld [vmem:[%s0 + $0x20] sm:$0xff]
  %v40 = vld [vmem:[%s0 + $0x28] sm:$0xff]
  %v41 = vld [vmem:[%s0 + $0x30] sm:$0xff]
  %v42 = vld [vmem:[%s0 + $0x38] sm:$0xff]
  %v43 = vld [vmem:[%s0 + $0x40] sm:$0xff]
  %v44 = vld [vmem:[%s0 + $0x48] sm:$0xff]
  %v45 = vld [vmem:[%s0 + $0x50] sm:$0xff]
  %v46 = vld [vmem:[%s0 + $0x58] sm:$0xff]
  %v47 = vld [vmem:[%s0 + $0x60] sm:$0xff]
  %v48 = vld [vmem:[%s0 + $0x68] sm:$0xff]
  %v49 = vld [vmem:[%s0 + $0x70] sm:$0xff]
  %v50 = vld [vmem:[%s0 + $0x78] sm:$0xff]
  %v51 = vld [vmem:[%s0 + $0x80] sm:$0xff]
  %v52 = vld [vmem:[%s0 + $0x88] sm:$0xff]
  %v53 = vld [vmem:[%s0 + $0x90] sm:$0xff]
  %v54 = vld [vmem:[%s0 + $0x98] sm:$0xff]
  %v55 = vld [vmem:[%s0 + $0xa0] sm:$0xff]
  %v56 = vld [vmem:[%s0 + $0xa8] sm:$0xff]
  %v57 = vld [vmem:[%s0 + $0xb0] sm:$0xff]
  %v58 = vld [vmem:[%s0 + $0xb8] sm:$0xff]
  %v59 = vld [vmem:[%s0 + $0xc0] sm:$0xff]
  %v60 = vld [vmem:[%s0 + $0xc8] sm:$0xff]
  %v61 = vld [vmem:[%s0 + $0xd0] sm:$0xff]
  %v62 = vld [vmem:[%s0 + $0xd8] sm:$0xff]
  %v63 = vld [vmem:[%s0 + $0xe0] sm:$0xff]
  %v64 = vld [vmem:[%s0 + $0xe8] sm:$0xff]
  %v65 = vld [vmem:[%s0 + $0xf0] sm:$0xff]
  %v66 = vld [vmem:[%s0 + $0xf8] sm:$0xff]
  %v67 = vld [vmem:[%s0 + $0x100] sm:$0xff]
  %v68 = vld [vmem:[%s0 + $0x108] sm:$0xff]
  %v69 = vld [vmem:[%s0 + $0x110] sm:$0xff]
  %v70 = vld [vmem:[%s0 + $0x118] sm:$0xff]
  %v71 = vld [vmem:[%s0 + $0x120] sm:$0xff]
  %v72 = vld [vmem:[%s0 + $0x128] sm:$0xff]
  %v73 = vld [vmem:[%s0 + $0x130] sm:$0xff]
  %v74 = vld [vmem:[%s0 + $0x138] sm:$0xff]
  %v75 = vld [vmem:[%s0 + $0x140] sm:$0xff]
  %v76 = vld [vmem:[%s0 + $0x148] sm:$0xff]
  %v77 = vld [vmem:[%s0 + $0x150] sm:$0xff]
  %v78 = vld [vmem:[%s0 + $0x158] sm:$0xff]
  %v79 = vld [vmem:[%s0 + $0x160] sm:$0xff]
  %v80 = vld [vmem:[%s0 + $0x168] sm:$0xff]
  %v81 = vld [vmem:[%s0 + $0x170] sm:$0xff]
  %v82 = vld [vmem:[%s0 + $0x178] sm:$0xff]
  %v83 = vld [vmem:[%s0 + $0x180] sm:$0xff]
  %v84 = vld [vmem:[%s0 + $0x188] sm:$0xff]
  %v85 = vld [vmem:[%s0 + $0x190] sm:$0xff]
  %v86 = vld [vmem:[%s0 + $0x198] sm:$0xff]
  %v87 = vld [vmem:[%s0 + $0x1a0] sm:$0xff]
  %v88 = vld [vmem:[%s0 + $0x1a8] sm:$0xff]
  %v89 = vld [vmem:[%s0 + $0x1b0] sm:$0xff]
  %v90 = vld [vmem:[%s0 + $0x1b8] sm:$0xff]
  %v91 = vld [vmem:[%s0 + $0x1c0] sm:$0xff]
  %v92 = vld [vmem:[%s0 + $0x1c8] sm:$0xff]
  %v93 = vld [vmem:[%s0 + $0x1d0] sm:$0xff]
  %v94 = vld [vmem:[%s0 + $0x1d8] sm:$0xff]
  %v95 = vld [vmem:[%s0 + $0x1e0] sm:$0xff]
  %v96 = vld [vmem:[%s0 + $0x1e8] sm:$0xff]
  %v97 = vld [vmem:[%s0 + $0x1f0] sm:$0xff]
  %v98 = vld [vmem:[%s0 + $0x1f8] sm:$0xff]
  %v99 = vld [vmem:[%s2] sm:$0xff]
  %v100 = vld [vmem:[%s2 + $0x8] sm:$0xff]
  %v101 = vld [vmem:[%s2 + $0x10] sm:$0xff]
  %v102 = vld [vmem:[%s2 + $0x18] sm:$0xff]
  %v103 = vld [vmem:[%s3] sm:$0x1]
  %v105 = vperm.slane %v103, 0
  %vm107 = vcmask 261120
  %v109 = vsel %vm107, %v35, 0
  %v112 = vsel %vm107, %v36, 0
  %v115 = vsel %vm107, %v37, 0
  %v118 = vsel %vm107, %v38, 0
  %v121 = vsel %vm107, %v39, 0
  %v124 = vsel %vm107, %v40, 0
  %v127 = vsel %vm107, %v41, 0
  %v130 = vsel %vm107, %v42, 0
  %v133 = vsel %vm107, %v43, 0
  %v136 = vsel %vm107, %v44, 0
  %v139 = vsel %vm107, %v45, 0
  %v142 = vsel %vm107, %v46, 0
  %v145 = vsel %vm107, %v47, 0
  %v148 = vsel %vm107, %v48, 0
  %v151 = vsel %vm107, %v49, 0
  %v154 = vsel %vm107, %v50, 0
  %v157 = vsel %vm107, %v51, 0
  %v160 = vsel %vm107, %v52, 0
  %v163 = vsel %vm107, %v53, 0
  %v166 = vsel %vm107, %v54, 0
  %v169 = vsel %vm107, %v55, 0
  %v172 = vsel %vm107, %v56, 0
  %v175 = vsel %vm107, %v57, 0
  %v178 = vsel %vm107, %v58, 0
  %v181 = vsel %vm107, %v59, 0
  %v184 = vsel %vm107, %v60, 0
  %v187 = vsel %vm107, %v61, 0
  %v190 = vsel %vm107, %v62, 0
  %v193 = vsel %vm107, %v63, 0
  %v196 = vsel %vm107, %v64, 0
  %v199 = vsel %vm107, %v65, 0
  %v202 = vsel %vm107, %v66, 0
  %v205 = vsel %vm107, %v67, 0
  %v208 = vsel %vm107, %v68, 0
  %v211 = vsel %vm107, %v69, 0
  %v214 = vsel %vm107, %v70, 0
  %v217 = vsel %vm107, %v71, 0
  %v220 = vsel %vm107, %v72, 0
  %v223 = vsel %vm107, %v73, 0
  %v226 = vsel %vm107, %v74, 0
  %v229 = vsel %vm107, %v75, 0
  %v232 = vsel %vm107, %v76, 0
  %v235 = vsel %vm107, %v77, 0
  %v238 = vsel %vm107, %v78, 0
  %v241 = vsel %vm107, %v79, 0
  %v244 = vsel %vm107, %v80, 0
  %v247 = vsel %vm107, %v81, 0
  %v250 = vsel %vm107, %v82, 0
  %v253 = vsel %vm107, %v83, 0
  %v256 = vsel %vm107, %v84, 0
  %v259 = vsel %vm107, %v85, 0
  %v262 = vsel %vm107, %v86, 0
  %v265 = vsel %vm107, %v87, 0
  %v268 = vsel %vm107, %v88, 0
  %v271 = vsel %vm107, %v89, 0
  %v274 = vsel %vm107, %v90, 0
  %v277 = vsel %vm107, %v91, 0
  %v280 = vsel %vm107, %v92, 0
  %v283 = vsel %vm107, %v93, 0
  %v286 = vsel %vm107, %v94, 0
  %v289 = vsel %vm107, %v95, 0
  %v292 = vsel %vm107, %v96, 0
  %v295 = vsel %vm107, %v97, 0
  %v298 = vsel %vm107, %v98, 0
  %300 = vmatpush.msra.mxu0 0.0
  %301 = vmatpush.msra.mxu0 0.0
  %302 = vmatpush.msra.mxu0 0.0
  %303 = vmatpush.msra.mxu0 0.0
  %304 = vmatpush.msra.mxu0 0.0
  %305 = vmatpush.msra.mxu0 0.0
  %306 = vmatpush.msra.mxu0 0.0
  %307 = vmatpush.msra.mxu0 0.0
  %308 = vmatpush.msra.mxu0 0.0
  %309 = vmatpush.msra.mxu0 0.0
  %310 = vmatpush.msra.mxu0 0.0
  %311 = vmatpush.msra.mxu0 0.0
  %312 = vmatpush.msra.mxu0 %v102
  %313 = vmatpush.msra.mxu0 %v101
  %314 = vmatpush.msra.mxu0 %v100
  %315 = vmatpush.msra.mxu0 %v99
  %316 = vmatmul.f32.gmra.mxu0 %v109
  %v317 = vpop.f32.mrf.mxu0
  %v318 = vadd.f32 %v105, %v317
  %319 = vmatmul.f32.gmra.mxu0 %v112
  %v320 = vpop.f32.mrf.mxu0
  %v321 = vadd.f32 %v105, %v320
  %322 = vmatmul.f32.gmra.mxu0 %v115
  %v323 = vpop.f32.mrf.mxu0
  %v324 = vadd.f32 %v105, %v323
  %325 = vmatmul.f32.gmra.mxu0 %v118
  %v326 = vpop.f32.mrf.mxu0
  %v327 = vadd.f32 %v105, %v326
  %328 = vmatmul.f32.gmra.mxu0 %v121
  %v329 = vpop.f32.mrf.mxu0
  %v330 = vadd.f32 %v105, %v329
  %331 = vmatmul.f32.gmra.mxu0 %v124
  %v332 = vpop.f32.mrf.mxu0
  %v333 = vadd.f32 %v105, %v332
  %334 = vmatmul.f32.gmra.mxu0 %v127
  %v335 = vpop.f32.mrf.mxu0
  %v336 = vadd.f32 %v105, %v335
  %337 = vmatmul.f32.gmra.mxu0 %v130
  %v338 = vpop.f32.mrf.mxu0
  %v339 = vadd.f32 %v105, %v338
  %340 = vmatmul.f32.gmra.mxu0 %v133
  %v341 = vpop.f32.mrf.mxu0
  %v342 = vadd.f32 %v105, %v341
  %343 = vmatmul.f32.gmra.mxu0 %v136
  %v344 = vpop.f32.mrf.mxu0
  %v345 = vadd.f32 %v105, %v344
  %346 = vmatmul.f32.gmra.mxu0 %v139
  %v347 = vpop.f32.mrf.mxu0
  %v348 = vadd.f32 %v105, %v347
  %349 = vmatmul.f32.gmra.mxu0 %v142
  %v350 = vpop.f32.mrf.mxu0
  %v351 = vadd.f32 %v105, %v350
  %352 = vmatmul.f32.gmra.mxu0 %v145
  %v353 = vpop.f32.mrf.mxu0
  %v354 = vadd.f32 %v105, %v353
  %355 = vmatmul.f32.gmra.mxu0 %v148
  %v356 = vpop.f32.mrf.mxu0
  %v357 = vadd.f32 %v105, %v356
  %358 = vmatmul.f32.gmra.mxu0 %v151
  %v359 = vpop.f32.mrf.mxu0
  %v360 = vadd.f32 %v105, %v359
  %361 = vmatmul.f32.gmra.mxu0 %v154
  %v362 = vpop.f32.mrf.mxu0
  %v363 = vadd.f32 %v105, %v362
  %364 = vmatmul.f32.gmra.mxu0 %v157
  %v365 = vpop.f32.mrf.mxu0
  %v366 = vadd.f32 %v105, %v365
  %367 = vmatmul.f32.gmra.mxu0 %v160
  %v368 = vpop.f32.mrf.mxu0
  %v369 = vadd.f32 %v105, %v368
  %370 = vmatmul.f32.gmra.mxu0 %v163
  %v371 = vpop.f32.mrf.mxu0
  %v372 = vadd.f32 %v105, %v371
  %373 = vmatmul.f32.gmra.mxu0 %v166
  %v374 = vpop.f32.mrf.mxu0
  %v375 = vadd.f32 %v105, %v374
  %376 = vmatmul.f32.gmra.mxu0 %v169
  %v377 = vpop.f32.mrf.mxu0
  %v378 = vadd.f32 %v105, %v377
  %379 = vmatmul.f32.gmra.mxu0 %v172
  %v380 = vpop.f32.mrf.mxu0
  %v381 = vadd.f32 %v105, %v380
  %382 = vmatmul.f32.gmra.mxu0 %v175
  %v383 = vpop.f32.mrf.mxu0
  %v384 = vadd.f32 %v105, %v383
  %385 = vmatmul.f32.gmra.mxu0 %v178
  %v386 = vpop.f32.mrf.mxu0
  %v387 = vadd.f32 %v105, %v386
  %388 = vmatmul.f32.gmra.mxu0 %v181
  %v389 = vpop.f32.mrf.mxu0
  %v390 = vadd.f32 %v105, %v389
  %391 = vmatmul.f32.gmra.mxu0 %v184
  %v392 = vpop.f32.mrf.mxu0
  %v393 = vadd.f32 %v105, %v392
  %394 = vmatmul.f32.gmra.mxu0 %v187
  %v395 = vpop.f32.mrf.mxu0
  %v396 = vadd.f32 %v105, %v395
  %397 = vmatmul.f32.gmra.mxu0 %v190
  %v398 = vpop.f32.mrf.mxu0
  %v399 = vadd.f32 %v105, %v398
  %400 = vmatmul.f32.gmra.mxu0 %v193
  %v401 = vpop.f32.mrf.mxu0
  %v402 = vadd.f32 %v105, %v401
  %403 = vmatmul.f32.gmra.mxu0 %v196
  %v404 = vpop.f32.mrf.mxu0
  %v405 = vadd.f32 %v105, %v404
  %406 = vmatmul.f32.gmra.mxu0 %v199
  %v407 = vpop.f32.mrf.mxu0
  %v408 = vadd.f32 %v105, %v407
  %409 = vmatmul.f32.gmra.mxu0 %v202
  %v410 = vpop.f32.mrf.mxu0
  %v411 = vadd.f32 %v105, %v410
  %412 = vmatmul.f32.gmra.mxu0 %v205
  %v413 = vpop.f32.mrf.mxu0
  %v414 = vadd.f32 %v105, %v413
  %415 = vmatmul.f32.gmra.mxu0 %v208
  %v416 = vpop.f32.mrf.mxu0
  %v417 = vadd.f32 %v105, %v416
  %418 = vmatmul.f32.gmra.mxu0 %v211
  %v419 = vpop.f32.mrf.mxu0
  %v420 = vadd.f32 %v105, %v419
  %421 = vmatmul.f32.gmra.mxu0 %v214
  %v422 = vpop.f32.mrf.mxu0
  %v423 = vadd.f32 %v105, %v422
  %424 = vmatmul.f32.gmra.mxu0 %v217
  %v425 = vpop.f32.mrf.mxu0
  %v426 = vadd.f32 %v105, %v425
  %427 = vmatmul.f32.gmra.mxu0 %v220
  %v428 = vpop.f32.mrf.mxu0
  %v429 = vadd.f32 %v105, %v428
  %430 = vmatmul.f32.gmra.mxu0 %v223
  %v431 = vpop.f32.mrf.mxu0
  %v432 = vadd.f32 %v105, %v431
  %433 = vmatmul.f32.gmra.mxu0 %v226
  %v434 = vpop.f32.mrf.mxu0
  %v435 = vadd.f32 %v105, %v434
  %436 = vmatmul.f32.gmra.mxu0 %v229
  %v437 = vpop.f32.mrf.mxu0
  %v438 = vadd.f32 %v105, %v437
  %439 = vmatmul.f32.gmra.mxu0 %v232
  %v440 = vpop.f32.mrf.mxu0
  %v441 = vadd.f32 %v105, %v440
  %442 = vmatmul.f32.gmra.mxu0 %v235
  %v443 = vpop.f32.mrf.mxu0
  %v444 = vadd.f32 %v105, %v443
  %445 = vmatmul.f32.gmra.mxu0 %v238
  %v446 = vpop.f32.mrf.mxu0
  %v447 = vadd.f32 %v105, %v446
  %448 = vmatmul.f32.gmra.mxu0 %v241
  %v449 = vpop.f32.mrf.mxu0
  %v450 = vadd.f32 %v105, %v449
  %451 = vmatmul.f32.gmra.mxu0 %v244
  %v452 = vpop.f32.mrf.mxu0
  %v453 = vadd.f32 %v105, %v452
  %454 = vmatmul.f32.gmra.mxu0 %v247
  %v455 = vpop.f32.mrf.mxu0
  %v456 = vadd.f32 %v105, %v455
  %457 = vmatmul.f32.gmra.mxu0 %v250
  %v458 = vpop.f32.mrf.mxu0
  %v459 = vadd.f32 %v105, %v458
  %460 = vmatmul.f32.gmra.mxu0 %v253
  %v461 = vpop.f32.mrf.mxu0
  %v462 = vadd.f32 %v105, %v461
  %463 = vmatmul.f32.gmra.mxu0 %v256
  %v464 = vpop.f32.mrf.mxu0
  %v465 = vadd.f32 %v105, %v464
  %466 = vmatmul.f32.gmra.mxu0 %v259
  %v467 = vpop.f32.mrf.mxu0
  %v468 = vadd.f32 %v105, %v467
  %469 = vmatmul.f32.gmra.mxu0 %v262
  %v470 = vpop.f32.mrf.mxu0
  %v471 = vadd.f32 %v105, %v470
  %472 = vmatmul.f32.gmra.mxu0 %v265
  %v473 = vpop.f32.mrf.mxu0
  %v474 = vadd.f32 %v105, %v473
  %475 = vmatmul.f32.gmra.mxu0 %v268
  %v476 = vpop.f32.mrf.mxu0
  %v477 = vadd.f32 %v105, %v476
  %478 = vmatmul.f32.gmra.mxu0 %v271
  %v479 = vpop.f32.mrf.mxu0
  %v480 = vadd.f32 %v105, %v479
  %481 = vmatmul.f32.gmra.mxu0 %v274
  %v482 = vpop.f32.mrf.mxu0
  %v483 = vadd.f32 %v105, %v482
  %484 = vmatmul.f32.gmra.mxu0 %v277
  %v485 = vpop.f32.mrf.mxu0
  %v486 = vadd.f32 %v105, %v485
  %487 = vmatmul.f32.gmra.mxu0 %v280
  %v488 = vpop.f32.mrf.mxu0
  %v489 = vadd.f32 %v105, %v488
  %490 = vmatmul.f32.gmra.mxu0 %v283
  %v491 = vpop.f32.mrf.mxu0
  %v492 = vadd.f32 %v105, %v491
  %493 = vmatmul.f32.gmra.mxu0 %v286
  %v494 = vpop.f32.mrf.mxu0
  %v495 = vadd.f32 %v105, %v494
  %496 = vmatmul.f32.gmra.mxu0 %v289
  %v497 = vpop.f32.mrf.mxu0
  %v498 = vadd.f32 %v105, %v497
  %499 = vmatmul.f32.gmra.mxu0 %v292
  %v500 = vpop.f32.mrf.mxu0
  %v501 = vadd.f32 %v105, %v500
  %502 = vmatmul.f32.gmra.mxu0 %v295
  %v503 = vpop.f32.mrf.mxu0
  %v504 = vadd.f32 %v105, %v503
  %505 = vmatmul.f32.gmra.mxu0 %v298
  %v506 = vpop.f32.mrf.mxu0
  %v507 = vadd.f32 %v105, %v506
  %508 = vdwg.mxu0
  %v509 = vxor.u32 %v318, 2147483648
  %v510 = vxor.u32 %v321, 2147483648
  %v511 = vxor.u32 %v324, 2147483648
  %v512 = vxor.u32 %v327, 2147483648
  %v513 = vxor.u32 %v330, 2147483648
  %v514 = vxor.u32 %v333, 2147483648
  %v515 = vxor.u32 %v336, 2147483648
  %v516 = vxor.u32 %v339, 2147483648
  %v517 = vxor.u32 %v342, 2147483648
  %v518 = vxor.u32 %v345, 2147483648
  %v519 = vxor.u32 %v348, 2147483648
  %v520 = vxor.u32 %v351, 2147483648
  %v521 = vxor.u32 %v354, 2147483648
  %v522 = vxor.u32 %v357, 2147483648
  %v523 = vxor.u32 %v360, 2147483648
  %v524 = vxor.u32 %v363, 2147483648
  %v525 = vxor.u32 %v366, 2147483648
  %v526 = vxor.u32 %v369, 2147483648
  %v527 = vxor.u32 %v372, 2147483648
  %v528 = vxor.u32 %v375, 2147483648
  %v529 = vxor.u32 %v378, 2147483648
  %v530 = vxor.u32 %v381, 2147483648
  %v531 = vxor.u32 %v384, 2147483648
  %v532 = vxor.u32 %v387, 2147483648
  %v533 = vxor.u32 %v390, 2147483648
  %v534 = vxor.u32 %v393, 2147483648
  %v535 = vxor.u32 %v396, 2147483648
  %v536 = vxor.u32 %v399, 2147483648
  %v537 = vxor.u32 %v402, 2147483648
  %v538 = vxor.u32 %v405, 2147483648
  %v539 = vxor.u32 %v408, 2147483648
  %v540 = vxor.u32 %v411, 2147483648
  %v541 = vxor.u32 %v414, 2147483648
  %v542 = vxor.u32 %v417, 2147483648
  %v543 = vxor.u32 %v420, 2147483648
  %v544 = vxor.u32 %v423, 2147483648
  %v545 = vxor.u32 %v426, 2147483648
  %v546 = vxor.u32 %v429, 2147483648
  %v547 = vxor.u32 %v432, 2147483648
  %v548 = vxor.u32 %v435, 2147483648
  %v549 = vxor.u32 %v438, 2147483648
  %v550 = vxor.u32 %v441, 2147483648
  %v551 = vxor.u32 %v444, 2147483648
  %v552 = vxor.u32 %v447, 2147483648
  %v553 = vxor.u32 %v450, 2147483648
  %v554 = vxor.u32 %v453, 2147483648
  %v555 = vxor.u32 %v456, 2147483648
  %v556 = vxor.u32 %v459, 2147483648
  %v557 = vxor.u32 %v462, 2147483648
  %v558 = vxor.u32 %v465, 2147483648
  %v559 = vxor.u32 %v468, 2147483648
  %v560 = vxor.u32 %v471, 2147483648
  %v561 = vxor.u32 %v474, 2147483648
  %v562 = vxor.u32 %v477, 2147483648
  %v563 = vxor.u32 %v480, 2147483648
  %v564 = vxor.u32 %v483, 2147483648
  %v565 = vxor.u32 %v486, 2147483648
  %v566 = vxor.u32 %v489, 2147483648
  %v567 = vxor.u32 %v492, 2147483648
  %v568 = vxor.u32 %v495, 2147483648
  %v569 = vxor.u32 %v498, 2147483648
  %v570 = vxor.u32 %v501, 2147483648
  %v571 = vxor.u32 %v504, 2147483648
  %v572 = vxor.u32 %v507, 2147483648
  %v573 = vmul.f32 %v509, 1.442695
  %v574 = vpow.pop %v573
  %v575 = vmul.f32 %v510, 1.442695
  %v576 = vpow.pop %v575
  %v577 = vmul.f32 %v511, 1.442695
  %v578 = vpow.pop %v577
  %v579 = vmul.f32 %v512, 1.442695
  %v580 = vpow.pop %v579
  %v581 = vmul.f32 %v513, 1.442695
  %v582 = vpow.pop %v581
  %v583 = vmul.f32 %v514, 1.442695
  %v584 = vpow.pop %v583
  %v585 = vmul.f32 %v515, 1.442695
  %v586 = vpow.pop %v585
  %v587 = vmul.f32 %v516, 1.442695
  %v588 = vpow.pop %v587
  %v589 = vmul.f32 %v517, 1.442695
  %v590 = vpow.pop %v589
  %v591 = vmul.f32 %v518, 1.442695
  %v592 = vpow.pop %v591
  %v593 = vmul.f32 %v519, 1.442695
  %v594 = vpow.pop %v593
  %v595 = vmul.f32 %v520, 1.442695
  %v596 = vpow.pop %v595
  %v597 = vmul.f32 %v521, 1.442695
  %v598 = vpow.pop %v597
  %v599 = vmul.f32 %v522, 1.442695
  %v600 = vpow.pop %v599
  %v601 = vmul.f32 %v523, 1.442695
  %v602 = vpow.pop %v601
  %v603 = vmul.f32 %v524, 1.442695
  %v604 = vpow.pop %v603
  %v605 = vmul.f32 %v525, 1.442695
  %v606 = vpow.pop %v605
  %v607 = vmul.f32 %v526, 1.442695
  %v608 = vpow.pop %v607
  %v609 = vmul.f32 %v527, 1.442695
  %v610 = vpow.pop %v609
  %v611 = vmul.f32 %v528, 1.442695
  %v612 = vpow.pop %v611
  %v613 = vmul.f32 %v529, 1.442695
  %v614 = vpow.pop %v613
  %v615 = vmul.f32 %v530, 1.442695
  %v616 = vpow.pop %v615
  %v617 = vmul.f32 %v531, 1.442695
  %v618 = vpow.pop %v617
  %v619 = vmul.f32 %v532, 1.442695
  %v620 = vpow.pop %v619
  %v621 = vmul.f32 %v533, 1.442695
  %v622 = vpow.pop %v621
  %v623 = vmul.f32 %v534, 1.442695
  %v624 = vpow.pop %v623
  %v625 = vmul.f32 %v535, 1.442695
  %v626 = vpow.pop %v625
  %v627 = vmul.f32 %v536, 1.442695
  %v628 = vpow.pop %v627
  %v629 = vmul.f32 %v537, 1.442695
  %v630 = vpow.pop %v629
  %v631 = vmul.f32 %v538, 1.442695
  %v632 = vpow.pop %v631
  %v633 = vmul.f32 %v539, 1.442695
  %v634 = vpow.pop %v633
  %v635 = vmul.f32 %v540, 1.442695
  %v636 = vpow.pop %v635
  %v637 = vmul.f32 %v541, 1.442695
  %v638 = vpow.pop %v637
  %v639 = vmul.f32 %v542, 1.442695
  %v640 = vpow.pop %v639
  %v641 = vmul.f32 %v543, 1.442695
  %v642 = vpow.pop %v641
  %v643 = vmul.f32 %v544, 1.442695
  %v644 = vpow.pop %v643
  %v645 = vmul.f32 %v545, 1.442695
  %v646 = vpow.pop %v645
  %v647 = vmul.f32 %v546, 1.442695
  %v648 = vpow.pop %v647
  %v649 = vmul.f32 %v547, 1.442695
  %v650 = vpow.pop %v649
  %v651 = vmul.f32 %v548, 1.442695
  %v652 = vpow.pop %v651
  %v653 = vmul.f32 %v549, 1.442695
  %v654 = vpow.pop %v653
  %v655 = vmul.f32 %v550, 1.442695
  %v656 = vpow.pop %v655
  %v657 = vmul.f32 %v551, 1.442695
  %v658 = vpow.pop %v657
  %v659 = vmul.f32 %v552, 1.442695
  %v660 = vpow.pop %v659
  %v661 = vmul.f32 %v553, 1.442695
  %v662 = vpow.pop %v661
  %v663 = vmul.f32 %v554, 1.442695
  %v664 = vpow.pop %v663
  %v665 = vmul.f32 %v555, 1.442695
  %v666 = vpow.pop %v665
  %v667 = vmul.f32 %v556, 1.442695
  %v668 = vpow.pop %v667
  %v669 = vmul.f32 %v557, 1.442695
  %v670 = vpow.pop %v669
  %v671 = vmul.f32 %v558, 1.442695
  %v672 = vpow.pop %v671
  %v673 = vmul.f32 %v559, 1.442695
  %v674 = vpow.pop %v673
  %v675 = vmul.f32 %v560, 1.442695
  %v676 = vpow.pop %v675
  %v677 = vmul.f32 %v561, 1.442695
  %v678 = vpow.pop %v677
  %v679 = vmul.f32 %v562, 1.442695
  %v680 = vpow.pop %v679
  %v681 = vmul.f32 %v563, 1.442695
  %v682 = vpow.pop %v681
  %v683 = vmul.f32 %v564, 1.442695
  %v684 = vpow.pop %v683
  %v685 = vmul.f32 %v565, 1.442695
  %v686 = vpow.pop %v685
  %v687 = vmul.f32 %v566, 1.442695
  %v688 = vpow.pop %v687
  %v689 = vmul.f32 %v567, 1.442695
  %v690 = vpow.pop %v689
  %v691 = vmul.f32 %v568, 1.442695
  %v692 = vpow.pop %v691
  %v693 = vmul.f32 %v569, 1.442695
  %v694 = vpow.pop %v693
  %v695 = vmul.f32 %v570, 1.442695
  %v696 = vpow.pop %v695
  %v697 = vmul.f32 %v571, 1.442695
  %v698 = vpow.pop %v697
  %v699 = vmul.f32 %v572, 1.442695
  %v700 = vpow.pop %v699
  %v701 = vadd.f32 %v574, 1.0
  %v702 = vadd.f32 %v576, 1.0
  %v703 = vadd.f32 %v578, 1.0
  %v704 = vadd.f32 %v580, 1.0
  %v705 = vadd.f32 %v582, 1.0
  %v706 = vadd.f32 %v584, 1.0
  %v707 = vadd.f32 %v586, 1.0
  %v708 = vadd.f32 %v588, 1.0
  %v709 = vadd.f32 %v590, 1.0
  %v710 = vadd.f32 %v592, 1.0
  %v711 = vadd.f32 %v594, 1.0
  %v712 = vadd.f32 %v596, 1.0
  %v713 = vadd.f32 %v598, 1.0
  %v714 = vadd.f32 %v600, 1.0
  %v715 = vadd.f32 %v602, 1.0
  %v716 = vadd.f32 %v604, 1.0
  %v717 = vadd.f32 %v606, 1.0
  %v718 = vadd.f32 %v608, 1.0
  %v719 = vadd.f32 %v610, 1.0
  %v720 = vadd.f32 %v612, 1.0
  %v721 = vadd.f32 %v614, 1.0
  %v722 = vadd.f32 %v616, 1.0
  %v723 = vadd.f32 %v618, 1.0
  %v724 = vadd.f32 %v620, 1.0
  %v725 = vadd.f32 %v622, 1.0
  %v726 = vadd.f32 %v624, 1.0
  %v727 = vadd.f32 %v626, 1.0
  %v728 = vadd.f32 %v628, 1.0
  %v729 = vadd.f32 %v630, 1.0
  %v730 = vadd.f32 %v632, 1.0
  %v731 = vadd.f32 %v634, 1.0
  %v732 = vadd.f32 %v636, 1.0
  %v733 = vadd.f32 %v638, 1.0
  %v734 = vadd.f32 %v640, 1.0
  %v735 = vadd.f32 %v642, 1.0
  %v736 = vadd.f32 %v644, 1.0
  %v737 = vadd.f32 %v646, 1.0
  %v738 = vadd.f32 %v648, 1.0
  %v739 = vadd.f32 %v650, 1.0
  %v740 = vadd.f32 %v652, 1.0
  %v741 = vadd.f32 %v654, 1.0
  %v742 = vadd.f32 %v656, 1.0
  %v743 = vadd.f32 %v658, 1.0
  %v744 = vadd.f32 %v660, 1.0
  %v745 = vadd.f32 %v662, 1.0
  %v746 = vadd.f32 %v664, 1.0
  %v747 = vadd.f32 %v666, 1.0
  %v748 = vadd.f32 %v668, 1.0
  %v749 = vadd.f32 %v670, 1.0
  %v750 = vadd.f32 %v672, 1.0
  %v751 = vadd.f32 %v674, 1.0
  %v752 = vadd.f32 %v676, 1.0
  %v753 = vadd.f32 %v678, 1.0
  %v754 = vadd.f32 %v680, 1.0
  %v755 = vadd.f32 %v682, 1.0
  %v756 = vadd.f32 %v684, 1.0
  %v757 = vadd.f32 %v686, 1.0
  %v758 = vadd.f32 %v688, 1.0
  %v759 = vadd.f32 %v690, 1.0
  %v760 = vadd.f32 %v692, 1.0
  %v761 = vadd.f32 %v694, 1.0
  %v762 = vadd.f32 %v696, 1.0
  %v763 = vadd.f32 %v698, 1.0
  %v764 = vadd.f32 %v700, 1.0
  %v765 = vrcp.pop %v701
  %v766 = vmul.f32 %v701, %v765
  %v767 = vsub.f32 1.0, %v766
  %v768 = vmul.f32 %v765, %v767
  %v769 = vadd.f32 %v765, %v768
  %vm770 = vweird.f32 %v701
  %vm771 = vweird.f32 %v765
  %vm772 = vmor %vm770, %vm771
  %v773 = vsel %vm772, %v765, %v769
  %v774 = vand.u32 2147483647, %v701
  %vm775 = vcmp.eq.f32.partialorder %v774, 8.507059e+37
  %v776 = vand.u32 %v701, 2147483648
  %v777 = vor.u32 1.1754944e-38, %v776
  %v778 = vsel %vm775, %v777, %v773
  %v779 = vmul.f32 1.0, %v778
  %v780 = vrcp.pop %v702
  %v781 = vmul.f32 %v702, %v780
  %v782 = vsub.f32 1.0, %v781
  %v783 = vmul.f32 %v780, %v782
  %v784 = vadd.f32 %v780, %v783
  %vm785 = vweird.f32 %v702
  %vm786 = vweird.f32 %v780
  %vm787 = vmor %vm785, %vm786
  %v788 = vsel %vm787, %v780, %v784
  %v789 = vand.u32 2147483647, %v702
  %vm790 = vcmp.eq.f32.partialorder %v789, 8.507059e+37
  %v791 = vand.u32 %v702, 2147483648
  %v792 = vor.u32 1.1754944e-38, %v791
  %v793 = vsel %vm790, %v792, %v788
  %v794 = vmul.f32 1.0, %v793
  %v795 = vrcp.pop %v703
  %v796 = vmul.f32 %v703, %v795
  %v797 = vsub.f32 1.0, %v796
  %v798 = vmul.f32 %v795, %v797
  %v799 = vadd.f32 %v795, %v798
  %vm800 = vweird.f32 %v703
  %vm801 = vweird.f32 %v795
  %vm802 = vmor %vm800, %vm801
  %v803 = vsel %vm802, %v795, %v799
  %v804 = vand.u32 2147483647, %v703
  %vm805 = vcmp.eq.f32.partialorder %v804, 8.507059e+37
  %v806 = vand.u32 %v703, 2147483648
  %v807 = vor.u32 1.1754944e-38, %v806
  %v808 = vsel %vm805, %v807, %v803
  %v809 = vmul.f32 1.0, %v808
  %v810 = vrcp.pop %v704
  %v811 = vmul.f32 %v704, %v810
  %v812 = vsub.f32 1.0, %v811
  %v813 = vmul.f32 %v810, %v812
  %v814 = vadd.f32 %v810, %v813
  %vm815 = vweird.f32 %v704
  %vm816 = vweird.f32 %v810
  %vm817 = vmor %vm815, %vm816
  %v818 = vsel %vm817, %v810, %v814
  %v819 = vand.u32 2147483647, %v704
  %vm820 = vcmp.eq.f32.partialorder %v819, 8.507059e+37
  %v821 = vand.u32 %v704, 2147483648
  %v822 = vor.u32 1.1754944e-38, %v821
  %v823 = vsel %vm820, %v822, %v818
  %v824 = vmul.f32 1.0, %v823
  %v825 = vrcp.pop %v705
  %v826 = vmul.f32 %v705, %v825
  %v827 = vsub.f32 1.0, %v826
  %v828 = vmul.f32 %v825, %v827
  %v829 = vadd.f32 %v825, %v828
  %vm830 = vweird.f32 %v705
  %vm831 = vweird.f32 %v825
  %vm832 = vmor %vm830, %vm831
  %v833 = vsel %vm832, %v825, %v829
  %v834 = vand.u32 2147483647, %v705
  %vm835 = vcmp.eq.f32.partialorder %v834, 8.507059e+37
  %v836 = vand.u32 %v705, 2147483648
  %v837 = vor.u32 1.1754944e-38, %v836
  %v838 = vsel %vm835, %v837, %v833
  %v839 = vmul.f32 1.0, %v838
  %v840 = vrcp.pop %v706
  %v841 = vmul.f32 %v706, %v840
  %v842 = vsub.f32 1.0, %v841
  %v843 = vmul.f32 %v840, %v842
  %v844 = vadd.f32 %v840, %v843
  %vm845 = vweird.f32 %v706
  %vm846 = vweird.f32 %v840
  %vm847 = vmor %vm845, %vm846
  %v848 = vsel %vm847, %v840, %v844
  %v849 = vand.u32 2147483647, %v706
  %vm850 = vcmp.eq.f32.partialorder %v849, 8.507059e+37
  %v851 = vand.u32 %v706, 2147483648
  %v852 = vor.u32 1.1754944e-38, %v851
  %v853 = vsel %vm850, %v852, %v848
  %v854 = vmul.f32 1.0, %v853
  %v855 = vrcp.pop %v707
  %v856 = vmul.f32 %v707, %v855
  %v857 = vsub.f32 1.0, %v856
  %v858 = vmul.f32 %v855, %v857
  %v859 = vadd.f32 %v855, %v858
  %vm860 = vweird.f32 %v707
  %vm861 = vweird.f32 %v855
  %vm862 = vmor %vm860, %vm861
  %v863 = vsel %vm862, %v855, %v859
  %v864 = vand.u32 2147483647, %v707
  %vm865 = vcmp.eq.f32.partialorder %v864, 8.507059e+37
  %v866 = vand.u32 %v707, 2147483648
  %v867 = vor.u32 1.1754944e-38, %v866
  %v868 = vsel %vm865, %v867, %v863
  %v869 = vmul.f32 1.0, %v868
  %v870 = vrcp.pop %v708
  %v871 = vmul.f32 %v708, %v870
  %v872 = vsub.f32 1.0, %v871
  %v873 = vmul.f32 %v870, %v872
  %v874 = vadd.f32 %v870, %v873
  %vm875 = vweird.f32 %v708
  %vm876 = vweird.f32 %v870
  %vm877 = vmor %vm875, %vm876
  %v878 = vsel %vm877, %v870, %v874
  %v879 = vand.u32 2147483647, %v708
  %vm880 = vcmp.eq.f32.partialorder %v879, 8.507059e+37
  %v881 = vand.u32 %v708, 2147483648
  %v882 = vor.u32 1.1754944e-38, %v881
  %v883 = vsel %vm880, %v882, %v878
  %v884 = vmul.f32 1.0, %v883
  %v885 = vrcp.pop %v709
  %v886 = vmul.f32 %v709, %v885
  %v887 = vsub.f32 1.0, %v886
  %v888 = vmul.f32 %v885, %v887
  %v889 = vadd.f32 %v885, %v888
  %vm890 = vweird.f32 %v709
  %vm891 = vweird.f32 %v885
  %vm892 = vmor %vm890, %vm891
  %v893 = vsel %vm892, %v885, %v889
  %v894 = vand.u32 2147483647, %v709
  %vm895 = vcmp.eq.f32.partialorder %v894, 8.507059e+37
  %v896 = vand.u32 %v709, 2147483648
  %v897 = vor.u32 1.1754944e-38, %v896
  %v898 = vsel %vm895, %v897, %v893
  %v899 = vmul.f32 1.0, %v898
  %v900 = vrcp.pop %v710
  %v901 = vmul.f32 %v710, %v900
  %v902 = vsub.f32 1.0, %v901
  %v903 = vmul.f32 %v900, %v902
  %v904 = vadd.f32 %v900, %v903
  %vm905 = vweird.f32 %v710
  %vm906 = vweird.f32 %v900
  %vm907 = vmor %vm905, %vm906
  %v908 = vsel %vm907, %v900, %v904
  %v909 = vand.u32 2147483647, %v710
  %vm910 = vcmp.eq.f32.partialorder %v909, 8.507059e+37
  %v911 = vand.u32 %v710, 2147483648
  %v912 = vor.u32 1.1754944e-38, %v911
  %v913 = vsel %vm910, %v912, %v908
  %v914 = vmul.f32 1.0, %v913
  %v915 = vrcp.pop %v711
  %v916 = vmul.f32 %v711, %v915
  %v917 = vsub.f32 1.0, %v916
  %v918 = vmul.f32 %v915, %v917
  %v919 = vadd.f32 %v915, %v918
  %vm920 = vweird.f32 %v711
  %vm921 = vweird.f32 %v915
  %vm922 = vmor %vm920, %vm921
  %v923 = vsel %vm922, %v915, %v919
  %v924 = vand.u32 2147483647, %v711
  %vm925 = vcmp.eq.f32.partialorder %v924, 8.507059e+37
  %v926 = vand.u32 %v711, 2147483648
  %v927 = vor.u32 1.1754944e-38, %v926
  %v928 = vsel %vm925, %v927, %v923
  %v929 = vmul.f32 1.0, %v928
  %v930 = vrcp.pop %v712
  %v931 = vmul.f32 %v712, %v930
  %v932 = vsub.f32 1.0, %v931
  %v933 = vmul.f32 %v930, %v932
  %v934 = vadd.f32 %v930, %v933
  %vm935 = vweird.f32 %v712
  %vm936 = vweird.f32 %v930
  %vm937 = vmor %vm935, %vm936
  %v938 = vsel %vm937, %v930, %v934
  %v939 = vand.u32 2147483647, %v712
  %vm940 = vcmp.eq.f32.partialorder %v939, 8.507059e+37
  %v941 = vand.u32 %v712, 2147483648
  %v942 = vor.u32 1.1754944e-38, %v941
  %v943 = vsel %vm940, %v942, %v938
  %v944 = vmul.f32 1.0, %v943
  %v945 = vrcp.pop %v713
  %v946 = vmul.f32 %v713, %v945
  %v947 = vsub.f32 1.0, %v946
  %v948 = vmul.f32 %v945, %v947
  %v949 = vadd.f32 %v945, %v948
  %vm950 = vweird.f32 %v713
  %vm951 = vweird.f32 %v945
  %vm952 = vmor %vm950, %vm951
  %v953 = vsel %vm952, %v945, %v949
  %v954 = vand.u32 2147483647, %v713
  %vm955 = vcmp.eq.f32.partialorder %v954, 8.507059e+37
  %v956 = vand.u32 %v713, 2147483648
  %v957 = vor.u32 1.1754944e-38, %v956
  %v958 = vsel %vm955, %v957, %v953
  %v959 = vmul.f32 1.0, %v958
  %v960 = vrcp.pop %v714
  %v961 = vmul.f32 %v714, %v960
  %v962 = vsub.f32 1.0, %v961
  %v963 = vmul.f32 %v960, %v962
  %v964 = vadd.f32 %v960, %v963
  %vm965 = vweird.f32 %v714
  %vm966 = vweird.f32 %v960
  %vm967 = vmor %vm965, %vm966
  %v968 = vsel %vm967, %v960, %v964
  %v969 = vand.u32 2147483647, %v714
  %vm970 = vcmp.eq.f32.partialorder %v969, 8.507059e+37
  %v971 = vand.u32 %v714, 2147483648
  %v972 = vor.u32 1.1754944e-38, %v971
  %v973 = vsel %vm970, %v972, %v968
  %v974 = vmul.f32 1.0, %v973
  %v975 = vrcp.pop %v715
  %v976 = vmul.f32 %v715, %v975
  %v977 = vsub.f32 1.0, %v976
  %v978 = vmul.f32 %v975, %v977
  %v979 = vadd.f32 %v975, %v978
  %vm980 = vweird.f32 %v715
  %vm981 = vweird.f32 %v975
  %vm982 = vmor %vm980, %vm981
  %v983 = vsel %vm982, %v975, %v979
  %v984 = vand.u32 2147483647, %v715
  %vm985 = vcmp.eq.f32.partialorder %v984, 8.507059e+37
  %v986 = vand.u32 %v715, 2147483648
  %v987 = vor.u32 1.1754944e-38, %v986
  %v988 = vsel %vm985, %v987, %v983
  %v989 = vmul.f32 1.0, %v988
  %v990 = vrcp.pop %v716
  %v991 = vmul.f32 %v716, %v990
  %v992 = vsub.f32 1.0, %v991
  %v993 = vmul.f32 %v990, %v992
  %v994 = vadd.f32 %v990, %v993
  %vm995 = vweird.f32 %v716
  %vm996 = vweird.f32 %v990
  %vm997 = vmor %vm995, %vm996
  %v998 = vsel %vm997, %v990, %v994
  %v999 = vand.u32 2147483647, %v716
  %vm1000 = vcmp.eq.f32.partialorder %v999, 8.507059e+37
  %v1001 = vand.u32 %v716, 2147483648
  %v1002 = vor.u32 1.1754944e-38, %v1001
  %v1003 = vsel %vm1000, %v1002, %v998
  %v1004 = vmul.f32 1.0, %v1003
  %v1005 = vrcp.pop %v717
  %v1006 = vmul.f32 %v717, %v1005
  %v1007 = vsub.f32 1.0, %v1006
  %v1008 = vmul.f32 %v1005, %v1007
  %v1009 = vadd.f32 %v1005, %v1008
  %vm1010 = vweird.f32 %v717
  %vm1011 = vweird.f32 %v1005
  %vm1012 = vmor %vm1010, %vm1011
  %v1013 = vsel %vm1012, %v1005, %v1009
  %v1014 = vand.u32 2147483647, %v717
  %vm1015 = vcmp.eq.f32.partialorder %v1014, 8.507059e+37
  %v1016 = vand.u32 %v717, 2147483648
  %v1017 = vor.u32 1.1754944e-38, %v1016
  %v1018 = vsel %vm1015, %v1017, %v1013
  %v1019 = vmul.f32 1.0, %v1018
  %v1020 = vrcp.pop %v718
  %v1021 = vmul.f32 %v718, %v1020
  %v1022 = vsub.f32 1.0, %v1021
  %v1023 = vmul.f32 %v1020, %v1022
  %v1024 = vadd.f32 %v1020, %v1023
  %vm1025 = vweird.f32 %v718
  %vm1026 = vweird.f32 %v1020
  %vm1027 = vmor %vm1025, %vm1026
  %v1028 = vsel %vm1027, %v1020, %v1024
  %v1029 = vand.u32 2147483647, %v718
  %vm1030 = vcmp.eq.f32.partialorder %v1029, 8.507059e+37
  %v1031 = vand.u32 %v718, 2147483648
  %v1032 = vor.u32 1.1754944e-38, %v1031
  %v1033 = vsel %vm1030, %v1032, %v1028
  %v1034 = vmul.f32 1.0, %v1033
  %v1035 = vrcp.pop %v719
  %v1036 = vmul.f32 %v719, %v1035
  %v1037 = vsub.f32 1.0, %v1036
  %v1038 = vmul.f32 %v1035, %v1037
  %v1039 = vadd.f32 %v1035, %v1038
  %vm1040 = vweird.f32 %v719
  %vm1041 = vweird.f32 %v1035
  %vm1042 = vmor %vm1040, %vm1041
  %v1043 = vsel %vm1042, %v1035, %v1039
  %v1044 = vand.u32 2147483647, %v719
  %vm1045 = vcmp.eq.f32.partialorder %v1044, 8.507059e+37
  %v1046 = vand.u32 %v719, 2147483648
  %v1047 = vor.u32 1.1754944e-38, %v1046
  %v1048 = vsel %vm1045, %v1047, %v1043
  %v1049 = vmul.f32 1.0, %v1048
  %v1050 = vrcp.pop %v720
  %v1051 = vmul.f32 %v720, %v1050
  %v1052 = vsub.f32 1.0, %v1051
  %v1053 = vmul.f32 %v1050, %v1052
  %v1054 = vadd.f32 %v1050, %v1053
  %vm1055 = vweird.f32 %v720
  %vm1056 = vweird.f32 %v1050
  %vm1057 = vmor %vm1055, %vm1056
  %v1058 = vsel %vm1057, %v1050, %v1054
  %v1059 = vand.u32 2147483647, %v720
  %vm1060 = vcmp.eq.f32.partialorder %v1059, 8.507059e+37
  %v1061 = vand.u32 %v720, 2147483648
  %v1062 = vor.u32 1.1754944e-38, %v1061
  %v1063 = vsel %vm1060, %v1062, %v1058
  %v1064 = vmul.f32 1.0, %v1063
  %v1065 = vrcp.pop %v721
  %v1066 = vmul.f32 %v721, %v1065
  %v1067 = vsub.f32 1.0, %v1066
  %v1068 = vmul.f32 %v1065, %v1067
  %v1069 = vadd.f32 %v1065, %v1068
  %vm1070 = vweird.f32 %v721
  %vm1071 = vweird.f32 %v1065
  %vm1072 = vmor %vm1070, %vm1071
  %v1073 = vsel %vm1072, %v1065, %v1069
  %v1074 = vand.u32 2147483647, %v721
  %vm1075 = vcmp.eq.f32.partialorder %v1074, 8.507059e+37
  %v1076 = vand.u32 %v721, 2147483648
  %v1077 = vor.u32 1.1754944e-38, %v1076
  %v1078 = vsel %vm1075, %v1077, %v1073
  %v1079 = vmul.f32 1.0, %v1078
  %v1080 = vrcp.pop %v722
  %v1081 = vmul.f32 %v722, %v1080
  %v1082 = vsub.f32 1.0, %v1081
  %v1083 = vmul.f32 %v1080, %v1082
  %v1084 = vadd.f32 %v1080, %v1083
  %vm1085 = vweird.f32 %v722
  %vm1086 = vweird.f32 %v1080
  %vm1087 = vmor %vm1085, %vm1086
  %v1088 = vsel %vm1087, %v1080, %v1084
  %v1089 = vand.u32 2147483647, %v722
  %vm1090 = vcmp.eq.f32.partialorder %v1089, 8.507059e+37
  %v1091 = vand.u32 %v722, 2147483648
  %v1092 = vor.u32 1.1754944e-38, %v1091
  %v1093 = vsel %vm1090, %v1092, %v1088
  %v1094 = vmul.f32 1.0, %v1093
  %v1095 = vrcp.pop %v723
  %v1096 = vmul.f32 %v723, %v1095
  %v1097 = vsub.f32 1.0, %v1096
  %v1098 = vmul.f32 %v1095, %v1097
  %v1099 = vadd.f32 %v1095, %v1098
  %vm1100 = vweird.f32 %v723
  %vm1101 = vweird.f32 %v1095
  %vm1102 = vmor %vm1100, %vm1101
  %v1103 = vsel %vm1102, %v1095, %v1099
  %v1104 = vand.u32 2147483647, %v723
  %vm1105 = vcmp.eq.f32.partialorder %v1104, 8.507059e+37
  %v1106 = vand.u32 %v723, 2147483648
  %v1107 = vor.u32 1.1754944e-38, %v1106
  %v1108 = vsel %vm1105, %v1107, %v1103
  %v1109 = vmul.f32 1.0, %v1108
  %v1110 = vrcp.pop %v724
  %v1111 = vmul.f32 %v724, %v1110
  %v1112 = vsub.f32 1.0, %v1111
  %v1113 = vmul.f32 %v1110, %v1112
  %v1114 = vadd.f32 %v1110, %v1113
  %vm1115 = vweird.f32 %v724
  %vm1116 = vweird.f32 %v1110
  %vm1117 = vmor %vm1115, %vm1116
  %v1118 = vsel %vm1117, %v1110, %v1114
  %v1119 = vand.u32 2147483647, %v724
  %vm1120 = vcmp.eq.f32.partialorder %v1119, 8.507059e+37
  %v1121 = vand.u32 %v724, 2147483648
  %v1122 = vor.u32 1.1754944e-38, %v1121
  %v1123 = vsel %vm1120, %v1122, %v1118
  %v1124 = vmul.f32 1.0, %v1123
  %v1125 = vrcp.pop %v725
  %v1126 = vmul.f32 %v725, %v1125
  %v1127 = vsub.f32 1.0, %v1126
  %v1128 = vmul.f32 %v1125, %v1127
  %v1129 = vadd.f32 %v1125, %v1128
  %vm1130 = vweird.f32 %v725
  %vm1131 = vweird.f32 %v1125
  %vm1132 = vmor %vm1130, %vm1131
  %v1133 = vsel %vm1132, %v1125, %v1129
  %v1134 = vand.u32 2147483647, %v725
  %vm1135 = vcmp.eq.f32.partialorder %v1134, 8.507059e+37
  %v1136 = vand.u32 %v725, 2147483648
  %v1137 = vor.u32 1.1754944e-38, %v1136
  %v1138 = vsel %vm1135, %v1137, %v1133
  %v1139 = vmul.f32 1.0, %v1138
  %v1140 = vrcp.pop %v726
  %v1141 = vmul.f32 %v726, %v1140
  %v1142 = vsub.f32 1.0, %v1141
  %v1143 = vmul.f32 %v1140, %v1142
  %v1144 = vadd.f32 %v1140, %v1143
  %vm1145 = vweird.f32 %v726
  %vm1146 = vweird.f32 %v1140
  %vm1147 = vmor %vm1145, %vm1146
  %v1148 = vsel %vm1147, %v1140, %v1144
  %v1149 = vand.u32 2147483647, %v726
  %vm1150 = vcmp.eq.f32.partialorder %v1149, 8.507059e+37
  %v1151 = vand.u32 %v726, 2147483648
  %v1152 = vor.u32 1.1754944e-38, %v1151
  %v1153 = vsel %vm1150, %v1152, %v1148
  %v1154 = vmul.f32 1.0, %v1153
  %v1155 = vrcp.pop %v727
  %v1156 = vmul.f32 %v727, %v1155
  %v1157 = vsub.f32 1.0, %v1156
  %v1158 = vmul.f32 %v1155, %v1157
  %v1159 = vadd.f32 %v1155, %v1158
  %vm1160 = vweird.f32 %v727
  %vm1161 = vweird.f32 %v1155
  %vm1162 = vmor %vm1160, %vm1161
  %v1163 = vsel %vm1162, %v1155, %v1159
  %v1164 = vand.u32 2147483647, %v727
  %vm1165 = vcmp.eq.f32.partialorder %v1164, 8.507059e+37
  %v1166 = vand.u32 %v727, 2147483648
  %v1167 = vor.u32 1.1754944e-38, %v1166
  %v1168 = vsel %vm1165, %v1167, %v1163
  %v1169 = vmul.f32 1.0, %v1168
  %v1170 = vrcp.pop %v728
  %v1171 = vmul.f32 %v728, %v1170
  %v1172 = vsub.f32 1.0, %v1171
  %v1173 = vmul.f32 %v1170, %v1172
  %v1174 = vadd.f32 %v1170, %v1173
  %vm1175 = vweird.f32 %v728
  %vm1176 = vweird.f32 %v1170
  %vm1177 = vmor %vm1175, %vm1176
  %v1178 = vsel %vm1177, %v1170, %v1174
  %v1179 = vand.u32 2147483647, %v728
  %vm1180 = vcmp.eq.f32.partialorder %v1179, 8.507059e+37
  %v1181 = vand.u32 %v728, 2147483648
  %v1182 = vor.u32 1.1754944e-38, %v1181
  %v1183 = vsel %vm1180, %v1182, %v1178
  %v1184 = vmul.f32 1.0, %v1183
  %v1185 = vrcp.pop %v729
  %v1186 = vmul.f32 %v729, %v1185
  %v1187 = vsub.f32 1.0, %v1186
  %v1188 = vmul.f32 %v1185, %v1187
  %v1189 = vadd.f32 %v1185, %v1188
  %vm1190 = vweird.f32 %v729
  %vm1191 = vweird.f32 %v1185
  %vm1192 = vmor %vm1190, %vm1191
  %v1193 = vsel %vm1192, %v1185, %v1189
  %v1194 = vand.u32 2147483647, %v729
  %vm1195 = vcmp.eq.f32.partialorder %v1194, 8.507059e+37
  %v1196 = vand.u32 %v729, 2147483648
  %v1197 = vor.u32 1.1754944e-38, %v1196
  %v1198 = vsel %vm1195, %v1197, %v1193
  %v1199 = vmul.f32 1.0, %v1198
  %v1200 = vrcp.pop %v730
  %v1201 = vmul.f32 %v730, %v1200
  %v1202 = vsub.f32 1.0, %v1201
  %v1203 = vmul.f32 %v1200, %v1202
  %v1204 = vadd.f32 %v1200, %v1203
  %vm1205 = vweird.f32 %v730
  %vm1206 = vweird.f32 %v1200
  %vm1207 = vmor %vm1205, %vm1206
  %v1208 = vsel %vm1207, %v1200, %v1204
  %v1209 = vand.u32 2147483647, %v730
  %vm1210 = vcmp.eq.f32.partialorder %v1209, 8.507059e+37
  %v1211 = vand.u32 %v730, 2147483648
  %v1212 = vor.u32 1.1754944e-38, %v1211
  %v1213 = vsel %vm1210, %v1212, %v1208
  %v1214 = vmul.f32 1.0, %v1213
  %v1215 = vrcp.pop %v731
  %v1216 = vmul.f32 %v731, %v1215
  %v1217 = vsub.f32 1.0, %v1216
  %v1218 = vmul.f32 %v1215, %v1217
  %v1219 = vadd.f32 %v1215, %v1218
  %vm1220 = vweird.f32 %v731
  %vm1221 = vweird.f32 %v1215
  %vm1222 = vmor %vm1220, %vm1221
  %v1223 = vsel %vm1222, %v1215, %v1219
  %v1224 = vand.u32 2147483647, %v731
  %vm1225 = vcmp.eq.f32.partialorder %v1224, 8.507059e+37
  %v1226 = vand.u32 %v731, 2147483648
  %v1227 = vor.u32 1.1754944e-38, %v1226
  %v1228 = vsel %vm1225, %v1227, %v1223
  %v1229 = vmul.f32 1.0, %v1228
  %v1230 = vrcp.pop %v732
  %v1231 = vmul.f32 %v732, %v1230
  %v1232 = vsub.f32 1.0, %v1231
  %v1233 = vmul.f32 %v1230, %v1232
  %v1234 = vadd.f32 %v1230, %v1233
  %vm1235 = vweird.f32 %v732
  %vm1236 = vweird.f32 %v1230
  %vm1237 = vmor %vm1235, %vm1236
  %v1238 = vsel %vm1237, %v1230, %v1234
  %v1239 = vand.u32 2147483647, %v732
  %vm1240 = vcmp.eq.f32.partialorder %v1239, 8.507059e+37
  %v1241 = vand.u32 %v732, 2147483648
  %v1242 = vor.u32 1.1754944e-38, %v1241
  %v1243 = vsel %vm1240, %v1242, %v1238
  %v1244 = vmul.f32 1.0, %v1243
  %v1245 = vrcp.pop %v733
  %v1246 = vmul.f32 %v733, %v1245
  %v1247 = vsub.f32 1.0, %v1246
  %v1248 = vmul.f32 %v1245, %v1247
  %v1249 = vadd.f32 %v1245, %v1248
  %vm1250 = vweird.f32 %v733
  %vm1251 = vweird.f32 %v1245
  %vm1252 = vmor %vm1250, %vm1251
  %v1253 = vsel %vm1252, %v1245, %v1249
  %v1254 = vand.u32 2147483647, %v733
  %vm1255 = vcmp.eq.f32.partialorder %v1254, 8.507059e+37
  %v1256 = vand.u32 %v733, 2147483648
  %v1257 = vor.u32 1.1754944e-38, %v1256
  %v1258 = vsel %vm1255, %v1257, %v1253
  %v1259 = vmul.f32 1.0, %v1258
  %v1260 = vrcp.pop %v734
  %v1261 = vmul.f32 %v734, %v1260
  %v1262 = vsub.f32 1.0, %v1261
  %v1263 = vmul.f32 %v1260, %v1262
  %v1264 = vadd.f32 %v1260, %v1263
  %vm1265 = vweird.f32 %v734
  %vm1266 = vweird.f32 %v1260
  %vm1267 = vmor %vm1265, %vm1266
  %v1268 = vsel %vm1267, %v1260, %v1264
  %v1269 = vand.u32 2147483647, %v734
  %vm1270 = vcmp.eq.f32.partialorder %v1269, 8.507059e+37
  %v1271 = vand.u32 %v734, 2147483648
  %v1272 = vor.u32 1.1754944e-38, %v1271
  %v1273 = vsel %vm1270, %v1272, %v1268
  %v1274 = vmul.f32 1.0, %v1273
  %v1275 = vrcp.pop %v735
  %v1276 = vmul.f32 %v735, %v1275
  %v1277 = vsub.f32 1.0, %v1276
  %v1278 = vmul.f32 %v1275, %v1277
  %v1279 = vadd.f32 %v1275, %v1278
  %vm1280 = vweird.f32 %v735
  %vm1281 = vweird.f32 %v1275
  %vm1282 = vmor %vm1280, %vm1281
  %v1283 = vsel %vm1282, %v1275, %v1279
  %v1284 = vand.u32 2147483647, %v735
  %vm1285 = vcmp.eq.f32.partialorder %v1284, 8.507059e+37
  %v1286 = vand.u32 %v735, 2147483648
  %v1287 = vor.u32 1.1754944e-38, %v1286
  %v1288 = vsel %vm1285, %v1287, %v1283
  %v1289 = vmul.f32 1.0, %v1288
  %v1290 = vrcp.pop %v736
  %v1291 = vmul.f32 %v736, %v1290
  %v1292 = vsub.f32 1.0, %v1291
  %v1293 = vmul.f32 %v1290, %v1292
  %v1294 = vadd.f32 %v1290, %v1293
  %vm1295 = vweird.f32 %v736
  %vm1296 = vweird.f32 %v1290
  %vm1297 = vmor %vm1295, %vm1296
  %v1298 = vsel %vm1297, %v1290, %v1294
  %v1299 = vand.u32 2147483647, %v736
  %vm1300 = vcmp.eq.f32.partialorder %v1299, 8.507059e+37
  %v1301 = vand.u32 %v736, 2147483648
  %v1302 = vor.u32 1.1754944e-38, %v1301
  %v1303 = vsel %vm1300, %v1302, %v1298
  %v1304 = vmul.f32 1.0, %v1303
  %v1305 = vrcp.pop %v737
  %v1306 = vmul.f32 %v737, %v1305
  %v1307 = vsub.f32 1.0, %v1306
  %v1308 = vmul.f32 %v1305, %v1307
  %v1309 = vadd.f32 %v1305, %v1308
  %vm1310 = vweird.f32 %v737
  %vm1311 = vweird.f32 %v1305
  %vm1312 = vmor %vm1310, %vm1311
  %v1313 = vsel %vm1312, %v1305, %v1309
  %v1314 = vand.u32 2147483647, %v737
  %vm1315 = vcmp.eq.f32.partialorder %v1314, 8.507059e+37
  %v1316 = vand.u32 %v737, 2147483648
  %v1317 = vor.u32 1.1754944e-38, %v1316
  %v1318 = vsel %vm1315, %v1317, %v1313
  %v1319 = vmul.f32 1.0, %v1318
  %v1320 = vrcp.pop %v738
  %v1321 = vmul.f32 %v738, %v1320
  %v1322 = vsub.f32 1.0, %v1321
  %v1323 = vmul.f32 %v1320, %v1322
  %v1324 = vadd.f32 %v1320, %v1323
  %vm1325 = vweird.f32 %v738
  %vm1326 = vweird.f32 %v1320
  %vm1327 = vmor %vm1325, %vm1326
  %v1328 = vsel %vm1327, %v1320, %v1324
  %v1329 = vand.u32 2147483647, %v738
  %vm1330 = vcmp.eq.f32.partialorder %v1329, 8.507059e+37
  %v1331 = vand.u32 %v738, 2147483648
  %v1332 = vor.u32 1.1754944e-38, %v1331
  %v1333 = vsel %vm1330, %v1332, %v1328
  %v1334 = vmul.f32 1.0, %v1333
  %v1335 = vrcp.pop %v739
  %v1336 = vmul.f32 %v739, %v1335
  %v1337 = vsub.f32 1.0, %v1336
  %v1338 = vmul.f32 %v1335, %v1337
  %v1339 = vadd.f32 %v1335, %v1338
  %vm1340 = vweird.f32 %v739
  %vm1341 = vweird.f32 %v1335
  %vm1342 = vmor %vm1340, %vm1341
  %v1343 = vsel %vm1342, %v1335, %v1339
  %v1344 = vand.u32 2147483647, %v739
  %vm1345 = vcmp.eq.f32.partialorder %v1344, 8.507059e+37
  %v1346 = vand.u32 %v739, 2147483648
  %v1347 = vor.u32 1.1754944e-38, %v1346
  %v1348 = vsel %vm1345, %v1347, %v1343
  %v1349 = vmul.f32 1.0, %v1348
  %v1350 = vrcp.pop %v740
  %v1351 = vmul.f32 %v740, %v1350
  %v1352 = vsub.f32 1.0, %v1351
  %v1353 = vmul.f32 %v1350, %v1352
  %v1354 = vadd.f32 %v1350, %v1353
  %vm1355 = vweird.f32 %v740
  %vm1356 = vweird.f32 %v1350
  %vm1357 = vmor %vm1355, %vm1356
  %v1358 = vsel %vm1357, %v1350, %v1354
  %v1359 = vand.u32 2147483647, %v740
  %vm1360 = vcmp.eq.f32.partialorder %v1359, 8.507059e+37
  %v1361 = vand.u32 %v740, 2147483648
  %v1362 = vor.u32 1.1754944e-38, %v1361
  %v1363 = vsel %vm1360, %v1362, %v1358
  %v1364 = vmul.f32 1.0, %v1363
  %v1365 = vrcp.pop %v741
  %v1366 = vmul.f32 %v741, %v1365
  %v1367 = vsub.f32 1.0, %v1366
  %v1368 = vmul.f32 %v1365, %v1367
  %v1369 = vadd.f32 %v1365, %v1368
  %vm1370 = vweird.f32 %v741
  %vm1371 = vweird.f32 %v1365
  %vm1372 = vmor %vm1370, %vm1371
  %v1373 = vsel %vm1372, %v1365, %v1369
  %v1374 = vand.u32 2147483647, %v741
  %vm1375 = vcmp.eq.f32.partialorder %v1374, 8.507059e+37
  %v1376 = vand.u32 %v741, 2147483648
  %v1377 = vor.u32 1.1754944e-38, %v1376
  %v1378 = vsel %vm1375, %v1377, %v1373
  %v1379 = vmul.f32 1.0, %v1378
  %v1380 = vrcp.pop %v742
  %v1381 = vmul.f32 %v742, %v1380
  %v1382 = vsub.f32 1.0, %v1381
  %v1383 = vmul.f32 %v1380, %v1382
  %v1384 = vadd.f32 %v1380, %v1383
  %vm1385 = vweird.f32 %v742
  %vm1386 = vweird.f32 %v1380
  %vm1387 = vmor %vm1385, %vm1386
  %v1388 = vsel %vm1387, %v1380, %v1384
  %v1389 = vand.u32 2147483647, %v742
  %vm1390 = vcmp.eq.f32.partialorder %v1389, 8.507059e+37
  %v1391 = vand.u32 %v742, 2147483648
  %v1392 = vor.u32 1.1754944e-38, %v1391
  %v1393 = vsel %vm1390, %v1392, %v1388
  %v1394 = vmul.f32 1.0, %v1393
  %v1395 = vrcp.pop %v743
  %v1396 = vmul.f32 %v743, %v1395
  %v1397 = vsub.f32 1.0, %v1396
  %v1398 = vmul.f32 %v1395, %v1397
  %v1399 = vadd.f32 %v1395, %v1398
  %vm1400 = vweird.f32 %v743
  %vm1401 = vweird.f32 %v1395
  %vm1402 = vmor %vm1400, %vm1401
  %v1403 = vsel %vm1402, %v1395, %v1399
  %v1404 = vand.u32 2147483647, %v743
  %vm1405 = vcmp.eq.f32.partialorder %v1404, 8.507059e+37
  %v1406 = vand.u32 %v743, 2147483648
  %v1407 = vor.u32 1.1754944e-38, %v1406
  %v1408 = vsel %vm1405, %v1407, %v1403
  %v1409 = vmul.f32 1.0, %v1408
  %v1410 = vrcp.pop %v744
  %v1411 = vmul.f32 %v744, %v1410
  %v1412 = vsub.f32 1.0, %v1411
  %v1413 = vmul.f32 %v1410, %v1412
  %v1414 = vadd.f32 %v1410, %v1413
  %vm1415 = vweird.f32 %v744
  %vm1416 = vweird.f32 %v1410
  %vm1417 = vmor %vm1415, %vm1416
  %v1418 = vsel %vm1417, %v1410, %v1414
  %v1419 = vand.u32 2147483647, %v744
  %vm1420 = vcmp.eq.f32.partialorder %v1419, 8.507059e+37
  %v1421 = vand.u32 %v744, 2147483648
  %v1422 = vor.u32 1.1754944e-38, %v1421
  %v1423 = vsel %vm1420, %v1422, %v1418
  %v1424 = vmul.f32 1.0, %v1423
  %v1425 = vrcp.pop %v745
  %v1426 = vmul.f32 %v745, %v1425
  %v1427 = vsub.f32 1.0, %v1426
  %v1428 = vmul.f32 %v1425, %v1427
  %v1429 = vadd.f32 %v1425, %v1428
  %vm1430 = vweird.f32 %v745
  %vm1431 = vweird.f32 %v1425
  %vm1432 = vmor %vm1430, %vm1431
  %v1433 = vsel %vm1432, %v1425, %v1429
  %v1434 = vand.u32 2147483647, %v745
  %vm1435 = vcmp.eq.f32.partialorder %v1434, 8.507059e+37
  %v1436 = vand.u32 %v745, 2147483648
  %v1437 = vor.u32 1.1754944e-38, %v1436
  %v1438 = vsel %vm1435, %v1437, %v1433
  %v1439 = vmul.f32 1.0, %v1438
  %v1440 = vrcp.pop %v746
  %v1441 = vmul.f32 %v746, %v1440
  %v1442 = vsub.f32 1.0, %v1441
  %v1443 = vmul.f32 %v1440, %v1442
  %v1444 = vadd.f32 %v1440, %v1443
  %vm1445 = vweird.f32 %v746
  %vm1446 = vweird.f32 %v1440
  %vm1447 = vmor %vm1445, %vm1446
  %v1448 = vsel %vm1447, %v1440, %v1444
  %v1449 = vand.u32 2147483647, %v746
  %vm1450 = vcmp.eq.f32.partialorder %v1449, 8.507059e+37
  %v1451 = vand.u32 %v746, 2147483648
  %v1452 = vor.u32 1.1754944e-38, %v1451
  %v1453 = vsel %vm1450, %v1452, %v1448
  %v1454 = vmul.f32 1.0, %v1453
  %v1455 = vrcp.pop %v747
  %v1456 = vmul.f32 %v747, %v1455
  %v1457 = vsub.f32 1.0, %v1456
  %v1458 = vmul.f32 %v1455, %v1457
  %v1459 = vadd.f32 %v1455, %v1458
  %vm1460 = vweird.f32 %v747
  %vm1461 = vweird.f32 %v1455
  %vm1462 = vmor %vm1460, %vm1461
  %v1463 = vsel %vm1462, %v1455, %v1459
  %v1464 = vand.u32 2147483647, %v747
  %vm1465 = vcmp.eq.f32.partialorder %v1464, 8.507059e+37
  %v1466 = vand.u32 %v747, 2147483648
  %v1467 = vor.u32 1.1754944e-38, %v1466
  %v1468 = vsel %vm1465, %v1467, %v1463
  %v1469 = vmul.f32 1.0, %v1468
  %v1470 = vrcp.pop %v748
  %v1471 = vmul.f32 %v748, %v1470
  %v1472 = vsub.f32 1.0, %v1471
  %v1473 = vmul.f32 %v1470, %v1472
  %v1474 = vadd.f32 %v1470, %v1473
  %vm1475 = vweird.f32 %v748
  %vm1476 = vweird.f32 %v1470
  %vm1477 = vmor %vm1475, %vm1476
  %v1478 = vsel %vm1477, %v1470, %v1474
  %v1479 = vand.u32 2147483647, %v748
  %vm1480 = vcmp.eq.f32.partialorder %v1479, 8.507059e+37
  %v1481 = vand.u32 %v748, 2147483648
  %v1482 = vor.u32 1.1754944e-38, %v1481
  %v1483 = vsel %vm1480, %v1482, %v1478
  %v1484 = vmul.f32 1.0, %v1483
  %v1485 = vrcp.pop %v749
  %v1486 = vmul.f32 %v749, %v1485
  %v1487 = vsub.f32 1.0, %v1486
  %v1488 = vmul.f32 %v1485, %v1487
  %v1489 = vadd.f32 %v1485, %v1488
  %vm1490 = vweird.f32 %v749
  %vm1491 = vweird.f32 %v1485
  %vm1492 = vmor %vm1490, %vm1491
  %v1493 = vsel %vm1492, %v1485, %v1489
  %v1494 = vand.u32 2147483647, %v749
  %vm1495 = vcmp.eq.f32.partialorder %v1494, 8.507059e+37
  %v1496 = vand.u32 %v749, 2147483648
  %v1497 = vor.u32 1.1754944e-38, %v1496
  %v1498 = vsel %vm1495, %v1497, %v1493
  %v1499 = vmul.f32 1.0, %v1498
  %v1500 = vrcp.pop %v750
  %v1501 = vmul.f32 %v750, %v1500
  %v1502 = vsub.f32 1.0, %v1501
  %v1503 = vmul.f32 %v1500, %v1502
  %v1504 = vadd.f32 %v1500, %v1503
  %vm1505 = vweird.f32 %v750
  %vm1506 = vweird.f32 %v1500
  %vm1507 = vmor %vm1505, %vm1506
  %v1508 = vsel %vm1507, %v1500, %v1504
  %v1509 = vand.u32 2147483647, %v750
  %vm1510 = vcmp.eq.f32.partialorder %v1509, 8.507059e+37
  %v1511 = vand.u32 %v750, 2147483648
  %v1512 = vor.u32 1.1754944e-38, %v1511
  %v1513 = vsel %vm1510, %v1512, %v1508
  %v1514 = vmul.f32 1.0, %v1513
  %v1515 = vrcp.pop %v751
  %v1516 = vmul.f32 %v751, %v1515
  %v1517 = vsub.f32 1.0, %v1516
  %v1518 = vmul.f32 %v1515, %v1517
  %v1519 = vadd.f32 %v1515, %v1518
  %vm1520 = vweird.f32 %v751
  %vm1521 = vweird.f32 %v1515
  %vm1522 = vmor %vm1520, %vm1521
  %v1523 = vsel %vm1522, %v1515, %v1519
  %v1524 = vand.u32 2147483647, %v751
  %vm1525 = vcmp.eq.f32.partialorder %v1524, 8.507059e+37
  %v1526 = vand.u32 %v751, 2147483648
  %v1527 = vor.u32 1.1754944e-38, %v1526
  %v1528 = vsel %vm1525, %v1527, %v1523
  %v1529 = vmul.f32 1.0, %v1528
  %v1530 = vrcp.pop %v752
  %v1531 = vmul.f32 %v752, %v1530
  %v1532 = vsub.f32 1.0, %v1531
  %v1533 = vmul.f32 %v1530, %v1532
  %v1534 = vadd.f32 %v1530, %v1533
  %vm1535 = vweird.f32 %v752
  %vm1536 = vweird.f32 %v1530
  %vm1537 = vmor %vm1535, %vm1536
  %v1538 = vsel %vm1537, %v1530, %v1534
  %v1539 = vand.u32 2147483647, %v752
  %vm1540 = vcmp.eq.f32.partialorder %v1539, 8.507059e+37
  %v1541 = vand.u32 %v752, 2147483648
  %v1542 = vor.u32 1.1754944e-38, %v1541
  %v1543 = vsel %vm1540, %v1542, %v1538
  %v1544 = vmul.f32 1.0, %v1543
  %v1545 = vrcp.pop %v753
  %v1546 = vmul.f32 %v753, %v1545
  %v1547 = vsub.f32 1.0, %v1546
  %v1548 = vmul.f32 %v1545, %v1547
  %v1549 = vadd.f32 %v1545, %v1548
  %vm1550 = vweird.f32 %v753
  %vm1551 = vweird.f32 %v1545
  %vm1552 = vmor %vm1550, %vm1551
  %v1553 = vsel %vm1552, %v1545, %v1549
  %v1554 = vand.u32 2147483647, %v753
  %vm1555 = vcmp.eq.f32.partialorder %v1554, 8.507059e+37
  %v1556 = vand.u32 %v753, 2147483648
  %v1557 = vor.u32 1.1754944e-38, %v1556
  %v1558 = vsel %vm1555, %v1557, %v1553
  %v1559 = vmul.f32 1.0, %v1558
  %v1560 = vrcp.pop %v754
  %v1561 = vmul.f32 %v754, %v1560
  %v1562 = vsub.f32 1.0, %v1561
  %v1563 = vmul.f32 %v1560, %v1562
  %v1564 = vadd.f32 %v1560, %v1563
  %vm1565 = vweird.f32 %v754
  %vm1566 = vweird.f32 %v1560
  %vm1567 = vmor %vm1565, %vm1566
  %v1568 = vsel %vm1567, %v1560, %v1564
  %v1569 = vand.u32 2147483647, %v754
  %vm1570 = vcmp.eq.f32.partialorder %v1569, 8.507059e+37
  %v1571 = vand.u32 %v754, 2147483648
  %v1572 = vor.u32 1.1754944e-38, %v1571
  %v1573 = vsel %vm1570, %v1572, %v1568
  %v1574 = vmul.f32 1.0, %v1573
  %v1575 = vrcp.pop %v755
  %v1576 = vmul.f32 %v755, %v1575
  %v1577 = vsub.f32 1.0, %v1576
  %v1578 = vmul.f32 %v1575, %v1577
  %v1579 = vadd.f32 %v1575, %v1578
  %vm1580 = vweird.f32 %v755
  %vm1581 = vweird.f32 %v1575
  %vm1582 = vmor %vm1580, %vm1581
  %v1583 = vsel %vm1582, %v1575, %v1579
  %v1584 = vand.u32 2147483647, %v755
  %vm1585 = vcmp.eq.f32.partialorder %v1584, 8.507059e+37
  %v1586 = vand.u32 %v755, 2147483648
  %v1587 = vor.u32 1.1754944e-38, %v1586
  %v1588 = vsel %vm1585, %v1587, %v1583
  %v1589 = vmul.f32 1.0, %v1588
  %v1590 = vrcp.pop %v756
  %v1591 = vmul.f32 %v756, %v1590
  %v1592 = vsub.f32 1.0, %v1591
  %v1593 = vmul.f32 %v1590, %v1592
  %v1594 = vadd.f32 %v1590, %v1593
  %vm1595 = vweird.f32 %v756
  %vm1596 = vweird.f32 %v1590
  %vm1597 = vmor %vm1595, %vm1596
  %v1598 = vsel %vm1597, %v1590, %v1594
  %v1599 = vand.u32 2147483647, %v756
  %vm1600 = vcmp.eq.f32.partialorder %v1599, 8.507059e+37
  %v1601 = vand.u32 %v756, 2147483648
  %v1602 = vor.u32 1.1754944e-38, %v1601
  %v1603 = vsel %vm1600, %v1602, %v1598
  %v1604 = vmul.f32 1.0, %v1603
  %v1605 = vrcp.pop %v757
  %v1606 = vmul.f32 %v757, %v1605
  %v1607 = vsub.f32 1.0, %v1606
  %v1608 = vmul.f32 %v1605, %v1607
  %v1609 = vadd.f32 %v1605, %v1608
  %vm1610 = vweird.f32 %v757
  %vm1611 = vweird.f32 %v1605
  %vm1612 = vmor %vm1610, %vm1611
  %v1613 = vsel %vm1612, %v1605, %v1609
  %v1614 = vand.u32 2147483647, %v757
  %vm1615 = vcmp.eq.f32.partialorder %v1614, 8.507059e+37
  %v1616 = vand.u32 %v757, 2147483648
  %v1617 = vor.u32 1.1754944e-38, %v1616
  %v1618 = vsel %vm1615, %v1617, %v1613
  %v1619 = vmul.f32 1.0, %v1618
  %v1620 = vrcp.pop %v758
  %v1621 = vmul.f32 %v758, %v1620
  %v1622 = vsub.f32 1.0, %v1621
  %v1623 = vmul.f32 %v1620, %v1622
  %v1624 = vadd.f32 %v1620, %v1623
  %vm1625 = vweird.f32 %v758
  %vm1626 = vweird.f32 %v1620
  %vm1627 = vmor %vm1625, %vm1626
  %v1628 = vsel %vm1627, %v1620, %v1624
  %v1629 = vand.u32 2147483647, %v758
  %vm1630 = vcmp.eq.f32.partialorder %v1629, 8.507059e+37
  %v1631 = vand.u32 %v758, 2147483648
  %v1632 = vor.u32 1.1754944e-38, %v1631
  %v1633 = vsel %vm1630, %v1632, %v1628
  %v1634 = vmul.f32 1.0, %v1633
  %v1635 = vrcp.pop %v759
  %v1636 = vmul.f32 %v759, %v1635
  %v1637 = vsub.f32 1.0, %v1636
  %v1638 = vmul.f32 %v1635, %v1637
  %v1639 = vadd.f32 %v1635, %v1638
  %vm1640 = vweird.f32 %v759
  %vm1641 = vweird.f32 %v1635
  %vm1642 = vmor %vm1640, %vm1641
  %v1643 = vsel %vm1642, %v1635, %v1639
  %v1644 = vand.u32 2147483647, %v759
  %vm1645 = vcmp.eq.f32.partialorder %v1644, 8.507059e+37
  %v1646 = vand.u32 %v759, 2147483648
  %v1647 = vor.u32 1.1754944e-38, %v1646
  %v1648 = vsel %vm1645, %v1647, %v1643
  %v1649 = vmul.f32 1.0, %v1648
  %v1650 = vrcp.pop %v760
  %v1651 = vmul.f32 %v760, %v1650
  %v1652 = vsub.f32 1.0, %v1651
  %v1653 = vmul.f32 %v1650, %v1652
  %v1654 = vadd.f32 %v1650, %v1653
  %vm1655 = vweird.f32 %v760
  %vm1656 = vweird.f32 %v1650
  %vm1657 = vmor %vm1655, %vm1656
  %v1658 = vsel %vm1657, %v1650, %v1654
  %v1659 = vand.u32 2147483647, %v760
  %vm1660 = vcmp.eq.f32.partialorder %v1659, 8.507059e+37
  %v1661 = vand.u32 %v760, 2147483648
  %v1662 = vor.u32 1.1754944e-38, %v1661
  %v1663 = vsel %vm1660, %v1662, %v1658
  %v1664 = vmul.f32 1.0, %v1663
  %v1665 = vrcp.pop %v761
  %v1666 = vmul.f32 %v761, %v1665
  %v1667 = vsub.f32 1.0, %v1666
  %v1668 = vmul.f32 %v1665, %v1667
  %v1669 = vadd.f32 %v1665, %v1668
  %vm1670 = vweird.f32 %v761
  %vm1671 = vweird.f32 %v1665
  %vm1672 = vmor %vm1670, %vm1671
  %v1673 = vsel %vm1672, %v1665, %v1669
  %v1674 = vand.u32 2147483647, %v761
  %vm1675 = vcmp.eq.f32.partialorder %v1674, 8.507059e+37
  %v1676 = vand.u32 %v761, 2147483648
  %v1677 = vor.u32 1.1754944e-38, %v1676
  %v1678 = vsel %vm1675, %v1677, %v1673
  %v1679 = vmul.f32 1.0, %v1678
  %v1680 = vrcp.pop %v762
  %v1681 = vmul.f32 %v762, %v1680
  %v1682 = vsub.f32 1.0, %v1681
  %v1683 = vmul.f32 %v1680, %v1682
  %v1684 = vadd.f32 %v1680, %v1683
  %vm1685 = vweird.f32 %v762
  %vm1686 = vweird.f32 %v1680
  %vm1687 = vmor %vm1685, %vm1686
  %v1688 = vsel %vm1687, %v1680, %v1684
  %v1689 = vand.u32 2147483647, %v762
  %vm1690 = vcmp.eq.f32.partialorder %v1689, 8.507059e+37
  %v1691 = vand.u32 %v762, 2147483648
  %v1692 = vor.u32 1.1754944e-38, %v1691
  %v1693 = vsel %vm1690, %v1692, %v1688
  %v1694 = vmul.f32 1.0, %v1693
  %v1695 = vrcp.pop %v763
  %v1696 = vmul.f32 %v763, %v1695
  %v1697 = vsub.f32 1.0, %v1696
  %v1698 = vmul.f32 %v1695, %v1697
  %v1699 = vadd.f32 %v1695, %v1698
  %vm1700 = vweird.f32 %v763
  %vm1701 = vweird.f32 %v1695
  %vm1702 = vmor %vm1700, %vm1701
  %v1703 = vsel %vm1702, %v1695, %v1699
  %v1704 = vand.u32 2147483647, %v763
  %vm1705 = vcmp.eq.f32.partialorder %v1704, 8.507059e+37
  %v1706 = vand.u32 %v763, 2147483648
  %v1707 = vor.u32 1.1754944e-38, %v1706
  %v1708 = vsel %vm1705, %v1707, %v1703
  %v1709 = vmul.f32 1.0, %v1708
  %v1710 = vrcp.pop %v764
  %v1711 = vmul.f32 %v764, %v1710
  %v1712 = vsub.f32 1.0, %v1711
  %v1713 = vmul.f32 %v1710, %v1712
  %v1714 = vadd.f32 %v1710, %v1713
  %vm1715 = vweird.f32 %v764
  %vm1716 = vweird.f32 %v1710
  %vm1717 = vmor %vm1715, %vm1716
  %v1718 = vsel %vm1717, %v1710, %v1714
  %v1719 = vand.u32 2147483647, %v764
  %vm1720 = vcmp.eq.f32.partialorder %v1719, 8.507059e+37
  %v1721 = vand.u32 %v764, 2147483648
  %v1722 = vor.u32 1.1754944e-38, %v1721
  %v1723 = vsel %vm1720, %v1722, %v1718
  %v1724 = vmul.f32 1.0, %v1723
  %v1725 = vld [vmem:[%s4] sm:$0xff]
  %v1726 = vld [vmem:[%s4 + $0x8] sm:$0xff]
  %v1727 = vld [vmem:[%s4 + $0x10] sm:$0xff]
  %v1728 = vld [vmem:[%s4 + $0x18] sm:$0xff]
  %v1729 = vld [vmem:[%s4 + $0x20] sm:$0xff]
  %v1730 = vld [vmem:[%s4 + $0x28] sm:$0xff]
  %v1731 = vld [vmem:[%s4 + $0x30] sm:$0xff]
  %v1732 = vld [vmem:[%s4 + $0x38] sm:$0xff]
  %v1733 = vld [vmem:[%s4 + $0x40] sm:$0xff]
  %v1734 = vld [vmem:[%s4 + $0x48] sm:$0xff]
  %v1735 = vld [vmem:[%s4 + $0x50] sm:$0xff]
  %v1736 = vld [vmem:[%s4 + $0x58] sm:$0xff]
  %v1737 = vld [vmem:[%s4 + $0x60] sm:$0xff]
  %v1738 = vld [vmem:[%s4 + $0x68] sm:$0xff]
  %v1739 = vld [vmem:[%s4 + $0x70] sm:$0xff]
  %v1740 = vld [vmem:[%s4 + $0x78] sm:$0xff]
  %v1741 = vld [vmem:[%s5] sm:$0x1]
  %v1743 = vperm.slane %v1741, 0
  %1745 = vmatpush.msra.mxu0 %v1740
  %1746 = vmatpush.msra.mxu0 %v1739
  %1747 = vmatpush.msra.mxu0 %v1738
  %1748 = vmatpush.msra.mxu0 %v1737
  %1749 = vmatpush.msra.mxu0 %v1736
  %1750 = vmatpush.msra.mxu0 %v1735
  %1751 = vmatpush.msra.mxu0 %v1734
  %1752 = vmatpush.msra.mxu0 %v1733
  %1753 = vmatpush.msra.mxu0 %v1732
  %1754 = vmatpush.msra.mxu0 %v1731
  %1755 = vmatpush.msra.mxu0 %v1730
  %1756 = vmatpush.msra.mxu0 %v1729
  %1757 = vmatpush.msra.mxu0 %v1728
  %1758 = vmatpush.msra.mxu0 %v1727
  %1759 = vmatpush.msra.mxu0 %v1726
  %1760 = vmatpush.msra.mxu0 %v1725
  %1761 = vmatmul.f32.gmra.mxu0 %v779
  %v1762 = vpop.f32.mrf.mxu0
  %v1763 = vadd.f32 %v1743, %v1762
  %1764 = vmatmul.f32.gmra.mxu0 %v794
  %v1765 = vpop.f32.mrf.mxu0
  %v1766 = vadd.f32 %v1743, %v1765
  %1767 = vmatmul.f32.gmra.mxu0 %v809
  %v1768 = vpop.f32.mrf.mxu0
  %v1769 = vadd.f32 %v1743, %v1768
  %1770 = vmatmul.f32.gmra.mxu0 %v824
  %v1771 = vpop.f32.mrf.mxu0
  %v1772 = vadd.f32 %v1743, %v1771
  %1773 = vmatmul.f32.gmra.mxu0 %v839
  %v1774 = vpop.f32.mrf.mxu0
  %v1775 = vadd.f32 %v1743, %v1774
  %1776 = vmatmul.f32.gmra.mxu0 %v854
  %v1777 = vpop.f32.mrf.mxu0
  %v1778 = vadd.f32 %v1743, %v1777
  %1779 = vmatmul.f32.gmra.mxu0 %v869
  %v1780 = vpop.f32.mrf.mxu0
  %v1781 = vadd.f32 %v1743, %v1780
  %1782 = vmatmul.f32.gmra.mxu0 %v884
  %v1783 = vpop.f32.mrf.mxu0
  %v1784 = vadd.f32 %v1743, %v1783
  %1785 = vmatmul.f32.gmra.mxu0 %v899
  %v1786 = vpop.f32.mrf.mxu0
  %v1787 = vadd.f32 %v1743, %v1786
  %1788 = vmatmul.f32.gmra.mxu0 %v914
  %v1789 = vpop.f32.mrf.mxu0
  %v1790 = vadd.f32 %v1743, %v1789
  %1791 = vmatmul.f32.gmra.mxu0 %v929
  %v1792 = vpop.f32.mrf.mxu0
  %v1793 = vadd.f32 %v1743, %v1792
  %1794 = vmatmul.f32.gmra.mxu0 %v944
  %v1795 = vpop.f32.mrf.mxu0
  %v1796 = vadd.f32 %v1743, %v1795
  %1797 = vmatmul.f32.gmra.mxu0 %v959
  %v1798 = vpop.f32.mrf.mxu0
  %v1799 = vadd.f32 %v1743, %v1798
  %1800 = vmatmul.f32.gmra.mxu0 %v974
  %v1801 = vpop.f32.mrf.mxu0
  %v1802 = vadd.f32 %v1743, %v1801
  %1803 = vmatmul.f32.gmra.mxu0 %v989
  %v1804 = vpop.f32.mrf.mxu0
  %v1805 = vadd.f32 %v1743, %v1804
  %1806 = vmatmul.f32.gmra.mxu0 %v1004
  %v1807 = vpop.f32.mrf.mxu0
  %v1808 = vadd.f32 %v1743, %v1807
  %1809 = vmatmul.f32.gmra.mxu0 %v1019
  %v1810 = vpop.f32.mrf.mxu0
  %v1811 = vadd.f32 %v1743, %v1810
  %1812 = vmatmul.f32.gmra.mxu0 %v1034
  %v1813 = vpop.f32.mrf.mxu0
  %v1814 = vadd.f32 %v1743, %v1813
  %1815 = vmatmul.f32.gmra.mxu0 %v1049
  %v1816 = vpop.f32.mrf.mxu0
  %v1817 = vadd.f32 %v1743, %v1816
  %1818 = vmatmul.f32.gmra.mxu0 %v1064
  %v1819 = vpop.f32.mrf.mxu0
  %v1820 = vadd.f32 %v1743, %v1819
  %1821 = vmatmul.f32.gmra.mxu0 %v1079
  %v1822 = vpop.f32.mrf.mxu0
  %v1823 = vadd.f32 %v1743, %v1822
  %1824 = vmatmul.f32.gmra.mxu0 %v1094
  %v1825 = vpop.f32.mrf.mxu0
  %v1826 = vadd.f32 %v1743, %v1825
  %1827 = vmatmul.f32.gmra.mxu0 %v1109
  %v1828 = vpop.f32.mrf.mxu0
  %v1829 = vadd.f32 %v1743, %v1828
  %1830 = vmatmul.f32.gmra.mxu0 %v1124
  %v1831 = vpop.f32.mrf.mxu0
  %v1832 = vadd.f32 %v1743, %v1831
  %1833 = vmatmul.f32.gmra.mxu0 %v1139
  %v1834 = vpop.f32.mrf.mxu0
  %v1835 = vadd.f32 %v1743, %v1834
  %1836 = vmatmul.f32.gmra.mxu0 %v1154
  %v1837 = vpop.f32.mrf.mxu0
  %v1838 = vadd.f32 %v1743, %v1837
  %1839 = vmatmul.f32.gmra.mxu0 %v1169
  %v1840 = vpop.f32.mrf.mxu0
  %v1841 = vadd.f32 %v1743, %v1840
  %1842 = vmatmul.f32.gmra.mxu0 %v1184
  %v1843 = vpop.f32.mrf.mxu0
  %v1844 = vadd.f32 %v1743, %v1843
  %1845 = vmatmul.f32.gmra.mxu0 %v1199
  %v1846 = vpop.f32.mrf.mxu0
  %v1847 = vadd.f32 %v1743, %v1846
  %1848 = vmatmul.f32.gmra.mxu0 %v1214
  %v1849 = vpop.f32.mrf.mxu0
  %v1850 = vadd.f32 %v1743, %v1849
  %1851 = vmatmul.f32.gmra.mxu0 %v1229
  %v1852 = vpop.f32.mrf.mxu0
  %v1853 = vadd.f32 %v1743, %v1852
  %1854 = vmatmul.f32.gmra.mxu0 %v1244
  %v1855 = vpop.f32.mrf.mxu0
  %v1856 = vadd.f32 %v1743, %v1855
  %1857 = vmatmul.f32.gmra.mxu0 %v1259
  %v1858 = vpop.f32.mrf.mxu0
  %v1859 = vadd.f32 %v1743, %v1858
  %1860 = vmatmul.f32.gmra.mxu0 %v1274
  %v1861 = vpop.f32.mrf.mxu0
  %v1862 = vadd.f32 %v1743, %v1861
  %1863 = vmatmul.f32.gmra.mxu0 %v1289
  %v1864 = vpop.f32.mrf.mxu0
  %v1865 = vadd.f32 %v1743, %v1864
  %1866 = vmatmul.f32.gmra.mxu0 %v1304
  %v1867 = vpop.f32.mrf.mxu0
  %v1868 = vadd.f32 %v1743, %v1867
  %1869 = vmatmul.f32.gmra.mxu0 %v1319
  %v1870 = vpop.f32.mrf.mxu0
  %v1871 = vadd.f32 %v1743, %v1870
  %1872 = vmatmul.f32.gmra.mxu0 %v1334
  %v1873 = vpop.f32.mrf.mxu0
  %v1874 = vadd.f32 %v1743, %v1873
  %1875 = vmatmul.f32.gmra.mxu0 %v1349
  %v1876 = vpop.f32.mrf.mxu0
  %v1877 = vadd.f32 %v1743, %v1876
  %1878 = vmatmul.f32.gmra.mxu0 %v1364
  %v1879 = vpop.f32.mrf.mxu0
  %v1880 = vadd.f32 %v1743, %v1879
  %1881 = vmatmul.f32.gmra.mxu0 %v1379
  %v1882 = vpop.f32.mrf.mxu0
  %v1883 = vadd.f32 %v1743, %v1882
  %1884 = vmatmul.f32.gmra.mxu0 %v1394
  %v1885 = vpop.f32.mrf.mxu0
  %v1886 = vadd.f32 %v1743, %v1885
  %1887 = vmatmul.f32.gmra.mxu0 %v1409
  %v1888 = vpop.f32.mrf.mxu0
  %v1889 = vadd.f32 %v1743, %v1888
  %1890 = vmatmul.f32.gmra.mxu0 %v1424
  %v1891 = vpop.f32.mrf.mxu0
  %v1892 = vadd.f32 %v1743, %v1891
  %1893 = vmatmul.f32.gmra.mxu0 %v1439
  %v1894 = vpop.f32.mrf.mxu0
  %v1895 = vadd.f32 %v1743, %v1894
  %1896 = vmatmul.f32.gmra.mxu0 %v1454
  %v1897 = vpop.f32.mrf.mxu0
  %v1898 = vadd.f32 %v1743, %v1897
  %1899 = vmatmul.f32.gmra.mxu0 %v1469
  %v1900 = vpop.f32.mrf.mxu0
  %v1901 = vadd.f32 %v1743, %v1900
  %1902 = vmatmul.f32.gmra.mxu0 %v1484
  %v1903 = vpop.f32.mrf.mxu0
  %v1904 = vadd.f32 %v1743, %v1903
  %1905 = vmatmul.f32.gmra.mxu0 %v1499
  %v1906 = vpop.f32.mrf.mxu0
  %v1907 = vadd.f32 %v1743, %v1906
  %1908 = vmatmul.f32.gmra.mxu0 %v1514
  %v1909 = vpop.f32.mrf.mxu0
  %v1910 = vadd.f32 %v1743, %v1909
  %1911 = vmatmul.f32.gmra.mxu0 %v1529
  %v1912 = vpop.f32.mrf.mxu0
  %v1913 = vadd.f32 %v1743, %v1912
  %1914 = vmatmul.f32.gmra.mxu0 %v1544
  %v1915 = vpop.f32.mrf.mxu0
  %v1916 = vadd.f32 %v1743, %v1915
  %1917 = vmatmul.f32.gmra.mxu0 %v1559
  %v1918 = vpop.f32.mrf.mxu0
  %v1919 = vadd.f32 %v1743, %v1918
  %1920 = vmatmul.f32.gmra.mxu0 %v1574
  %v1921 = vpop.f32.mrf.mxu0
  %v1922 = vadd.f32 %v1743, %v1921
  %1923 = vmatmul.f32.gmra.mxu0 %v1589
  %v1924 = vpop.f32.mrf.mxu0
  %v1925 = vadd.f32 %v1743, %v1924
  %1926 = vmatmul.f32.gmra.mxu0 %v1604
  %v1927 = vpop.f32.mrf.mxu0
  %v1928 = vadd.f32 %v1743, %v1927
  %1929 = vmatmul.f32.gmra.mxu0 %v1619
  %v1930 = vpop.f32.mrf.mxu0
  %v1931 = vadd.f32 %v1743, %v1930
  %1932 = vmatmul.f32.gmra.mxu0 %v1634
  %v1933 = vpop.f32.mrf.mxu0
  %v1934 = vadd.f32 %v1743, %v1933
  %1935 = vmatmul.f32.gmra.mxu0 %v1649
  %v1936 = vpop.f32.mrf.mxu0
  %v1937 = vadd.f32 %v1743, %v1936
  %1938 = vmatmul.f32.gmra.mxu0 %v1664
  %v1939 = vpop.f32.mrf.mxu0
  %v1940 = vadd.f32 %v1743, %v1939
  %1941 = vmatmul.f32.gmra.mxu0 %v1679
  %v1942 = vpop.f32.mrf.mxu0
  %v1943 = vadd.f32 %v1743, %v1942
  %1944 = vmatmul.f32.gmra.mxu0 %v1694
  %v1945 = vpop.f32.mrf.mxu0
  %v1946 = vadd.f32 %v1743, %v1945
  %1947 = vmatmul.f32.gmra.mxu0 %v1709
  %v1948 = vpop.f32.mrf.mxu0
  %v1949 = vadd.f32 %v1743, %v1948
  %1950 = vmatmul.f32.gmra.mxu0 %v1724
  %v1951 = vpop.f32.mrf.mxu0
  %v1952 = vadd.f32 %v1743, %v1951
  %1953 = vdwg.mxu0
  %v1954 = vld [vmem:[%s1] sm:$0xff]
  %v1955 = vld [vmem:[%s1 + $0x8] sm:$0xff]
  %v1956 = vld [vmem:[%s1 + $0x10] sm:$0xff]
  %v1957 = vld [vmem:[%s1 + $0x18] sm:$0xff]
  %v1958 = vld [vmem:[%s1 + $0x20] sm:$0xff]
  %v1959 = vld [vmem:[%s1 + $0x28] sm:$0xff]
  %v1960 = vld [vmem:[%s1 + $0x30] sm:$0xff]
  %v1961 = vld [vmem:[%s1 + $0x38] sm:$0xff]
  %v1962 = vld [vmem:[%s1 + $0x40] sm:$0xff]
  %v1963 = vld [vmem:[%s1 + $0x48] sm:$0xff]
  %v1964 = vld [vmem:[%s1 + $0x50] sm:$0xff]
  %v1965 = vld [vmem:[%s1 + $0x58] sm:$0xff]
  %v1966 = vld [vmem:[%s1 + $0x60] sm:$0xff]
  %v1967 = vld [vmem:[%s1 + $0x68] sm:$0xff]
  %v1968 = vld [vmem:[%s1 + $0x70] sm:$0xff]
  %v1969 = vld [vmem:[%s1 + $0x78] sm:$0xff]
  %v1970 = vld [vmem:[%s1 + $0x80] sm:$0xff]
  %v1971 = vld [vmem:[%s1 + $0x88] sm:$0xff]
  %v1972 = vld [vmem:[%s1 + $0x90] sm:$0xff]
  %v1973 = vld [vmem:[%s1 + $0x98] sm:$0xff]
  %v1974 = vld [vmem:[%s1 + $0xa0] sm:$0xff]
  %v1975 = vld [vmem:[%s1 + $0xa8] sm:$0xff]
  %v1976 = vld [vmem:[%s1 + $0xb0] sm:$0xff]
  %v1977 = vld [vmem:[%s1 + $0xb8] sm:$0xff]
  %v1978 = vld [vmem:[%s1 + $0xc0] sm:$0xff]
  %v1979 = vld [vmem:[%s1 + $0xc8] sm:$0xff]
  %v1980 = vld [vmem:[%s1 + $0xd0] sm:$0xff]
  %v1981 = vld [vmem:[%s1 + $0xd8] sm:$0xff]
  %v1982 = vld [vmem:[%s1 + $0xe0] sm:$0xff]
  %v1983 = vld [vmem:[%s1 + $0xe8] sm:$0xff]
  %v1984 = vld [vmem:[%s1 + $0xf0] sm:$0xff]
  %v1985 = vld [vmem:[%s1 + $0xf8] sm:$0xff]
  %v1986 = vld [vmem:[%s1 + $0x100] sm:$0xff]
  %v1987 = vld [vmem:[%s1 + $0x108] sm:$0xff]
  %v1988 = vld [vmem:[%s1 + $0x110] sm:$0xff]
  %v1989 = vld [vmem:[%s1 + $0x118] sm:$0xff]
  %v1990 = vld [vmem:[%s1 + $0x120] sm:$0xff]
  %v1991 = vld [vmem:[%s1 + $0x128] sm:$0xff]
  %v1992 = vld [vmem:[%s1 + $0x130] sm:$0xff]
  %v1993 = vld [vmem:[%s1 + $0x138] sm:$0xff]
  %v1994 = vld [vmem:[%s1 + $0x140] sm:$0xff]
  %v1995 = vld [vmem:[%s1 + $0x148] sm:$0xff]
  %v1996 = vld [vmem:[%s1 + $0x150] sm:$0xff]
  %v1997 = vld [vmem:[%s1 + $0x158] sm:$0xff]
  %v1998 = vld [vmem:[%s1 + $0x160] sm:$0xff]
  %v1999 = vld [vmem:[%s1 + $0x168] sm:$0xff]
  %v2000 = vld [vmem:[%s1 + $0x170] sm:$0xff]
  %v2001 = vld [vmem:[%s1 + $0x178] sm:$0xff]
  %v2002 = vld [vmem:[%s1 + $0x180] sm:$0xff]
  %v2003 = vld [vmem:[%s1 + $0x188] sm:$0xff]
  %v2004 = vld [vmem:[%s1 + $0x190] sm:$0xff]
  %v2005 = vld [vmem:[%s1 + $0x198] sm:$0xff]
  %v2006 = vld [vmem:[%s1 + $0x1a0] sm:$0xff]
  %v2007 = vld [vmem:[%s1 + $0x1a8] sm:$0xff]
  %v2008 = vld [vmem:[%s1 + $0x1b0] sm:$0xff]
  %v2009 = vld [vmem:[%s1 + $0x1b8] sm:$0xff]
  %v2010 = vld [vmem:[%s1 + $0x1c0] sm:$0xff]
  %v2011 = vld [vmem:[%s1 + $0x1c8] sm:$0xff]
  %v2012 = vld [vmem:[%s1 + $0x1d0] sm:$0xff]
  %v2013 = vld [vmem:[%s1 + $0x1d8] sm:$0xff]
  %v2014 = vld [vmem:[%s1 + $0x1e0] sm:$0xff]
  %v2015 = vld [vmem:[%s1 + $0x1e8] sm:$0xff]
  %v2016 = vld [vmem:[%s1 + $0x1f0] sm:$0xff]
  %v2017 = vld [vmem:[%s1 + $0x1f8] sm:$0xff]
  %v2018 = vmul.f32 %v1763, %v1954
  %v2019 = vmul.f32 %v1766, %v1955
  %v2020 = vmul.f32 %v1769, %v1956
  %v2021 = vmul.f32 %v1772, %v1957
  %v2022 = vmul.f32 %v1775, %v1958
  %v2023 = vmul.f32 %v1778, %v1959
  %v2024 = vmul.f32 %v1781, %v1960
  %v2025 = vmul.f32 %v1784, %v1961
  %v2026 = vmul.f32 %v1787, %v1962
  %v2027 = vmul.f32 %v1790, %v1963
  %v2028 = vmul.f32 %v1793, %v1964
  %v2029 = vmul.f32 %v1796, %v1965
  %v2030 = vmul.f32 %v1799, %v1966
  %v2031 = vmul.f32 %v1802, %v1967
  %v2032 = vmul.f32 %v1805, %v1968
  %v2033 = vmul.f32 %v1808, %v1969
  %v2034 = vmul.f32 %v1811, %v1970
  %v2035 = vmul.f32 %v1814, %v1971
  %v2036 = vmul.f32 %v1817, %v1972
  %v2037 = vmul.f32 %v1820, %v1973
  %v2038 = vmul.f32 %v1823, %v1974
  %v2039 = vmul.f32 %v1826, %v1975
  %v2040 = vmul.f32 %v1829, %v1976
  %v2041 = vmul.f32 %v1832, %v1977
  %v2042 = vmul.f32 %v1835, %v1978
  %v2043 = vmul.f32 %v1838, %v1979
  %v2044 = vmul.f32 %v1841, %v1980
  %v2045 = vmul.f32 %v1844, %v1981
  %v2046 = vmul.f32 %v1847, %v1982
  %v2047 = vmul.f32 %v1850, %v1983
  %v2048 = vmul.f32 %v1853, %v1984
  %v2049 = vmul.f32 %v1856, %v1985
  %v2050 = vmul.f32 %v1859, %v1986
  %v2051 = vmul.f32 %v1862, %v1987
  %v2052 = vmul.f32 %v1865, %v1988
  %v2053 = vmul.f32 %v1868, %v1989
  %v2054 = vmul.f32 %v1871, %v1990
  %v2055 = vmul.f32 %v1874, %v1991
  %v2056 = vmul.f32 %v1877, %v1992
  %v2057 = vmul.f32 %v1880, %v1993
  %v2058 = vmul.f32 %v1883, %v1994
  %v2059 = vmul.f32 %v1886, %v1995
  %v2060 = vmul.f32 %v1889, %v1996
  %v2061 = vmul.f32 %v1892, %v1997
  %v2062 = vmul.f32 %v1895, %v1998
  %v2063 = vmul.f32 %v1898, %v1999
  %v2064 = vmul.f32 %v1901, %v2000
  %v2065 = vmul.f32 %v1904, %v2001
  %v2066 = vmul.f32 %v1907, %v2002
  %v2067 = vmul.f32 %v1910, %v2003
  %v2068 = vmul.f32 %v1913, %v2004
  %v2069 = vmul.f32 %v1916, %v2005
  %v2070 = vmul.f32 %v1919, %v2006
  %v2071 = vmul.f32 %v1922, %v2007
  %v2072 = vmul.f32 %v1925, %v2008
  %v2073 = vmul.f32 %v1928, %v2009
  %v2074 = vmul.f32 %v1931, %v2010
  %v2075 = vmul.f32 %v1934, %v2011
  %v2076 = vmul.f32 %v1937, %v2012
  %v2077 = vmul.f32 %v1940, %v2013
  %v2078 = vmul.f32 %v1943, %v2014
  %v2079 = vmul.f32 %v1946, %v2015
  %v2080 = vmul.f32 %v1949, %v2016
  %v2081 = vmul.f32 %v1952, %v2017
  %v2082 = vld [vmem:[%s6] sm:$0xff]
  %v2083 = vld [vmem:[%s6 + $0x8] sm:$0xff]
  %v2084 = vld [vmem:[%s7] sm:$0x1]
  %v2086 = vperm.slane %v2084, 0
  %vm2088 = vcmask 130048
  %v2090 = vsel %vm2088, %v2018, 0
  %v2093 = vsel %vm2088, %v2019, 0
  %v2096 = vsel %vm2088, %v2020, 0
  %v2099 = vsel %vm2088, %v2021, 0
  %v2102 = vsel %vm2088, %v2022, 0
  %v2105 = vsel %vm2088, %v2023, 0
  %v2108 = vsel %vm2088, %v2024, 0
  %v2111 = vsel %vm2088, %v2025, 0
  %v2114 = vsel %vm2088, %v2026, 0
  %v2117 = vsel %vm2088, %v2027, 0
  %v2120 = vsel %vm2088, %v2028, 0
  %v2123 = vsel %vm2088, %v2029, 0
  %v2126 = vsel %vm2088, %v2030, 0
  %v2129 = vsel %vm2088, %v2031, 0
  %v2132 = vsel %vm2088, %v2032, 0
  %v2135 = vsel %vm2088, %v2033, 0
  %v2138 = vsel %vm2088, %v2034, 0
  %v2141 = vsel %vm2088, %v2035, 0
  %v2144 = vsel %vm2088, %v2036, 0
  %v2147 = vsel %vm2088, %v2037, 0
  %v2150 = vsel %vm2088, %v2038, 0
  %v2153 = vsel %vm2088, %v2039, 0
  %v2156 = vsel %vm2088, %v2040, 0
  %v2159 = vsel %vm2088, %v2041, 0
  %v2162 = vsel %vm2088, %v2042, 0
  %v2165 = vsel %vm2088, %v2043, 0
  %v2168 = vsel %vm2088, %v2044, 0
  %v2171 = vsel %vm2088, %v2045, 0
  %v2174 = vsel %vm2088, %v2046, 0
  %v2177 = vsel %vm2088, %v2047, 0
  %v2180 = vsel %vm2088, %v2048, 0
  %v2183 = vsel %vm2088, %v2049, 0
  %v2186 = vsel %vm2088, %v2050, 0
  %v2189 = vsel %vm2088, %v2051, 0
  %v2192 = vsel %vm2088, %v2052, 0
  %v2195 = vsel %vm2088, %v2053, 0
  %v2198 = vsel %vm2088, %v2054, 0
  %v2201 = vsel %vm2088, %v2055, 0
  %v2204 = vsel %vm2088, %v2056, 0
  %v2207 = vsel %vm2088, %v2057, 0
  %v2210 = vsel %vm2088, %v2058, 0
  %v2213 = vsel %vm2088, %v2059, 0
  %v2216 = vsel %vm2088, %v2060, 0
  %v2219 = vsel %vm2088, %v2061, 0
  %v2222 = vsel %vm2088, %v2062, 0
  %v2225 = vsel %vm2088, %v2063, 0
  %v2228 = vsel %vm2088, %v2064, 0
  %v2231 = vsel %vm2088, %v2065, 0
  %v2234 = vsel %vm2088, %v2066, 0
  %v2237 = vsel %vm2088, %v2067, 0
  %v2240 = vsel %vm2088, %v2068, 0
  %v2243 = vsel %vm2088, %v2069, 0
  %v2246 = vsel %vm2088, %v2070, 0
  %v2249 = vsel %vm2088, %v2071, 0
  %v2252 = vsel %vm2088, %v2072, 0
  %v2255 = vsel %vm2088, %v2073, 0
  %v2258 = vsel %vm2088, %v2074, 0
  %v2261 = vsel %vm2088, %v2075, 0
  %v2264 = vsel %vm2088, %v2076, 0
  %v2267 = vsel %vm2088, %v2077, 0
  %v2270 = vsel %vm2088, %v2078, 0
  %v2273 = vsel %vm2088, %v2079, 0
  %v2276 = vsel %vm2088, %v2080, 0
  %v2279 = vsel %vm2088, %v2081, 0
  %2281 = vmatpush.msra.mxu0 0.0
  %2282 = vmatpush.msra.mxu0 0.0
  %2283 = vmatpush.msra.mxu0 0.0
  %2284 = vmatpush.msra.mxu0 0.0
  %2285 = vmatpush.msra.mxu0 0.0
  %2286 = vmatpush.msra.mxu0 0.0
  %2287 = vmatpush.msra.mxu0 0.0
  %2288 = vmatpush.msra.mxu0 0.0
  %2289 = vmatpush.msra.mxu0 0.0
  %2290 = vmatpush.msra.mxu0 0.0
  %2291 = vmatpush.msra.mxu0 0.0
  %2292 = vmatpush.msra.mxu0 0.0
  %2293 = vmatpush.msra.mxu0 0.0
  %2294 = vmatpush.msra.mxu0 0.0
  %2295 = vmatpush.msra.mxu0 %v2083
  %2296 = vmatpush.msra.mxu0 %v2082
  %2297 = vmatmul.f32.gmra.mxu0 %v2090
  %v2298 = vpop.f32.mrf.mxu0
  %v2299 = vadd.f32 %v2086, %v2298
  %2300 = vmatmul.f32.gmra.mxu0 %v2093
  %v2301 = vpop.f32.mrf.mxu0
  %v2302 = vadd.f32 %v2086, %v2301
  %2303 = vmatmul.f32.gmra.mxu0 %v2096
  %v2304 = vpop.f32.mrf.mxu0
  %v2305 = vadd.f32 %v2086, %v2304
  %2306 = vmatmul.f32.gmra.mxu0 %v2099
  %v2307 = vpop.f32.mrf.mxu0
  %v2308 = vadd.f32 %v2086, %v2307
  %2309 = vmatmul.f32.gmra.mxu0 %v2102
  %v2310 = vpop.f32.mrf.mxu0
  %v2311 = vadd.f32 %v2086, %v2310
  %2312 = vmatmul.f32.gmra.mxu0 %v2105
  %v2313 = vpop.f32.mrf.mxu0
  %v2314 = vadd.f32 %v2086, %v2313
  %2315 = vmatmul.f32.gmra.mxu0 %v2108
  %v2316 = vpop.f32.mrf.mxu0
  %v2317 = vadd.f32 %v2086, %v2316
  %2318 = vmatmul.f32.gmra.mxu0 %v2111
  %v2319 = vpop.f32.mrf.mxu0
  %v2320 = vadd.f32 %v2086, %v2319
  %2321 = vmatmul.f32.gmra.mxu0 %v2114
  %v2322 = vpop.f32.mrf.mxu0
  %v2323 = vadd.f32 %v2086, %v2322
  %2324 = vmatmul.f32.gmra.mxu0 %v2117
  %v2325 = vpop.f32.mrf.mxu0
  %v2326 = vadd.f32 %v2086, %v2325
  %2327 = vmatmul.f32.gmra.mxu0 %v2120
  %v2328 = vpop.f32.mrf.mxu0
  %v2329 = vadd.f32 %v2086, %v2328
  %2330 = vmatmul.f32.gmra.mxu0 %v2123
  %v2331 = vpop.f32.mrf.mxu0
  %v2332 = vadd.f32 %v2086, %v2331
  %2333 = vmatmul.f32.gmra.mxu0 %v2126
  %v2334 = vpop.f32.mrf.mxu0
  %v2335 = vadd.f32 %v2086, %v2334
  %2336 = vmatmul.f32.gmra.mxu0 %v2129
  %v2337 = vpop.f32.mrf.mxu0
  %v2338 = vadd.f32 %v2086, %v2337
  %2339 = vmatmul.f32.gmra.mxu0 %v2132
  %v2340 = vpop.f32.mrf.mxu0
  %v2341 = vadd.f32 %v2086, %v2340
  %2342 = vmatmul.f32.gmra.mxu0 %v2135
  %v2343 = vpop.f32.mrf.mxu0
  %v2344 = vadd.f32 %v2086, %v2343
  %2345 = vmatmul.f32.gmra.mxu0 %v2138
  %v2346 = vpop.f32.mrf.mxu0
  %v2347 = vadd.f32 %v2086, %v2346
  %2348 = vmatmul.f32.gmra.mxu0 %v2141
  %v2349 = vpop.f32.mrf.mxu0
  %v2350 = vadd.f32 %v2086, %v2349
  %2351 = vmatmul.f32.gmra.mxu0 %v2144
  %v2352 = vpop.f32.mrf.mxu0
  %v2353 = vadd.f32 %v2086, %v2352
  %2354 = vmatmul.f32.gmra.mxu0 %v2147
  %v2355 = vpop.f32.mrf.mxu0
  %v2356 = vadd.f32 %v2086, %v2355
  %2357 = vmatmul.f32.gmra.mxu0 %v2150
  %v2358 = vpop.f32.mrf.mxu0
  %v2359 = vadd.f32 %v2086, %v2358
  %2360 = vmatmul.f32.gmra.mxu0 %v2153
  %v2361 = vpop.f32.mrf.mxu0
  %v2362 = vadd.f32 %v2086, %v2361
  %2363 = vmatmul.f32.gmra.mxu0 %v2156
  %v2364 = vpop.f32.mrf.mxu0
  %v2365 = vadd.f32 %v2086, %v2364
  %2366 = vmatmul.f32.gmra.mxu0 %v2159
  %v2367 = vpop.f32.mrf.mxu0
  %v2368 = vadd.f32 %v2086, %v2367
  %2369 = vmatmul.f32.gmra.mxu0 %v2162
  %v2370 = vpop.f32.mrf.mxu0
  %v2371 = vadd.f32 %v2086, %v2370
  %2372 = vmatmul.f32.gmra.mxu0 %v2165
  %v2373 = vpop.f32.mrf.mxu0
  %v2374 = vadd.f32 %v2086, %v2373
  %2375 = vmatmul.f32.gmra.mxu0 %v2168
  %v2376 = vpop.f32.mrf.mxu0
  %v2377 = vadd.f32 %v2086, %v2376
  %2378 = vmatmul.f32.gmra.mxu0 %v2171
  %v2379 = vpop.f32.mrf.mxu0
  %v2380 = vadd.f32 %v2086, %v2379
  %2381 = vmatmul.f32.gmra.mxu0 %v2174
  %v2382 = vpop.f32.mrf.mxu0
  %v2383 = vadd.f32 %v2086, %v2382
  %2384 = vmatmul.f32.gmra.mxu0 %v2177
  %v2385 = vpop.f32.mrf.mxu0
  %v2386 = vadd.f32 %v2086, %v2385
  %2387 = vmatmul.f32.gmra.mxu0 %v2180
  %v2388 = vpop.f32.mrf.mxu0
  %v2389 = vadd.f32 %v2086, %v2388
  %2390 = vmatmul.f32.gmra.mxu0 %v2183
  %v2391 = vpop.f32.mrf.mxu0
  %v2392 = vadd.f32 %v2086, %v2391
  %2393 = vmatmul.f32.gmra.mxu0 %v2186
  %v2394 = vpop.f32.mrf.mxu0
  %v2395 = vadd.f32 %v2086, %v2394
  %2396 = vmatmul.f32.gmra.mxu0 %v2189
  %v2397 = vpop.f32.mrf.mxu0
  %v2398 = vadd.f32 %v2086, %v2397
  %2399 = vmatmul.f32.gmra.mxu0 %v2192
  %v2400 = vpop.f32.mrf.mxu0
  %v2401 = vadd.f32 %v2086, %v2400
  %2402 = vmatmul.f32.gmra.mxu0 %v2195
  %v2403 = vpop.f32.mrf.mxu0
  %v2404 = vadd.f32 %v2086, %v2403
  %2405 = vmatmul.f32.gmra.mxu0 %v2198
  %v2406 = vpop.f32.mrf.mxu0
  %v2407 = vadd.f32 %v2086, %v2406
  %2408 = vmatmul.f32.gmra.mxu0 %v2201
  %v2409 = vpop.f32.mrf.mxu0
  %v2410 = vadd.f32 %v2086, %v2409
  %2411 = vmatmul.f32.gmra.mxu0 %v2204
  %v2412 = vpop.f32.mrf.mxu0
  %v2413 = vadd.f32 %v2086, %v2412
  %2414 = vmatmul.f32.gmra.mxu0 %v2207
  %v2415 = vpop.f32.mrf.mxu0
  %v2416 = vadd.f32 %v2086, %v2415
  %2417 = vmatmul.f32.gmra.mxu0 %v2210
  %v2418 = vpop.f32.mrf.mxu0
  %v2419 = vadd.f32 %v2086, %v2418
  %2420 = vmatmul.f32.gmra.mxu0 %v2213
  %v2421 = vpop.f32.mrf.mxu0
  %v2422 = vadd.f32 %v2086, %v2421
  %2423 = vmatmul.f32.gmra.mxu0 %v2216
  %v2424 = vpop.f32.mrf.mxu0
  %v2425 = vadd.f32 %v2086, %v2424
  %2426 = vmatmul.f32.gmra.mxu0 %v2219
  %v2427 = vpop.f32.mrf.mxu0
  %v2428 = vadd.f32 %v2086, %v2427
  %2429 = vmatmul.f32.gmra.mxu0 %v2222
  %v2430 = vpop.f32.mrf.mxu0
  %v2431 = vadd.f32 %v2086, %v2430
  %2432 = vmatmul.f32.gmra.mxu0 %v2225
  %v2433 = vpop.f32.mrf.mxu0
  %v2434 = vadd.f32 %v2086, %v2433
  %2435 = vmatmul.f32.gmra.mxu0 %v2228
  %v2436 = vpop.f32.mrf.mxu0
  %v2437 = vadd.f32 %v2086, %v2436
  %2438 = vmatmul.f32.gmra.mxu0 %v2231
  %v2439 = vpop.f32.mrf.mxu0
  %v2440 = vadd.f32 %v2086, %v2439
  %2441 = vmatmul.f32.gmra.mxu0 %v2234
  %v2442 = vpop.f32.mrf.mxu0
  %v2443 = vadd.f32 %v2086, %v2442
  %2444 = vmatmul.f32.gmra.mxu0 %v2237
  %v2445 = vpop.f32.mrf.mxu0
  %v2446 = vadd.f32 %v2086, %v2445
  %2447 = vmatmul.f32.gmra.mxu0 %v2240
  %v2448 = vpop.f32.mrf.mxu0
  %v2449 = vadd.f32 %v2086, %v2448
  %2450 = vmatmul.f32.gmra.mxu0 %v2243
  %v2451 = vpop.f32.mrf.mxu0
  %v2452 = vadd.f32 %v2086, %v2451
  %2453 = vmatmul.f32.gmra.mxu0 %v2246
  %v2454 = vpop.f32.mrf.mxu0
  %v2455 = vadd.f32 %v2086, %v2454
  %2456 = vmatmul.f32.gmra.mxu0 %v2249
  %v2457 = vpop.f32.mrf.mxu0
  %v2458 = vadd.f32 %v2086, %v2457
  %2459 = vmatmul.f32.gmra.mxu0 %v2252
  %v2460 = vpop.f32.mrf.mxu0
  %v2461 = vadd.f32 %v2086, %v2460
  %2462 = vmatmul.f32.gmra.mxu0 %v2255
  %v2463 = vpop.f32.mrf.mxu0
  %v2464 = vadd.f32 %v2086, %v2463
  %2465 = vmatmul.f32.gmra.mxu0 %v2258
  %v2466 = vpop.f32.mrf.mxu0
  %v2467 = vadd.f32 %v2086, %v2466
  %2468 = vmatmul.f32.gmra.mxu0 %v2261
  %v2469 = vpop.f32.mrf.mxu0
  %v2470 = vadd.f32 %v2086, %v2469
  %2471 = vmatmul.f32.gmra.mxu0 %v2264
  %v2472 = vpop.f32.mrf.mxu0
  %v2473 = vadd.f32 %v2086, %v2472
  %2474 = vmatmul.f32.gmra.mxu0 %v2267
  %v2475 = vpop.f32.mrf.mxu0
  %v2476 = vadd.f32 %v2086, %v2475
  %2477 = vmatmul.f32.gmra.mxu0 %v2270
  %v2478 = vpop.f32.mrf.mxu0
  %v2479 = vadd.f32 %v2086, %v2478
  %2480 = vmatmul.f32.gmra.mxu0 %v2273
  %v2481 = vpop.f32.mrf.mxu0
  %v2482 = vadd.f32 %v2086, %v2481
  %2483 = vmatmul.f32.gmra.mxu0 %v2276
  %v2484 = vpop.f32.mrf.mxu0
  %v2485 = vadd.f32 %v2086, %v2484
  %2486 = vmatmul.f32.gmra.mxu0 %v2279
  %v2487 = vpop.f32.mrf.mxu0
  %v2488 = vadd.f32 %v2086, %v2487
  %2489 = vdwg.mxu0
  %v2490 = vxor.u32 %v2299, 2147483648
  %v2491 = vxor.u32 %v2302, 2147483648
  %v2492 = vxor.u32 %v2305, 2147483648
  %v2493 = vxor.u32 %v2308, 2147483648
  %v2494 = vxor.u32 %v2311, 2147483648
  %v2495 = vxor.u32 %v2314, 2147483648
  %v2496 = vxor.u32 %v2317, 2147483648
  %v2497 = vxor.u32 %v2320, 2147483648
  %v2498 = vxor.u32 %v2323, 2147483648
  %v2499 = vxor.u32 %v2326, 2147483648
  %v2500 = vxor.u32 %v2329, 2147483648
  %v2501 = vxor.u32 %v2332, 2147483648
  %v2502 = vxor.u32 %v2335, 2147483648
  %v2503 = vxor.u32 %v2338, 2147483648
  %v2504 = vxor.u32 %v2341, 2147483648
  %v2505 = vxor.u32 %v2344, 2147483648
  %v2506 = vxor.u32 %v2347, 2147483648
  %v2507 = vxor.u32 %v2350, 2147483648
  %v2508 = vxor.u32 %v2353, 2147483648
  %v2509 = vxor.u32 %v2356, 2147483648
  %v2510 = vxor.u32 %v2359, 2147483648
  %v2511 = vxor.u32 %v2362, 2147483648
  %v2512 = vxor.u32 %v2365, 2147483648
  %v2513 = vxor.u32 %v2368, 2147483648
  %v2514 = vxor.u32 %v2371, 2147483648
  %v2515 = vxor.u32 %v2374, 2147483648
  %v2516 = vxor.u32 %v2377, 2147483648
  %v2517 = vxor.u32 %v2380, 2147483648
  %v2518 = vxor.u32 %v2383, 2147483648
  %v2519 = vxor.u32 %v2386, 2147483648
  %v2520 = vxor.u32 %v2389, 2147483648
  %v2521 = vxor.u32 %v2392, 2147483648
  %v2522 = vxor.u32 %v2395, 2147483648
  %v2523 = vxor.u32 %v2398, 2147483648
  %v2524 = vxor.u32 %v2401, 2147483648
  %v2525 = vxor.u32 %v2404, 2147483648
  %v2526 = vxor.u32 %v2407, 2147483648
  %v2527 = vxor.u32 %v2410, 2147483648
  %v2528 = vxor.u32 %v2413, 2147483648
  %v2529 = vxor.u32 %v2416, 2147483648
  %v2530 = vxor.u32 %v2419, 2147483648
  %v2531 = vxor.u32 %v2422, 2147483648
  %v2532 = vxor.u32 %v2425, 2147483648
  %v2533 = vxor.u32 %v2428, 2147483648
  %v2534 = vxor.u32 %v2431, 2147483648
  %v2535 = vxor.u32 %v2434, 2147483648
  %v2536 = vxor.u32 %v2437, 2147483648
  %v2537 = vxor.u32 %v2440, 2147483648
  %v2538 = vxor.u32 %v2443, 2147483648
  %v2539 = vxor.u32 %v2446, 2147483648
  %v2540 = vxor.u32 %v2449, 2147483648
  %v2541 = vxor.u32 %v2452, 2147483648
  %v2542 = vxor.u32 %v2455, 2147483648
  %v2543 = vxor.u32 %v2458, 2147483648
  %v2544 = vxor.u32 %v2461, 2147483648
  %v2545 = vxor.u32 %v2464, 2147483648
  %v2546 = vxor.u32 %v2467, 2147483648
  %v2547 = vxor.u32 %v2470, 2147483648
  %v2548 = vxor.u32 %v2473, 2147483648
  %v2549 = vxor.u32 %v2476, 2147483648
  %v2550 = vxor.u32 %v2479, 2147483648
  %v2551 = vxor.u32 %v2482, 2147483648
  %v2552 = vxor.u32 %v2485, 2147483648
  %v2553 = vxor.u32 %v2488, 2147483648
  %v2554 = vmul.f32 %v2490, 1.442695
  %v2555 = vpow.pop %v2554
  %v2556 = vmul.f32 %v2491, 1.442695
  %v2557 = vpow.pop %v2556
  %v2558 = vmul.f32 %v2492, 1.442695
  %v2559 = vpow.pop %v2558
  %v2560 = vmul.f32 %v2493, 1.442695
  %v2561 = vpow.pop %v2560
  %v2562 = vmul.f32 %v2494, 1.442695
  %v2563 = vpow.pop %v2562
  %v2564 = vmul.f32 %v2495, 1.442695
  %v2565 = vpow.pop %v2564
  %v2566 = vmul.f32 %v2496, 1.442695
  %v2567 = vpow.pop %v2566
  %v2568 = vmul.f32 %v2497, 1.442695
  %v2569 = vpow.pop %v2568
  %v2570 = vmul.f32 %v2498, 1.442695
  %v2571 = vpow.pop %v2570
  %v2572 = vmul.f32 %v2499, 1.442695
  %v2573 = vpow.pop %v2572
  %v2574 = vmul.f32 %v2500, 1.442695
  %v2575 = vpow.pop %v2574
  %v2576 = vmul.f32 %v2501, 1.442695
  %v2577 = vpow.pop %v2576
  %v2578 = vmul.f32 %v2502, 1.442695
  %v2579 = vpow.pop %v2578
  %v2580 = vmul.f32 %v2503, 1.442695
  %v2581 = vpow.pop %v2580
  %v2582 = vmul.f32 %v2504, 1.442695
  %v2583 = vpow.pop %v2582
  %v2584 = vmul.f32 %v2505, 1.442695
  %v2585 = vpow.pop %v2584
  %v2586 = vmul.f32 %v2506, 1.442695
  %v2587 = vpow.pop %v2586
  %v2588 = vmul.f32 %v2507, 1.442695
  %v2589 = vpow.pop %v2588
  %v2590 = vmul.f32 %v2508, 1.442695
  %v2591 = vpow.pop %v2590
  %v2592 = vmul.f32 %v2509, 1.442695
  %v2593 = vpow.pop %v2592
  %v2594 = vmul.f32 %v2510, 1.442695
  %v2595 = vpow.pop %v2594
  %v2596 = vmul.f32 %v2511, 1.442695
  %v2597 = vpow.pop %v2596
  %v2598 = vmul.f32 %v2512, 1.442695
  %v2599 = vpow.pop %v2598
  %v2600 = vmul.f32 %v2513, 1.442695
  %v2601 = vpow.pop %v2600
  %v2602 = vmul.f32 %v2514, 1.442695
  %v2603 = vpow.pop %v2602
  %v2604 = vmul.f32 %v2515, 1.442695
  %v2605 = vpow.pop %v2604
  %v2606 = vmul.f32 %v2516, 1.442695
  %v2607 = vpow.pop %v2606
  %v2608 = vmul.f32 %v2517, 1.442695
  %v2609 = vpow.pop %v2608
  %v2610 = vmul.f32 %v2518, 1.442695
  %v2611 = vpow.pop %v2610
  %v2612 = vmul.f32 %v2519, 1.442695
  %v2613 = vpow.pop %v2612
  %v2614 = vmul.f32 %v2520, 1.442695
  %v2615 = vpow.pop %v2614
  %v2616 = vmul.f32 %v2521, 1.442695
  %v2617 = vpow.pop %v2616
  %v2618 = vmul.f32 %v2522, 1.442695
  %v2619 = vpow.pop %v2618
  %v2620 = vmul.f32 %v2523, 1.442695
  %v2621 = vpow.pop %v2620
  %v2622 = vmul.f32 %v2524, 1.442695
  %v2623 = vpow.pop %v2622
  %v2624 = vmul.f32 %v2525, 1.442695
  %v2625 = vpow.pop %v2624
  %v2626 = vmul.f32 %v2526, 1.442695
  %v2627 = vpow.pop %v2626
  %v2628 = vmul.f32 %v2527, 1.442695
  %v2629 = vpow.pop %v2628
  %v2630 = vmul.f32 %v2528, 1.442695
  %v2631 = vpow.pop %v2630
  %v2632 = vmul.f32 %v2529, 1.442695
  %v2633 = vpow.pop %v2632
  %v2634 = vmul.f32 %v2530, 1.442695
  %v2635 = vpow.pop %v2634
  %v2636 = vmul.f32 %v2531, 1.442695
  %v2637 = vpow.pop %v2636
  %v2638 = vmul.f32 %v2532, 1.442695
  %v2639 = vpow.pop %v2638
  %v2640 = vmul.f32 %v2533, 1.442695
  %v2641 = vpow.pop %v2640
  %v2642 = vmul.f32 %v2534, 1.442695
  %v2643 = vpow.pop %v2642
  %v2644 = vmul.f32 %v2535, 1.442695
  %v2645 = vpow.pop %v2644
  %v2646 = vmul.f32 %v2536, 1.442695
  %v2647 = vpow.pop %v2646
  %v2648 = vmul.f32 %v2537, 1.442695
  %v2649 = vpow.pop %v2648
  %v2650 = vmul.f32 %v2538, 1.442695
  %v2651 = vpow.pop %v2650
  %v2652 = vmul.f32 %v2539, 1.442695
  %v2653 = vpow.pop %v2652
  %v2654 = vmul.f32 %v2540, 1.442695
  %v2655 = vpow.pop %v2654
  %v2656 = vmul.f32 %v2541, 1.442695
  %v2657 = vpow.pop %v2656
  %v2658 = vmul.f32 %v2542, 1.442695
  %v2659 = vpow.pop %v2658
  %v2660 = vmul.f32 %v2543, 1.442695
  %v2661 = vpow.pop %v2660
  %v2662 = vmul.f32 %v2544, 1.442695
  %v2663 = vpow.pop %v2662
  %v2664 = vmul.f32 %v2545, 1.442695
  %v2665 = vpow.pop %v2664
  %v2666 = vmul.f32 %v2546, 1.442695
  %v2667 = vpow.pop %v2666
  %v2668 = vmul.f32 %v2547, 1.442695
  %v2669 = vpow.pop %v2668
  %v2670 = vmul.f32 %v2548, 1.442695
  %v2671 = vpow.pop %v2670
  %v2672 = vmul.f32 %v2549, 1.442695
  %v2673 = vpow.pop %v2672
  %v2674 = vmul.f32 %v2550, 1.442695
  %v2675 = vpow.pop %v2674
  %v2676 = vmul.f32 %v2551, 1.442695
  %v2677 = vpow.pop %v2676
  %v2678 = vmul.f32 %v2552, 1.442695
  %v2679 = vpow.pop %v2678
  %v2680 = vmul.f32 %v2553, 1.442695
  %v2681 = vpow.pop %v2680
  %v2682 = vadd.f32 %v2555, 1.0
  %v2683 = vadd.f32 %v2557, 1.0
  %v2684 = vadd.f32 %v2559, 1.0
  %v2685 = vadd.f32 %v2561, 1.0
  %v2686 = vadd.f32 %v2563, 1.0
  %v2687 = vadd.f32 %v2565, 1.0
  %v2688 = vadd.f32 %v2567, 1.0
  %v2689 = vadd.f32 %v2569, 1.0
  %v2690 = vadd.f32 %v2571, 1.0
  %v2691 = vadd.f32 %v2573, 1.0
  %v2692 = vadd.f32 %v2575, 1.0
  %v2693 = vadd.f32 %v2577, 1.0
  %v2694 = vadd.f32 %v2579, 1.0
  %v2695 = vadd.f32 %v2581, 1.0
  %v2696 = vadd.f32 %v2583, 1.0
  %v2697 = vadd.f32 %v2585, 1.0
  %v2698 = vadd.f32 %v2587, 1.0
  %v2699 = vadd.f32 %v2589, 1.0
  %v2700 = vadd.f32 %v2591, 1.0
  %v2701 = vadd.f32 %v2593, 1.0
  %v2702 = vadd.f32 %v2595, 1.0
  %v2703 = vadd.f32 %v2597, 1.0
  %v2704 = vadd.f32 %v2599, 1.0
  %v2705 = vadd.f32 %v2601, 1.0
  %v2706 = vadd.f32 %v2603, 1.0
  %v2707 = vadd.f32 %v2605, 1.0
  %v2708 = vadd.f32 %v2607, 1.0
  %v2709 = vadd.f32 %v2609, 1.0
  %v2710 = vadd.f32 %v2611, 1.0
  %v2711 = vadd.f32 %v2613, 1.0
  %v2712 = vadd.f32 %v2615, 1.0
  %v2713 = vadd.f32 %v2617, 1.0
  %v2714 = vadd.f32 %v2619, 1.0
  %v2715 = vadd.f32 %v2621, 1.0
  %v2716 = vadd.f32 %v2623, 1.0
  %v2717 = vadd.f32 %v2625, 1.0
  %v2718 = vadd.f32 %v2627, 1.0
  %v2719 = vadd.f32 %v2629, 1.0
  %v2720 = vadd.f32 %v2631, 1.0
  %v2721 = vadd.f32 %v2633, 1.0
  %v2722 = vadd.f32 %v2635, 1.0
  %v2723 = vadd.f32 %v2637, 1.0
  %v2724 = vadd.f32 %v2639, 1.0
  %v2725 = vadd.f32 %v2641, 1.0
  %v2726 = vadd.f32 %v2643, 1.0
  %v2727 = vadd.f32 %v2645, 1.0
  %v2728 = vadd.f32 %v2647, 1.0
  %v2729 = vadd.f32 %v2649, 1.0
  %v2730 = vadd.f32 %v2651, 1.0
  %v2731 = vadd.f32 %v2653, 1.0
  %v2732 = vadd.f32 %v2655, 1.0
  %v2733 = vadd.f32 %v2657, 1.0
  %v2734 = vadd.f32 %v2659, 1.0
  %v2735 = vadd.f32 %v2661, 1.0
  %v2736 = vadd.f32 %v2663, 1.0
  %v2737 = vadd.f32 %v2665, 1.0
  %v2738 = vadd.f32 %v2667, 1.0
  %v2739 = vadd.f32 %v2669, 1.0
  %v2740 = vadd.f32 %v2671, 1.0
  %v2741 = vadd.f32 %v2673, 1.0
  %v2742 = vadd.f32 %v2675, 1.0
  %v2743 = vadd.f32 %v2677, 1.0
  %v2744 = vadd.f32 %v2679, 1.0
  %v2745 = vadd.f32 %v2681, 1.0
  %v2746 = vrcp.pop %v2682
  %v2747 = vmul.f32 %v2682, %v2746
  %v2748 = vsub.f32 1.0, %v2747
  %v2749 = vmul.f32 %v2746, %v2748
  %v2750 = vadd.f32 %v2746, %v2749
  %vm2751 = vweird.f32 %v2682
  %vm2752 = vweird.f32 %v2746
  %vm2753 = vmor %vm2751, %vm2752
  %v2754 = vsel %vm2753, %v2746, %v2750
  %v2755 = vand.u32 2147483647, %v2682
  %vm2756 = vcmp.eq.f32.partialorder %v2755, 8.507059e+37
  %v2757 = vand.u32 %v2682, 2147483648
  %v2758 = vor.u32 1.1754944e-38, %v2757
  %v2759 = vsel %vm2756, %v2758, %v2754
  %v2760 = vmul.f32 1.0, %v2759
  %v2761 = vrcp.pop %v2683
  %v2762 = vmul.f32 %v2683, %v2761
  %v2763 = vsub.f32 1.0, %v2762
  %v2764 = vmul.f32 %v2761, %v2763
  %v2765 = vadd.f32 %v2761, %v2764
  %vm2766 = vweird.f32 %v2683
  %vm2767 = vweird.f32 %v2761
  %vm2768 = vmor %vm2766, %vm2767
  %v2769 = vsel %vm2768, %v2761, %v2765
  %v2770 = vand.u32 2147483647, %v2683
  %vm2771 = vcmp.eq.f32.partialorder %v2770, 8.507059e+37
  %v2772 = vand.u32 %v2683, 2147483648
  %v2773 = vor.u32 1.1754944e-38, %v2772
  %v2774 = vsel %vm2771, %v2773, %v2769
  %v2775 = vmul.f32 1.0, %v2774
  %v2776 = vrcp.pop %v2684
  %v2777 = vmul.f32 %v2684, %v2776
  %v2778 = vsub.f32 1.0, %v2777
  %v2779 = vmul.f32 %v2776, %v2778
  %v2780 = vadd.f32 %v2776, %v2779
  %vm2781 = vweird.f32 %v2684
  %vm2782 = vweird.f32 %v2776
  %vm2783 = vmor %vm2781, %vm2782
  %v2784 = vsel %vm2783, %v2776, %v2780
  %v2785 = vand.u32 2147483647, %v2684
  %vm2786 = vcmp.eq.f32.partialorder %v2785, 8.507059e+37
  %v2787 = vand.u32 %v2684, 2147483648
  %v2788 = vor.u32 1.1754944e-38, %v2787
  %v2789 = vsel %vm2786, %v2788, %v2784
  %v2790 = vmul.f32 1.0, %v2789
  %v2791 = vrcp.pop %v2685
  %v2792 = vmul.f32 %v2685, %v2791
  %v2793 = vsub.f32 1.0, %v2792
  %v2794 = vmul.f32 %v2791, %v2793
  %v2795 = vadd.f32 %v2791, %v2794
  %vm2796 = vweird.f32 %v2685
  %vm2797 = vweird.f32 %v2791
  %vm2798 = vmor %vm2796, %vm2797
  %v2799 = vsel %vm2798, %v2791, %v2795
  %v2800 = vand.u32 2147483647, %v2685
  %vm2801 = vcmp.eq.f32.partialorder %v2800, 8.507059e+37
  %v2802 = vand.u32 %v2685, 2147483648
  %v2803 = vor.u32 1.1754944e-38, %v2802
  %v2804 = vsel %vm2801, %v2803, %v2799
  %v2805 = vmul.f32 1.0, %v2804
  %v2806 = vrcp.pop %v2686
  %v2807 = vmul.f32 %v2686, %v2806
  %v2808 = vsub.f32 1.0, %v2807
  %v2809 = vmul.f32 %v2806, %v2808
  %v2810 = vadd.f32 %v2806, %v2809
  %vm2811 = vweird.f32 %v2686
  %vm2812 = vweird.f32 %v2806
  %vm2813 = vmor %vm2811, %vm2812
  %v2814 = vsel %vm2813, %v2806, %v2810
  %v2815 = vand.u32 2147483647, %v2686
  %vm2816 = vcmp.eq.f32.partialorder %v2815, 8.507059e+37
  %v2817 = vand.u32 %v2686, 2147483648
  %v2818 = vor.u32 1.1754944e-38, %v2817
  %v2819 = vsel %vm2816, %v2818, %v2814
  %v2820 = vmul.f32 1.0, %v2819
  %v2821 = vrcp.pop %v2687
  %v2822 = vmul.f32 %v2687, %v2821
  %v2823 = vsub.f32 1.0, %v2822
  %v2824 = vmul.f32 %v2821, %v2823
  %v2825 = vadd.f32 %v2821, %v2824
  %vm2826 = vweird.f32 %v2687
  %vm2827 = vweird.f32 %v2821
  %vm2828 = vmor %vm2826, %vm2827
  %v2829 = vsel %vm2828, %v2821, %v2825
  %v2830 = vand.u32 2147483647, %v2687
  %vm2831 = vcmp.eq.f32.partialorder %v2830, 8.507059e+37
  %v2832 = vand.u32 %v2687, 2147483648
  %v2833 = vor.u32 1.1754944e-38, %v2832
  %v2834 = vsel %vm2831, %v2833, %v2829
  %v2835 = vmul.f32 1.0, %v2834
  %v2836 = vrcp.pop %v2688
  %v2837 = vmul.f32 %v2688, %v2836
  %v2838 = vsub.f32 1.0, %v2837
  %v2839 = vmul.f32 %v2836, %v2838
  %v2840 = vadd.f32 %v2836, %v2839
  %vm2841 = vweird.f32 %v2688
  %vm2842 = vweird.f32 %v2836
  %vm2843 = vmor %vm2841, %vm2842
  %v2844 = vsel %vm2843, %v2836, %v2840
  %v2845 = vand.u32 2147483647, %v2688
  %vm2846 = vcmp.eq.f32.partialorder %v2845, 8.507059e+37
  %v2847 = vand.u32 %v2688, 2147483648
  %v2848 = vor.u32 1.1754944e-38, %v2847
  %v2849 = vsel %vm2846, %v2848, %v2844
  %v2850 = vmul.f32 1.0, %v2849
  %v2851 = vrcp.pop %v2689
  %v2852 = vmul.f32 %v2689, %v2851
  %v2853 = vsub.f32 1.0, %v2852
  %v2854 = vmul.f32 %v2851, %v2853
  %v2855 = vadd.f32 %v2851, %v2854
  %vm2856 = vweird.f32 %v2689
  %vm2857 = vweird.f32 %v2851
  %vm2858 = vmor %vm2856, %vm2857
  %v2859 = vsel %vm2858, %v2851, %v2855
  %v2860 = vand.u32 2147483647, %v2689
  %vm2861 = vcmp.eq.f32.partialorder %v2860, 8.507059e+37
  %v2862 = vand.u32 %v2689, 2147483648
  %v2863 = vor.u32 1.1754944e-38, %v2862
  %v2864 = vsel %vm2861, %v2863, %v2859
  %v2865 = vmul.f32 1.0, %v2864
  %v2866 = vrcp.pop %v2690
  %v2867 = vmul.f32 %v2690, %v2866
  %v2868 = vsub.f32 1.0, %v2867
  %v2869 = vmul.f32 %v2866, %v2868
  %v2870 = vadd.f32 %v2866, %v2869
  %vm2871 = vweird.f32 %v2690
  %vm2872 = vweird.f32 %v2866
  %vm2873 = vmor %vm2871, %vm2872
  %v2874 = vsel %vm2873, %v2866, %v2870
  %v2875 = vand.u32 2147483647, %v2690
  %vm2876 = vcmp.eq.f32.partialorder %v2875, 8.507059e+37
  %v2877 = vand.u32 %v2690, 2147483648
  %v2878 = vor.u32 1.1754944e-38, %v2877
  %v2879 = vsel %vm2876, %v2878, %v2874
  %v2880 = vmul.f32 1.0, %v2879
  %v2881 = vrcp.pop %v2691
  %v2882 = vmul.f32 %v2691, %v2881
  %v2883 = vsub.f32 1.0, %v2882
  %v2884 = vmul.f32 %v2881, %v2883
  %v2885 = vadd.f32 %v2881, %v2884
  %vm2886 = vweird.f32 %v2691
  %vm2887 = vweird.f32 %v2881
  %vm2888 = vmor %vm2886, %vm2887
  %v2889 = vsel %vm2888, %v2881, %v2885
  %v2890 = vand.u32 2147483647, %v2691
  %vm2891 = vcmp.eq.f32.partialorder %v2890, 8.507059e+37
  %v2892 = vand.u32 %v2691, 2147483648
  %v2893 = vor.u32 1.1754944e-38, %v2892
  %v2894 = vsel %vm2891, %v2893, %v2889
  %v2895 = vmul.f32 1.0, %v2894
  %v2896 = vrcp.pop %v2692
  %v2897 = vmul.f32 %v2692, %v2896
  %v2898 = vsub.f32 1.0, %v2897
  %v2899 = vmul.f32 %v2896, %v2898
  %v2900 = vadd.f32 %v2896, %v2899
  %vm2901 = vweird.f32 %v2692
  %vm2902 = vweird.f32 %v2896
  %vm2903 = vmor %vm2901, %vm2902
  %v2904 = vsel %vm2903, %v2896, %v2900
  %v2905 = vand.u32 2147483647, %v2692
  %vm2906 = vcmp.eq.f32.partialorder %v2905, 8.507059e+37
  %v2907 = vand.u32 %v2692, 2147483648
  %v2908 = vor.u32 1.1754944e-38, %v2907
  %v2909 = vsel %vm2906, %v2908, %v2904
  %v2910 = vmul.f32 1.0, %v2909
  %v2911 = vrcp.pop %v2693
  %v2912 = vmul.f32 %v2693, %v2911
  %v2913 = vsub.f32 1.0, %v2912
  %v2914 = vmul.f32 %v2911, %v2913
  %v2915 = vadd.f32 %v2911, %v2914
  %vm2916 = vweird.f32 %v2693
  %vm2917 = vweird.f32 %v2911
  %vm2918 = vmor %vm2916, %vm2917
  %v2919 = vsel %vm2918, %v2911, %v2915
  %v2920 = vand.u32 2147483647, %v2693
  %vm2921 = vcmp.eq.f32.partialorder %v2920, 8.507059e+37
  %v2922 = vand.u32 %v2693, 2147483648
  %v2923 = vor.u32 1.1754944e-38, %v2922
  %v2924 = vsel %vm2921, %v2923, %v2919
  %v2925 = vmul.f32 1.0, %v2924
  %v2926 = vrcp.pop %v2694
  %v2927 = vmul.f32 %v2694, %v2926
  %v2928 = vsub.f32 1.0, %v2927
  %v2929 = vmul.f32 %v2926, %v2928
  %v2930 = vadd.f32 %v2926, %v2929
  %vm2931 = vweird.f32 %v2694
  %vm2932 = vweird.f32 %v2926
  %vm2933 = vmor %vm2931, %vm2932
  %v2934 = vsel %vm2933, %v2926, %v2930
  %v2935 = vand.u32 2147483647, %v2694
  %vm2936 = vcmp.eq.f32.partialorder %v2935, 8.507059e+37
  %v2937 = vand.u32 %v2694, 2147483648
  %v2938 = vor.u32 1.1754944e-38, %v2937
  %v2939 = vsel %vm2936, %v2938, %v2934
  %v2940 = vmul.f32 1.0, %v2939
  %v2941 = vrcp.pop %v2695
  %v2942 = vmul.f32 %v2695, %v2941
  %v2943 = vsub.f32 1.0, %v2942
  %v2944 = vmul.f32 %v2941, %v2943
  %v2945 = vadd.f32 %v2941, %v2944
  %vm2946 = vweird.f32 %v2695
  %vm2947 = vweird.f32 %v2941
  %vm2948 = vmor %vm2946, %vm2947
  %v2949 = vsel %vm2948, %v2941, %v2945
  %v2950 = vand.u32 2147483647, %v2695
  %vm2951 = vcmp.eq.f32.partialorder %v2950, 8.507059e+37
  %v2952 = vand.u32 %v2695, 2147483648
  %v2953 = vor.u32 1.1754944e-38, %v2952
  %v2954 = vsel %vm2951, %v2953, %v2949
  %v2955 = vmul.f32 1.0, %v2954
  %v2956 = vrcp.pop %v2696
  %v2957 = vmul.f32 %v2696, %v2956
  %v2958 = vsub.f32 1.0, %v2957
  %v2959 = vmul.f32 %v2956, %v2958
  %v2960 = vadd.f32 %v2956, %v2959
  %vm2961 = vweird.f32 %v2696
  %vm2962 = vweird.f32 %v2956
  %vm2963 = vmor %vm2961, %vm2962
  %v2964 = vsel %vm2963, %v2956, %v2960
  %v2965 = vand.u32 2147483647, %v2696
  %vm2966 = vcmp.eq.f32.partialorder %v2965, 8.507059e+37
  %v2967 = vand.u32 %v2696, 2147483648
  %v2968 = vor.u32 1.1754944e-38, %v2967
  %v2969 = vsel %vm2966, %v2968, %v2964
  %v2970 = vmul.f32 1.0, %v2969
  %v2971 = vrcp.pop %v2697
  %v2972 = vmul.f32 %v2697, %v2971
  %v2973 = vsub.f32 1.0, %v2972
  %v2974 = vmul.f32 %v2971, %v2973
  %v2975 = vadd.f32 %v2971, %v2974
  %vm2976 = vweird.f32 %v2697
  %vm2977 = vweird.f32 %v2971
  %vm2978 = vmor %vm2976, %vm2977
  %v2979 = vsel %vm2978, %v2971, %v2975
  %v2980 = vand.u32 2147483647, %v2697
  %vm2981 = vcmp.eq.f32.partialorder %v2980, 8.507059e+37
  %v2982 = vand.u32 %v2697, 2147483648
  %v2983 = vor.u32 1.1754944e-38, %v2982
  %v2984 = vsel %vm2981, %v2983, %v2979
  %v2985 = vmul.f32 1.0, %v2984
  %v2986 = vrcp.pop %v2698
  %v2987 = vmul.f32 %v2698, %v2986
  %v2988 = vsub.f32 1.0, %v2987
  %v2989 = vmul.f32 %v2986, %v2988
  %v2990 = vadd.f32 %v2986, %v2989
  %vm2991 = vweird.f32 %v2698
  %vm2992 = vweird.f32 %v2986
  %vm2993 = vmor %vm2991, %vm2992
  %v2994 = vsel %vm2993, %v2986, %v2990
  %v2995 = vand.u32 2147483647, %v2698
  %vm2996 = vcmp.eq.f32.partialorder %v2995, 8.507059e+37
  %v2997 = vand.u32 %v2698, 2147483648
  %v2998 = vor.u32 1.1754944e-38, %v2997
  %v2999 = vsel %vm2996, %v2998, %v2994
  %v3000 = vmul.f32 1.0, %v2999
  %v3001 = vrcp.pop %v2699
  %v3002 = vmul.f32 %v2699, %v3001
  %v3003 = vsub.f32 1.0, %v3002
  %v3004 = vmul.f32 %v3001, %v3003
  %v3005 = vadd.f32 %v3001, %v3004
  %vm3006 = vweird.f32 %v2699
  %vm3007 = vweird.f32 %v3001
  %vm3008 = vmor %vm3006, %vm3007
  %v3009 = vsel %vm3008, %v3001, %v3005
  %v3010 = vand.u32 2147483647, %v2699
  %vm3011 = vcmp.eq.f32.partialorder %v3010, 8.507059e+37
  %v3012 = vand.u32 %v2699, 2147483648
  %v3013 = vor.u32 1.1754944e-38, %v3012
  %v3014 = vsel %vm3011, %v3013, %v3009
  %v3015 = vmul.f32 1.0, %v3014
  %v3016 = vrcp.pop %v2700
  %v3017 = vmul.f32 %v2700, %v3016
  %v3018 = vsub.f32 1.0, %v3017
  %v3019 = vmul.f32 %v3016, %v3018
  %v3020 = vadd.f32 %v3016, %v3019
  %vm3021 = vweird.f32 %v2700
  %vm3022 = vweird.f32 %v3016
  %vm3023 = vmor %vm3021, %vm3022
  %v3024 = vsel %vm3023, %v3016, %v3020
  %v3025 = vand.u32 2147483647, %v2700
  %vm3026 = vcmp.eq.f32.partialorder %v3025, 8.507059e+37
  %v3027 = vand.u32 %v2700, 2147483648
  %v3028 = vor.u32 1.1754944e-38, %v3027
  %v3029 = vsel %vm3026, %v3028, %v3024
  %v3030 = vmul.f32 1.0, %v3029
  %v3031 = vrcp.pop %v2701
  %v3032 = vmul.f32 %v2701, %v3031
  %v3033 = vsub.f32 1.0, %v3032
  %v3034 = vmul.f32 %v3031, %v3033
  %v3035 = vadd.f32 %v3031, %v3034
  %vm3036 = vweird.f32 %v2701
  %vm3037 = vweird.f32 %v3031
  %vm3038 = vmor %vm3036, %vm3037
  %v3039 = vsel %vm3038, %v3031, %v3035
  %v3040 = vand.u32 2147483647, %v2701
  %vm3041 = vcmp.eq.f32.partialorder %v3040, 8.507059e+37
  %v3042 = vand.u32 %v2701, 2147483648
  %v3043 = vor.u32 1.1754944e-38, %v3042
  %v3044 = vsel %vm3041, %v3043, %v3039
  %v3045 = vmul.f32 1.0, %v3044
  %v3046 = vrcp.pop %v2702
  %v3047 = vmul.f32 %v2702, %v3046
  %v3048 = vsub.f32 1.0, %v3047
  %v3049 = vmul.f32 %v3046, %v3048
  %v3050 = vadd.f32 %v3046, %v3049
  %vm3051 = vweird.f32 %v2702
  %vm3052 = vweird.f32 %v3046
  %vm3053 = vmor %vm3051, %vm3052
  %v3054 = vsel %vm3053, %v3046, %v3050
  %v3055 = vand.u32 2147483647, %v2702
  %vm3056 = vcmp.eq.f32.partialorder %v3055, 8.507059e+37
  %v3057 = vand.u32 %v2702, 2147483648
  %v3058 = vor.u32 1.1754944e-38, %v3057
  %v3059 = vsel %vm3056, %v3058, %v3054
  %v3060 = vmul.f32 1.0, %v3059
  %v3061 = vrcp.pop %v2703
  %v3062 = vmul.f32 %v2703, %v3061
  %v3063 = vsub.f32 1.0, %v3062
  %v3064 = vmul.f32 %v3061, %v3063
  %v3065 = vadd.f32 %v3061, %v3064
  %vm3066 = vweird.f32 %v2703
  %vm3067 = vweird.f32 %v3061
  %vm3068 = vmor %vm3066, %vm3067
  %v3069 = vsel %vm3068, %v3061, %v3065
  %v3070 = vand.u32 2147483647, %v2703
  %vm3071 = vcmp.eq.f32.partialorder %v3070, 8.507059e+37
  %v3072 = vand.u32 %v2703, 2147483648
  %v3073 = vor.u32 1.1754944e-38, %v3072
  %v3074 = vsel %vm3071, %v3073, %v3069
  %v3075 = vmul.f32 1.0, %v3074
  %v3076 = vrcp.pop %v2704
  %v3077 = vmul.f32 %v2704, %v3076
  %v3078 = vsub.f32 1.0, %v3077
  %v3079 = vmul.f32 %v3076, %v3078
  %v3080 = vadd.f32 %v3076, %v3079
  %vm3081 = vweird.f32 %v2704
  %vm3082 = vweird.f32 %v3076
  %vm3083 = vmor %vm3081, %vm3082
  %v3084 = vsel %vm3083, %v3076, %v3080
  %v3085 = vand.u32 2147483647, %v2704
  %vm3086 = vcmp.eq.f32.partialorder %v3085, 8.507059e+37
  %v3087 = vand.u32 %v2704, 2147483648
  %v3088 = vor.u32 1.1754944e-38, %v3087
  %v3089 = vsel %vm3086, %v3088, %v3084
  %v3090 = vmul.f32 1.0, %v3089
  %v3091 = vrcp.pop %v2705
  %v3092 = vmul.f32 %v2705, %v3091
  %v3093 = vsub.f32 1.0, %v3092
  %v3094 = vmul.f32 %v3091, %v3093
  %v3095 = vadd.f32 %v3091, %v3094
  %vm3096 = vweird.f32 %v2705
  %vm3097 = vweird.f32 %v3091
  %vm3098 = vmor %vm3096, %vm3097
  %v3099 = vsel %vm3098, %v3091, %v3095
  %v3100 = vand.u32 2147483647, %v2705
  %vm3101 = vcmp.eq.f32.partialorder %v3100, 8.507059e+37
  %v3102 = vand.u32 %v2705, 2147483648
  %v3103 = vor.u32 1.1754944e-38, %v3102
  %v3104 = vsel %vm3101, %v3103, %v3099
  %v3105 = vmul.f32 1.0, %v3104
  %v3106 = vrcp.pop %v2706
  %v3107 = vmul.f32 %v2706, %v3106
  %v3108 = vsub.f32 1.0, %v3107
  %v3109 = vmul.f32 %v3106, %v3108
  %v3110 = vadd.f32 %v3106, %v3109
  %vm3111 = vweird.f32 %v2706
  %vm3112 = vweird.f32 %v3106
  %vm3113 = vmor %vm3111, %vm3112
  %v3114 = vsel %vm3113, %v3106, %v3110
  %v3115 = vand.u32 2147483647, %v2706
  %vm3116 = vcmp.eq.f32.partialorder %v3115, 8.507059e+37
  %v3117 = vand.u32 %v2706, 2147483648
  %v3118 = vor.u32 1.1754944e-38, %v3117
  %v3119 = vsel %vm3116, %v3118, %v3114
  %v3120 = vmul.f32 1.0, %v3119
  %v3121 = vrcp.pop %v2707
  %v3122 = vmul.f32 %v2707, %v3121
  %v3123 = vsub.f32 1.0, %v3122
  %v3124 = vmul.f32 %v3121, %v3123
  %v3125 = vadd.f32 %v3121, %v3124
  %vm3126 = vweird.f32 %v2707
  %vm3127 = vweird.f32 %v3121
  %vm3128 = vmor %vm3126, %vm3127
  %v3129 = vsel %vm3128, %v3121, %v3125
  %v3130 = vand.u32 2147483647, %v2707
  %vm3131 = vcmp.eq.f32.partialorder %v3130, 8.507059e+37
  %v3132 = vand.u32 %v2707, 2147483648
  %v3133 = vor.u32 1.1754944e-38, %v3132
  %v3134 = vsel %vm3131, %v3133, %v3129
  %v3135 = vmul.f32 1.0, %v3134
  %v3136 = vrcp.pop %v2708
  %v3137 = vmul.f32 %v2708, %v3136
  %v3138 = vsub.f32 1.0, %v3137
  %v3139 = vmul.f32 %v3136, %v3138
  %v3140 = vadd.f32 %v3136, %v3139
  %vm3141 = vweird.f32 %v2708
  %vm3142 = vweird.f32 %v3136
  %vm3143 = vmor %vm3141, %vm3142
  %v3144 = vsel %vm3143, %v3136, %v3140
  %v3145 = vand.u32 2147483647, %v2708
  %vm3146 = vcmp.eq.f32.partialorder %v3145, 8.507059e+37
  %v3147 = vand.u32 %v2708, 2147483648
  %v3148 = vor.u32 1.1754944e-38, %v3147
  %v3149 = vsel %vm3146, %v3148, %v3144
  %v3150 = vmul.f32 1.0, %v3149
  %v3151 = vrcp.pop %v2709
  %v3152 = vmul.f32 %v2709, %v3151
  %v3153 = vsub.f32 1.0, %v3152
  %v3154 = vmul.f32 %v3151, %v3153
  %v3155 = vadd.f32 %v3151, %v3154
  %vm3156 = vweird.f32 %v2709
  %vm3157 = vweird.f32 %v3151
  %vm3158 = vmor %vm3156, %vm3157
  %v3159 = vsel %vm3158, %v3151, %v3155
  %v3160 = vand.u32 2147483647, %v2709
  %vm3161 = vcmp.eq.f32.partialorder %v3160, 8.507059e+37
  %v3162 = vand.u32 %v2709, 2147483648
  %v3163 = vor.u32 1.1754944e-38, %v3162
  %v3164 = vsel %vm3161, %v3163, %v3159
  %v3165 = vmul.f32 1.0, %v3164
  %v3166 = vrcp.pop %v2710
  %v3167 = vmul.f32 %v2710, %v3166
  %v3168 = vsub.f32 1.0, %v3167
  %v3169 = vmul.f32 %v3166, %v3168
  %v3170 = vadd.f32 %v3166, %v3169
  %vm3171 = vweird.f32 %v2710
  %vm3172 = vweird.f32 %v3166
  %vm3173 = vmor %vm3171, %vm3172
  %v3174 = vsel %vm3173, %v3166, %v3170
  %v3175 = vand.u32 2147483647, %v2710
  %vm3176 = vcmp.eq.f32.partialorder %v3175, 8.507059e+37
  %v3177 = vand.u32 %v2710, 2147483648
  %v3178 = vor.u32 1.1754944e-38, %v3177
  %v3179 = vsel %vm3176, %v3178, %v3174
  %v3180 = vmul.f32 1.0, %v3179
  %v3181 = vrcp.pop %v2711
  %v3182 = vmul.f32 %v2711, %v3181
  %v3183 = vsub.f32 1.0, %v3182
  %v3184 = vmul.f32 %v3181, %v3183
  %v3185 = vadd.f32 %v3181, %v3184
  %vm3186 = vweird.f32 %v2711
  %vm3187 = vweird.f32 %v3181
  %vm3188 = vmor %vm3186, %vm3187
  %v3189 = vsel %vm3188, %v3181, %v3185
  %v3190 = vand.u32 2147483647, %v2711
  %vm3191 = vcmp.eq.f32.partialorder %v3190, 8.507059e+37
  %v3192 = vand.u32 %v2711, 2147483648
  %v3193 = vor.u32 1.1754944e-38, %v3192
  %v3194 = vsel %vm3191, %v3193, %v3189
  %v3195 = vmul.f32 1.0, %v3194
  %v3196 = vrcp.pop %v2712
  %v3197 = vmul.f32 %v2712, %v3196
  %v3198 = vsub.f32 1.0, %v3197
  %v3199 = vmul.f32 %v3196, %v3198
  %v3200 = vadd.f32 %v3196, %v3199
  %vm3201 = vweird.f32 %v2712
  %vm3202 = vweird.f32 %v3196
  %vm3203 = vmor %vm3201, %vm3202
  %v3204 = vsel %vm3203, %v3196, %v3200
  %v3205 = vand.u32 2147483647, %v2712
  %vm3206 = vcmp.eq.f32.partialorder %v3205, 8.507059e+37
  %v3207 = vand.u32 %v2712, 2147483648
  %v3208 = vor.u32 1.1754944e-38, %v3207
  %v3209 = vsel %vm3206, %v3208, %v3204
  %v3210 = vmul.f32 1.0, %v3209
  %v3211 = vrcp.pop %v2713
  %v3212 = vmul.f32 %v2713, %v3211
  %v3213 = vsub.f32 1.0, %v3212
  %v3214 = vmul.f32 %v3211, %v3213
  %v3215 = vadd.f32 %v3211, %v3214
  %vm3216 = vweird.f32 %v2713
  %vm3217 = vweird.f32 %v3211
  %vm3218 = vmor %vm3216, %vm3217
  %v3219 = vsel %vm3218, %v3211, %v3215
  %v3220 = vand.u32 2147483647, %v2713
  %vm3221 = vcmp.eq.f32.partialorder %v3220, 8.507059e+37
  %v3222 = vand.u32 %v2713, 2147483648
  %v3223 = vor.u32 1.1754944e-38, %v3222
  %v3224 = vsel %vm3221, %v3223, %v3219
  %v3225 = vmul.f32 1.0, %v3224
  %v3226 = vrcp.pop %v2714
  %v3227 = vmul.f32 %v2714, %v3226
  %v3228 = vsub.f32 1.0, %v3227
  %v3229 = vmul.f32 %v3226, %v3228
  %v3230 = vadd.f32 %v3226, %v3229
  %vm3231 = vweird.f32 %v2714
  %vm3232 = vweird.f32 %v3226
  %vm3233 = vmor %vm3231, %vm3232
  %v3234 = vsel %vm3233, %v3226, %v3230
  %v3235 = vand.u32 2147483647, %v2714
  %vm3236 = vcmp.eq.f32.partialorder %v3235, 8.507059e+37
  %v3237 = vand.u32 %v2714, 2147483648
  %v3238 = vor.u32 1.1754944e-38, %v3237
  %v3239 = vsel %vm3236, %v3238, %v3234
  %v3240 = vmul.f32 1.0, %v3239
  %v3241 = vrcp.pop %v2715
  %v3242 = vmul.f32 %v2715, %v3241
  %v3243 = vsub.f32 1.0, %v3242
  %v3244 = vmul.f32 %v3241, %v3243
  %v3245 = vadd.f32 %v3241, %v3244
  %vm3246 = vweird.f32 %v2715
  %vm3247 = vweird.f32 %v3241
  %vm3248 = vmor %vm3246, %vm3247
  %v3249 = vsel %vm3248, %v3241, %v3245
  %v3250 = vand.u32 2147483647, %v2715
  %vm3251 = vcmp.eq.f32.partialorder %v3250, 8.507059e+37
  %v3252 = vand.u32 %v2715, 2147483648
  %v3253 = vor.u32 1.1754944e-38, %v3252
  %v3254 = vsel %vm3251, %v3253, %v3249
  %v3255 = vmul.f32 1.0, %v3254
  %v3256 = vrcp.pop %v2716
  %v3257 = vmul.f32 %v2716, %v3256
  %v3258 = vsub.f32 1.0, %v3257
  %v3259 = vmul.f32 %v3256, %v3258
  %v3260 = vadd.f32 %v3256, %v3259
  %vm3261 = vweird.f32 %v2716
  %vm3262 = vweird.f32 %v3256
  %vm3263 = vmor %vm3261, %vm3262
  %v3264 = vsel %vm3263, %v3256, %v3260
  %v3265 = vand.u32 2147483647, %v2716
  %vm3266 = vcmp.eq.f32.partialorder %v3265, 8.507059e+37
  %v3267 = vand.u32 %v2716, 2147483648
  %v3268 = vor.u32 1.1754944e-38, %v3267
  %v3269 = vsel %vm3266, %v3268, %v3264
  %v3270 = vmul.f32 1.0, %v3269
  %v3271 = vrcp.pop %v2717
  %v3272 = vmul.f32 %v2717, %v3271
  %v3273 = vsub.f32 1.0, %v3272
  %v3274 = vmul.f32 %v3271, %v3273
  %v3275 = vadd.f32 %v3271, %v3274
  %vm3276 = vweird.f32 %v2717
  %vm3277 = vweird.f32 %v3271
  %vm3278 = vmor %vm3276, %vm3277
  %v3279 = vsel %vm3278, %v3271, %v3275
  %v3280 = vand.u32 2147483647, %v2717
  %vm3281 = vcmp.eq.f32.partialorder %v3280, 8.507059e+37
  %v3282 = vand.u32 %v2717, 2147483648
  %v3283 = vor.u32 1.1754944e-38, %v3282
  %v3284 = vsel %vm3281, %v3283, %v3279
  %v3285 = vmul.f32 1.0, %v3284
  %v3286 = vrcp.pop %v2718
  %v3287 = vmul.f32 %v2718, %v3286
  %v3288 = vsub.f32 1.0, %v3287
  %v3289 = vmul.f32 %v3286, %v3288
  %v3290 = vadd.f32 %v3286, %v3289
  %vm3291 = vweird.f32 %v2718
  %vm3292 = vweird.f32 %v3286
  %vm3293 = vmor %vm3291, %vm3292
  %v3294 = vsel %vm3293, %v3286, %v3290
  %v3295 = vand.u32 2147483647, %v2718
  %vm3296 = vcmp.eq.f32.partialorder %v3295, 8.507059e+37
  %v3297 = vand.u32 %v2718, 2147483648
  %v3298 = vor.u32 1.1754944e-38, %v3297
  %v3299 = vsel %vm3296, %v3298, %v3294
  %v3300 = vmul.f32 1.0, %v3299
  %v3301 = vrcp.pop %v2719
  %v3302 = vmul.f32 %v2719, %v3301
  %v3303 = vsub.f32 1.0, %v3302
  %v3304 = vmul.f32 %v3301, %v3303
  %v3305 = vadd.f32 %v3301, %v3304
  %vm3306 = vweird.f32 %v2719
  %vm3307 = vweird.f32 %v3301
  %vm3308 = vmor %vm3306, %vm3307
  %v3309 = vsel %vm3308, %v3301, %v3305
  %v3310 = vand.u32 2147483647, %v2719
  %vm3311 = vcmp.eq.f32.partialorder %v3310, 8.507059e+37
  %v3312 = vand.u32 %v2719, 2147483648
  %v3313 = vor.u32 1.1754944e-38, %v3312
  %v3314 = vsel %vm3311, %v3313, %v3309
  %v3315 = vmul.f32 1.0, %v3314
  %v3316 = vrcp.pop %v2720
  %v3317 = vmul.f32 %v2720, %v3316
  %v3318 = vsub.f32 1.0, %v3317
  %v3319 = vmul.f32 %v3316, %v3318
  %v3320 = vadd.f32 %v3316, %v3319
  %vm3321 = vweird.f32 %v2720
  %vm3322 = vweird.f32 %v3316
  %vm3323 = vmor %vm3321, %vm3322
  %v3324 = vsel %vm3323, %v3316, %v3320
  %v3325 = vand.u32 2147483647, %v2720
  %vm3326 = vcmp.eq.f32.partialorder %v3325, 8.507059e+37
  %v3327 = vand.u32 %v2720, 2147483648
  %v3328 = vor.u32 1.1754944e-38, %v3327
  %v3329 = vsel %vm3326, %v3328, %v3324
  %v3330 = vmul.f32 1.0, %v3329
  %v3331 = vrcp.pop %v2721
  %v3332 = vmul.f32 %v2721, %v3331
  %v3333 = vsub.f32 1.0, %v3332
  %v3334 = vmul.f32 %v3331, %v3333
  %v3335 = vadd.f32 %v3331, %v3334
  %vm3336 = vweird.f32 %v2721
  %vm3337 = vweird.f32 %v3331
  %vm3338 = vmor %vm3336, %vm3337
  %v3339 = vsel %vm3338, %v3331, %v3335
  %v3340 = vand.u32 2147483647, %v2721
  %vm3341 = vcmp.eq.f32.partialorder %v3340, 8.507059e+37
  %v3342 = vand.u32 %v2721, 2147483648
  %v3343 = vor.u32 1.1754944e-38, %v3342
  %v3344 = vsel %vm3341, %v3343, %v3339
  %v3345 = vmul.f32 1.0, %v3344
  %v3346 = vrcp.pop %v2722
  %v3347 = vmul.f32 %v2722, %v3346
  %v3348 = vsub.f32 1.0, %v3347
  %v3349 = vmul.f32 %v3346, %v3348
  %v3350 = vadd.f32 %v3346, %v3349
  %vm3351 = vweird.f32 %v2722
  %vm3352 = vweird.f32 %v3346
  %vm3353 = vmor %vm3351, %vm3352
  %v3354 = vsel %vm3353, %v3346, %v3350
  %v3355 = vand.u32 2147483647, %v2722
  %vm3356 = vcmp.eq.f32.partialorder %v3355, 8.507059e+37
  %v3357 = vand.u32 %v2722, 2147483648
  %v3358 = vor.u32 1.1754944e-38, %v3357
  %v3359 = vsel %vm3356, %v3358, %v3354
  %v3360 = vmul.f32 1.0, %v3359
  %v3361 = vrcp.pop %v2723
  %v3362 = vmul.f32 %v2723, %v3361
  %v3363 = vsub.f32 1.0, %v3362
  %v3364 = vmul.f32 %v3361, %v3363
  %v3365 = vadd.f32 %v3361, %v3364
  %vm3366 = vweird.f32 %v2723
  %vm3367 = vweird.f32 %v3361
  %vm3368 = vmor %vm3366, %vm3367
  %v3369 = vsel %vm3368, %v3361, %v3365
  %v3370 = vand.u32 2147483647, %v2723
  %vm3371 = vcmp.eq.f32.partialorder %v3370, 8.507059e+37
  %v3372 = vand.u32 %v2723, 2147483648
  %v3373 = vor.u32 1.1754944e-38, %v3372
  %v3374 = vsel %vm3371, %v3373, %v3369
  %v3375 = vmul.f32 1.0, %v3374
  %v3376 = vrcp.pop %v2724
  %v3377 = vmul.f32 %v2724, %v3376
  %v3378 = vsub.f32 1.0, %v3377
  %v3379 = vmul.f32 %v3376, %v3378
  %v3380 = vadd.f32 %v3376, %v3379
  %vm3381 = vweird.f32 %v2724
  %vm3382 = vweird.f32 %v3376
  %vm3383 = vmor %vm3381, %vm3382
  %v3384 = vsel %vm3383, %v3376, %v3380
  %v3385 = vand.u32 2147483647, %v2724
  %vm3386 = vcmp.eq.f32.partialorder %v3385, 8.507059e+37
  %v3387 = vand.u32 %v2724, 2147483648
  %v3388 = vor.u32 1.1754944e-38, %v3387
  %v3389 = vsel %vm3386, %v3388, %v3384
  %v3390 = vmul.f32 1.0, %v3389
  %v3391 = vrcp.pop %v2725
  %v3392 = vmul.f32 %v2725, %v3391
  %v3393 = vsub.f32 1.0, %v3392
  %v3394 = vmul.f32 %v3391, %v3393
  %v3395 = vadd.f32 %v3391, %v3394
  %vm3396 = vweird.f32 %v2725
  %vm3397 = vweird.f32 %v3391
  %vm3398 = vmor %vm3396, %vm3397
  %v3399 = vsel %vm3398, %v3391, %v3395
  %v3400 = vand.u32 2147483647, %v2725
  %vm3401 = vcmp.eq.f32.partialorder %v3400, 8.507059e+37
  %v3402 = vand.u32 %v2725, 2147483648
  %v3403 = vor.u32 1.1754944e-38, %v3402
  %v3404 = vsel %vm3401, %v3403, %v3399
  %v3405 = vmul.f32 1.0, %v3404
  %v3406 = vrcp.pop %v2726
  %v3407 = vmul.f32 %v2726, %v3406
  %v3408 = vsub.f32 1.0, %v3407
  %v3409 = vmul.f32 %v3406, %v3408
  %v3410 = vadd.f32 %v3406, %v3409
  %vm3411 = vweird.f32 %v2726
  %vm3412 = vweird.f32 %v3406
  %vm3413 = vmor %vm3411, %vm3412
  %v3414 = vsel %vm3413, %v3406, %v3410
  %v3415 = vand.u32 2147483647, %v2726
  %vm3416 = vcmp.eq.f32.partialorder %v3415, 8.507059e+37
  %v3417 = vand.u32 %v2726, 2147483648
  %v3418 = vor.u32 1.1754944e-38, %v3417
  %v3419 = vsel %vm3416, %v3418, %v3414
  %v3420 = vmul.f32 1.0, %v3419
  %v3421 = vrcp.pop %v2727
  %v3422 = vmul.f32 %v2727, %v3421
  %v3423 = vsub.f32 1.0, %v3422
  %v3424 = vmul.f32 %v3421, %v3423
  %v3425 = vadd.f32 %v3421, %v3424
  %vm3426 = vweird.f32 %v2727
  %vm3427 = vweird.f32 %v3421
  %vm3428 = vmor %vm3426, %vm3427
  %v3429 = vsel %vm3428, %v3421, %v3425
  %v3430 = vand.u32 2147483647, %v2727
  %vm3431 = vcmp.eq.f32.partialorder %v3430, 8.507059e+37
  %v3432 = vand.u32 %v2727, 2147483648
  %v3433 = vor.u32 1.1754944e-38, %v3432
  %v3434 = vsel %vm3431, %v3433, %v3429
  %v3435 = vmul.f32 1.0, %v3434
  %v3436 = vrcp.pop %v2728
  %v3437 = vmul.f32 %v2728, %v3436
  %v3438 = vsub.f32 1.0, %v3437
  %v3439 = vmul.f32 %v3436, %v3438
  %v3440 = vadd.f32 %v3436, %v3439
  %vm3441 = vweird.f32 %v2728
  %vm3442 = vweird.f32 %v3436
  %vm3443 = vmor %vm3441, %vm3442
  %v3444 = vsel %vm3443, %v3436, %v3440
  %v3445 = vand.u32 2147483647, %v2728
  %vm3446 = vcmp.eq.f32.partialorder %v3445, 8.507059e+37
  %v3447 = vand.u32 %v2728, 2147483648
  %v3448 = vor.u32 1.1754944e-38, %v3447
  %v3449 = vsel %vm3446, %v3448, %v3444
  %v3450 = vmul.f32 1.0, %v3449
  %v3451 = vrcp.pop %v2729
  %v3452 = vmul.f32 %v2729, %v3451
  %v3453 = vsub.f32 1.0, %v3452
  %v3454 = vmul.f32 %v3451, %v3453
  %v3455 = vadd.f32 %v3451, %v3454
  %vm3456 = vweird.f32 %v2729
  %vm3457 = vweird.f32 %v3451
  %vm3458 = vmor %vm3456, %vm3457
  %v3459 = vsel %vm3458, %v3451, %v3455
  %v3460 = vand.u32 2147483647, %v2729
  %vm3461 = vcmp.eq.f32.partialorder %v3460, 8.507059e+37
  %v3462 = vand.u32 %v2729, 2147483648
  %v3463 = vor.u32 1.1754944e-38, %v3462
  %v3464 = vsel %vm3461, %v3463, %v3459
  %v3465 = vmul.f32 1.0, %v3464
  %v3466 = vrcp.pop %v2730
  %v3467 = vmul.f32 %v2730, %v3466
  %v3468 = vsub.f32 1.0, %v3467
  %v3469 = vmul.f32 %v3466, %v3468
  %v3470 = vadd.f32 %v3466, %v3469
  %vm3471 = vweird.f32 %v2730
  %vm3472 = vweird.f32 %v3466
  %vm3473 = vmor %vm3471, %vm3472
  %v3474 = vsel %vm3473, %v3466, %v3470
  %v3475 = vand.u32 2147483647, %v2730
  %vm3476 = vcmp.eq.f32.partialorder %v3475, 8.507059e+37
  %v3477 = vand.u32 %v2730, 2147483648
  %v3478 = vor.u32 1.1754944e-38, %v3477
  %v3479 = vsel %vm3476, %v3478, %v3474
  %v3480 = vmul.f32 1.0, %v3479
  %v3481 = vrcp.pop %v2731
  %v3482 = vmul.f32 %v2731, %v3481
  %v3483 = vsub.f32 1.0, %v3482
  %v3484 = vmul.f32 %v3481, %v3483
  %v3485 = vadd.f32 %v3481, %v3484
  %vm3486 = vweird.f32 %v2731
  %vm3487 = vweird.f32 %v3481
  %vm3488 = vmor %vm3486, %vm3487
  %v3489 = vsel %vm3488, %v3481, %v3485
  %v3490 = vand.u32 2147483647, %v2731
  %vm3491 = vcmp.eq.f32.partialorder %v3490, 8.507059e+37
  %v3492 = vand.u32 %v2731, 2147483648
  %v3493 = vor.u32 1.1754944e-38, %v3492
  %v3494 = vsel %vm3491, %v3493, %v3489
  %v3495 = vmul.f32 1.0, %v3494
  %v3496 = vrcp.pop %v2732
  %v3497 = vmul.f32 %v2732, %v3496
  %v3498 = vsub.f32 1.0, %v3497
  %v3499 = vmul.f32 %v3496, %v3498
  %v3500 = vadd.f32 %v3496, %v3499
  %vm3501 = vweird.f32 %v2732
  %vm3502 = vweird.f32 %v3496
  %vm3503 = vmor %vm3501, %vm3502
  %v3504 = vsel %vm3503, %v3496, %v3500
  %v3505 = vand.u32 2147483647, %v2732
  %vm3506 = vcmp.eq.f32.partialorder %v3505, 8.507059e+37
  %v3507 = vand.u32 %v2732, 2147483648
  %v3508 = vor.u32 1.1754944e-38, %v3507
  %v3509 = vsel %vm3506, %v3508, %v3504
  %v3510 = vmul.f32 1.0, %v3509
  %v3511 = vrcp.pop %v2733
  %v3512 = vmul.f32 %v2733, %v3511
  %v3513 = vsub.f32 1.0, %v3512
  %v3514 = vmul.f32 %v3511, %v3513
  %v3515 = vadd.f32 %v3511, %v3514
  %vm3516 = vweird.f32 %v2733
  %vm3517 = vweird.f32 %v3511
  %vm3518 = vmor %vm3516, %vm3517
  %v3519 = vsel %vm3518, %v3511, %v3515
  %v3520 = vand.u32 2147483647, %v2733
  %vm3521 = vcmp.eq.f32.partialorder %v3520, 8.507059e+37
  %v3522 = vand.u32 %v2733, 2147483648
  %v3523 = vor.u32 1.1754944e-38, %v3522
  %v3524 = vsel %vm3521, %v3523, %v3519
  %v3525 = vmul.f32 1.0, %v3524
  %v3526 = vrcp.pop %v2734
  %v3527 = vmul.f32 %v2734, %v3526
  %v3528 = vsub.f32 1.0, %v3527
  %v3529 = vmul.f32 %v3526, %v3528
  %v3530 = vadd.f32 %v3526, %v3529
  %vm3531 = vweird.f32 %v2734
  %vm3532 = vweird.f32 %v3526
  %vm3533 = vmor %vm3531, %vm3532
  %v3534 = vsel %vm3533, %v3526, %v3530
  %v3535 = vand.u32 2147483647, %v2734
  %vm3536 = vcmp.eq.f32.partialorder %v3535, 8.507059e+37
  %v3537 = vand.u32 %v2734, 2147483648
  %v3538 = vor.u32 1.1754944e-38, %v3537
  %v3539 = vsel %vm3536, %v3538, %v3534
  %v3540 = vmul.f32 1.0, %v3539
  %v3541 = vrcp.pop %v2735
  %v3542 = vmul.f32 %v2735, %v3541
  %v3543 = vsub.f32 1.0, %v3542
  %v3544 = vmul.f32 %v3541, %v3543
  %v3545 = vadd.f32 %v3541, %v3544
  %vm3546 = vweird.f32 %v2735
  %vm3547 = vweird.f32 %v3541
  %vm3548 = vmor %vm3546, %vm3547
  %v3549 = vsel %vm3548, %v3541, %v3545
  %v3550 = vand.u32 2147483647, %v2735
  %vm3551 = vcmp.eq.f32.partialorder %v3550, 8.507059e+37
  %v3552 = vand.u32 %v2735, 2147483648
  %v3553 = vor.u32 1.1754944e-38, %v3552
  %v3554 = vsel %vm3551, %v3553, %v3549
  %v3555 = vmul.f32 1.0, %v3554
  %v3556 = vrcp.pop %v2736
  %v3557 = vmul.f32 %v2736, %v3556
  %v3558 = vsub.f32 1.0, %v3557
  %v3559 = vmul.f32 %v3556, %v3558
  %v3560 = vadd.f32 %v3556, %v3559
  %vm3561 = vweird.f32 %v2736
  %vm3562 = vweird.f32 %v3556
  %vm3563 = vmor %vm3561, %vm3562
  %v3564 = vsel %vm3563, %v3556, %v3560
  %v3565 = vand.u32 2147483647, %v2736
  %vm3566 = vcmp.eq.f32.partialorder %v3565, 8.507059e+37
  %v3567 = vand.u32 %v2736, 2147483648
  %v3568 = vor.u32 1.1754944e-38, %v3567
  %v3569 = vsel %vm3566, %v3568, %v3564
  %v3570 = vmul.f32 1.0, %v3569
  %v3571 = vrcp.pop %v2737
  %v3572 = vmul.f32 %v2737, %v3571
  %v3573 = vsub.f32 1.0, %v3572
  %v3574 = vmul.f32 %v3571, %v3573
  %v3575 = vadd.f32 %v3571, %v3574
  %vm3576 = vweird.f32 %v2737
  %vm3577 = vweird.f32 %v3571
  %vm3578 = vmor %vm3576, %vm3577
  %v3579 = vsel %vm3578, %v3571, %v3575
  %v3580 = vand.u32 2147483647, %v2737
  %vm3581 = vcmp.eq.f32.partialorder %v3580, 8.507059e+37
  %v3582 = vand.u32 %v2737, 2147483648
  %v3583 = vor.u32 1.1754944e-38, %v3582
  %v3584 = vsel %vm3581, %v3583, %v3579
  %v3585 = vmul.f32 1.0, %v3584
  %v3586 = vrcp.pop %v2738
  %v3587 = vmul.f32 %v2738, %v3586
  %v3588 = vsub.f32 1.0, %v3587
  %v3589 = vmul.f32 %v3586, %v3588
  %v3590 = vadd.f32 %v3586, %v3589
  %vm3591 = vweird.f32 %v2738
  %vm3592 = vweird.f32 %v3586
  %vm3593 = vmor %vm3591, %vm3592
  %v3594 = vsel %vm3593, %v3586, %v3590
  %v3595 = vand.u32 2147483647, %v2738
  %vm3596 = vcmp.eq.f32.partialorder %v3595, 8.507059e+37
  %v3597 = vand.u32 %v2738, 2147483648
  %v3598 = vor.u32 1.1754944e-38, %v3597
  %v3599 = vsel %vm3596, %v3598, %v3594
  %v3600 = vmul.f32 1.0, %v3599
  %v3601 = vrcp.pop %v2739
  %v3602 = vmul.f32 %v2739, %v3601
  %v3603 = vsub.f32 1.0, %v3602
  %v3604 = vmul.f32 %v3601, %v3603
  %v3605 = vadd.f32 %v3601, %v3604
  %vm3606 = vweird.f32 %v2739
  %vm3607 = vweird.f32 %v3601
  %vm3608 = vmor %vm3606, %vm3607
  %v3609 = vsel %vm3608, %v3601, %v3605
  %v3610 = vand.u32 2147483647, %v2739
  %vm3611 = vcmp.eq.f32.partialorder %v3610, 8.507059e+37
  %v3612 = vand.u32 %v2739, 2147483648
  %v3613 = vor.u32 1.1754944e-38, %v3612
  %v3614 = vsel %vm3611, %v3613, %v3609
  %v3615 = vmul.f32 1.0, %v3614
  %v3616 = vrcp.pop %v2740
  %v3617 = vmul.f32 %v2740, %v3616
  %v3618 = vsub.f32 1.0, %v3617
  %v3619 = vmul.f32 %v3616, %v3618
  %v3620 = vadd.f32 %v3616, %v3619
  %vm3621 = vweird.f32 %v2740
  %vm3622 = vweird.f32 %v3616
  %vm3623 = vmor %vm3621, %vm3622
  %v3624 = vsel %vm3623, %v3616, %v3620
  %v3625 = vand.u32 2147483647, %v2740
  %vm3626 = vcmp.eq.f32.partialorder %v3625, 8.507059e+37
  %v3627 = vand.u32 %v2740, 2147483648
  %v3628 = vor.u32 1.1754944e-38, %v3627
  %v3629 = vsel %vm3626, %v3628, %v3624
  %v3630 = vmul.f32 1.0, %v3629
  %v3631 = vrcp.pop %v2741
  %v3632 = vmul.f32 %v2741, %v3631
  %v3633 = vsub.f32 1.0, %v3632
  %v3634 = vmul.f32 %v3631, %v3633
  %v3635 = vadd.f32 %v3631, %v3634
  %vm3636 = vweird.f32 %v2741
  %vm3637 = vweird.f32 %v3631
  %vm3638 = vmor %vm3636, %vm3637
  %v3639 = vsel %vm3638, %v3631, %v3635
  %v3640 = vand.u32 2147483647, %v2741
  %vm3641 = vcmp.eq.f32.partialorder %v3640, 8.507059e+37
  %v3642 = vand.u32 %v2741, 2147483648
  %v3643 = vor.u32 1.1754944e-38, %v3642
  %v3644 = vsel %vm3641, %v3643, %v3639
  %v3645 = vmul.f32 1.0, %v3644
  %v3646 = vrcp.pop %v2742
  %v3647 = vmul.f32 %v2742, %v3646
  %v3648 = vsub.f32 1.0, %v3647
  %v3649 = vmul.f32 %v3646, %v3648
  %v3650 = vadd.f32 %v3646, %v3649
  %vm3651 = vweird.f32 %v2742
  %vm3652 = vweird.f32 %v3646
  %vm3653 = vmor %vm3651, %vm3652
  %v3654 = vsel %vm3653, %v3646, %v3650
  %v3655 = vand.u32 2147483647, %v2742
  %vm3656 = vcmp.eq.f32.partialorder %v3655, 8.507059e+37
  %v3657 = vand.u32 %v2742, 2147483648
  %v3658 = vor.u32 1.1754944e-38, %v3657
  %v3659 = vsel %vm3656, %v3658, %v3654
  %v3660 = vmul.f32 1.0, %v3659
  %v3661 = vrcp.pop %v2743
  %v3662 = vmul.f32 %v2743, %v3661
  %v3663 = vsub.f32 1.0, %v3662
  %v3664 = vmul.f32 %v3661, %v3663
  %v3665 = vadd.f32 %v3661, %v3664
  %vm3666 = vweird.f32 %v2743
  %vm3667 = vweird.f32 %v3661
  %vm3668 = vmor %vm3666, %vm3667
  %v3669 = vsel %vm3668, %v3661, %v3665
  %v3670 = vand.u32 2147483647, %v2743
  %vm3671 = vcmp.eq.f32.partialorder %v3670, 8.507059e+37
  %v3672 = vand.u32 %v2743, 2147483648
  %v3673 = vor.u32 1.1754944e-38, %v3672
  %v3674 = vsel %vm3671, %v3673, %v3669
  %v3675 = vmul.f32 1.0, %v3674
  %v3676 = vrcp.pop %v2744
  %v3677 = vmul.f32 %v2744, %v3676
  %v3678 = vsub.f32 1.0, %v3677
  %v3679 = vmul.f32 %v3676, %v3678
  %v3680 = vadd.f32 %v3676, %v3679
  %vm3681 = vweird.f32 %v2744
  %vm3682 = vweird.f32 %v3676
  %vm3683 = vmor %vm3681, %vm3682
  %v3684 = vsel %vm3683, %v3676, %v3680
  %v3685 = vand.u32 2147483647, %v2744
  %vm3686 = vcmp.eq.f32.partialorder %v3685, 8.507059e+37
  %v3687 = vand.u32 %v2744, 2147483648
  %v3688 = vor.u32 1.1754944e-38, %v3687
  %v3689 = vsel %vm3686, %v3688, %v3684
  %v3690 = vmul.f32 1.0, %v3689
  %v3691 = vrcp.pop %v2745
  %v3692 = vmul.f32 %v2745, %v3691
  %v3693 = vsub.f32 1.0, %v3692
  %v3694 = vmul.f32 %v3691, %v3693
  %v3695 = vadd.f32 %v3691, %v3694
  %vm3696 = vweird.f32 %v2745
  %vm3697 = vweird.f32 %v3691
  %vm3698 = vmor %vm3696, %vm3697
  %v3699 = vsel %vm3698, %v3691, %v3695
  %v3700 = vand.u32 2147483647, %v2745
  %vm3701 = vcmp.eq.f32.partialorder %v3700, 8.507059e+37
  %v3702 = vand.u32 %v2745, 2147483648
  %v3703 = vor.u32 1.1754944e-38, %v3702
  %v3704 = vsel %vm3701, %v3703, %v3699
  %v3705 = vmul.f32 1.0, %v3704
  %v3706 = vld [vmem:[%s8] sm:$0xff]
  %v3707 = vld [vmem:[%s8 + $0x8] sm:$0xff]
  %v3708 = vld [vmem:[%s8 + $0x10] sm:$0xff]
  %v3709 = vld [vmem:[%s8 + $0x18] sm:$0xff]
  %v3710 = vld [vmem:[%s8 + $0x20] sm:$0xff]
  %v3711 = vld [vmem:[%s8 + $0x28] sm:$0xff]
  %v3712 = vld [vmem:[%s8 + $0x30] sm:$0xff]
  %v3713 = vld [vmem:[%s8 + $0x38] sm:$0xff]
  %v3714 = vld [vmem:[%s8 + $0x40] sm:$0xff]
  %v3715 = vld [vmem:[%s8 + $0x48] sm:$0xff]
  %v3716 = vld [vmem:[%s8 + $0x50] sm:$0xff]
  %v3717 = vld [vmem:[%s8 + $0x58] sm:$0xff]
  %v3718 = vld [vmem:[%s8 + $0x60] sm:$0xff]
  %v3719 = vld [vmem:[%s8 + $0x68] sm:$0xff]
  %v3720 = vld [vmem:[%s8 + $0x70] sm:$0xff]
  %v3721 = vld [vmem:[%s8 + $0x78] sm:$0xff]
  %v3722 = vld [vmem:[%s9] sm:$0x1]
  %v3724 = vperm.slane %v3722, 0
  %3726 = vmatpush.msra.mxu0 %v3721
  %3727 = vmatpush.msra.mxu0 %v3720
  %3728 = vmatpush.msra.mxu0 %v3719
  %3729 = vmatpush.msra.mxu0 %v3718
  %3730 = vmatpush.msra.mxu0 %v3717
  %3731 = vmatpush.msra.mxu0 %v3716
  %3732 = vmatpush.msra.mxu0 %v3715
  %3733 = vmatpush.msra.mxu0 %v3714
  %3734 = vmatpush.msra.mxu0 %v3713
  %3735 = vmatpush.msra.mxu0 %v3712
  %3736 = vmatpush.msra.mxu0 %v3711
  %3737 = vmatpush.msra.mxu0 %v3710
  %3738 = vmatpush.msra.mxu0 %v3709
  %3739 = vmatpush.msra.mxu0 %v3708
  %3740 = vmatpush.msra.mxu0 %v3707
  %3741 = vmatpush.msra.mxu0 %v3706
  %3742 = vmatmul.f32.gmra.mxu0 %v2760
  %v3743 = vpop.f32.mrf.mxu0
  %v3744 = vadd.f32 %v3724, %v3743
  %3745 = vmatmul.f32.gmra.mxu0 %v2775
  %v3746 = vpop.f32.mrf.mxu0
  %v3747 = vadd.f32 %v3724, %v3746
  %3748 = vmatmul.f32.gmra.mxu0 %v2790
  %v3749 = vpop.f32.mrf.mxu0
  %v3750 = vadd.f32 %v3724, %v3749
  %3751 = vmatmul.f32.gmra.mxu0 %v2805
  %v3752 = vpop.f32.mrf.mxu0
  %v3753 = vadd.f32 %v3724, %v3752
  %3754 = vmatmul.f32.gmra.mxu0 %v2820
  %v3755 = vpop.f32.mrf.mxu0
  %v3756 = vadd.f32 %v3724, %v3755
  %3757 = vmatmul.f32.gmra.mxu0 %v2835
  %v3758 = vpop.f32.mrf.mxu0
  %v3759 = vadd.f32 %v3724, %v3758
  %3760 = vmatmul.f32.gmra.mxu0 %v2850
  %v3761 = vpop.f32.mrf.mxu0
  %v3762 = vadd.f32 %v3724, %v3761
  %3763 = vmatmul.f32.gmra.mxu0 %v2865
  %v3764 = vpop.f32.mrf.mxu0
  %v3765 = vadd.f32 %v3724, %v3764
  %3766 = vmatmul.f32.gmra.mxu0 %v2880
  %v3767 = vpop.f32.mrf.mxu0
  %v3768 = vadd.f32 %v3724, %v3767
  %3769 = vmatmul.f32.gmra.mxu0 %v2895
  %v3770 = vpop.f32.mrf.mxu0
  %v3771 = vadd.f32 %v3724, %v3770
  %3772 = vmatmul.f32.gmra.mxu0 %v2910
  %v3773 = vpop.f32.mrf.mxu0
  %v3774 = vadd.f32 %v3724, %v3773
  %3775 = vmatmul.f32.gmra.mxu0 %v2925
  %v3776 = vpop.f32.mrf.mxu0
  %v3777 = vadd.f32 %v3724, %v3776
  %3778 = vmatmul.f32.gmra.mxu0 %v2940
  %v3779 = vpop.f32.mrf.mxu0
  %v3780 = vadd.f32 %v3724, %v3779
  %3781 = vmatmul.f32.gmra.mxu0 %v2955
  %v3782 = vpop.f32.mrf.mxu0
  %v3783 = vadd.f32 %v3724, %v3782
  %3784 = vmatmul.f32.gmra.mxu0 %v2970
  %v3785 = vpop.f32.mrf.mxu0
  %v3786 = vadd.f32 %v3724, %v3785
  %3787 = vmatmul.f32.gmra.mxu0 %v2985
  %v3788 = vpop.f32.mrf.mxu0
  %v3789 = vadd.f32 %v3724, %v3788
  %3790 = vmatmul.f32.gmra.mxu0 %v3000
  %v3791 = vpop.f32.mrf.mxu0
  %v3792 = vadd.f32 %v3724, %v3791
  %3793 = vmatmul.f32.gmra.mxu0 %v3015
  %v3794 = vpop.f32.mrf.mxu0
  %v3795 = vadd.f32 %v3724, %v3794
  %3796 = vmatmul.f32.gmra.mxu0 %v3030
  %v3797 = vpop.f32.mrf.mxu0
  %v3798 = vadd.f32 %v3724, %v3797
  %3799 = vmatmul.f32.gmra.mxu0 %v3045
  %v3800 = vpop.f32.mrf.mxu0
  %v3801 = vadd.f32 %v3724, %v3800
  %3802 = vmatmul.f32.gmra.mxu0 %v3060
  %v3803 = vpop.f32.mrf.mxu0
  %v3804 = vadd.f32 %v3724, %v3803
  %3805 = vmatmul.f32.gmra.mxu0 %v3075
  %v3806 = vpop.f32.mrf.mxu0
  %v3807 = vadd.f32 %v3724, %v3806
  %3808 = vmatmul.f32.gmra.mxu0 %v3090
  %v3809 = vpop.f32.mrf.mxu0
  %v3810 = vadd.f32 %v3724, %v3809
  %3811 = vmatmul.f32.gmra.mxu0 %v3105
  %v3812 = vpop.f32.mrf.mxu0
  %v3813 = vadd.f32 %v3724, %v3812
  %3814 = vmatmul.f32.gmra.mxu0 %v3120
  %v3815 = vpop.f32.mrf.mxu0
  %v3816 = vadd.f32 %v3724, %v3815
  %3817 = vmatmul.f32.gmra.mxu0 %v3135
  %v3818 = vpop.f32.mrf.mxu0
  %v3819 = vadd.f32 %v3724, %v3818
  %3820 = vmatmul.f32.gmra.mxu0 %v3150
  %v3821 = vpop.f32.mrf.mxu0
  %v3822 = vadd.f32 %v3724, %v3821
  %3823 = vmatmul.f32.gmra.mxu0 %v3165
  %v3824 = vpop.f32.mrf.mxu0
  %v3825 = vadd.f32 %v3724, %v3824
  %3826 = vmatmul.f32.gmra.mxu0 %v3180
  %v3827 = vpop.f32.mrf.mxu0
  %v3828 = vadd.f32 %v3724, %v3827
  %3829 = vmatmul.f32.gmra.mxu0 %v3195
  %v3830 = vpop.f32.mrf.mxu0
  %v3831 = vadd.f32 %v3724, %v3830
  %3832 = vmatmul.f32.gmra.mxu0 %v3210
  %v3833 = vpop.f32.mrf.mxu0
  %v3834 = vadd.f32 %v3724, %v3833
  %3835 = vmatmul.f32.gmra.mxu0 %v3225
  %v3836 = vpop.f32.mrf.mxu0
  %v3837 = vadd.f32 %v3724, %v3836
  %3838 = vmatmul.f32.gmra.mxu0 %v3240
  %v3839 = vpop.f32.mrf.mxu0
  %v3840 = vadd.f32 %v3724, %v3839
  %3841 = vmatmul.f32.gmra.mxu0 %v3255
  %v3842 = vpop.f32.mrf.mxu0
  %v3843 = vadd.f32 %v3724, %v3842
  %3844 = vmatmul.f32.gmra.mxu0 %v3270
  %v3845 = vpop.f32.mrf.mxu0
  %v3846 = vadd.f32 %v3724, %v3845
  %3847 = vmatmul.f32.gmra.mxu0 %v3285
  %v3848 = vpop.f32.mrf.mxu0
  %v3849 = vadd.f32 %v3724, %v3848
  %3850 = vmatmul.f32.gmra.mxu0 %v3300
  %v3851 = vpop.f32.mrf.mxu0
  %v3852 = vadd.f32 %v3724, %v3851
  %3853 = vmatmul.f32.gmra.mxu0 %v3315
  %v3854 = vpop.f32.mrf.mxu0
  %v3855 = vadd.f32 %v3724, %v3854
  %3856 = vmatmul.f32.gmra.mxu0 %v3330
  %v3857 = vpop.f32.mrf.mxu0
  %v3858 = vadd.f32 %v3724, %v3857
  %3859 = vmatmul.f32.gmra.mxu0 %v3345
  %v3860 = vpop.f32.mrf.mxu0
  %v3861 = vadd.f32 %v3724, %v3860
  %3862 = vmatmul.f32.gmra.mxu0 %v3360
  %v3863 = vpop.f32.mrf.mxu0
  %v3864 = vadd.f32 %v3724, %v3863
  %3865 = vmatmul.f32.gmra.mxu0 %v3375
  %v3866 = vpop.f32.mrf.mxu0
  %v3867 = vadd.f32 %v3724, %v3866
  %3868 = vmatmul.f32.gmra.mxu0 %v3390
  %v3869 = vpop.f32.mrf.mxu0
  %v3870 = vadd.f32 %v3724, %v3869
  %3871 = vmatmul.f32.gmra.mxu0 %v3405
  %v3872 = vpop.f32.mrf.mxu0
  %v3873 = vadd.f32 %v3724, %v3872
  %3874 = vmatmul.f32.gmra.mxu0 %v3420
  %v3875 = vpop.f32.mrf.mxu0
  %v3876 = vadd.f32 %v3724, %v3875
  %3877 = vmatmul.f32.gmra.mxu0 %v3435
  %v3878 = vpop.f32.mrf.mxu0
  %v3879 = vadd.f32 %v3724, %v3878
  %3880 = vmatmul.f32.gmra.mxu0 %v3450
  %v3881 = vpop.f32.mrf.mxu0
  %v3882 = vadd.f32 %v3724, %v3881
  %3883 = vmatmul.f32.gmra.mxu0 %v3465
  %v3884 = vpop.f32.mrf.mxu0
  %v3885 = vadd.f32 %v3724, %v3884
  %3886 = vmatmul.f32.gmra.mxu0 %v3480
  %v3887 = vpop.f32.mrf.mxu0
  %v3888 = vadd.f32 %v3724, %v3887
  %3889 = vmatmul.f32.gmra.mxu0 %v3495
  %v3890 = vpop.f32.mrf.mxu0
  %v3891 = vadd.f32 %v3724, %v3890
  %3892 = vmatmul.f32.gmra.mxu0 %v3510
  %v3893 = vpop.f32.mrf.mxu0
  %v3894 = vadd.f32 %v3724, %v3893
  %3895 = vmatmul.f32.gmra.mxu0 %v3525
  %v3896 = vpop.f32.mrf.mxu0
  %v3897 = vadd.f32 %v3724, %v3896
  %3898 = vmatmul.f32.gmra.mxu0 %v3540
  %v3899 = vpop.f32.mrf.mxu0
  %v3900 = vadd.f32 %v3724, %v3899
  %3901 = vmatmul.f32.gmra.mxu0 %v3555
  %v3902 = vpop.f32.mrf.mxu0
  %v3903 = vadd.f32 %v3724, %v3902
  %3904 = vmatmul.f32.gmra.mxu0 %v3570
  %v3905 = vpop.f32.mrf.mxu0
  %v3906 = vadd.f32 %v3724, %v3905
  %3907 = vmatmul.f32.gmra.mxu0 %v3585
  %v3908 = vpop.f32.mrf.mxu0
  %v3909 = vadd.f32 %v3724, %v3908
  %3910 = vmatmul.f32.gmra.mxu0 %v3600
  %v3911 = vpop.f32.mrf.mxu0
  %v3912 = vadd.f32 %v3724, %v3911
  %3913 = vmatmul.f32.gmra.mxu0 %v3615
  %v3914 = vpop.f32.mrf.mxu0
  %v3915 = vadd.f32 %v3724, %v3914
  %3916 = vmatmul.f32.gmra.mxu0 %v3630
  %v3917 = vpop.f32.mrf.mxu0
  %v3918 = vadd.f32 %v3724, %v3917
  %3919 = vmatmul.f32.gmra.mxu0 %v3645
  %v3920 = vpop.f32.mrf.mxu0
  %v3921 = vadd.f32 %v3724, %v3920
  %3922 = vmatmul.f32.gmra.mxu0 %v3660
  %v3923 = vpop.f32.mrf.mxu0
  %v3924 = vadd.f32 %v3724, %v3923
  %3925 = vmatmul.f32.gmra.mxu0 %v3675
  %v3926 = vpop.f32.mrf.mxu0
  %v3927 = vadd.f32 %v3724, %v3926
  %3928 = vmatmul.f32.gmra.mxu0 %v3690
  %v3929 = vpop.f32.mrf.mxu0
  %v3930 = vadd.f32 %v3724, %v3929
  %3931 = vmatmul.f32.gmra.mxu0 %v3705
  %v3932 = vpop.f32.mrf.mxu0
  %v3933 = vadd.f32 %v3724, %v3932
  %3934 = vdwg.mxu0
  %3935 = vst.msk [vmem:[%s10] sm:$0xff] %vm107, %v3744
  %3936 = vst.msk [vmem:[%s10 + $0x8] sm:$0xff] %vm107, %v3747
  %3937 = vst.msk [vmem:[%s10 + $0x10] sm:$0xff] %vm107, %v3750
  %3938 = vst.msk [vmem:[%s10 + $0x18] sm:$0xff] %vm107, %v3753
  %3939 = vst.msk [vmem:[%s10 + $0x20] sm:$0xff] %vm107, %v3756
  %3940 = vst.msk [vmem:[%s10 + $0x28] sm:$0xff] %vm107, %v3759
  %3941 = vst.msk [vmem:[%s10 + $0x30] sm:$0xff] %vm107, %v3762
  %3942 = vst.msk [vmem:[%s10 + $0x38] sm:$0xff] %vm107, %v3765
  %3943 = vst.msk [vmem:[%s10 + $0x40] sm:$0xff] %vm107, %v3768
  %3944 = vst.msk [vmem:[%s10 + $0x48] sm:$0xff] %vm107, %v3771
  %3945 = vst.msk [vmem:[%s10 + $0x50] sm:$0xff] %vm107, %v3774
  %3946 = vst.msk [vmem:[%s10 + $0x58] sm:$0xff] %vm107, %v3777
  %3947 = vst.msk [vmem:[%s10 + $0x60] sm:$0xff] %vm107, %v3780
  %3948 = vst.msk [vmem:[%s10 + $0x68] sm:$0xff] %vm107, %v3783
  %3949 = vst.msk [vmem:[%s10 + $0x70] sm:$0xff] %vm107, %v3786
  %3950 = vst.msk [vmem:[%s10 + $0x78] sm:$0xff] %vm107, %v3789
  %3951 = vst.msk [vmem:[%s10 + $0x80] sm:$0xff] %vm107, %v3792
  %3952 = vst.msk [vmem:[%s10 + $0x88] sm:$0xff] %vm107, %v3795
  %3953 = vst.msk [vmem:[%s10 + $0x90] sm:$0xff] %vm107, %v3798
  %3954 = vst.msk [vmem:[%s10 + $0x98] sm:$0xff] %vm107, %v3801
  %3955 = vst.msk [vmem:[%s10 + $0xa0] sm:$0xff] %vm107, %v3804
  %3956 = vst.msk [vmem:[%s10 + $0xa8] sm:$0xff] %vm107, %v3807
  %3957 = vst.msk [vmem:[%s10 + $0xb0] sm:$0xff] %vm107, %v3810
  %3958 = vst.msk [vmem:[%s10 + $0xb8] sm:$0xff] %vm107, %v3813
  %3959 = vst.msk [vmem:[%s10 + $0xc0] sm:$0xff] %vm107, %v3816
  %3960 = vst.msk [vmem:[%s10 + $0xc8] sm:$0xff] %vm107, %v3819
  %3961 = vst.msk [vmem:[%s10 + $0xd0] sm:$0xff] %vm107, %v3822
  %3962 = vst.msk [vmem:[%s10 + $0xd8] sm:$0xff] %vm107, %v3825
  %3963 = vst.msk [vmem:[%s10 + $0xe0] sm:$0xff] %vm107, %v3828
  %3964 = vst.msk [vmem:[%s10 + $0xe8] sm:$0xff] %vm107, %v3831
  %3965 = vst.msk [vmem:[%s10 + $0xf0] sm:$0xff] %vm107, %v3834
  %3966 = vst.msk [vmem:[%s10 + $0xf8] sm:$0xff] %vm107, %v3837
  %3967 = vst.msk [vmem:[%s10 + $0x100] sm:$0xff] %vm107, %v3840
  %3968 = vst.msk [vmem:[%s10 + $0x108] sm:$0xff] %vm107, %v3843
  %3969 = vst.msk [vmem:[%s10 + $0x110] sm:$0xff] %vm107, %v3846
  %3970 = vst.msk [vmem:[%s10 + $0x118] sm:$0xff] %vm107, %v3849
  %3971 = vst.msk [vmem:[%s10 + $0x120] sm:$0xff] %vm107, %v3852
  %3972 = vst.msk [vmem:[%s10 + $0x128] sm:$0xff] %vm107, %v3855
  %3973 = vst.msk [vmem:[%s10 + $0x130] sm:$0xff] %vm107, %v3858
  %3974 = vst.msk [vmem:[%s10 + $0x138] sm:$0xff] %vm107, %v3861
  %3975 = vst.msk [vmem:[%s10 + $0x140] sm:$0xff] %vm107, %v3864
  %3976 = vst.msk [vmem:[%s10 + $0x148] sm:$0xff] %vm107, %v3867
  %3977 = vst.msk [vmem:[%s10 + $0x150] sm:$0xff] %vm107, %v3870
  %3978 = vst.msk [vmem:[%s10 + $0x158] sm:$0xff] %vm107, %v3873
  %3979 = vst.msk [vmem:[%s10 + $0x160] sm:$0xff] %vm107, %v3876
  %3980 = vst.msk [vmem:[%s10 + $0x168] sm:$0xff] %vm107, %v3879
  %3981 = vst.msk [vmem:[%s10 + $0x170] sm:$0xff] %vm107, %v3882
  %3982 = vst.msk [vmem:[%s10 + $0x178] sm:$0xff] %vm107, %v3885
  %3983 = vst.msk [vmem:[%s10 + $0x180] sm:$0xff] %vm107, %v3888
  %3984 = vst.msk [vmem:[%s10 + $0x188] sm:$0xff] %vm107, %v3891
  %3985 = vst.msk [vmem:[%s10 + $0x190] sm:$0xff] %vm107, %v3894
  %3986 = vst.msk [vmem:[%s10 + $0x198] sm:$0xff] %vm107, %v3897
  %3987 = vst.msk [vmem:[%s10 + $0x1a0] sm:$0xff] %vm107, %v3900
  %3988 = vst.msk [vmem:[%s10 + $0x1a8] sm:$0xff] %vm107, %v3903
  %3989 = vst.msk [vmem:[%s10 + $0x1b0] sm:$0xff] %vm107, %v3906
  %3990 = vst.msk [vmem:[%s10 + $0x1b8] sm:$0xff] %vm107, %v3909
  %3991 = vst.msk [vmem:[%s10 + $0x1c0] sm:$0xff] %vm107, %v3912
  %3992 = vst.msk [vmem:[%s10 + $0x1c8] sm:$0xff] %vm107, %v3915
  %3993 = vst.msk [vmem:[%s10 + $0x1d0] sm:$0xff] %vm107, %v3918
  %3994 = vst.msk [vmem:[%s10 + $0x1d8] sm:$0xff] %vm107, %v3921
  %3995 = vst.msk [vmem:[%s10 + $0x1e0] sm:$0xff] %vm107, %v3924
  %3996 = vst.msk [vmem:[%s10 + $0x1e8] sm:$0xff] %vm107, %v3927
  %3997 = vst.msk [vmem:[%s10 + $0x1f0] sm:$0xff] %vm107, %v3930
  %3998 = vst.msk [vmem:[%s10 + $0x1f8] sm:$0xff] %vm107, %v3933
  // Predicated region
  $region42: #{tpu_custom_call.1} parent=0 // pred_check
    _
  $region43: #{tpu_custom_call.1} parent=0 // pred_check_branch
    %4000 = sbr.rel (0) target = $region45
  $region44: #{tpu_custom_call.1} parent=0 // pred_region
    _
  $region45: #{tpu_custom_call.1} parent=0 // pred_fallthru
    _
  // Predicated region
  $region46: #{tpu_custom_call.1} parent=0 // pred_check
    _
  $region47: #{tpu_custom_call.1} parent=0 // pred_check_branch
    %4002 = sbr.rel (0) target = $region49
  $region48: #{tpu_custom_call.1} parent=0 // pred_region
    _
  $region49: #{tpu_custom_call.1} parent=0 // pred_fallthru
    _

</llo_original>
